<compile_context>
chip_gen: v5e
topology: v5e:2x2
jax: 0.10.0
libtpu: 0.0.40
codegen_flags: <defaults>
</compile_context>

<pallas_src>
import numpy as np
import jax
import jax.numpy as jnp
from jax import lax
from jax.experimental import pallas as pl
from jax.experimental.pallas import tpu as pltpu


def se_basic_block_kernel(x_ref, wb1_ref, wb2_ref, bn_ref, wse1t_ref, wse2_ref,
                          out_ref, pad1_ref, pad2_ref):
    # x_ref    : (nb, D, H, W*C)    unpadded input, lane-dense, f32
    # wb1/wb2  : (9, W*C, W*C)      banded conv weights (kw taps + W boundary
    #                               zeros folded in), one matrix per (kd, kh)
    # bn_ref   : (8, W*C)           rows 0..3 = s1, b1, s2, b2 (folded BN)
    # wse1t    : (Cr, C)            first SE FC weight, pre-transposed
    # wse2     : (Cr, C)            second SE FC weight
    # out_ref  : (nb, D*H, W*C)     f32
    # pad1/2   : VMEM (nb, D+2, H+2, W*C) scratch in the MXU operand dtype
    nb, D, H, WC = x_ref.shape
    Cr, C = wse2_ref.shape
    W = WC // C
    DH = D * H
    M = nb * DH
    pdt = pad1_ref.dtype          # MXU operand dtype (f32 or bf16)

    # ---- zero only the D/H halo (interior is fully overwritten below).
    # Re-done every step so the batch grid axis can stay "parallel". ----
    def zero_halo(pad_ref):
        pad_ref[:, 0:1, :, :] = jnp.zeros((nb, 1, H + 2, WC), pdt)
        pad_ref[:, D + 1:D + 2, :, :] = jnp.zeros((nb, 1, H + 2, WC), pdt)
        pad_ref[:, 1:D + 1, 0:1, :] = jnp.zeros((nb, D, 1, WC), pdt)
        pad_ref[:, 1:D + 1, H + 1:H + 2, :] = jnp.zeros((nb, D, 1, WC), pdt)

    zero_halo(pad1_ref)
    zero_halo(pad2_ref)

    x = x_ref[...]                                        # (nb, D, H, WC) f32
    pad1_ref[:, 1:D + 1, 1:H + 1, :] = x.astype(pdt)      # lane-aligned fill

    def conv_banded(pad_ref, wb_ref):
        # out[(n,d,h), wi*C+cout] =
        #   sum_{kd,kh} pad[n, d+kd, h+kh, :] @ wb[kd*3+kh]
        # where wb folds the kw taps AND the W 'SAME' zero boundary into the
        # contraction (K = W*C).
        acc = jnp.zeros((M, WC), jnp.float32)
        for kd in range(3):
            for kh in range(3):
                lhs = pad_ref[:, kd:kd + D, kh:kh + H, :].reshape(M, WC)
                acc += jnp.dot(lhs, wb_ref[kd * 3 + kh],
                               preferred_element_type=jnp.float32)
        return acc

    s1 = bn_ref[0:1, :]
    b1 = bn_ref[1:2, :]
    s2 = bn_ref[2:3, :]
    b2 = bn_ref[3:4, :]

    # ---- conv1 + bn1 (folded) + ReLU ----
    h1 = jnp.maximum(conv_banded(pad1_ref, wb1_ref) * s1 + b1, 0.0)  # (M, WC)

    # ---- re-pad h1 in VMEM for conv2 (single cast to MXU dtype) ----
    pad2_ref[:, 1:D + 1, 1:H + 1, :] = h1.reshape(nb, D, H, WC).astype(pdt)

    # ---- conv2 + bn2 (folded) ----
    h2 = (conv_banded(pad2_ref, wb2_ref) * s2 + b2).reshape(nb, DH, WC)

    # ---- SE: global average pool -> FC -> ReLU -> FC -> sigmoid ----
    y_wc = jnp.mean(h2, axis=1)                           # (nb, W*C)
    y = jnp.mean(y_wc.reshape(nb, W, C), axis=1)          # (nb, C)
    # Tiny FC layers (Cr == C // reduction): lane-broadcast multiply + lane
    # reduce on the VPU/XLU instead of MXU round trips. Cr is tiny -> unrolled.
    w1t = wse1t_ref[...]                                  # (Cr, C)
    w2se = wse2_ref[...]                                  # (Cr, C)
    g_pre = jnp.zeros((nb, C), jnp.float32)
    for r in range(Cr):
        z_r = jnp.maximum(
            jnp.sum(y * w1t[r:r + 1, :], axis=1, keepdims=True), 0.0)  # (nb,1)
        g_pre = g_pre + z_r * w2se[r:r + 1, :]
    gate = jnp.tile(jax.nn.sigmoid(g_pre), (1, W)).reshape(nb, 1, WC)

    # ---- SE scale + residual add + ReLU ----
    out = jnp.maximum(h2 * gate + x.reshape(nb, DH, WC), 0.0)
    out_ref[...] = out.astype(out_ref.dtype)


def _band_conv_weight(w, W):
    """(3,3,3,Cin,Cout) DHWIO -> (9, W*Cin, W*Cout) banded weights.

    wb[kd*3+kh, wj*Cin + cin, wi*Cout + cout] = w[kd, kh, kw, cin, cout]
    with wj = wi + kw - 1 and out-of-range wj rows simply left zero, so an
    UNPADDED input row flattened over (W, Cin) contracted with wb[kd*3+kh]
    performs the kw taps of the conv including the W 'SAME' zero boundary.
    """
    kd_, kh_, kw_, Cin, Cout = w.shape
    w_np = np.asarray(w, np.float32)
    wb = np.zeros((kd_, kh_, W * Cin, W * Cout), np.float32)
    for kd in range(kd_):
        for kh in range(kh_):
            for kw in range(kw_):
                for wi in range(W):
                    wj = wi + kw - 1               # input W position for tap kw
                    if 0 <= wj < W:
                        wb[kd, kh,
                           wj * Cin:(wj + 1) * Cin,
                           wi * Cout:(wi + 1) * Cout] = w_np[kd, kh, kw]
    return jnp.asarray(wb.reshape(kd_ * kh_, W * Cin, W * Cout))


def se_basic_block(x_ndhwc, w1, s1, b1, w2, s2, b2, wse1, wse2, *,
                   use_bf16=True, nb=1):
    """SEBasicBlock forward. x is NDHWC; conv weights are DHWIO (no bias).

    use_bf16: bf16 MXU operands (banded weights + pad scratch) with f32
              accumulation — default, since the kernel is HBM-bound on the
              inflated banded weights at small batch.
    nb      : batch elements per grid step (raise to 2-4 on v6e/v7x at larger
              B to fill the MXU M dimension; keep grid length >= 2 for v7x
              megacore sharding).
    """
    B, D, H, W, C = x_ndhwc.shape
    Cr = wse1.shape[1]
    WC = W * C
    assert B % nb == 0
    mxu_dt = jnp.bfloat16 if use_bf16 else jnp.float32

    x_flat = x_ndhwc.reshape(B, D, H, WC)          # free: W, C are contiguous
    wb1 = _band_conv_weight(w1, W).astype(mxu_dt)
    wb2 = _band_conv_weight(w2, W).astype(mxu_dt)

    # Folded BN params tiled W times (lane-dense) and packed into one (8, W*C)
    # operand: rows 0..3 = s1, b1, s2, b2; rows 4..7 sublane padding.
    def tile_wc(v):
        return jnp.tile(jnp.asarray(v, jnp.float32).reshape(1, C), (1, W))
    bn = jnp.concatenate(
        [tile_wc(s1), tile_wc(b1), tile_wc(s2), tile_wc(b2),
         jnp.zeros((4, WC), jnp.float32)], axis=0)

    wse1_t = jnp.asarray(wse1, jnp.float32).T      # (Cr, C): lane-dense rows
    wse2_f = jnp.asarray(wse2, jnp.float32)        # (Cr, C)

    grid_spec = pltpu.PrefetchScalarGridSpec(
        num_scalar_prefetch=0,
        grid=(B // nb,),
        in_specs=[
            pl.BlockSpec((nb, D, H, WC), lambda b: (b, 0, 0, 0)),
            pl.BlockSpec((9, WC, WC), lambda b: (0, 0, 0)),
            pl.BlockSpec((9, WC, WC), lambda b: (0, 0, 0)),
            pl.BlockSpec((8, WC), lambda b: (0, 0)),
            pl.BlockSpec((Cr, C), lambda b: (0, 0)),
            pl.BlockSpec((Cr, C), lambda b: (0, 0)),
        ],
        out_specs=pl.BlockSpec((nb, D * H, WC), lambda b: (b, 0, 0)),
        scratch_shapes=[pltpu.VMEM((nb, D + 2, H + 2, WC), mxu_dt),
                        pltpu.VMEM((nb, D + 2, H + 2, WC), mxu_dt)],
    )

    out = pl.pallas_call(
        se_basic_block_kernel,
        out_shape=jax.ShapeDtypeStruct((B, D * H, WC), jnp.float32),
        grid_spec=grid_spec,
        compiler_params=pltpu.CompilerParams(
            dimension_semantics=("parallel",),
            # 32 MiB also fits v7x's 64 MiB total / 32 MiB scoped VMEM budget.
            vmem_limit_bytes=32 * 1024 * 1024),
    )(x_flat, wb1, wb2, bn, wse1_t, wse2_f)
    return out.reshape(B, D, H, W, C)


def se_basic_block_ref(x_ndhwc, w1, s1, b1, w2, s2, b2, wse1, wse2):
    """Pure-JAX reference (same NDHWC layout), high-precision convs."""
    dn = ('NDHWC', 'DHWIO', 'NDHWC')
    conv = lambda x, w: lax.conv_general_dilated(
        x, w, window_strides=(1, 1, 1), padding='SAME', dimension_numbers=dn,
        precision=lax.Precision.HIGHEST)
    h1 = jnp.maximum(conv(x_ndhwc, w1) * s1 + b1, 0.0)
    h2 = conv(h1, w2) * s2 + b2
    y = jnp.mean(h2, axis=(1, 2, 3))                      # (B, C)
    gate = jax.nn.sigmoid(jnp.maximum(y @ wse1, 0.0) @ wse2)
    out = h2 * gate[:, None, None, None, :] + x_ndhwc
    return jnp.maximum(out, 0.0)


if __name__ == "__main__":
    # Small shapes: inplanes == planes == 32 (reduction=16 -> hidden 2),
    # batch=2, spatial 8x8x8, stride=1, downsample=None.
    B, C, D, H, W = 2, 32, 8, 8, 8
    reduction = 16
    Cr = C // reduction
    eps = 1e-5

    key = jax.random.PRNGKey(0)
    keys = jax.random.split(key, 16)

    # PyTorch-style NCDHW input, transposed to the kernel's NDHWC layout.
    x_ncdhw = jax.random.normal(keys[0], (B, C, D, H, W), jnp.float32)
    x = jnp.transpose(x_ncdhw, (0, 2, 3, 4, 1))           # NDHWC

    # Conv weights (DHWIO), no bias.
    w1 = jax.random.normal(keys[1], (3, 3, 3, C, C), jnp.float32) * 0.05
    w2 = jax.random.normal(keys[2], (3, 3, 3, C, C), jnp.float32) * 0.05

    # BatchNorm3d params (inference form), folded to scale/bias.
    def fold_bn(kg, kb, km, kv):
        gamma = 1.0 + 0.1 * jax.random.normal(kg, (C,), jnp.float32)
        beta = 0.1 * jax.random.normal(kb, (C,), jnp.float32)
        mean = 0.1 * jax.random.normal(km, (C,), jnp.float32)
        var = 1.0 + 0.1 * jax.random.uniform(kv, (C,), jnp.float32)
        scale = gamma / jnp.sqrt(var + eps)
        bias = beta - mean * scale
        return scale, bias

    s1, b1 = fold_bn(keys[3], keys[4], keys[5], keys[6])
    s2, b2 = fold_bn(keys[7], keys[8], keys[9], keys[10])

    # SE FC weights (stored as (in, out); PyTorch Linear is y = x @ W.T).
    wse1 = jax.random.normal(keys[11], (C, Cr), jnp.float32) * 0.2
    wse2 = jax.random.normal(keys[12], (Cr, C), jnp.float32) * 0.2

    ref = se_basic_block_ref(x, w1, s1, b1, w2, s2, b2, wse1, wse2)

    # f32 MXU-operand path (tolerance allows for in-kernel matmul pass count).
    out_f32 = jax.block_until_ready(
        se_basic_block(x, w1, s1, b1, w2, s2, b2, wse1, wse2,
                       use_bf16=False, nb=1))
    np.testing.assert_allclose(np.asarray(out_f32), np.asarray(ref),
                               rtol=1e-2, atol=3e-2)

    # Default path: bf16 MXU operands, f32 accumulation (loose check — input
    # quantization to bf16 is the accepted accuracy/bandwidth trade-off).
    out_bf16 = jax.block_until_ready(
        se_basic_block(x, w1, s1, b1, w2, s2, b2, wse1, wse2, nb=1))
    np.testing.assert_allclose(np.asarray(out_bf16), np.asarray(ref),
                               rtol=1e-1, atol=1e-1)

    # Multi-batch-per-step path (fills the MXU M dim; used for larger B).
    out_nb2 = jax.block_until_ready(
        se_basic_block(x, w1, s1, b1, w2, s2, b2, wse1, wse2, nb=2))
    np.testing.assert_allclose(np.asarray(out_nb2), np.asarray(ref),
                               rtol=1e-1, atol=1e-1)

    print("KERNEL_OK")
</pallas_src>

<mosaic_0001>
module attributes {stable_mosaic.version = 11 : i64} {
  func.func @se_basic_block_kernel(%arg0: i32, %arg1: memref<1x8x8x256xf32, #tpu.memory_space<vmem>>, %arg2: memref<9x256x256xf32, #tpu.memory_space<vmem>>, %arg3: memref<9x256x256xf32, #tpu.memory_space<vmem>>, %arg4: memref<8x256xf32, #tpu.memory_space<vmem>>, %arg5: memref<2x32xf32, #tpu.memory_space<vmem>>, %arg6: memref<2x32xf32, #tpu.memory_space<vmem>>, %arg7: memref<1x64x256xf32, #tpu.memory_space<vmem>>, %arg8: memref<1x10x10x256xf32, #tpu.memory_space<vmem>>, %arg9: memref<1x10x10x256xf32, #tpu.memory_space<vmem>>) attributes {dimension_semantics = [#tpu.dimension_semantics<parallel>], iteration_bounds = array<i64: 2>, scalar_prefetch = 0 : i64, scratch_operands = 2 : i64, tpu.core_type = #tpu.core_type<tc>, window_params = [{transform_indices = @transform_0, window_bounds = array<i64: 1, 8, 8, 256>}, {pipeline_mode = #tpu.pipeline_mode<synchronous>, transform_indices = @transform_1, window_bounds = array<i64: 9, 256, 256>}, {pipeline_mode = #tpu.pipeline_mode<synchronous>, transform_indices = @transform_2, window_bounds = array<i64: 9, 256, 256>}, {pipeline_mode = #tpu.pipeline_mode<synchronous>, transform_indices = @transform_3, window_bounds = array<i64: 8, 256>}, {pipeline_mode = #tpu.pipeline_mode<synchronous>, transform_indices = @transform_4, window_bounds = array<i64: 2, 32>}, {pipeline_mode = #tpu.pipeline_mode<synchronous>, transform_indices = @transform_5, window_bounds = array<i64: 2, 32>}, {transform_indices = @transform_6, window_bounds = array<i64: 1, 64, 256>}]} {
    %cst = arith.constant 0.000000e+00 : f32
    %0 = vector.broadcast %cst : f32 to vector<1x1x10x256xf32>
    %c0 = arith.constant 0 : index
    %c0_0 = arith.constant 0 : index
    %c0_1 = arith.constant 0 : index
    %c0_2 = arith.constant 0 : index
    %1 = vector.load %arg8[%c0, %c0_0, %c0_1, %c0_2] : memref<1x10x10x256xf32, #tpu.memory_space<vmem>>, vector<1x1x10x256xf32>
    tpu.vector_store %arg8[%c0, %c0_0, %c0_1, %c0_2], %0 {strides = array<i32>} : memref<1x10x10x256xf32, #tpu.memory_space<vmem>>, vector<1x1x10x256xf32>,
    %cst_3 = arith.constant 0.000000e+00 : f32
    %2 = vector.broadcast %cst_3 : f32 to vector<1x1x10x256xf32>
    %c0_4 = arith.constant 0 : index
    %c9 = arith.constant 9 : index
    %c0_5 = arith.constant 0 : index
    %c0_6 = arith.constant 0 : index
    %3 = vector.load %arg8[%c0_4, %c9, %c0_5, %c0_6] : memref<1x10x10x256xf32, #tpu.memory_space<vmem>>, vector<1x1x10x256xf32>
    tpu.vector_store %arg8[%c0_4, %c9, %c0_5, %c0_6], %2 {strides = array<i32>} : memref<1x10x10x256xf32, #tpu.memory_space<vmem>>, vector<1x1x10x256xf32>,
    %cst_7 = arith.constant 0.000000e+00 : f32
    %4 = vector.broadcast %cst_7 : f32 to vector<1x8x1x256xf32>
    %c0_8 = arith.constant 0 : index
    %c1 = arith.constant 1 : index
    %c0_9 = arith.constant 0 : index
    %c0_10 = arith.constant 0 : index
    %5 = vector.load %arg8[%c0_8, %c1, %c0_9, %c0_10] : memref<1x10x10x256xf32, #tpu.memory_space<vmem>>, vector<1x8x1x256xf32>
    tpu.vector_store %arg8[%c0_8, %c1, %c0_9, %c0_10], %4 {strides = array<i32>} : memref<1x10x10x256xf32, #tpu.memory_space<vmem>>, vector<1x8x1x256xf32>,
    %cst_11 = arith.constant 0.000000e+00 : f32
    %6 = vector.broadcast %cst_11 : f32 to vector<1x8x1x256xf32>
    %c0_12 = arith.constant 0 : index
    %c1_13 = arith.constant 1 : index
    %c9_14 = arith.constant 9 : index
    %c0_15 = arith.constant 0 : index
    %7 = vector.load %arg8[%c0_12, %c1_13, %c9_14, %c0_15] : memref<1x10x10x256xf32, #tpu.memory_space<vmem>>, vector<1x8x1x256xf32>
    tpu.vector_store %arg8[%c0_12, %c1_13, %c9_14, %c0_15], %6 {strides = array<i32>} : memref<1x10x10x256xf32, #tpu.memory_space<vmem>>, vector<1x8x1x256xf32>,
    %cst_16 = arith.constant 0.000000e+00 : f32
    %8 = vector.broadcast %cst_16 : f32 to vector<1x1x10x256xf32>
    %c0_17 = arith.constant 0 : index
    %c0_18 = arith.constant 0 : index
    %c0_19 = arith.constant 0 : index
    %c0_20 = arith.constant 0 : index
    %9 = vector.load %arg9[%c0_17, %c0_18, %c0_19, %c0_20] : memref<1x10x10x256xf32, #tpu.memory_space<vmem>>, vector<1x1x10x256xf32>
    tpu.vector_store %arg9[%c0_17, %c0_18, %c0_19, %c0_20], %8 {strides = array<i32>} : memref<1x10x10x256xf32, #tpu.memory_space<vmem>>, vector<1x1x10x256xf32>,
    %cst_21 = arith.constant 0.000000e+00 : f32
    %10 = vector.broadcast %cst_21 : f32 to vector<1x1x10x256xf32>
    %c0_22 = arith.constant 0 : index
    %c9_23 = arith.constant 9 : index
    %c0_24 = arith.constant 0 : index
    %c0_25 = arith.constant 0 : index
    %11 = vector.load %arg9[%c0_22, %c9_23, %c0_24, %c0_25] : memref<1x10x10x256xf32, #tpu.memory_space<vmem>>, vector<1x1x10x256xf32>
    tpu.vector_store %arg9[%c0_22, %c9_23, %c0_24, %c0_25], %10 {strides = array<i32>} : memref<1x10x10x256xf32, #tpu.memory_space<vmem>>, vector<1x1x10x256xf32>,
    %cst_26 = arith.constant 0.000000e+00 : f32
    %12 = vector.broadcast %cst_26 : f32 to vector<1x8x1x256xf32>
    %c0_27 = arith.constant 0 : index
    %c1_28 = arith.constant 1 : index
    %c0_29 = arith.constant 0 : index
    %c0_30 = arith.constant 0 : index
    %13 = vector.load %arg9[%c0_27, %c1_28, %c0_29, %c0_30] : memref<1x10x10x256xf32, #tpu.memory_space<vmem>>, vector<1x8x1x256xf32>
    tpu.vector_store %arg9[%c0_27, %c1_28, %c0_29, %c0_30], %12 {strides = array<i32>} : memref<1x10x10x256xf32, #tpu.memory_space<vmem>>, vector<1x8x1x256xf32>,
    %cst_31 = arith.constant 0.000000e+00 : f32
    %14 = vector.broadcast %cst_31 : f32 to vector<1x8x1x256xf32>
    %c0_32 = arith.constant 0 : index
    %c1_33 = arith.constant 1 : index
    %c9_34 = arith.constant 9 : index
    %c0_35 = arith.constant 0 : index
    %15 = vector.load %arg9[%c0_32, %c1_33, %c9_34, %c0_35] : memref<1x10x10x256xf32, #tpu.memory_space<vmem>>, vector<1x8x1x256xf32>
    tpu.vector_store %arg9[%c0_32, %c1_33, %c9_34, %c0_35], %14 {strides = array<i32>} : memref<1x10x10x256xf32, #tpu.memory_space<vmem>>, vector<1x8x1x256xf32>,
    %c0_36 = arith.constant 0 : index
    %c0_37 = arith.constant 0 : index
    %c0_38 = arith.constant 0 : index
    %c0_39 = arith.constant 0 : index
    %16 = vector.load %arg1[%c0_36, %c0_37, %c0_38, %c0_39] : memref<1x8x8x256xf32, #tpu.memory_space<vmem>>, vector<1x8x8x256xf32>
    %c0_40 = arith.constant 0 : index
    %c1_41 = arith.constant 1 : index
    %c1_42 = arith.constant 1 : index
    %c0_43 = arith.constant 0 : index
    %17 = vector.load %arg8[%c0_40, %c1_41, %c1_42, %c0_43] : memref<1x10x10x256xf32, #tpu.memory_space<vmem>>, vector<1x8x8x256xf32>
    tpu.vector_store %arg8[%c0_40, %c1_41, %c1_42, %c0_43], %16 {strides = array<i32>} : memref<1x10x10x256xf32, #tpu.memory_space<vmem>>, vector<1x8x8x256xf32>,
    %c0_44 = arith.constant 0 : index
    %c0_45 = arith.constant 0 : index
    %18 = vector.load %arg4[%c0_44, %c0_45] : memref<8x256xf32, #tpu.memory_space<vmem>>, vector<1x256xf32>
    %c1_46 = arith.constant 1 : index
    %c0_47 = arith.constant 0 : index
    %19 = vector.load %arg4[%c1_46, %c0_47] : memref<8x256xf32, #tpu.memory_space<vmem>>, vector<1x256xf32>
    %c2 = arith.constant 2 : index
    %c0_48 = arith.constant 0 : index
    %20 = vector.load %arg4[%c2, %c0_48] : memref<8x256xf32, #tpu.memory_space<vmem>>, vector<1x256xf32>
    %c3 = arith.constant 3 : index
    %c0_49 = arith.constant 0 : index
    %21 = vector.load %arg4[%c3, %c0_49] : memref<8x256xf32, #tpu.memory_space<vmem>>, vector<1x256xf32>
    %cst_50 = arith.constant 0.000000e+00 : f32
    %22 = vector.broadcast %cst_50 : f32 to vector<64x256xf32>
    %c0_51 = arith.constant 0 : index
    %c0_52 = arith.constant 0 : index
    %c0_53 = arith.constant 0 : index
    %c0_54 = arith.constant 0 : index
    %23 = vector.load %arg8[%c0_51, %c0_52, %c0_53, %c0_54] : memref<1x10x10x256xf32, #tpu.memory_space<vmem>>, vector<1x8x8x256xf32>
    %24 = vector.shape_cast %23 : vector<1x8x8x256xf32> to vector<64x256xf32>
    %c0_55 = arith.constant 0 : index
    %c0_56 = arith.constant 0 : index
    %c0_57 = arith.constant 0 : index
    %25 = vector.load %arg2[%c0_55, %c0_56, %c0_57] : memref<9x256x256xf32, #tpu.memory_space<vmem>>, vector<1x256x256xf32>
    %26 = vector.shape_cast %25 : vector<1x256x256xf32> to vector<256x256xf32>
    %cst_58 = arith.constant dense<0.000000e+00> : vector<64x256xf32>
    %27 = tpu.matmul %24, %26, %cst_58 {dimension_numbers = #tpu.dot_dimension_numbers<[1], [0], [0], [1], [0, 0, 1, 1], [], []>} : vector<64x256xf32>, vector<256x256xf32>, vector<64x256xf32> -> vector<64x256xf32>
    %28 = arith.addf %22, %27 : vector<64x256xf32>
    %c0_59 = arith.constant 0 : index
    %c0_60 = arith.constant 0 : index
    %c1_61 = arith.constant 1 : index
    %c0_62 = arith.constant 0 : index
    %29 = vector.load %arg8[%c0_59, %c0_60, %c1_61, %c0_62] : memref<1x10x10x256xf32, #tpu.memory_space<vmem>>, vector<1x8x8x256xf32>
    %30 = vector.shape_cast %29 : vector<1x8x8x256xf32> to vector<64x256xf32>
    %c1_63 = arith.constant 1 : index
    %c0_64 = arith.constant 0 : index
    %c0_65 = arith.constant 0 : index
    %31 = vector.load %arg2[%c1_63, %c0_64, %c0_65] : memref<9x256x256xf32, #tpu.memory_space<vmem>>, vector<1x256x256xf32>
    %32 = vector.shape_cast %31 : vector<1x256x256xf32> to vector<256x256xf32>
    %cst_66 = arith.constant dense<0.000000e+00> : vector<64x256xf32>
    %33 = tpu.matmul %30, %32, %cst_66 {dimension_numbers = #tpu.dot_dimension_numbers<[1], [0], [0], [1], [0, 0, 1, 1], [], []>} : vector<64x256xf32>, vector<256x256xf32>, vector<64x256xf32> -> vector<64x256xf32>
    %34 = arith.addf %28, %33 : vector<64x256xf32>
    %c0_67 = arith.constant 0 : index
    %c0_68 = arith.constant 0 : index
    %c2_69 = arith.constant 2 : index
    %c0_70 = arith.constant 0 : index
    %35 = vector.load %arg8[%c0_67, %c0_68, %c2_69, %c0_70] : memref<1x10x10x256xf32, #tpu.memory_space<vmem>>, vector<1x8x8x256xf32>
    %36 = vector.shape_cast %35 : vector<1x8x8x256xf32> to vector<64x256xf32>
    %c2_71 = arith.constant 2 : index
    %c0_72 = arith.constant 0 : index
    %c0_73 = arith.constant 0 : index
    %37 = vector.load %arg2[%c2_71, %c0_72, %c0_73] : memref<9x256x256xf32, #tpu.memory_space<vmem>>, vector<1x256x256xf32>
    %38 = vector.shape_cast %37 : vector<1x256x256xf32> to vector<256x256xf32>
    %cst_74 = arith.constant dense<0.000000e+00> : vector<64x256xf32>
    %39 = tpu.matmul %36, %38, %cst_74 {dimension_numbers = #tpu.dot_dimension_numbers<[1], [0], [0], [1], [0, 0, 1, 1], [], []>} : vector<64x256xf32>, vector<256x256xf32>, vector<64x256xf32> -> vector<64x256xf32>
    %40 = arith.addf %34, %39 : vector<64x256xf32>
    %c0_75 = arith.constant 0 : index
    %c1_76 = arith.constant 1 : index
    %c0_77 = arith.constant 0 : index
    %c0_78 = arith.constant 0 : index
    %41 = vector.load %arg8[%c0_75, %c1_76, %c0_77, %c0_78] : memref<1x10x10x256xf32, #tpu.memory_space<vmem>>, vector<1x8x8x256xf32>
    %42 = vector.shape_cast %41 : vector<1x8x8x256xf32> to vector<64x256xf32>
    %c3_79 = arith.constant 3 : index
    %c0_80 = arith.constant 0 : index
    %c0_81 = arith.constant 0 : index
    %43 = vector.load %arg2[%c3_79, %c0_80, %c0_81] : memref<9x256x256xf32, #tpu.memory_space<vmem>>, vector<1x256x256xf32>
    %44 = vector.shape_cast %43 : vector<1x256x256xf32> to vector<256x256xf32>
    %cst_82 = arith.constant dense<0.000000e+00> : vector<64x256xf32>
    %45 = tpu.matmul %42, %44, %cst_82 {dimension_numbers = #tpu.dot_dimension_numbers<[1], [0], [0], [1], [0, 0, 1, 1], [], []>} : vector<64x256xf32>, vector<256x256xf32>, vector<64x256xf32> -> vector<64x256xf32>
    %46 = arith.addf %40, %45 : vector<64x256xf32>
    %c0_83 = arith.constant 0 : index
    %c1_84 = arith.constant 1 : index
    %c1_85 = arith.constant 1 : index
    %c0_86 = arith.constant 0 : index
    %47 = vector.load %arg8[%c0_83, %c1_84, %c1_85, %c0_86] : memref<1x10x10x256xf32, #tpu.memory_space<vmem>>, vector<1x8x8x256xf32>
    %48 = vector.shape_cast %47 : vector<1x8x8x256xf32> to vector<64x256xf32>
    %c4 = arith.constant 4 : index
    %c0_87 = arith.constant 0 : index
    %c0_88 = arith.constant 0 : index
    %49 = vector.load %arg2[%c4, %c0_87, %c0_88] : memref<9x256x256xf32, #tpu.memory_space<vmem>>, vector<1x256x256xf32>
    %50 = vector.shape_cast %49 : vector<1x256x256xf32> to vector<256x256xf32>
    %cst_89 = arith.constant dense<0.000000e+00> : vector<64x256xf32>
    %51 = tpu.matmul %48, %50, %cst_89 {dimension_numbers = #tpu.dot_dimension_numbers<[1], [0], [0], [1], [0, 0, 1, 1], [], []>} : vector<64x256xf32>, vector<256x256xf32>, vector<64x256xf32> -> vector<64x256xf32>
    %52 = arith.addf %46, %51 : vector<64x256xf32>
    %c0_90 = arith.constant 0 : index
    %c1_91 = arith.constant 1 : index
    %c2_92 = arith.constant 2 : index
    %c0_93 = arith.constant 0 : index
    %53 = vector.load %arg8[%c0_90, %c1_91, %c2_92, %c0_93] : memref<1x10x10x256xf32, #tpu.memory_space<vmem>>, vector<1x8x8x256xf32>
    %54 = vector.shape_cast %53 : vector<1x8x8x256xf32> to vector<64x256xf32>
    %c5 = arith.constant 5 : index
    %c0_94 = arith.constant 0 : index
    %c0_95 = arith.constant 0 : index
    %55 = vector.load %arg2[%c5, %c0_94, %c0_95] : memref<9x256x256xf32, #tpu.memory_space<vmem>>, vector<1x256x256xf32>
    %56 = vector.shape_cast %55 : vector<1x256x256xf32> to vector<256x256xf32>
    %cst_96 = arith.constant dense<0.000000e+00> : vector<64x256xf32>
    %57 = tpu.matmul %54, %56, %cst_96 {dimension_numbers = #tpu.dot_dimension_numbers<[1], [0], [0], [1], [0, 0, 1, 1], [], []>} : vector<64x256xf32>, vector<256x256xf32>, vector<64x256xf32> -> vector<64x256xf32>
    %58 = arith.addf %52, %57 : vector<64x256xf32>
    %c0_97 = arith.constant 0 : index
    %c2_98 = arith.constant 2 : index
    %c0_99 = arith.constant 0 : index
    %c0_100 = arith.constant 0 : index
    %59 = vector.load %arg8[%c0_97, %c2_98, %c0_99, %c0_100] : memref<1x10x10x256xf32, #tpu.memory_space<vmem>>, vector<1x8x8x256xf32>
    %60 = vector.shape_cast %59 : vector<1x8x8x256xf32> to vector<64x256xf32>
    %c6 = arith.constant 6 : index
    %c0_101 = arith.constant 0 : index
    %c0_102 = arith.constant 0 : index
    %61 = vector.load %arg2[%c6, %c0_101, %c0_102] : memref<9x256x256xf32, #tpu.memory_space<vmem>>, vector<1x256x256xf32>
    %62 = vector.shape_cast %61 : vector<1x256x256xf32> to vector<256x256xf32>
    %cst_103 = arith.constant dense<0.000000e+00> : vector<64x256xf32>
    %63 = tpu.matmul %60, %62, %cst_103 {dimension_numbers = #tpu.dot_dimension_numbers<[1], [0], [0], [1], [0, 0, 1, 1], [], []>} : vector<64x256xf32>, vector<256x256xf32>, vector<64x256xf32> -> vector<64x256xf32>
    %64 = arith.addf %58, %63 : vector<64x256xf32>
    %c0_104 = arith.constant 0 : index
    %c2_105 = arith.constant 2 : index
    %c1_106 = arith.constant 1 : index
    %c0_107 = arith.constant 0 : index
    %65 = vector.load %arg8[%c0_104, %c2_105, %c1_106, %c0_107] : memref<1x10x10x256xf32, #tpu.memory_space<vmem>>, vector<1x8x8x256xf32>
    %66 = vector.shape_cast %65 : vector<1x8x8x256xf32> to vector<64x256xf32>
    %c7 = arith.constant 7 : index
    %c0_108 = arith.constant 0 : index
    %c0_109 = arith.constant 0 : index
    %67 = vector.load %arg2[%c7, %c0_108, %c0_109] : memref<9x256x256xf32, #tpu.memory_space<vmem>>, vector<1x256x256xf32>
    %68 = vector.shape_cast %67 : vector<1x256x256xf32> to vector<256x256xf32>
    %cst_110 = arith.constant dense<0.000000e+00> : vector<64x256xf32>
    %69 = tpu.matmul %66, %68, %cst_110 {dimension_numbers = #tpu.dot_dimension_numbers<[1], [0], [0], [1], [0, 0, 1, 1], [], []>} : vector<64x256xf32>, vector<256x256xf32>, vector<64x256xf32> -> vector<64x256xf32>
    %70 = arith.addf %64, %69 : vector<64x256xf32>
    %c0_111 = arith.constant 0 : index
    %c2_112 = arith.constant 2 : index
    %c2_113 = arith.constant 2 : index
    %c0_114 = arith.constant 0 : index
    %71 = vector.load %arg8[%c0_111, %c2_112, %c2_113, %c0_114] : memref<1x10x10x256xf32, #tpu.memory_space<vmem>>, vector<1x8x8x256xf32>
    %72 = vector.shape_cast %71 : vector<1x8x8x256xf32> to vector<64x256xf32>
    %c8 = arith.constant 8 : index
    %c0_115 = arith.constant 0 : index
    %c0_116 = arith.constant 0 : index
    %73 = vector.load %arg2[%c8, %c0_115, %c0_116] : memref<9x256x256xf32, #tpu.memory_space<vmem>>, vector<1x256x256xf32>
    %74 = vector.shape_cast %73 : vector<1x256x256xf32> to vector<256x256xf32>
    %cst_117 = arith.constant dense<0.000000e+00> : vector<64x256xf32>
    %75 = tpu.matmul %72, %74, %cst_117 {dimension_numbers = #tpu.dot_dimension_numbers<[1], [0], [0], [1], [0, 0, 1, 1], [], []>} : vector<64x256xf32>, vector<256x256xf32>, vector<64x256xf32> -> vector<64x256xf32>
    %76 = arith.addf %70, %75 : vector<64x256xf32>
    %77 = vector.broadcast %18 : vector<1x256xf32> to vector<64x256xf32>
    %78 = arith.mulf %76, %77 : vector<64x256xf32>
    %79 = vector.broadcast %19 : vector<1x256xf32> to vector<64x256xf32>
    %80 = arith.addf %78, %79 : vector<64x256xf32>
    %cst_118 = arith.constant 0.000000e+00 : f32
    %81 = vector.broadcast %cst_118 : f32 to vector<64x256xf32>
    %82 = arith.maximumf %80, %81 : vector<64x256xf32>
    %83 = vector.shape_cast %82 : vector<64x256xf32> to vector<1x8x8x256xf32>
    %c0_119 = arith.constant 0 : index
    %c1_120 = arith.constant 1 : index
    %c1_121 = arith.constant 1 : index
    %c0_122 = arith.constant 0 : index
    %84 = vector.load %arg9[%c0_119, %c1_120, %c1_121, %c0_122] : memref<1x10x10x256xf32, #tpu.memory_space<vmem>>, vector<1x8x8x256xf32>
    tpu.vector_store %arg9[%c0_119, %c1_120, %c1_121, %c0_122], %83 {strides = array<i32>} : memref<1x10x10x256xf32, #tpu.memory_space<vmem>>, vector<1x8x8x256xf32>,
    %cst_123 = arith.constant 0.000000e+00 : f32
    %85 = vector.broadcast %cst_123 : f32 to vector<64x256xf32>
    %c0_124 = arith.constant 0 : index
    %c0_125 = arith.constant 0 : index
    %c0_126 = arith.constant 0 : index
    %c0_127 = arith.constant 0 : index
    %86 = vector.load %arg9[%c0_124, %c0_125, %c0_126, %c0_127] : memref<1x10x10x256xf32, #tpu.memory_space<vmem>>, vector<1x8x8x256xf32>
    %87 = vector.shape_cast %86 : vector<1x8x8x256xf32> to vector<64x256xf32>
    %c0_128 = arith.constant 0 : index
    %c0_129 = arith.constant 0 : index
    %c0_130 = arith.constant 0 : index
    %88 = vector.load %arg3[%c0_128, %c0_129, %c0_130] : memref<9x256x256xf32, #tpu.memory_space<vmem>>, vector<1x256x256xf32>
    %89 = vector.shape_cast %88 : vector<1x256x256xf32> to vector<256x256xf32>
    %cst_131 = arith.constant dense<0.000000e+00> : vector<64x256xf32>
    %90 = tpu.matmul %87, %89, %cst_131 {dimension_numbers = #tpu.dot_dimension_numbers<[1], [0], [0], [1], [0, 0, 1, 1], [], []>} : vector<64x256xf32>, vector<256x256xf32>, vector<64x256xf32> -> vector<64x256xf32>
    %91 = arith.addf %85, %90 : vector<64x256xf32>
    %c0_132 = arith.constant 0 : index
    %c0_133 = arith.constant 0 : index
    %c1_134 = arith.constant 1 : index
    %c0_135 = arith.constant 0 : index
    %92 = vector.load %arg9[%c0_132, %c0_133, %c1_134, %c0_135] : memref<1x10x10x256xf32, #tpu.memory_space<vmem>>, vector<1x8x8x256xf32>
    %93 = vector.shape_cast %92 : vector<1x8x8x256xf32> to vector<64x256xf32>
    %c1_136 = arith.constant 1 : index
    %c0_137 = arith.constant 0 : index
    %c0_138 = arith.constant 0 : index
    %94 = vector.load %arg3[%c1_136, %c0_137, %c0_138] : memref<9x256x256xf32, #tpu.memory_space<vmem>>, vector<1x256x256xf32>
    %95 = vector.shape_cast %94 : vector<1x256x256xf32> to vector<256x256xf32>
    %cst_139 = arith.constant dense<0.000000e+00> : vector<64x256xf32>
    %96 = tpu.matmul %93, %95, %cst_139 {dimension_numbers = #tpu.dot_dimension_numbers<[1], [0], [0], [1], [0, 0, 1, 1], [], []>} : vector<64x256xf32>, vector<256x256xf32>, vector<64x256xf32> -> vector<64x256xf32>
    %97 = arith.addf %91, %96 : vector<64x256xf32>
    %c0_140 = arith.constant 0 : index
    %c0_141 = arith.constant 0 : index
    %c2_142 = arith.constant 2 : index
    %c0_143 = arith.constant 0 : index
    %98 = vector.load %arg9[%c0_140, %c0_141, %c2_142, %c0_143] : memref<1x10x10x256xf32, #tpu.memory_space<vmem>>, vector<1x8x8x256xf32>
    %99 = vector.shape_cast %98 : vector<1x8x8x256xf32> to vector<64x256xf32>
    %c2_144 = arith.constant 2 : index
    %c0_145 = arith.constant 0 : index
    %c0_146 = arith.constant 0 : index
    %100 = vector.load %arg3[%c2_144, %c0_145, %c0_146] : memref<9x256x256xf32, #tpu.memory_space<vmem>>, vector<1x256x256xf32>
    %101 = vector.shape_cast %100 : vector<1x256x256xf32> to vector<256x256xf32>
    %cst_147 = arith.constant dense<0.000000e+00> : vector<64x256xf32>
    %102 = tpu.matmul %99, %101, %cst_147 {dimension_numbers = #tpu.dot_dimension_numbers<[1], [0], [0], [1], [0, 0, 1, 1], [], []>} : vector<64x256xf32>, vector<256x256xf32>, vector<64x256xf32> -> vector<64x256xf32>
    %103 = arith.addf %97, %102 : vector<64x256xf32>
    %c0_148 = arith.constant 0 : index
    %c1_149 = arith.constant 1 : index
    %c0_150 = arith.constant 0 : index
    %c0_151 = arith.constant 0 : index
    %104 = vector.load %arg9[%c0_148, %c1_149, %c0_150, %c0_151] : memref<1x10x10x256xf32, #tpu.memory_space<vmem>>, vector<1x8x8x256xf32>
    %105 = vector.shape_cast %104 : vector<1x8x8x256xf32> to vector<64x256xf32>
    %c3_152 = arith.constant 3 : index
    %c0_153 = arith.constant 0 : index
    %c0_154 = arith.constant 0 : index
    %106 = vector.load %arg3[%c3_152, %c0_153, %c0_154] : memref<9x256x256xf32, #tpu.memory_space<vmem>>, vector<1x256x256xf32>
    %107 = vector.shape_cast %106 : vector<1x256x256xf32> to vector<256x256xf32>
    %cst_155 = arith.constant dense<0.000000e+00> : vector<64x256xf32>
    %108 = tpu.matmul %105, %107, %cst_155 {dimension_numbers = #tpu.dot_dimension_numbers<[1], [0], [0], [1], [0, 0, 1, 1], [], []>} : vector<64x256xf32>, vector<256x256xf32>, vector<64x256xf32> -> vector<64x256xf32>
    %109 = arith.addf %103, %108 : vector<64x256xf32>
    %c0_156 = arith.constant 0 : index
    %c1_157 = arith.constant 1 : index
    %c1_158 = arith.constant 1 : index
    %c0_159 = arith.constant 0 : index
    %110 = vector.load %arg9[%c0_156, %c1_157, %c1_158, %c0_159] : memref<1x10x10x256xf32, #tpu.memory_space<vmem>>, vector<1x8x8x256xf32>
    %111 = vector.shape_cast %110 : vector<1x8x8x256xf32> to vector<64x256xf32>
    %c4_160 = arith.constant 4 : index
    %c0_161 = arith.constant 0 : index
    %c0_162 = arith.constant 0 : index
    %112 = vector.load %arg3[%c4_160, %c0_161, %c0_162] : memref<9x256x256xf32, #tpu.memory_space<vmem>>, vector<1x256x256xf32>
    %113 = vector.shape_cast %112 : vector<1x256x256xf32> to vector<256x256xf32>
    %cst_163 = arith.constant dense<0.000000e+00> : vector<64x256xf32>
    %114 = tpu.matmul %111, %113, %cst_163 {dimension_numbers = #tpu.dot_dimension_numbers<[1], [0], [0], [1], [0, 0, 1, 1], [], []>} : vector<64x256xf32>, vector<256x256xf32>, vector<64x256xf32> -> vector<64x256xf32>
    %115 = arith.addf %109, %114 : vector<64x256xf32>
    %c0_164 = arith.constant 0 : index
    %c1_165 = arith.constant 1 : index
    %c2_166 = arith.constant 2 : index
    %c0_167 = arith.constant 0 : index
    %116 = vector.load %arg9[%c0_164, %c1_165, %c2_166, %c0_167] : memref<1x10x10x256xf32, #tpu.memory_space<vmem>>, vector<1x8x8x256xf32>
    %117 = vector.shape_cast %116 : vector<1x8x8x256xf32> to vector<64x256xf32>
    %c5_168 = arith.constant 5 : index
    %c0_169 = arith.constant 0 : index
    %c0_170 = arith.constant 0 : index
    %118 = vector.load %arg3[%c5_168, %c0_169, %c0_170] : memref<9x256x256xf32, #tpu.memory_space<vmem>>, vector<1x256x256xf32>
    %119 = vector.shape_cast %118 : vector<1x256x256xf32> to vector<256x256xf32>
    %cst_171 = arith.constant dense<0.000000e+00> : vector<64x256xf32>
    %120 = tpu.matmul %117, %119, %cst_171 {dimension_numbers = #tpu.dot_dimension_numbers<[1], [0], [0], [1], [0, 0, 1, 1], [], []>} : vector<64x256xf32>, vector<256x256xf32>, vector<64x256xf32> -> vector<64x256xf32>
    %121 = arith.addf %115, %120 : vector<64x256xf32>
    %c0_172 = arith.constant 0 : index
    %c2_173 = arith.constant 2 : index
    %c0_174 = arith.constant 0 : index
    %c0_175 = arith.constant 0 : index
    %122 = vector.load %arg9[%c0_172, %c2_173, %c0_174, %c0_175] : memref<1x10x10x256xf32, #tpu.memory_space<vmem>>, vector<1x8x8x256xf32>
    %123 = vector.shape_cast %122 : vector<1x8x8x256xf32> to vector<64x256xf32>
    %c6_176 = arith.constant 6 : index
    %c0_177 = arith.constant 0 : index
    %c0_178 = arith.constant 0 : index
    %124 = vector.load %arg3[%c6_176, %c0_177, %c0_178] : memref<9x256x256xf32, #tpu.memory_space<vmem>>, vector<1x256x256xf32>
    %125 = vector.shape_cast %124 : vector<1x256x256xf32> to vector<256x256xf32>
    %cst_179 = arith.constant dense<0.000000e+00> : vector<64x256xf32>
    %126 = tpu.matmul %123, %125, %cst_179 {dimension_numbers = #tpu.dot_dimension_numbers<[1], [0], [0], [1], [0, 0, 1, 1], [], []>} : vector<64x256xf32>, vector<256x256xf32>, vector<64x256xf32> -> vector<64x256xf32>
    %127 = arith.addf %121, %126 : vector<64x256xf32>
    %c0_180 = arith.constant 0 : index
    %c2_181 = arith.constant 2 : index
    %c1_182 = arith.constant 1 : index
    %c0_183 = arith.constant 0 : index
    %128 = vector.load %arg9[%c0_180, %c2_181, %c1_182, %c0_183] : memref<1x10x10x256xf32, #tpu.memory_space<vmem>>, vector<1x8x8x256xf32>
    %129 = vector.shape_cast %128 : vector<1x8x8x256xf32> to vector<64x256xf32>
    %c7_184 = arith.constant 7 : index
    %c0_185 = arith.constant 0 : index
    %c0_186 = arith.constant 0 : index
    %130 = vector.load %arg3[%c7_184, %c0_185, %c0_186] : memref<9x256x256xf32, #tpu.memory_space<vmem>>, vector<1x256x256xf32>
    %131 = vector.shape_cast %130 : vector<1x256x256xf32> to vector<256x256xf32>
    %cst_187 = arith.constant dense<0.000000e+00> : vector<64x256xf32>
    %132 = tpu.matmul %129, %131, %cst_187 {dimension_numbers = #tpu.dot_dimension_numbers<[1], [0], [0], [1], [0, 0, 1, 1], [], []>} : vector<64x256xf32>, vector<256x256xf32>, vector<64x256xf32> -> vector<64x256xf32>
    %133 = arith.addf %127, %132 : vector<64x256xf32>
    %c0_188 = arith.constant 0 : index
    %c2_189 = arith.constant 2 : index
    %c2_190 = arith.constant 2 : index
    %c0_191 = arith.constant 0 : index
    %134 = vector.load %arg9[%c0_188, %c2_189, %c2_190, %c0_191] : memref<1x10x10x256xf32, #tpu.memory_space<vmem>>, vector<1x8x8x256xf32>
    %135 = vector.shape_cast %134 : vector<1x8x8x256xf32> to vector<64x256xf32>
    %c8_192 = arith.constant 8 : index
    %c0_193 = arith.constant 0 : index
    %c0_194 = arith.constant 0 : index
    %136 = vector.load %arg3[%c8_192, %c0_193, %c0_194] : memref<9x256x256xf32, #tpu.memory_space<vmem>>, vector<1x256x256xf32>
    %137 = vector.shape_cast %136 : vector<1x256x256xf32> to vector<256x256xf32>
    %cst_195 = arith.constant dense<0.000000e+00> : vector<64x256xf32>
    %138 = tpu.matmul %135, %137, %cst_195 {dimension_numbers = #tpu.dot_dimension_numbers<[1], [0], [0], [1], [0, 0, 1, 1], [], []>} : vector<64x256xf32>, vector<256x256xf32>, vector<64x256xf32> -> vector<64x256xf32>
    %139 = arith.addf %133, %138 : vector<64x256xf32>
    %140 = vector.broadcast %20 : vector<1x256xf32> to vector<64x256xf32>
    %141 = arith.mulf %139, %140 : vector<64x256xf32>
    %142 = vector.broadcast %21 : vector<1x256xf32> to vector<64x256xf32>
    %143 = arith.addf %141, %142 : vector<64x256xf32>
    %144 = vector.shape_cast %143 : vector<64x256xf32> to vector<1x64x256xf32>
    %cst_196 = arith.constant dense<0.000000e+00> : vector<1x256xf32>
    %145 = vector.multi_reduction <add>, %144, %cst_196 [1] : vector<1x64x256xf32> to vector<1x256xf32>
    %cst_197 = arith.constant 6.400000e+01 : f32
    %146 = vector.broadcast %cst_197 : f32 to vector<1x256xf32>
    %147 = arith.divf %145, %146 : vector<1x256xf32>
    %148 = vector.shape_cast %147 : vector<1x256xf32> to vector<1x8x32xf32>
    %cst_198 = arith.constant dense<0.000000e+00> : vector<1x32xf32>
    %149 = vector.multi_reduction <add>, %148, %cst_198 [1] : vector<1x8x32xf32> to vector<1x32xf32>
    %cst_199 = arith.constant 8.000000e+00 : f32
    %150 = vector.broadcast %cst_199 : f32 to vector<1x32xf32>
    %151 = arith.divf %149, %150 : vector<1x32xf32>
    %c0_200 = arith.constant 0 : index
    %c0_201 = arith.constant 0 : index
    %152 = vector.load %arg5[%c0_200, %c0_201] : memref<2x32xf32, #tpu.memory_space<vmem>>, vector<2x32xf32>
    %c0_202 = arith.constant 0 : index
    %c0_203 = arith.constant 0 : index
    %153 = vector.load %arg6[%c0_202, %c0_203] : memref<2x32xf32, #tpu.memory_space<vmem>>, vector<2x32xf32>
    %cst_204 = arith.constant 0.000000e+00 : f32
    %154 = vector.broadcast %cst_204 : f32 to vector<1x32xf32>
    %155 = vector.extract_strided_slice %152 {offsets = [0, 0], sizes = [1, 32], strides = [1, 1]} : vector<2x32xf32> to vector<1x32xf32>
    %156 = arith.mulf %151, %155 : vector<1x32xf32>
    %cst_205 = arith.constant dense<0.000000e+00> : vector<1xf32>
    %157 = vector.multi_reduction <add>, %156, %cst_205 [1] : vector<1x32xf32> to vector<1xf32>
    %158 = vector.shape_cast %157 : vector<1xf32> to vector<1x1xf32>
    %cst_206 = arith.constant 0.000000e+00 : f32
    %159 = vector.broadcast %cst_206 : f32 to vector<1x1xf32>
    %160 = arith.maximumf %158, %159 : vector<1x1xf32>
    %161 = vector.extract_strided_slice %153 {offsets = [0, 0], sizes = [1, 32], strides = [1, 1]} : vector<2x32xf32> to vector<1x32xf32>
    %162 = vector.broadcast %160 : vector<1x1xf32> to vector<1x32xf32>
    %163 = arith.mulf %162, %161 : vector<1x32xf32>
    %164 = arith.addf %154, %163 : vector<1x32xf32>
    %165 = vector.extract_strided_slice %152 {offsets = [1, 0], sizes = [1, 32], strides = [1, 1]} : vector<2x32xf32> to vector<1x32xf32>
    %166 = arith.mulf %151, %165 : vector<1x32xf32>
    %cst_207 = arith.constant dense<0.000000e+00> : vector<1xf32>
    %167 = vector.multi_reduction <add>, %166, %cst_207 [1] : vector<1x32xf32> to vector<1xf32>
    %168 = vector.shape_cast %167 : vector<1xf32> to vector<1x1xf32>
    %cst_208 = arith.constant 0.000000e+00 : f32
    %169 = vector.broadcast %cst_208 : f32 to vector<1x1xf32>
    %170 = arith.maximumf %168, %169 : vector<1x1xf32>
    %171 = vector.extract_strided_slice %153 {offsets = [1, 0], sizes = [1, 32], strides = [1, 1]} : vector<2x32xf32> to vector<1x32xf32>
    %172 = vector.broadcast %170 : vector<1x1xf32> to vector<1x32xf32>
    %173 = arith.mulf %172, %171 : vector<1x32xf32>
    %174 = arith.addf %164, %173 : vector<1x32xf32>
    %175 = arith.negf %174 : vector<1x32xf32>
    %176 = math.exp %175 : vector<1x32xf32>
    %cst_209 = arith.constant 1.000000e+00 : f32
    %177 = vector.broadcast %cst_209 : f32 to vector<1x32xf32>
    %178 = arith.addf %177, %176 : vector<1x32xf32>
    %179 = arith.divf %177, %178 : vector<1x32xf32>
    %180 = tpu.concatenate %179, %179, %179, %179, %179, %179, %179, %179 in 1 : vector<1x32xf32>, vector<1x32xf32>, vector<1x32xf32>, vector<1x32xf32>, vector<1x32xf32>, vector<1x32xf32>, vector<1x32xf32>, vector<1x32xf32> -> vector<1x256xf32>
    %181 = vector.shape_cast %180 : vector<1x256xf32> to vector<1x1x256xf32>
    %182 = vector.broadcast %181 : vector<1x1x256xf32> to vector<1x64x256xf32>
    %183 = arith.mulf %144, %182 : vector<1x64x256xf32>
    %184 = vector.shape_cast %16 : vector<1x8x8x256xf32> to vector<1x64x256xf32>
    %185 = arith.addf %183, %184 : vector<1x64x256xf32>
    %cst_210 = arith.constant 0.000000e+00 : f32
    %186 = vector.broadcast %cst_210 : f32 to vector<1x64x256xf32>
    %187 = arith.maximumf %185, %186 : vector<1x64x256xf32>
    %c0_211 = arith.constant 0 : index
    %c0_212 = arith.constant 0 : index
    %c0_213 = arith.constant 0 : index
    %188 = vector.load %arg7[%c0_211, %c0_212, %c0_213] : memref<1x64x256xf32, #tpu.memory_space<vmem>>, vector<1x64x256xf32>
    tpu.vector_store %arg7[%c0_211, %c0_212, %c0_213], %187 {strides = array<i32>} : memref<1x64x256xf32, #tpu.memory_space<vmem>>, vector<1x64x256xf32>,
    return
  }
  func.func @transform_0(%arg0: i32) -> (i32, i32, i32, i32) {
    %c0_i32 = arith.constant 0 : i32
    %c0_i32_0 = arith.constant 0 : i32
    %c0_i32_1 = arith.constant 0 : i32
    %c0_i32_2 = arith.constant 0 : i32
    return %arg0, %c0_i32, %c0_i32_0, %c0_i32_1 : i32, i32, i32, i32
  }
  func.func @transform_1(%arg0: i32) -> (i32, i32, i32) {
    %c0_i32 = arith.constant 0 : i32
    %c0_i32_0 = arith.constant 0 : i32
    %c0_i32_1 = arith.constant 0 : i32
    %c0_i32_2 = arith.constant 0 : i32
    return %c0_i32, %c0_i32_0, %c0_i32_1 : i32, i32, i32
  }
  func.func @transform_2(%arg0: i32) -> (i32, i32, i32) {
    %c0_i32 = arith.constant 0 : i32
    %c0_i32_0 = arith.constant 0 : i32
    %c0_i32_1 = arith.constant 0 : i32
    %c0_i32_2 = arith.constant 0 : i32
    return %c0_i32, %c0_i32_0, %c0_i32_1 : i32, i32, i32
  }
  func.func @transform_3(%arg0: i32) -> (i32, i32) {
    %c0_i32 = arith.constant 0 : i32
    %c0_i32_0 = arith.constant 0 : i32
    %c0_i32_1 = arith.constant 0 : i32
    return %c0_i32, %c0_i32_0 : i32, i32
  }
  func.func @transform_4(%arg0: i32) -> (i32, i32) {
    %c0_i32 = arith.constant 0 : i32
    %c0_i32_0 = arith.constant 0 : i32
    %c0_i32_1 = arith.constant 0 : i32
    return %c0_i32, %c0_i32_0 : i32, i32
  }
  func.func @transform_5(%arg0: i32) -> (i32, i32) {
    %c0_i32 = arith.constant 0 : i32
    %c0_i32_0 = arith.constant 0 : i32
    %c0_i32_1 = arith.constant 0 : i32
    return %c0_i32, %c0_i32_0 : i32, i32
  }
  func.func @transform_6(%arg0: i32) -> (i32, i32, i32) {
    %c0_i32 = arith.constant 0 : i32
    %c0_i32_0 = arith.constant 0 : i32
    %c0_i32_1 = arith.constant 0 : i32
    return %arg0, %c0_i32, %c0_i32_0 : i32, i32, i32
  }
}

</mosaic_0001>

<llo_original>
// kernel: tpu_custom_call.1
$region0: #{tpu_custom_call.1}
  #allocation0 [shape = 'u32[]', space=smem, size = 0x4, offset = 0x4, fixed_abs, tag = 'smem constant byte address 0x4 - core index']
  #allocation1 [shape = 'u32[72,128]{1,0:T(1,128)}', space=vmem, size = 0x9000, scoped, tag = 'internal scratch']
  #allocation2 [shape = 'f32[1,10,10,256]{3,2,1,0:T(8,128)}', space=vmem, size = 0x28000, scoped, tag = 'scratch operand']
  #allocation3 [shape = 'f32[1,10,10,256]{3,2,1,0:T(8,128)}', space=vmem, size = 0x28000, scoped, tag = 'scratch operand']
  %s0 = inlined_call_operand.hbm [shape: f32[2,8,8,256], index: 0, kind: input, shape index: {}]
  %s1 = inlined_call_operand.hbm [shape: f32[9,256,256], index: 1, kind: input, shape index: {}]
  %s2 = inlined_call_operand.hbm [shape: f32[9,256,256], index: 2, kind: input, shape index: {}]
  %s3 = inlined_call_operand.hbm [shape: f32[8,256], index: 3, kind: input, shape index: {}]
  %s4 = inlined_call_operand.hbm [shape: f32[2,32], index: 4, kind: input, shape index: {}]
  %s5 = inlined_call_operand.hbm [shape: f32[2,32], index: 5, kind: input, shape index: {}]
  %s6 = inlined_call_operand.hbm [shape: f32[2,64,256], index: 6, kind: output, shape index: {}]
  %s7 = sld [smem:[#allocation0]]
  $region81: #{tpu_custom_call.1} parent=0
    _
  %s9 = ssub.s32 1, %s7
  %s10 = scalar_select 0, %s9, %s7
  $region1: #{tpu_custom_call.1} parent=0
    #allocation4 [shape = 'u8[131072]{0}', space=vmem, size = 0x20000, scoped, tag = 'input window, operand 0']
    #allocation5 [shape = 's32[2]{0}', space=sflag, size = 0x8, scoped, tag = 'scoped memory for tpu_custom_call.1']
    #allocation6 [shape = 's32[2]{0}', space=sflag, size = 0x8, scoped, tag = 'scoped memory for tpu_custom_call.1']
    #allocation7 [shape = 'u8[2359296]{0}', space=vmem, size = 0x240000, scoped, tag = 'input window, operand 1, single buffered']
    #allocation8 [shape = 's32[1]{0}', space=sflag, size = 0x4, scoped, tag = 'scoped memory for tpu_custom_call.1']
    #allocation9 [shape = 'u8[2359296]{0}', space=vmem, size = 0x240000, scoped, tag = 'input window, operand 2, single buffered']
    #allocation10 [shape = 'u8[8192]{0}', space=vmem, size = 0x2000, scoped, tag = 'input window, operand 3, single buffered']
    #allocation11 [shape = 's32[1]{0}', space=sflag, size = 0x4, scoped, tag = 'scoped memory for tpu_custom_call.1']
    #allocation12 [shape = 'u8[1024]{0}', space=vmem, size = 0x400, scoped, tag = 'input window, operand 4, single buffered']
    #allocation13 [shape = 'u8[1024]{0}', space=vmem, size = 0x400, scoped, tag = 'input window, operand 5, single buffered']
    #allocation14 [shape = 's32[1]{0}', space=sflag, size = 0x4, scoped, tag = 'scoped memory for tpu_custom_call.1']
    #allocation15 [shape = 'u8[131072]{0}', space=vmem, size = 0x20000, scoped, tag = 'output window, operand 0']
    %11 = vsyncpa [#allocation5], 0
    %s12 = scalar_lea.sflag [#allocation5], 1
    %13 = vsyncpa %s12, 0
    %14 = vsyncpa [#allocation8], 0
    %15 = vsyncpa [#allocation11], 0
    %16 = vsyncpa [#allocation14], 0
    %17 = vsyncpa [#allocation6], 0
    %s18 = scalar_lea.sflag [#allocation6], 1
    %19 = vsyncpa %s18, 0
    loop: start=0, step=1, limit=4
    $region2: #{tpu_custom_call.1} parent=1 // loop_pre_header
      _
    $region3: #{tpu_custom_call.1} parent=1 // loop_header
      %s21 = sphi 0, %s25
      %p22 = scmp.ge.s32.totalorder %s21, 4
      %s31 = sphi 0, %s33
      %s34 = sphi 0, %s31
      %s35 = sphi 0, %s34
      %s51 = sphi 0, %s35
      %s55 = sphi 0, %s55
      %s57 = sphi 0, %s55
      %s58 = sphi 0, %s57
      %s72 = sphi 0, %s58
      %s76 = sphi 0, %s76
      %s78 = sphi 0, %s76
      %s79 = sphi 0, %s78
      %s93 = sphi 0, %s79
      %s97 = sphi 0, %s97
      %s99 = sphi 0, %s97
      %s100 = sphi 0, %s99
      %s114 = sphi 0, %s100
      %s118 = sphi 0, %s118
      %s120 = sphi 0, %s118
      %s121 = sphi 0, %s120
      %s135 = sphi 0, %s121
      %s139 = sphi 0, %s139
      %s141 = sphi 0, %s139
      %s142 = sphi 0, %s141
      %s156 = sphi 0, %s142
      %s162 = sphi 0, %s164
      %s165 = sphi 0, %s162
      %s166 = sphi 0, %s165
      %s182 = sphi 0, %s166
    $region4: #{tpu_custom_call.1} parent=1 // loop_header_branch
      %24 = sbr.rel (%p22) target = $region8
    $region5: #{tpu_custom_call.1} parent=1 // loop_body
      %s26 = ssub.s32 %s21, 1
      %s27 = ssub.s32 %s21, 2
      %s28 = sadd.s32 %s21, 1
      %s29 = ssub.s32 %s21, %s28
      %p30 = scmp.eq.s32.totalorder %s29, 0
      %s32 = sadd.s32 %s31, 1
      %s33 = scalar_select %p30, %s31, %s32
      %p36 = pneg %p30
      %p37 = scmp.eq.s32.totalorder %s21, 1
      %p38 = por %p36, %p37
      %p39 = scmp.ne.s32.totalorder %s31, %s34
      %p40 = scmp.eq.s32.totalorder %s21, 0
      %p41 = por %p39, %p40
      %p42 = scmp.ne.s32.totalorder %s31, %s34
      %p43 = scmp.eq.s32.totalorder %s26, 1
      %p44 = por %p42, %p43
      %p45 = scmp.ne.s32.totalorder %s34, %s35
      %p46 = scmp.eq.s32.totalorder %s26, 0
      %p47 = por %p45, %p46
      %p48 = scmp.ne.s32.totalorder %s34, %s35
      %p49 = scmp.eq.s32.totalorder %s27, 1
      %p50 = por %p48, %p49
      %p52 = scmp.ne.s32.totalorder %s35, %s51
      %p53 = scmp.eq.s32.totalorder %s27, 0
      %p54 = por %p52, %p53
      %s56 = sadd.s32 %s55, 1
      %p59 = scmp.eq.s32.totalorder %s21, 1
      %p60 = scmp.ne.s32.totalorder %s55, %s57
      %p61 = scmp.eq.s32.totalorder %s21, 0
      %p62 = por %p60, %p61
      %p63 = scmp.ne.s32.totalorder %s55, %s57
      %p64 = scmp.eq.s32.totalorder %s26, 1
      %p65 = por %p63, %p64
      %p66 = scmp.ne.s32.totalorder %s57, %s58
      %p67 = scmp.eq.s32.totalorder %s26, 0
      %p68 = por %p66, %p67
      %p69 = scmp.ne.s32.totalorder %s57, %s58
      %p70 = scmp.eq.s32.totalorder %s27, 1
      %p71 = por %p69, %p70
      %p73 = scmp.ne.s32.totalorder %s58, %s72
      %p74 = scmp.eq.s32.totalorder %s27, 0
      %p75 = por %p73, %p74
      %s77 = sadd.s32 %s76, 1
      %p80 = scmp.eq.s32.totalorder %s21, 1
      %p81 = scmp.ne.s32.totalorder %s76, %s78
      %p82 = scmp.eq.s32.totalorder %s21, 0
      %p83 = por %p81, %p82
      %p84 = scmp.ne.s32.totalorder %s76, %s78
      %p85 = scmp.eq.s32.totalorder %s26, 1
      %p86 = por %p84, %p85
      %p87 = scmp.ne.s32.totalorder %s78, %s79
      %p88 = scmp.eq.s32.totalorder %s26, 0
      %p89 = por %p87, %p88
      %p90 = scmp.ne.s32.totalorder %s78, %s79
      %p91 = scmp.eq.s32.totalorder %s27, 1
      %p92 = por %p90, %p91
      %p94 = scmp.ne.s32.totalorder %s79, %s93
      %p95 = scmp.eq.s32.totalorder %s27, 0
      %p96 = por %p94, %p95
      %s98 = sadd.s32 %s97, 1
      %p101 = scmp.eq.s32.totalorder %s21, 1
      %p102 = scmp.ne.s32.totalorder %s97, %s99
      %p103 = scmp.eq.s32.totalorder %s21, 0
      %p104 = por %p102, %p103
      %p105 = scmp.ne.s32.totalorder %s97, %s99
      %p106 = scmp.eq.s32.totalorder %s26, 1
      %p107 = por %p105, %p106
      %p108 = scmp.ne.s32.totalorder %s99, %s100
      %p109 = scmp.eq.s32.totalorder %s26, 0
      %p110 = por %p108, %p109
      %p111 = scmp.ne.s32.totalorder %s99, %s100
      %p112 = scmp.eq.s32.totalorder %s27, 1
      %p113 = por %p111, %p112
      %p115 = scmp.ne.s32.totalorder %s100, %s114
      %p116 = scmp.eq.s32.totalorder %s27, 0
      %p117 = por %p115, %p116
      %s119 = sadd.s32 %s118, 1
      %p122 = scmp.eq.s32.totalorder %s21, 1
      %p123 = scmp.ne.s32.totalorder %s118, %s120
      %p124 = scmp.eq.s32.totalorder %s21, 0
      %p125 = por %p123, %p124
      %p126 = scmp.ne.s32.totalorder %s118, %s120
      %p127 = scmp.eq.s32.totalorder %s26, 1
      %p128 = por %p126, %p127
      %p129 = scmp.ne.s32.totalorder %s120, %s121
      %p130 = scmp.eq.s32.totalorder %s26, 0
      %p131 = por %p129, %p130
      %p132 = scmp.ne.s32.totalorder %s120, %s121
      %p133 = scmp.eq.s32.totalorder %s27, 1
      %p134 = por %p132, %p133
      %p136 = scmp.ne.s32.totalorder %s121, %s135
      %p137 = scmp.eq.s32.totalorder %s27, 0
      %p138 = por %p136, %p137
      %s140 = sadd.s32 %s139, 1
      %p143 = scmp.eq.s32.totalorder %s21, 1
      %p144 = scmp.ne.s32.totalorder %s139, %s141
      %p145 = scmp.eq.s32.totalorder %s21, 0
      %p146 = por %p144, %p145
      %p147 = scmp.ne.s32.totalorder %s139, %s141
      %p148 = scmp.eq.s32.totalorder %s26, 1
      %p149 = por %p147, %p148
      %p150 = scmp.ne.s32.totalorder %s141, %s142
      %p151 = scmp.eq.s32.totalorder %s26, 0
      %p152 = por %p150, %p151
      %p153 = scmp.ne.s32.totalorder %s141, %s142
      %p154 = scmp.eq.s32.totalorder %s27, 1
      %p155 = por %p153, %p154
      %p157 = scmp.ne.s32.totalorder %s142, %s156
      %p158 = scmp.eq.s32.totalorder %s27, 0
      %p159 = por %p157, %p158
      %s160 = ssub.s32 %s21, %s28
      %p161 = scmp.eq.s32.totalorder %s160, 0
      %s163 = sadd.s32 %s162, 1
      %s164 = scalar_select %p161, %s162, %s163
      %p167 = pneg %p161
      %p168 = scmp.eq.s32.totalorder %s21, 1
      %p169 = por %p167, %p168
      %p170 = scmp.ne.s32.totalorder %s162, %s165
      %p171 = scmp.eq.s32.totalorder %s21, 0
      %p172 = por %p170, %p171
      %p173 = scmp.ne.s32.totalorder %s162, %s165
      %p174 = scmp.eq.s32.totalorder %s26, 1
      %p175 = por %p173, %p174
      %p176 = scmp.ne.s32.totalorder %s165, %s166
      %p177 = scmp.eq.s32.totalorder %s26, 0
      %p178 = por %p176, %p177
      %p179 = scmp.ne.s32.totalorder %s165, %s166
      %p180 = scmp.eq.s32.totalorder %s27, 1
      %p181 = por %p179, %p180
      %p183 = scmp.ne.s32.totalorder %s166, %s182
      %p184 = scmp.eq.s32.totalorder %s27, 0
      %p185 = por %p183, %p184
      %p186 = scmp.le.s32.totalorder 1, %s21
      %p187 = scmp.lt.s32.totalorder %s21, 3
      %p188 = pnand %p186, %p187
      %p189 = pneg %p188
      // Predicated region
      $region9: #{tpu_custom_call.1} parent=5 // pred_check
        _
      $region10: #{tpu_custom_call.1} parent=5 // pred_check_branch
        %191 = sbr.rel (%p188) target = $region12
      $region11: #{tpu_custom_call.1} parent=5 // pred_region
        %s192 = ssub.s32 %s21, 1
        // Predicated region
        $region13: #{tpu_custom_call.1} parent=11 // pred_check
          %p193 = pneg %p68
        $region14: #{tpu_custom_call.1} parent=11 // pred_check_branch
          %195 = sbr.rel (%p193) target = $region16
        $region15: #{tpu_custom_call.1} parent=11 // pred_region
          %197 = vsyncadd [#allocation8], 0
          %s198 = sshll.u32 %s1, 4
          %s199 = int_to_ptr.hbm [resolvable:$true] %s198
          %s200 = sshll.u32 [#allocation7], 4
          %s201 = int_to_ptr.vmem [resolvable:$true] %s200
          %206 = dma.hbm_to_vmem [thread:$0]  %s199, 73728, %s201, [#allocation8], 256, 256, 16
        $region16: #{tpu_custom_call.1} parent=11 // pred_fallthru
          _
        // Predicated region
        $region17: #{tpu_custom_call.1} parent=11 // pred_check
          %p207 = pneg %p89
        $region18: #{tpu_custom_call.1} parent=11 // pred_check_branch
          %209 = sbr.rel (%p207) target = $region20
        $region19: #{tpu_custom_call.1} parent=11 // pred_region
          %211 = vsyncadd [#allocation8], 0
          %s212 = sshll.u32 %s2, 4
          %s213 = int_to_ptr.hbm [resolvable:$true] %s212
          %s214 = sshll.u32 [#allocation9], 4
          %s215 = int_to_ptr.vmem [resolvable:$true] %s214
          %220 = dma.hbm_to_vmem [thread:$0]  %s213, 73728, %s215, [#allocation8], 256, 256, 16
        $region20: #{tpu_custom_call.1} parent=11 // pred_fallthru
          _
        // Predicated region
        $region21: #{tpu_custom_call.1} parent=11 // pred_check
          %p221 = pneg %p110
        $region22: #{tpu_custom_call.1} parent=11 // pred_check_branch
          %223 = sbr.rel (%p221) target = $region24
        $region23: #{tpu_custom_call.1} parent=11 // pred_region
          %225 = vsyncadd [#allocation11], 0
          %s227 = sshll.u32 %s3, 4
          %s228 = int_to_ptr.hbm [resolvable:$true] %s227
          %s229 = sshll.u32 [#allocation10], 4
          %s230 = int_to_ptr.vmem [resolvable:$true] %s229
          %232 = dma.hbm_to_vmem [thread:$0]  %s228, 256, %s230, [#allocation11]
        $region24: #{tpu_custom_call.1} parent=11 // pred_fallthru
          _
        // Predicated region
        $region25: #{tpu_custom_call.1} parent=11 // pred_check
          %p233 = pneg %p131
        $region26: #{tpu_custom_call.1} parent=11 // pred_check_branch
          %235 = sbr.rel (%p233) target = $region28
        $region27: #{tpu_custom_call.1} parent=11 // pred_region
          %237 = vsyncadd [#allocation11], 0
          %s239 = sshll.u32 %s4, 4
          %s240 = int_to_ptr.hbm [resolvable:$true] %s239
          %s241 = sshll.u32 [#allocation12], 4
          %s242 = int_to_ptr.vmem [resolvable:$true] %s241
          %244 = dma.hbm_to_vmem [thread:$0]  %s240, 32, %s242, [#allocation11]
        $region28: #{tpu_custom_call.1} parent=11 // pred_fallthru
          _
        // Predicated region
        $region29: #{tpu_custom_call.1} parent=11 // pred_check
          %p245 = pneg %p152
        $region30: #{tpu_custom_call.1} parent=11 // pred_check_branch
          %247 = sbr.rel (%p245) target = $region32
        $region31: #{tpu_custom_call.1} parent=11 // pred_region
          %249 = vsyncadd [#allocation14], 0
          %s251 = sshll.u32 %s5, 4
          %s252 = int_to_ptr.hbm [resolvable:$true] %s251
          %s253 = sshll.u32 [#allocation13], 4
          %s254 = int_to_ptr.vmem [resolvable:$true] %s253
          %256 = dma.hbm_to_vmem [thread:$0]  %s252, 32, %s254, [#allocation14]
        $region32: #{tpu_custom_call.1} parent=11 // pred_fallthru
          _
      $region12: #{tpu_custom_call.1} parent=5 // pred_fallthru
        _
      %p257 = scmp.lt.s32.totalorder %s21, 2
      // Predicated region
      $region33: #{tpu_custom_call.1} parent=5 // pred_check
        %p258 = pneg %p257
      $region34: #{tpu_custom_call.1} parent=5 // pred_check_branch
        %260 = sbr.rel (%p258) target = $region36
      $region35: #{tpu_custom_call.1} parent=5 // pred_region
        // Predicated region
        $region37: #{tpu_custom_call.1} parent=35 // pred_check
          %p261 = pneg %p41
        $region38: #{tpu_custom_call.1} parent=35 // pred_check_branch
          %263 = sbr.rel (%p261) target = $region40
        $region39: #{tpu_custom_call.1} parent=35 // pred_region
          %s264 = sand.u32 %s31, 1
          %s265 = scalar_lea.sflag [#allocation5], %s264
          %s266 = sand.u32 %s31, 1
          %s267 = smul.addr %s266, 128
          %s268 = scalar_lea.vmem [#allocation4], %s267
          %270 = vsyncadd %s265, 0
          %s271 = smul.addr %s21, 16
          %s272 = smul.addr %s271, 8
          %s273 = scalar_lea.hbm %s0, %s272
          %s274 = sshll.u32 %s273, 4
          %s275 = int_to_ptr.hbm [resolvable:$true] %s274
          %s276 = sshll.u32 %s268, 4
          %s277 = int_to_ptr.vmem [resolvable:$true] %s276
          %282 = dma.hbm_to_vmem [thread:$0]  %s275, 2048, %s277, %s265, 256, 256, 16
        $region40: #{tpu_custom_call.1} parent=35 // pred_fallthru
          _
      $region36: #{tpu_custom_call.1} parent=5 // pred_fallthru
        _
      %p283 = scmp.le.s32.totalorder 1, %s21
      %p284 = scmp.lt.s32.totalorder %s21, 3
      %p285 = pnand %p283, %p284
      %p286 = pneg %p285
      // Predicated region
      $region41: #{tpu_custom_call.1} parent=5 // pred_check
        _
      $region42: #{tpu_custom_call.1} parent=5 // pred_check_branch
        %288 = sbr.rel (%p285) target = $region44
      $region43: #{tpu_custom_call.1} parent=5 // pred_region
        %s289 = ssub.s32 %s21, 1
        %s290 = sand.u32 %s34, 1
        %s291 = scalar_lea.sflag [#allocation5], %s290
        %s292 = sand.u32 %s34, 1
        %s293 = smul.addr %s292, 128
        %s294 = scalar_lea.vmem [#allocation4], %s293
        // Predicated region
        $region45: #{tpu_custom_call.1} parent=43 // pred_check
          %p295 = pneg %p47
        $region46: #{tpu_custom_call.1} parent=43 // pred_check_branch
          %297 = sbr.rel (%p295) target = $region48
        $region47: #{tpu_custom_call.1} parent=43 // pred_region
          %299 = dma.done %s291, 2048
        $region48: #{tpu_custom_call.1} parent=43 // pred_fallthru
          _
        // Predicated region
        $region49: #{tpu_custom_call.1} parent=43 // pred_check
          %p300 = pneg %p68
        $region50: #{tpu_custom_call.1} parent=43 // pred_check_branch
          %302 = sbr.rel (%p300) target = $region52
        $region51: #{tpu_custom_call.1} parent=43 // pred_region
          %304 = dma.done [#allocation8], 73728
        $region52: #{tpu_custom_call.1} parent=43 // pred_fallthru
          _
        // Predicated region
        $region53: #{tpu_custom_call.1} parent=43 // pred_check
          %p305 = pneg %p89
        $region54: #{tpu_custom_call.1} parent=43 // pred_check_branch
          %307 = sbr.rel (%p305) target = $region56
        $region55: #{tpu_custom_call.1} parent=43 // pred_region
          %309 = dma.done [#allocation8], 73728
        $region56: #{tpu_custom_call.1} parent=43 // pred_fallthru
          _
        // Predicated region
        $region57: #{tpu_custom_call.1} parent=43 // pred_check
          %p310 = pneg %p110
        $region58: #{tpu_custom_call.1} parent=43 // pred_check_branch
          %312 = sbr.rel (%p310) target = $region60
        $region59: #{tpu_custom_call.1} parent=43 // pred_region
          %314 = dma.done [#allocation11], 256
        $region60: #{tpu_custom_call.1} parent=43 // pred_fallthru
          _
        // Predicated region
        $region61: #{tpu_custom_call.1} parent=43 // pred_check
          %p315 = pneg %p131
        $region62: #{tpu_custom_call.1} parent=43 // pred_check_branch
          %317 = sbr.rel (%p315) target = $region64
        $region63: #{tpu_custom_call.1} parent=43 // pred_region
          %319 = dma.done [#allocation11], 32
        $region64: #{tpu_custom_call.1} parent=43 // pred_fallthru
          _
        // Predicated region
        $region65: #{tpu_custom_call.1} parent=43 // pred_check
          %p320 = pneg %p152
        $region66: #{tpu_custom_call.1} parent=43 // pred_check_branch
          %322 = sbr.rel (%p320) target = $region68
        $region67: #{tpu_custom_call.1} parent=43 // pred_region
          %324 = dma.done [#allocation14], 32
        $region68: #{tpu_custom_call.1} parent=43 // pred_fallthru
          _
        %s325 = sand.u32 %s34, 1
        %s326 = scalar_lea.sflag [#allocation5], %s325
        %s327 = sand.u32 %s34, 1
        %s328 = smul.addr %s327, 128
        %s329 = scalar_lea.vmem [#allocation4], %s328
        %p330 = pneg %p47
        %p331 = pneg %p44
        %p332 = pneg %p68
        %p333 = pneg %p65
        %p334 = pneg %p89
        %p335 = pneg %p86
        %p336 = pneg %p110
        %p337 = pneg %p107
        %p338 = pneg %p131
        %p339 = pneg %p128
        %p340 = pneg %p152
        %p341 = pneg %p149
        %p342 = pneg %p178
        %p343 = pneg %p175
        %s344 = sand.u32 %s165, 1
        %s345 = scalar_lea.sflag [#allocation6], %s344
        %s346 = sand.u32 %s165, 1
        %s347 = smul.addr %s346, 128
        %s348 = scalar_lea.vmem [#allocation15], %s347
        %349 = vst [vmem:[#allocation2] sm:$0xff] 0.0
        %350 = vst [vmem:[#allocation2 + $0x8] sm:$0xff] 0.0
        %351 = vst [vmem:[#allocation2 + $0x10] sm:$0x3] 0.0
        %352 = vst [vmem:[#allocation2 + $0x18] sm:$0x3] 0.0
        %s353 = scalar_lea.vmem [#allocation2], 288
        %354 = vst [vmem:[%s353] sm:$0xff] 0.0
        %355 = vst [vmem:[%s353 + $0x8] sm:$0xff] 0.0
        %356 = vst [vmem:[%s353 + $0x10] sm:$0x3] 0.0
        %357 = vst [vmem:[%s353 + $0x18] sm:$0x3] 0.0
        %s358 = scalar_lea.vmem [#allocation2], 32
        %v359 = vlaneseq
        %vm360 = vcmp.ge.s32.totalorder %v359, 0
        %vm361 = vcmp.lt.s32.totalorder %v359, 256
        %vm362 = vmand %vm360, %vm361
        %363 = vst.msk [vmem:[%s358] ss:$8 sm:$0x3] %vm362, 0.0
        %364 = vst.msk [vmem:[%s358] ss:$8 sm:$0x0] %vm362, 0.0
        %s365 = scalar_lea.vmem %s358, 32 [#allocation2]
        %366 = vst.msk [vmem:[%s365] ss:$8 sm:$0x3] %vm362, 0.0
        %367 = vst.msk [vmem:[%s365] ss:$8 sm:$0x0] %vm362, 0.0
        %s368 = scalar_lea.vmem %s358, 64 [#allocation2]
        %369 = vst.msk [vmem:[%s368] ss:$8 sm:$0x3] %vm362, 0.0
        %370 = vst.msk [vmem:[%s368] ss:$8 sm:$0x0] %vm362, 0.0
        %s371 = scalar_lea.vmem %s358, 96 [#allocation2]
        %372 = vst.msk [vmem:[%s371] ss:$8 sm:$0x3] %vm362, 0.0
        %373 = vst.msk [vmem:[%s371] ss:$8 sm:$0x0] %vm362, 0.0
        %s374 = scalar_lea.vmem %s358, 128 [#allocation2]
        %375 = vst.msk [vmem:[%s374] ss:$8 sm:$0x3] %vm362, 0.0
        %376 = vst.msk [vmem:[%s374] ss:$8 sm:$0x0] %vm362, 0.0
        %s377 = scalar_lea.vmem %s358, 160 [#allocation2]
        %378 = vst.msk [vmem:[%s377] ss:$8 sm:$0x3] %vm362, 0.0
        %379 = vst.msk [vmem:[%s377] ss:$8 sm:$0x0] %vm362, 0.0
        %s380 = scalar_lea.vmem %s358, 192 [#allocation2]
        %381 = vst.msk [vmem:[%s380] ss:$8 sm:$0x3] %vm362, 0.0
        %382 = vst.msk [vmem:[%s380] ss:$8 sm:$0x0] %vm362, 0.0
        %s383 = scalar_lea.vmem %s358, 224 [#allocation2]
        %384 = vst.msk [vmem:[%s383] ss:$8 sm:$0x3] %vm362, 0.0
        %385 = vst.msk [vmem:[%s383] ss:$8 sm:$0x0] %vm362, 0.0
        %s386 = scalar_lea.vmem %s358, 17 [#allocation2]
        %387 = vst.msk [vmem:[%s386] ss:$8 sm:$0x3] %vm362, 0.0
        %388 = vst.msk [vmem:[%s386] ss:$8 sm:$0x0] %vm362, 0.0
        %s389 = scalar_lea.vmem %s358, 49 [#allocation2]
        %390 = vst.msk [vmem:[%s389] ss:$8 sm:$0x3] %vm362, 0.0
        %391 = vst.msk [vmem:[%s389] ss:$8 sm:$0x0] %vm362, 0.0
        %s392 = scalar_lea.vmem %s358, 81 [#allocation2]
        %393 = vst.msk [vmem:[%s392] ss:$8 sm:$0x3] %vm362, 0.0
        %394 = vst.msk [vmem:[%s392] ss:$8 sm:$0x0] %vm362, 0.0
        %s395 = scalar_lea.vmem %s358, 113 [#allocation2]
        %396 = vst.msk [vmem:[%s395] ss:$8 sm:$0x3] %vm362, 0.0
        %397 = vst.msk [vmem:[%s395] ss:$8 sm:$0x0] %vm362, 0.0
        %s398 = scalar_lea.vmem %s358, 145 [#allocation2]
        %399 = vst.msk [vmem:[%s398] ss:$8 sm:$0x3] %vm362, 0.0
        %400 = vst.msk [vmem:[%s398] ss:$8 sm:$0x0] %vm362, 0.0
        %s401 = scalar_lea.vmem %s358, 177 [#allocation2]
        %402 = vst.msk [vmem:[%s401] ss:$8 sm:$0x3] %vm362, 0.0
        %403 = vst.msk [vmem:[%s401] ss:$8 sm:$0x0] %vm362, 0.0
        %s404 = scalar_lea.vmem %s358, 209 [#allocation2]
        %405 = vst.msk [vmem:[%s404] ss:$8 sm:$0x3] %vm362, 0.0
        %406 = vst.msk [vmem:[%s404] ss:$8 sm:$0x0] %vm362, 0.0
        %s407 = scalar_lea.vmem %s358, 241 [#allocation2]
        %408 = vst.msk [vmem:[%s407] ss:$8 sm:$0x3] %vm362, 0.0
        %409 = vst.msk [vmem:[%s407] ss:$8 sm:$0x0] %vm362, 0.0
        %410 = vst [vmem:[#allocation3] sm:$0xff] 0.0
        %411 = vst [vmem:[#allocation3 + $0x8] sm:$0xff] 0.0
        %412 = vst [vmem:[#allocation3 + $0x10] sm:$0x3] 0.0
        %413 = vst [vmem:[#allocation3 + $0x18] sm:$0x3] 0.0
        %s414 = scalar_lea.vmem [#allocation3], 288
        %415 = vst [vmem:[%s414] sm:$0xff] 0.0
        %416 = vst [vmem:[%s414 + $0x8] sm:$0xff] 0.0
        %417 = vst [vmem:[%s414 + $0x10] sm:$0x3] 0.0
        %418 = vst [vmem:[%s414 + $0x18] sm:$0x3] 0.0
        %s419 = scalar_lea.vmem [#allocation3], 32
        %420 = vst.msk [vmem:[%s419] ss:$8 sm:$0x3] %vm362, 0.0
        %421 = vst.msk [vmem:[%s419] ss:$8 sm:$0x0] %vm362, 0.0
        %s422 = scalar_lea.vmem %s419, 32 [#allocation3]
        %423 = vst.msk [vmem:[%s422] ss:$8 sm:$0x3] %vm362, 0.0
        %424 = vst.msk [vmem:[%s422] ss:$8 sm:$0x0] %vm362, 0.0
        %s425 = scalar_lea.vmem %s419, 64 [#allocation3]
        %426 = vst.msk [vmem:[%s425] ss:$8 sm:$0x3] %vm362, 0.0
        %427 = vst.msk [vmem:[%s425] ss:$8 sm:$0x0] %vm362, 0.0
        %s428 = scalar_lea.vmem %s419, 96 [#allocation3]
        %429 = vst.msk [vmem:[%s428] ss:$8 sm:$0x3] %vm362, 0.0
        %430 = vst.msk [vmem:[%s428] ss:$8 sm:$0x0] %vm362, 0.0
        %s431 = scalar_lea.vmem %s419, 128 [#allocation3]
        %432 = vst.msk [vmem:[%s431] ss:$8 sm:$0x3] %vm362, 0.0
        %433 = vst.msk [vmem:[%s431] ss:$8 sm:$0x0] %vm362, 0.0
        %s434 = scalar_lea.vmem %s419, 160 [#allocation3]
        %435 = vst.msk [vmem:[%s434] ss:$8 sm:$0x3] %vm362, 0.0
        %436 = vst.msk [vmem:[%s434] ss:$8 sm:$0x0] %vm362, 0.0
        %s437 = scalar_lea.vmem %s419, 192 [#allocation3]
        %438 = vst.msk [vmem:[%s437] ss:$8 sm:$0x3] %vm362, 0.0
        %439 = vst.msk [vmem:[%s437] ss:$8 sm:$0x0] %vm362, 0.0
        %s440 = scalar_lea.vmem %s419, 224 [#allocation3]
        %441 = vst.msk [vmem:[%s440] ss:$8 sm:$0x3] %vm362, 0.0
        %442 = vst.msk [vmem:[%s440] ss:$8 sm:$0x0] %vm362, 0.0
        %s443 = scalar_lea.vmem %s419, 17 [#allocation3]
        %444 = vst.msk [vmem:[%s443] ss:$8 sm:$0x3] %vm362, 0.0
        %445 = vst.msk [vmem:[%s443] ss:$8 sm:$0x0] %vm362, 0.0
        %s446 = scalar_lea.vmem %s419, 49 [#allocation3]
        %447 = vst.msk [vmem:[%s446] ss:$8 sm:$0x3] %vm362, 0.0
        %448 = vst.msk [vmem:[%s446] ss:$8 sm:$0x0] %vm362, 0.0
        %s449 = scalar_lea.vmem %s419, 81 [#allocation3]
        %450 = vst.msk [vmem:[%s449] ss:$8 sm:$0x3] %vm362, 0.0
        %451 = vst.msk [vmem:[%s449] ss:$8 sm:$0x0] %vm362, 0.0
        %s452 = scalar_lea.vmem %s419, 113 [#allocation3]
        %453 = vst.msk [vmem:[%s452] ss:$8 sm:$0x3] %vm362, 0.0
        %454 = vst.msk [vmem:[%s452] ss:$8 sm:$0x0] %vm362, 0.0
        %s455 = scalar_lea.vmem %s419, 145 [#allocation3]
        %456 = vst.msk [vmem:[%s455] ss:$8 sm:$0x3] %vm362, 0.0
        %457 = vst.msk [vmem:[%s455] ss:$8 sm:$0x0] %vm362, 0.0
        %s458 = scalar_lea.vmem %s419, 177 [#allocation3]
        %459 = vst.msk [vmem:[%s458] ss:$8 sm:$0x3] %vm362, 0.0
        %460 = vst.msk [vmem:[%s458] ss:$8 sm:$0x0] %vm362, 0.0
        %s461 = scalar_lea.vmem %s419, 209 [#allocation3]
        %462 = vst.msk [vmem:[%s461] ss:$8 sm:$0x3] %vm362, 0.0
        %463 = vst.msk [vmem:[%s461] ss:$8 sm:$0x0] %vm362, 0.0
        %s464 = scalar_lea.vmem %s419, 241 [#allocation3]
        %465 = vst.msk [vmem:[%s464] ss:$8 sm:$0x3] %vm362, 0.0
        %466 = vst.msk [vmem:[%s464] ss:$8 sm:$0x0] %vm362, 0.0
        %v467 = vld [vmem:[%s294] sm:$0xff]
        %v468 = vld [vmem:[%s294 + $0x8] sm:$0xff]
        %v469 = vld [vmem:[%s294 + $0x10] sm:$0xff]
        %v470 = vld [vmem:[%s294 + $0x18] sm:$0xff]
        %v471 = vld [vmem:[%s294 + $0x20] sm:$0xff]
        %v472 = vld [vmem:[%s294 + $0x28] sm:$0xff]
        %v473 = vld [vmem:[%s294 + $0x30] sm:$0xff]
        %v474 = vld [vmem:[%s294 + $0x38] sm:$0xff]
        %v475 = vld [vmem:[%s294 + $0x40] sm:$0xff]
        %v476 = vld [vmem:[%s294 + $0x48] sm:$0xff]
        %v477 = vld [vmem:[%s294 + $0x50] sm:$0xff]
        %v478 = vld [vmem:[%s294 + $0x58] sm:$0xff]
        %v479 = vld [vmem:[%s294 + $0x60] sm:$0xff]
        %v480 = vld [vmem:[%s294 + $0x68] sm:$0xff]
        %v481 = vld [vmem:[%s294 + $0x70] sm:$0xff]
        %v482 = vld [vmem:[%s294 + $0x78] sm:$0xff]
        %v499 = vrot.slane %v467, 7
        %v500 = vrot.slane %v468, 7
        %v501 = vrot.slane %v469, 7
        %v502 = vrot.slane %v470, 7
        %v503 = vrot.slane %v471, 7
        %v504 = vrot.slane %v472, 7
        %v505 = vrot.slane %v473, 7
        %v506 = vrot.slane %v474, 7
        %v507 = vrot.slane %v475, 7
        %v508 = vrot.slane %v476, 7
        %v509 = vrot.slane %v477, 7
        %v510 = vrot.slane %v478, 7
        %v511 = vrot.slane %v479, 7
        %v512 = vrot.slane %v480, 7
        %v513 = vrot.slane %v481, 7
        %v514 = vrot.slane %v482, 7
        %531 = vst [vmem:[%s358] sm:$0xfe] %v499
        %532 = vst [vmem:[%s358 + $0x8] sm:$0xfe] %v500
        %533 = vst [vmem:[%s358 + $0x10] sm:$0x1] %v499
        %534 = vst [vmem:[%s358 + $0x18] sm:$0x1] %v500
        %535 = vst [vmem:[%s358 + $0x20] sm:$0xfe] %v501
        %536 = vst [vmem:[%s358 + $0x28] sm:$0xfe] %v502
        %537 = vst [vmem:[%s358 + $0x30] sm:$0x1] %v501
        %538 = vst [vmem:[%s358 + $0x38] sm:$0x1] %v502
        %539 = vst [vmem:[%s358 + $0x40] sm:$0xfe] %v503
        %540 = vst [vmem:[%s358 + $0x48] sm:$0xfe] %v504
        %541 = vst [vmem:[%s358 + $0x50] sm:$0x1] %v503
        %542 = vst [vmem:[%s358 + $0x58] sm:$0x1] %v504
        %543 = vst [vmem:[%s358 + $0x60] sm:$0xfe] %v505
        %544 = vst [vmem:[%s358 + $0x68] sm:$0xfe] %v506
        %545 = vst [vmem:[%s358 + $0x70] sm:$0x1] %v505
        %546 = vst [vmem:[%s358 + $0x78] sm:$0x1] %v506
        %547 = vst [vmem:[%s358 + $0x80] sm:$0xfe] %v507
        %548 = vst [vmem:[%s358 + $0x88] sm:$0xfe] %v508
        %549 = vst [vmem:[%s358 + $0x90] sm:$0x1] %v507
        %550 = vst [vmem:[%s358 + $0x98] sm:$0x1] %v508
        %551 = vst [vmem:[%s358 + $0xa0] sm:$0xfe] %v509
        %552 = vst [vmem:[%s358 + $0xa8] sm:$0xfe] %v510
        %553 = vst [vmem:[%s358 + $0xb0] sm:$0x1] %v509
        %554 = vst [vmem:[%s358 + $0xb8] sm:$0x1] %v510
        %555 = vst [vmem:[%s358 + $0xc0] sm:$0xfe] %v511
        %556 = vst [vmem:[%s358 + $0xc8] sm:$0xfe] %v512
        %557 = vst [vmem:[%s358 + $0xd0] sm:$0x1] %v511
        %558 = vst [vmem:[%s358 + $0xd8] sm:$0x1] %v512
        %559 = vst [vmem:[%s358 + $0xe0] sm:$0xfe] %v513
        %560 = vst [vmem:[%s358 + $0xe8] sm:$0xfe] %v514
        %561 = vst [vmem:[%s358 + $0xf0] sm:$0x1] %v513
        %562 = vst [vmem:[%s358 + $0xf8] sm:$0x1] %v514
        %v563 = vld [vmem:[#allocation10] ss:$8 sm:$0x3]
        %s564 = scalar_lea.vmem [#allocation10], 1
        %v565 = vld [vmem:[%s564] ss:$8 sm:$0x3]
        %s566 = scalar_lea.vmem [#allocation10], 2
        %v567 = vld [vmem:[%s566] ss:$8 sm:$0x3]
        %s568 = scalar_lea.vmem [#allocation10], 3
        %v569 = vld [vmem:[%s568] ss:$8 sm:$0x3]
        %v570 = vld [vmem:[#allocation2] sm:$0xff]
        %v571 = vld [vmem:[#allocation2 + $0x8] sm:$0xff]
        %v572 = vld [vmem:[#allocation2 + $0x20] sm:$0xff]
        %v573 = vld [vmem:[#allocation2 + $0x28] sm:$0xff]
        %v574 = vld [vmem:[#allocation2 + $0x40] sm:$0xff]
        %v575 = vld [vmem:[#allocation2 + $0x48] sm:$0xff]
        %v576 = vld [vmem:[#allocation2 + $0x60] sm:$0xff]
        %v577 = vld [vmem:[#allocation2 + $0x68] sm:$0xff]
        %v578 = vld [vmem:[#allocation2 + $0x80] sm:$0xff]
        %v579 = vld [vmem:[#allocation2 + $0x88] sm:$0xff]
        %v580 = vld [vmem:[#allocation2 + $0xa0] sm:$0xff]
        %v581 = vld [vmem:[#allocation2 + $0xa8] sm:$0xff]
        %v582 = vld [vmem:[#allocation2 + $0xc0] sm:$0xff]
        %v583 = vld [vmem:[#allocation2 + $0xc8] sm:$0xff]
        %v584 = vld [vmem:[#allocation2 + $0xe0] sm:$0xff]
        %v585 = vld [vmem:[#allocation2 + $0xe8] sm:$0xff]
        %v586 = vld [vmem:[#allocation7] sm:$0xff]
        %v587 = vld [vmem:[#allocation7 + $0x8] sm:$0xff]
        %v588 = vld [vmem:[#allocation7 + $0x10] sm:$0xff]
        %v589 = vld [vmem:[#allocation7 + $0x18] sm:$0xff]
        %v590 = vld [vmem:[#allocation7 + $0x20] sm:$0xff]
        %v591 = vld [vmem:[#allocation7 + $0x28] sm:$0xff]
        %v592 = vld [vmem:[#allocation7 + $0x30] sm:$0xff]
        %v593 = vld [vmem:[#allocation7 + $0x38] sm:$0xff]
        %v594 = vld [vmem:[#allocation7 + $0x40] sm:$0xff]
        %v595 = vld [vmem:[#allocation7 + $0x48] sm:$0xff]
        %v596 = vld [vmem:[#allocation7 + $0x50] sm:$0xff]
        %v597 = vld [vmem:[#allocation7 + $0x58] sm:$0xff]
        %v598 = vld [vmem:[#allocation7 + $0x60] sm:$0xff]
        %v599 = vld [vmem:[#allocation7 + $0x68] sm:$0xff]
        %v600 = vld [vmem:[#allocation7 + $0x70] sm:$0xff]
        %v601 = vld [vmem:[#allocation7 + $0x78] sm:$0xff]
        %v602 = vld [vmem:[#allocation7 + $0x80] sm:$0xff]
        %v603 = vld [vmem:[#allocation7 + $0x88] sm:$0xff]
        %v604 = vld [vmem:[#allocation7 + $0x90] sm:$0xff]
        %v605 = vld [vmem:[#allocation7 + $0x98] sm:$0xff]
        %v606 = vld [vmem:[#allocation7 + $0xa0] sm:$0xff]
        %v607 = vld [vmem:[#allocation7 + $0xa8] sm:$0xff]
        %v608 = vld [vmem:[#allocation7 + $0xb0] sm:$0xff]
        %v609 = vld [vmem:[#allocation7 + $0xb8] sm:$0xff]
        %v610 = vld [vmem:[#allocation7 + $0xc0] sm:$0xff]
        %v611 = vld [vmem:[#allocation7 + $0xc8] sm:$0xff]
        %v612 = vld [vmem:[#allocation7 + $0xd0] sm:$0xff]
        %v613 = vld [vmem:[#allocation7 + $0xd8] sm:$0xff]
        %v614 = vld [vmem:[#allocation7 + $0xe0] sm:$0xff]
        %v615 = vld [vmem:[#allocation7 + $0xe8] sm:$0xff]
        %v616 = vld [vmem:[#allocation7 + $0xf0] sm:$0xff]
        %v617 = vld [vmem:[#allocation7 + $0xf8] sm:$0xff]
        %v618 = vld [vmem:[#allocation7 + $0x100] sm:$0xff]
        %v619 = vld [vmem:[#allocation7 + $0x108] sm:$0xff]
        %v620 = vld [vmem:[#allocation7 + $0x110] sm:$0xff]
        %v621 = vld [vmem:[#allocation7 + $0x118] sm:$0xff]
        %v622 = vld [vmem:[#allocation7 + $0x120] sm:$0xff]
        %v623 = vld [vmem:[#allocation7 + $0x128] sm:$0xff]
        %v624 = vld [vmem:[#allocation7 + $0x130] sm:$0xff]
        %v625 = vld [vmem:[#allocation7 + $0x138] sm:$0xff]
        %v626 = vld [vmem:[#allocation7 + $0x140] sm:$0xff]
        %v627 = vld [vmem:[#allocation7 + $0x148] sm:$0xff]
        %v628 = vld [vmem:[#allocation7 + $0x150] sm:$0xff]
        %v629 = vld [vmem:[#allocation7 + $0x158] sm:$0xff]
        %v630 = vld [vmem:[#allocation7 + $0x160] sm:$0xff]
        %v631 = vld [vmem:[#allocation7 + $0x168] sm:$0xff]
        %v632 = vld [vmem:[#allocation7 + $0x170] sm:$0xff]
        %v633 = vld [vmem:[#allocation7 + $0x178] sm:$0xff]
        %v634 = vld [vmem:[#allocation7 + $0x180] sm:$0xff]
        %v635 = vld [vmem:[#allocation7 + $0x188] sm:$0xff]
        %v636 = vld [vmem:[#allocation7 + $0x190] sm:$0xff]
        %v637 = vld [vmem:[#allocation7 + $0x198] sm:$0xff]
        %v638 = vld [vmem:[#allocation7 + $0x1a0] sm:$0xff]
        %v639 = vld [vmem:[#allocation7 + $0x1a8] sm:$0xff]
        %v640 = vld [vmem:[#allocation7 + $0x1b0] sm:$0xff]
        %v641 = vld [vmem:[#allocation7 + $0x1b8] sm:$0xff]
        %v642 = vld [vmem:[#allocation7 + $0x1c0] sm:$0xff]
        %v643 = vld [vmem:[#allocation7 + $0x1c8] sm:$0xff]
        %v644 = vld [vmem:[#allocation7 + $0x1d0] sm:$0xff]
        %v645 = vld [vmem:[#allocation7 + $0x1d8] sm:$0xff]
        %v646 = vld [vmem:[#allocation7 + $0x1e0] sm:$0xff]
        %v647 = vld [vmem:[#allocation7 + $0x1e8] sm:$0xff]
        %v648 = vld [vmem:[#allocation7 + $0x1f0] sm:$0xff]
        %v649 = vld [vmem:[#allocation7 + $0x1f8] sm:$0xff]
        %v650 = vld [vmem:[#allocation2] sm:$0xfe]
        %v651 = vld [vmem:[#allocation2 + $0x8] sm:$0xfe]
        %v652 = vld [vmem:[#allocation2 + $0x10] sm:$0x1]
        %v653 = vld [vmem:[#allocation2 + $0x18] sm:$0x1]
        %v654 = vld [vmem:[#allocation2 + $0x20] sm:$0xfe]
        %v655 = vld [vmem:[#allocation2 + $0x28] sm:$0xfe]
        %v656 = vld [vmem:[#allocation2 + $0x30] sm:$0x1]
        %v657 = vld [vmem:[#allocation2 + $0x38] sm:$0x1]
        %v658 = vld [vmem:[#allocation2 + $0x40] sm:$0xfe]
        %v659 = vld [vmem:[#allocation2 + $0x48] sm:$0xfe]
        %v660 = vld [vmem:[#allocation2 + $0x50] sm:$0x1]
        %v661 = vld [vmem:[#allocation2 + $0x58] sm:$0x1]
        %v662 = vld [vmem:[#allocation2 + $0x60] sm:$0xfe]
        %v663 = vld [vmem:[#allocation2 + $0x68] sm:$0xfe]
        %v664 = vld [vmem:[#allocation2 + $0x70] sm:$0x1]
        %v665 = vld [vmem:[#allocation2 + $0x78] sm:$0x1]
        %v666 = vld [vmem:[#allocation2 + $0x80] sm:$0xfe]
        %v667 = vld [vmem:[#allocation2 + $0x88] sm:$0xfe]
        %v668 = vld [vmem:[#allocation2 + $0x90] sm:$0x1]
        %v669 = vld [vmem:[#allocation2 + $0x98] sm:$0x1]
        %v670 = vld [vmem:[#allocation2 + $0xa0] sm:$0xfe]
        %v671 = vld [vmem:[#allocation2 + $0xa8] sm:$0xfe]
        %v672 = vld [vmem:[#allocation2 + $0xb0] sm:$0x1]
        %v673 = vld [vmem:[#allocation2 + $0xb8] sm:$0x1]
        %v674 = vld [vmem:[#allocation2 + $0xc0] sm:$0xfe]
        %v675 = vld [vmem:[#allocation2 + $0xc8] sm:$0xfe]
        %v676 = vld [vmem:[#allocation2 + $0xd0] sm:$0x1]
        %v677 = vld [vmem:[#allocation2 + $0xd8] sm:$0x1]
        %v678 = vld [vmem:[#allocation2 + $0xe0] sm:$0xfe]
        %v679 = vld [vmem:[#allocation2 + $0xe8] sm:$0xfe]
        %v680 = vld [vmem:[#allocation2 + $0xf0] sm:$0x1]
        %v681 = vld [vmem:[#allocation2 + $0xf8] sm:$0x1]
        %vm714 = vcmask 1046528
        %v715 = vrot.slane %v650, 1
        %v716 = vrot.slane %v652, 1
        %v717 = vsel %vm714, %v715, %v716
        %v718 = vrot.slane %v651, 1
        %v719 = vrot.slane %v653, 1
        %v720 = vsel %vm714, %v718, %v719
        %v721 = vrot.slane %v654, 1
        %v722 = vrot.slane %v656, 1
        %v723 = vsel %vm714, %v721, %v722
        %v724 = vrot.slane %v655, 1
        %v725 = vrot.slane %v657, 1
        %v726 = vsel %vm714, %v724, %v725
        %v727 = vrot.slane %v658, 1
        %v728 = vrot.slane %v660, 1
        %v729 = vsel %vm714, %v727, %v728
        %v730 = vrot.slane %v659, 1
        %v731 = vrot.slane %v661, 1
        %v732 = vsel %vm714, %v730, %v731
        %v733 = vrot.slane %v662, 1
        %v734 = vrot.slane %v664, 1
        %v735 = vsel %vm714, %v733, %v734
        %v736 = vrot.slane %v663, 1
        %v737 = vrot.slane %v665, 1
        %v738 = vsel %vm714, %v736, %v737
        %v739 = vrot.slane %v666, 1
        %v740 = vrot.slane %v668, 1
        %v741 = vsel %vm714, %v739, %v740
        %v742 = vrot.slane %v667, 1
        %v743 = vrot.slane %v669, 1
        %v744 = vsel %vm714, %v742, %v743
        %v745 = vrot.slane %v670, 1
        %v746 = vrot.slane %v672, 1
        %v747 = vsel %vm714, %v745, %v746
        %v748 = vrot.slane %v671, 1
        %v749 = vrot.slane %v673, 1
        %v750 = vsel %vm714, %v748, %v749
        %v751 = vrot.slane %v674, 1
        %v752 = vrot.slane %v676, 1
        %v753 = vsel %vm714, %v751, %v752
        %v754 = vrot.slane %v675, 1
        %v755 = vrot.slane %v677, 1
        %v756 = vsel %vm714, %v754, %v755
        %v757 = vrot.slane %v678, 1
        %v758 = vrot.slane %v680, 1
        %v759 = vsel %vm714, %v757, %v758
        %v760 = vrot.slane %v679, 1
        %v761 = vrot.slane %v681, 1
        %v762 = vsel %vm714, %v760, %v761
        %s779 = scalar_lea.vmem [#allocation7], 512
        %v780 = vld [vmem:[%s779] sm:$0xff]
        %v781 = vld [vmem:[%s779 + $0x8] sm:$0xff]
        %v782 = vld [vmem:[%s779 + $0x10] sm:$0xff]
        %v783 = vld [vmem:[%s779 + $0x18] sm:$0xff]
        %v784 = vld [vmem:[%s779 + $0x20] sm:$0xff]
        %v785 = vld [vmem:[%s779 + $0x28] sm:$0xff]
        %v786 = vld [vmem:[%s779 + $0x30] sm:$0xff]
        %v787 = vld [vmem:[%s779 + $0x38] sm:$0xff]
        %v788 = vld [vmem:[%s779 + $0x40] sm:$0xff]
        %v789 = vld [vmem:[%s779 + $0x48] sm:$0xff]
        %v790 = vld [vmem:[%s779 + $0x50] sm:$0xff]
        %v791 = vld [vmem:[%s779 + $0x58] sm:$0xff]
        %v792 = vld [vmem:[%s779 + $0x60] sm:$0xff]
        %v793 = vld [vmem:[%s779 + $0x68] sm:$0xff]
        %v794 = vld [vmem:[%s779 + $0x70] sm:$0xff]
        %v795 = vld [vmem:[%s779 + $0x78] sm:$0xff]
        %v796 = vld [vmem:[%s779 + $0x80] sm:$0xff]
        %v797 = vld [vmem:[%s779 + $0x88] sm:$0xff]
        %v798 = vld [vmem:[%s779 + $0x90] sm:$0xff]
        %v799 = vld [vmem:[%s779 + $0x98] sm:$0xff]
        %v800 = vld [vmem:[%s779 + $0xa0] sm:$0xff]
        %v801 = vld [vmem:[%s779 + $0xa8] sm:$0xff]
        %v802 = vld [vmem:[%s779 + $0xb0] sm:$0xff]
        %v803 = vld [vmem:[%s779 + $0xb8] sm:$0xff]
        %v804 = vld [vmem:[%s779 + $0xc0] sm:$0xff]
        %v805 = vld [vmem:[%s779 + $0xc8] sm:$0xff]
        %v806 = vld [vmem:[%s779 + $0xd0] sm:$0xff]
        %v807 = vld [vmem:[%s779 + $0xd8] sm:$0xff]
        %v808 = vld [vmem:[%s779 + $0xe0] sm:$0xff]
        %v809 = vld [vmem:[%s779 + $0xe8] sm:$0xff]
        %v810 = vld [vmem:[%s779 + $0xf0] sm:$0xff]
        %v811 = vld [vmem:[%s779 + $0xf8] sm:$0xff]
        %v812 = vld [vmem:[%s779 + $0x100] sm:$0xff]
        %v813 = vld [vmem:[%s779 + $0x108] sm:$0xff]
        %v814 = vld [vmem:[%s779 + $0x110] sm:$0xff]
        %v815 = vld [vmem:[%s779 + $0x118] sm:$0xff]
        %v816 = vld [vmem:[%s779 + $0x120] sm:$0xff]
        %v817 = vld [vmem:[%s779 + $0x128] sm:$0xff]
        %v818 = vld [vmem:[%s779 + $0x130] sm:$0xff]
        %v819 = vld [vmem:[%s779 + $0x138] sm:$0xff]
        %v820 = vld [vmem:[%s779 + $0x140] sm:$0xff]
        %v821 = vld [vmem:[%s779 + $0x148] sm:$0xff]
        %v822 = vld [vmem:[%s779 + $0x150] sm:$0xff]
        %v823 = vld [vmem:[%s779 + $0x158] sm:$0xff]
        %v824 = vld [vmem:[%s779 + $0x160] sm:$0xff]
        %v825 = vld [vmem:[%s779 + $0x168] sm:$0xff]
        %v826 = vld [vmem:[%s779 + $0x170] sm:$0xff]
        %v827 = vld [vmem:[%s779 + $0x178] sm:$0xff]
        %v828 = vld [vmem:[%s779 + $0x180] sm:$0xff]
        %v829 = vld [vmem:[%s779 + $0x188] sm:$0xff]
        %v830 = vld [vmem:[%s779 + $0x190] sm:$0xff]
        %v831 = vld [vmem:[%s779 + $0x198] sm:$0xff]
        %v832 = vld [vmem:[%s779 + $0x1a0] sm:$0xff]
        %v833 = vld [vmem:[%s779 + $0x1a8] sm:$0xff]
        %v834 = vld [vmem:[%s779 + $0x1b0] sm:$0xff]
        %v835 = vld [vmem:[%s779 + $0x1b8] sm:$0xff]
        %v836 = vld [vmem:[%s779 + $0x1c0] sm:$0xff]
        %v837 = vld [vmem:[%s779 + $0x1c8] sm:$0xff]
        %v838 = vld [vmem:[%s779 + $0x1d0] sm:$0xff]
        %v839 = vld [vmem:[%s779 + $0x1d8] sm:$0xff]
        %v840 = vld [vmem:[%s779 + $0x1e0] sm:$0xff]
        %v841 = vld [vmem:[%s779 + $0x1e8] sm:$0xff]
        %v842 = vld [vmem:[%s779 + $0x1f0] sm:$0xff]
        %v843 = vld [vmem:[%s779 + $0x1f8] sm:$0xff]
        %844 = vmatpush.msra.mxu0 %v810
        %845 = vmatpush.msra.mxu0 %v808
        %846 = vmatpush.msra.mxu0 %v806
        %847 = vmatpush.msra.mxu0 %v804
        %848 = vmatpush.msra.mxu0 %v802
        %849 = vmatpush.msra.mxu0 %v800
        %850 = vmatpush.msra.mxu0 %v798
        %851 = vmatpush.msra.mxu0 %v796
        %852 = vmatpush.msra.mxu0 %v794
        %853 = vmatpush.msra.mxu0 %v792
        %854 = vmatpush.msra.mxu0 %v790
        %855 = vmatpush.msra.mxu0 %v788
        %856 = vmatpush.msra.mxu0 %v786
        %857 = vmatpush.msra.mxu0 %v784
        %858 = vmatpush.msra.mxu0 %v782
        %859 = vmatpush.msra.mxu0 %v780
        %860 = vmatmul.f32.gmra.mxu0 %v717
        %v861 = vpop.f32.mrf.mxu0
        %v862 = vadd.f32 0.0, %v861
        %863 = vmatmul.f32.gmra.mxu0 %v723
        %v864 = vpop.f32.mrf.mxu0
        %v865 = vadd.f32 0.0, %v864
        %866 = vmatmul.f32.gmra.mxu0 %v729
        %v867 = vpop.f32.mrf.mxu0
        %v868 = vadd.f32 0.0, %v867
        %869 = vmatmul.f32.gmra.mxu0 %v735
        %v870 = vpop.f32.mrf.mxu0
        %v871 = vadd.f32 0.0, %v870
        %872 = vmatmul.f32.gmra.mxu0 %v741
        %v873 = vpop.f32.mrf.mxu0
        %v874 = vadd.f32 0.0, %v873
        %875 = vmatmul.f32.gmra.mxu0 %v747
        %v876 = vpop.f32.mrf.mxu0
        %v877 = vadd.f32 0.0, %v876
        %878 = vmatmul.f32.gmra.mxu0 %v753
        %v879 = vpop.f32.mrf.mxu0
        %v880 = vadd.f32 0.0, %v879
        %881 = vmatmul.f32.gmra.mxu0 %v759
        %v882 = vpop.f32.mrf.mxu0
        %v883 = vadd.f32 0.0, %v882
        %884 = vdwg.mxu0
        %885 = vmatpush.msra.mxu0 %v842
        %886 = vmatpush.msra.mxu0 %v840
        %887 = vmatpush.msra.mxu0 %v838
        %888 = vmatpush.msra.mxu0 %v836
        %889 = vmatpush.msra.mxu0 %v834
        %890 = vmatpush.msra.mxu0 %v832
        %891 = vmatpush.msra.mxu0 %v830
        %892 = vmatpush.msra.mxu0 %v828
        %893 = vmatpush.msra.mxu0 %v826
        %894 = vmatpush.msra.mxu0 %v824
        %895 = vmatpush.msra.mxu0 %v822
        %896 = vmatpush.msra.mxu0 %v820
        %897 = vmatpush.msra.mxu0 %v818
        %898 = vmatpush.msra.mxu0 %v816
        %899 = vmatpush.msra.mxu0 %v814
        %900 = vmatpush.msra.mxu0 %v812
        %901 = vmatmul.f32.gmra.mxu0 %v720
        %v902 = vpop.f32.mrf.mxu0
        %v903 = vadd.f32 %v862, %v902
        %904 = vmatmul.f32.gmra.mxu0 %v726
        %v905 = vpop.f32.mrf.mxu0
        %v906 = vadd.f32 %v865, %v905
        %907 = vmatmul.f32.gmra.mxu0 %v732
        %v908 = vpop.f32.mrf.mxu0
        %v909 = vadd.f32 %v868, %v908
        %910 = vmatmul.f32.gmra.mxu0 %v738
        %v911 = vpop.f32.mrf.mxu0
        %v912 = vadd.f32 %v871, %v911
        %913 = vmatmul.f32.gmra.mxu0 %v744
        %v914 = vpop.f32.mrf.mxu0
        %v915 = vadd.f32 %v874, %v914
        %916 = vmatmul.f32.gmra.mxu0 %v750
        %v917 = vpop.f32.mrf.mxu0
        %v918 = vadd.f32 %v877, %v917
        %919 = vmatmul.f32.gmra.mxu0 %v756
        %v920 = vpop.f32.mrf.mxu0
        %v921 = vadd.f32 %v880, %v920
        %922 = vmatmul.f32.gmra.mxu0 %v762
        %v923 = vpop.f32.mrf.mxu0
        %v924 = vadd.f32 %v883, %v923
        %925 = vdwg.mxu0
        %926 = vmatpush.msra.mxu0 %v811
        %927 = vmatpush.msra.mxu0 %v809
        %928 = vmatpush.msra.mxu0 %v807
        %929 = vmatpush.msra.mxu0 %v805
        %930 = vmatpush.msra.mxu0 %v803
        %931 = vmatpush.msra.mxu0 %v801
        %932 = vmatpush.msra.mxu0 %v799
        %933 = vmatpush.msra.mxu0 %v797
        %934 = vmatpush.msra.mxu0 %v795
        %935 = vmatpush.msra.mxu0 %v793
        %936 = vmatpush.msra.mxu0 %v791
        %937 = vmatpush.msra.mxu0 %v789
        %938 = vmatpush.msra.mxu0 %v787
        %939 = vmatpush.msra.mxu0 %v785
        %940 = vmatpush.msra.mxu0 %v783
        %941 = vmatpush.msra.mxu0 %v781
        %942 = vmatmul.f32.gmra.mxu0 %v717
        %v943 = vpop.f32.mrf.mxu0
        %v944 = vadd.f32 0.0, %v943
        %945 = vmatmul.f32.gmra.mxu0 %v723
        %v946 = vpop.f32.mrf.mxu0
        %v947 = vadd.f32 0.0, %v946
        %948 = vmatmul.f32.gmra.mxu0 %v729
        %v949 = vpop.f32.mrf.mxu0
        %v950 = vadd.f32 0.0, %v949
        %951 = vmatmul.f32.gmra.mxu0 %v735
        %v952 = vpop.f32.mrf.mxu0
        %v953 = vadd.f32 0.0, %v952
        %954 = vmatmul.f32.gmra.mxu0 %v741
        %v955 = vpop.f32.mrf.mxu0
        %v956 = vadd.f32 0.0, %v955
        %957 = vmatmul.f32.gmra.mxu0 %v747
        %v958 = vpop.f32.mrf.mxu0
        %v959 = vadd.f32 0.0, %v958
        %960 = vmatmul.f32.gmra.mxu0 %v753
        %v961 = vpop.f32.mrf.mxu0
        %v962 = vadd.f32 0.0, %v961
        %963 = vmatmul.f32.gmra.mxu0 %v759
        %v964 = vpop.f32.mrf.mxu0
        %v965 = vadd.f32 0.0, %v964
        %966 = vdwg.mxu0
        %967 = vmatpush.msra.mxu0 %v843
        %968 = vmatpush.msra.mxu0 %v841
        %969 = vmatpush.msra.mxu0 %v839
        %970 = vmatpush.msra.mxu0 %v837
        %971 = vmatpush.msra.mxu0 %v835
        %972 = vmatpush.msra.mxu0 %v833
        %973 = vmatpush.msra.mxu0 %v831
        %974 = vmatpush.msra.mxu0 %v829
        %975 = vmatpush.msra.mxu0 %v827
        %976 = vmatpush.msra.mxu0 %v825
        %977 = vmatpush.msra.mxu0 %v823
        %978 = vmatpush.msra.mxu0 %v821
        %979 = vmatpush.msra.mxu0 %v819
        %980 = vmatpush.msra.mxu0 %v817
        %981 = vmatpush.msra.mxu0 %v815
        %982 = vmatpush.msra.mxu0 %v813
        %983 = vmatmul.f32.gmra.mxu0 %v720
        %v984 = vpop.f32.mrf.mxu0
        %v985 = vadd.f32 %v944, %v984
        %986 = vmatmul.f32.gmra.mxu0 %v726
        %v987 = vpop.f32.mrf.mxu0
        %v988 = vadd.f32 %v947, %v987
        %989 = vmatmul.f32.gmra.mxu0 %v732
        %v990 = vpop.f32.mrf.mxu0
        %v991 = vadd.f32 %v950, %v990
        %992 = vmatmul.f32.gmra.mxu0 %v738
        %v993 = vpop.f32.mrf.mxu0
        %v994 = vadd.f32 %v953, %v993
        %995 = vmatmul.f32.gmra.mxu0 %v744
        %v996 = vpop.f32.mrf.mxu0
        %v997 = vadd.f32 %v956, %v996
        %998 = vmatmul.f32.gmra.mxu0 %v750
        %v999 = vpop.f32.mrf.mxu0
        %v1000 = vadd.f32 %v959, %v999
        %1001 = vmatmul.f32.gmra.mxu0 %v756
        %v1002 = vpop.f32.mrf.mxu0
        %v1003 = vadd.f32 %v962, %v1002
        %1004 = vmatmul.f32.gmra.mxu0 %v762
        %v1005 = vpop.f32.mrf.mxu0
        %v1006 = vadd.f32 %v965, %v1005
        %1007 = vdwg.mxu0
        %1008 = vmatpush.msra.mxu0 %v616
        %1009 = vmatpush.msra.mxu0 %v614
        %1010 = vmatpush.msra.mxu0 %v612
        %1011 = vmatpush.msra.mxu0 %v610
        %1012 = vmatpush.msra.mxu0 %v608
        %1013 = vmatpush.msra.mxu0 %v606
        %1014 = vmatpush.msra.mxu0 %v604
        %1015 = vmatpush.msra.mxu0 %v602
        %1016 = vmatpush.msra.mxu0 %v600
        %1017 = vmatpush.msra.mxu0 %v598
        %1018 = vmatpush.msra.mxu0 %v596
        %1019 = vmatpush.msra.mxu0 %v594
        %1020 = vmatpush.msra.mxu0 %v592
        %1021 = vmatpush.msra.mxu0 %v590
        %1022 = vmatpush.msra.mxu0 %v588
        %1023 = vmatpush.msra.mxu0 %v586
        %1024 = vmatmul.f32.gmra.mxu0 %v570
        %v1025 = vpop.f32.mrf.mxu0
        %v1026 = vadd.f32 %v903, %v1025
        %1027 = vmatmul.f32.gmra.mxu0 %v572
        %v1028 = vpop.f32.mrf.mxu0
        %v1029 = vadd.f32 %v906, %v1028
        %1030 = vmatmul.f32.gmra.mxu0 %v574
        %v1031 = vpop.f32.mrf.mxu0
        %v1032 = vadd.f32 %v909, %v1031
        %1033 = vmatmul.f32.gmra.mxu0 %v576
        %v1034 = vpop.f32.mrf.mxu0
        %v1035 = vadd.f32 %v912, %v1034
        %1036 = vmatmul.f32.gmra.mxu0 %v578
        %v1037 = vpop.f32.mrf.mxu0
        %v1038 = vadd.f32 %v915, %v1037
        %1039 = vmatmul.f32.gmra.mxu0 %v580
        %v1040 = vpop.f32.mrf.mxu0
        %v1041 = vadd.f32 %v918, %v1040
        %1042 = vmatmul.f32.gmra.mxu0 %v582
        %v1043 = vpop.f32.mrf.mxu0
        %v1044 = vadd.f32 %v921, %v1043
        %1045 = vmatmul.f32.gmra.mxu0 %v584
        %v1046 = vpop.f32.mrf.mxu0
        %v1047 = vadd.f32 %v924, %v1046
        %1048 = vdwg.mxu0
        %1049 = vmatpush.msra.mxu0 %v648
        %1050 = vmatpush.msra.mxu0 %v646
        %1051 = vmatpush.msra.mxu0 %v644
        %1052 = vmatpush.msra.mxu0 %v642
        %1053 = vmatpush.msra.mxu0 %v640
        %1054 = vmatpush.msra.mxu0 %v638
        %1055 = vmatpush.msra.mxu0 %v636
        %1056 = vmatpush.msra.mxu0 %v634
        %1057 = vmatpush.msra.mxu0 %v632
        %1058 = vmatpush.msra.mxu0 %v630
        %1059 = vmatpush.msra.mxu0 %v628
        %1060 = vmatpush.msra.mxu0 %v626
        %1061 = vmatpush.msra.mxu0 %v624
        %1062 = vmatpush.msra.mxu0 %v622
        %1063 = vmatpush.msra.mxu0 %v620
        %1064 = vmatpush.msra.mxu0 %v618
        %1065 = vmatmul.f32.gmra.mxu0 %v571
        %v1066 = vpop.f32.mrf.mxu0
        %v1067 = vadd.f32 %v1026, %v1066
        %1068 = vmatmul.f32.gmra.mxu0 %v573
        %v1069 = vpop.f32.mrf.mxu0
        %v1070 = vadd.f32 %v1029, %v1069
        %1071 = vmatmul.f32.gmra.mxu0 %v575
        %v1072 = vpop.f32.mrf.mxu0
        %v1073 = vadd.f32 %v1032, %v1072
        %1074 = vmatmul.f32.gmra.mxu0 %v577
        %v1075 = vpop.f32.mrf.mxu0
        %v1076 = vadd.f32 %v1035, %v1075
        %1077 = vmatmul.f32.gmra.mxu0 %v579
        %v1078 = vpop.f32.mrf.mxu0
        %v1079 = vadd.f32 %v1038, %v1078
        %1080 = vmatmul.f32.gmra.mxu0 %v581
        %v1081 = vpop.f32.mrf.mxu0
        %v1082 = vadd.f32 %v1041, %v1081
        %1083 = vmatmul.f32.gmra.mxu0 %v583
        %v1084 = vpop.f32.mrf.mxu0
        %v1085 = vadd.f32 %v1044, %v1084
        %1086 = vmatmul.f32.gmra.mxu0 %v585
        %v1087 = vpop.f32.mrf.mxu0
        %v1088 = vadd.f32 %v1047, %v1087
        %1089 = vdwg.mxu0
        %1090 = vmatpush.msra.mxu0 %v617
        %1091 = vmatpush.msra.mxu0 %v615
        %1092 = vmatpush.msra.mxu0 %v613
        %1093 = vmatpush.msra.mxu0 %v611
        %1094 = vmatpush.msra.mxu0 %v609
        %1095 = vmatpush.msra.mxu0 %v607
        %1096 = vmatpush.msra.mxu0 %v605
        %1097 = vmatpush.msra.mxu0 %v603
        %1098 = vmatpush.msra.mxu0 %v601
        %1099 = vmatpush.msra.mxu0 %v599
        %1100 = vmatpush.msra.mxu0 %v597
        %1101 = vmatpush.msra.mxu0 %v595
        %1102 = vmatpush.msra.mxu0 %v593
        %1103 = vmatpush.msra.mxu0 %v591
        %1104 = vmatpush.msra.mxu0 %v589
        %1105 = vmatpush.msra.mxu0 %v587
        %1106 = vmatmul.f32.gmra.mxu0 %v570
        %v1107 = vpop.f32.mrf.mxu0
        %v1108 = vadd.f32 %v985, %v1107
        %1109 = vmatmul.f32.gmra.mxu0 %v572
        %v1110 = vpop.f32.mrf.mxu0
        %v1111 = vadd.f32 %v988, %v1110
        %1112 = vmatmul.f32.gmra.mxu0 %v574
        %v1113 = vpop.f32.mrf.mxu0
        %v1114 = vadd.f32 %v991, %v1113
        %1115 = vmatmul.f32.gmra.mxu0 %v576
        %v1116 = vpop.f32.mrf.mxu0
        %v1117 = vadd.f32 %v994, %v1116
        %1118 = vmatmul.f32.gmra.mxu0 %v578
        %v1119 = vpop.f32.mrf.mxu0
        %v1120 = vadd.f32 %v997, %v1119
        %1121 = vmatmul.f32.gmra.mxu0 %v580
        %v1122 = vpop.f32.mrf.mxu0
        %v1123 = vadd.f32 %v1000, %v1122
        %1124 = vmatmul.f32.gmra.mxu0 %v582
        %v1125 = vpop.f32.mrf.mxu0
        %v1126 = vadd.f32 %v1003, %v1125
        %1127 = vmatmul.f32.gmra.mxu0 %v584
        %v1128 = vpop.f32.mrf.mxu0
        %v1129 = vadd.f32 %v1006, %v1128
        %1130 = vdwg.mxu0
        %1131 = vmatpush.msra.mxu0 %v649
        %1132 = vmatpush.msra.mxu0 %v647
        %1133 = vmatpush.msra.mxu0 %v645
        %1134 = vmatpush.msra.mxu0 %v643
        %1135 = vmatpush.msra.mxu0 %v641
        %1136 = vmatpush.msra.mxu0 %v639
        %1137 = vmatpush.msra.mxu0 %v637
        %1138 = vmatpush.msra.mxu0 %v635
        %1139 = vmatpush.msra.mxu0 %v633
        %1140 = vmatpush.msra.mxu0 %v631
        %1141 = vmatpush.msra.mxu0 %v629
        %1142 = vmatpush.msra.mxu0 %v627
        %1143 = vmatpush.msra.mxu0 %v625
        %1144 = vmatpush.msra.mxu0 %v623
        %1145 = vmatpush.msra.mxu0 %v621
        %1146 = vmatpush.msra.mxu0 %v619
        %1147 = vmatmul.f32.gmra.mxu0 %v571
        %v1148 = vpop.f32.mrf.mxu0
        %v1149 = vadd.f32 %v1108, %v1148
        %1150 = vmatmul.f32.gmra.mxu0 %v573
        %v1151 = vpop.f32.mrf.mxu0
        %v1152 = vadd.f32 %v1111, %v1151
        %1153 = vmatmul.f32.gmra.mxu0 %v575
        %v1154 = vpop.f32.mrf.mxu0
        %v1155 = vadd.f32 %v1114, %v1154
        %1156 = vmatmul.f32.gmra.mxu0 %v577
        %v1157 = vpop.f32.mrf.mxu0
        %v1158 = vadd.f32 %v1117, %v1157
        %1159 = vmatmul.f32.gmra.mxu0 %v579
        %v1160 = vpop.f32.mrf.mxu0
        %v1161 = vadd.f32 %v1120, %v1160
        %1162 = vmatmul.f32.gmra.mxu0 %v581
        %v1163 = vpop.f32.mrf.mxu0
        %v1164 = vadd.f32 %v1123, %v1163
        %1165 = vmatmul.f32.gmra.mxu0 %v583
        %v1166 = vpop.f32.mrf.mxu0
        %v1167 = vadd.f32 %v1126, %v1166
        %1168 = vmatmul.f32.gmra.mxu0 %v585
        %v1169 = vpop.f32.mrf.mxu0
        %v1170 = vadd.f32 %v1129, %v1169
        %1171 = vdwg.mxu0
        %v1172 = vld [vmem:[#allocation2] sm:$0xfc]
        %v1173 = vld [vmem:[#allocation2 + $0x8] sm:$0xfc]
        %v1174 = vld [vmem:[#allocation2 + $0x10] sm:$0x3]
        %v1175 = vld [vmem:[#allocation2 + $0x18] sm:$0x3]
        %v1176 = vld [vmem:[#allocation2 + $0x20] sm:$0xfc]
        %v1177 = vld [vmem:[#allocation2 + $0x28] sm:$0xfc]
        %v1178 = vld [vmem:[#allocation2 + $0x30] sm:$0x3]
        %v1179 = vld [vmem:[#allocation2 + $0x38] sm:$0x3]
        %v1180 = vld [vmem:[#allocation2 + $0x40] sm:$0xfc]
        %v1181 = vld [vmem:[#allocation2 + $0x48] sm:$0xfc]
        %v1182 = vld [vmem:[#allocation2 + $0x50] sm:$0x3]
        %v1183 = vld [vmem:[#allocation2 + $0x58] sm:$0x3]
        %v1184 = vld [vmem:[#allocation2 + $0x60] sm:$0xfc]
        %v1185 = vld [vmem:[#allocation2 + $0x68] sm:$0xfc]
        %v1186 = vld [vmem:[#allocation2 + $0x70] sm:$0x3]
        %v1187 = vld [vmem:[#allocation2 + $0x78] sm:$0x3]
        %v1188 = vld [vmem:[#allocation2 + $0x80] sm:$0xfc]
        %v1189 = vld [vmem:[#allocation2 + $0x88] sm:$0xfc]
        %v1190 = vld [vmem:[#allocation2 + $0x90] sm:$0x3]
        %v1191 = vld [vmem:[#allocation2 + $0x98] sm:$0x3]
        %v1192 = vld [vmem:[#allocation2 + $0xa0] sm:$0xfc]
        %v1193 = vld [vmem:[#allocation2 + $0xa8] sm:$0xfc]
        %v1194 = vld [vmem:[#allocation2 + $0xb0] sm:$0x3]
        %v1195 = vld [vmem:[#allocation2 + $0xb8] sm:$0x3]
        %v1196 = vld [vmem:[#allocation2 + $0xc0] sm:$0xfc]
        %v1197 = vld [vmem:[#allocation2 + $0xc8] sm:$0xfc]
        %v1198 = vld [vmem:[#allocation2 + $0xd0] sm:$0x3]
        %v1199 = vld [vmem:[#allocation2 + $0xd8] sm:$0x3]
        %v1200 = vld [vmem:[#allocation2 + $0xe0] sm:$0xfc]
        %v1201 = vld [vmem:[#allocation2 + $0xe8] sm:$0xfc]
        %v1202 = vld [vmem:[#allocation2 + $0xf0] sm:$0x3]
        %v1203 = vld [vmem:[#allocation2 + $0xf8] sm:$0x3]
        %vm1236 = vcmask 1045504
        %v1237 = vrot.slane %v1172, 2
        %v1238 = vrot.slane %v1174, 2
        %v1239 = vsel %vm1236, %v1237, %v1238
        %v1240 = vrot.slane %v1173, 2
        %v1241 = vrot.slane %v1175, 2
        %v1242 = vsel %vm1236, %v1240, %v1241
        %v1243 = vrot.slane %v1176, 2
        %v1244 = vrot.slane %v1178, 2
        %v1245 = vsel %vm1236, %v1243, %v1244
        %v1246 = vrot.slane %v1177, 2
        %v1247 = vrot.slane %v1179, 2
        %v1248 = vsel %vm1236, %v1246, %v1247
        %v1249 = vrot.slane %v1180, 2
        %v1250 = vrot.slane %v1182, 2
        %v1251 = vsel %vm1236, %v1249, %v1250
        %v1252 = vrot.slane %v1181, 2
        %v1253 = vrot.slane %v1183, 2
        %v1254 = vsel %vm1236, %v1252, %v1253
        %v1255 = vrot.slane %v1184, 2
        %v1256 = vrot.slane %v1186, 2
        %v1257 = vsel %vm1236, %v1255, %v1256
        %v1258 = vrot.slane %v1185, 2
        %v1259 = vrot.slane %v1187, 2
        %v1260 = vsel %vm1236, %v1258, %v1259
        %v1261 = vrot.slane %v1188, 2
        %v1262 = vrot.slane %v1190, 2
        %v1263 = vsel %vm1236, %v1261, %v1262
        %v1264 = vrot.slane %v1189, 2
        %v1265 = vrot.slane %v1191, 2
        %v1266 = vsel %vm1236, %v1264, %v1265
        %v1267 = vrot.slane %v1192, 2
        %v1268 = vrot.slane %v1194, 2
        %v1269 = vsel %vm1236, %v1267, %v1268
        %v1270 = vrot.slane %v1193, 2
        %v1271 = vrot.slane %v1195, 2
        %v1272 = vsel %vm1236, %v1270, %v1271
        %v1273 = vrot.slane %v1196, 2
        %v1274 = vrot.slane %v1198, 2
        %v1275 = vsel %vm1236, %v1273, %v1274
        %v1276 = vrot.slane %v1197, 2
        %v1277 = vrot.slane %v1199, 2
        %v1278 = vsel %vm1236, %v1276, %v1277
        %v1279 = vrot.slane %v1200, 2
        %v1280 = vrot.slane %v1202, 2
        %v1281 = vsel %vm1236, %v1279, %v1280
        %v1282 = vrot.slane %v1201, 2
        %v1283 = vrot.slane %v1203, 2
        %v1284 = vsel %vm1236, %v1282, %v1283
        %s1301 = scalar_lea.vmem [#allocation7], 1024
        %v1302 = vld [vmem:[%s1301] sm:$0xff]
        %v1303 = vld [vmem:[%s1301 + $0x8] sm:$0xff]
        %v1304 = vld [vmem:[%s1301 + $0x10] sm:$0xff]
        %v1305 = vld [vmem:[%s1301 + $0x18] sm:$0xff]
        %v1306 = vld [vmem:[%s1301 + $0x20] sm:$0xff]
        %v1307 = vld [vmem:[%s1301 + $0x28] sm:$0xff]
        %v1308 = vld [vmem:[%s1301 + $0x30] sm:$0xff]
        %v1309 = vld [vmem:[%s1301 + $0x38] sm:$0xff]
        %v1310 = vld [vmem:[%s1301 + $0x40] sm:$0xff]
        %v1311 = vld [vmem:[%s1301 + $0x48] sm:$0xff]
        %v1312 = vld [vmem:[%s1301 + $0x50] sm:$0xff]
        %v1313 = vld [vmem:[%s1301 + $0x58] sm:$0xff]
        %v1314 = vld [vmem:[%s1301 + $0x60] sm:$0xff]
        %v1315 = vld [vmem:[%s1301 + $0x68] sm:$0xff]
        %v1316 = vld [vmem:[%s1301 + $0x70] sm:$0xff]
        %v1317 = vld [vmem:[%s1301 + $0x78] sm:$0xff]
        %v1318 = vld [vmem:[%s1301 + $0x80] sm:$0xff]
        %v1319 = vld [vmem:[%s1301 + $0x88] sm:$0xff]
        %v1320 = vld [vmem:[%s1301 + $0x90] sm:$0xff]
        %v1321 = vld [vmem:[%s1301 + $0x98] sm:$0xff]
        %v1322 = vld [vmem:[%s1301 + $0xa0] sm:$0xff]
        %v1323 = vld [vmem:[%s1301 + $0xa8] sm:$0xff]
        %v1324 = vld [vmem:[%s1301 + $0xb0] sm:$0xff]
        %v1325 = vld [vmem:[%s1301 + $0xb8] sm:$0xff]
        %v1326 = vld [vmem:[%s1301 + $0xc0] sm:$0xff]
        %v1327 = vld [vmem:[%s1301 + $0xc8] sm:$0xff]
        %v1328 = vld [vmem:[%s1301 + $0xd0] sm:$0xff]
        %v1329 = vld [vmem:[%s1301 + $0xd8] sm:$0xff]
        %v1330 = vld [vmem:[%s1301 + $0xe0] sm:$0xff]
        %v1331 = vld [vmem:[%s1301 + $0xe8] sm:$0xff]
        %v1332 = vld [vmem:[%s1301 + $0xf0] sm:$0xff]
        %v1333 = vld [vmem:[%s1301 + $0xf8] sm:$0xff]
        %v1334 = vld [vmem:[%s1301 + $0x100] sm:$0xff]
        %v1335 = vld [vmem:[%s1301 + $0x108] sm:$0xff]
        %v1336 = vld [vmem:[%s1301 + $0x110] sm:$0xff]
        %v1337 = vld [vmem:[%s1301 + $0x118] sm:$0xff]
        %v1338 = vld [vmem:[%s1301 + $0x120] sm:$0xff]
        %v1339 = vld [vmem:[%s1301 + $0x128] sm:$0xff]
        %v1340 = vld [vmem:[%s1301 + $0x130] sm:$0xff]
        %v1341 = vld [vmem:[%s1301 + $0x138] sm:$0xff]
        %v1342 = vld [vmem:[%s1301 + $0x140] sm:$0xff]
        %v1343 = vld [vmem:[%s1301 + $0x148] sm:$0xff]
        %v1344 = vld [vmem:[%s1301 + $0x150] sm:$0xff]
        %v1345 = vld [vmem:[%s1301 + $0x158] sm:$0xff]
        %v1346 = vld [vmem:[%s1301 + $0x160] sm:$0xff]
        %v1347 = vld [vmem:[%s1301 + $0x168] sm:$0xff]
        %v1348 = vld [vmem:[%s1301 + $0x170] sm:$0xff]
        %v1349 = vld [vmem:[%s1301 + $0x178] sm:$0xff]
        %v1350 = vld [vmem:[%s1301 + $0x180] sm:$0xff]
        %v1351 = vld [vmem:[%s1301 + $0x188] sm:$0xff]
        %v1352 = vld [vmem:[%s1301 + $0x190] sm:$0xff]
        %v1353 = vld [vmem:[%s1301 + $0x198] sm:$0xff]
        %v1354 = vld [vmem:[%s1301 + $0x1a0] sm:$0xff]
        %v1355 = vld [vmem:[%s1301 + $0x1a8] sm:$0xff]
        %v1356 = vld [vmem:[%s1301 + $0x1b0] sm:$0xff]
        %v1357 = vld [vmem:[%s1301 + $0x1b8] sm:$0xff]
        %v1358 = vld [vmem:[%s1301 + $0x1c0] sm:$0xff]
        %v1359 = vld [vmem:[%s1301 + $0x1c8] sm:$0xff]
        %v1360 = vld [vmem:[%s1301 + $0x1d0] sm:$0xff]
        %v1361 = vld [vmem:[%s1301 + $0x1d8] sm:$0xff]
        %v1362 = vld [vmem:[%s1301 + $0x1e0] sm:$0xff]
        %v1363 = vld [vmem:[%s1301 + $0x1e8] sm:$0xff]
        %v1364 = vld [vmem:[%s1301 + $0x1f0] sm:$0xff]
        %v1365 = vld [vmem:[%s1301 + $0x1f8] sm:$0xff]
        %1366 = vmatpush.msra.mxu0 %v1332
        %1367 = vmatpush.msra.mxu0 %v1330
        %1368 = vmatpush.msra.mxu0 %v1328
        %1369 = vmatpush.msra.mxu0 %v1326
        %1370 = vmatpush.msra.mxu0 %v1324
        %1371 = vmatpush.msra.mxu0 %v1322
        %1372 = vmatpush.msra.mxu0 %v1320
        %1373 = vmatpush.msra.mxu0 %v1318
        %1374 = vmatpush.msra.mxu0 %v1316
        %1375 = vmatpush.msra.mxu0 %v1314
        %1376 = vmatpush.msra.mxu0 %v1312
        %1377 = vmatpush.msra.mxu0 %v1310
        %1378 = vmatpush.msra.mxu0 %v1308
        %1379 = vmatpush.msra.mxu0 %v1306
        %1380 = vmatpush.msra.mxu0 %v1304
        %1381 = vmatpush.msra.mxu0 %v1302
        %1382 = vmatmul.f32.gmra.mxu0 %v1239
        %v1383 = vpop.f32.mrf.mxu0
        %v1384 = vadd.f32 0.0, %v1383
        %1385 = vmatmul.f32.gmra.mxu0 %v1245
        %v1386 = vpop.f32.mrf.mxu0
        %v1387 = vadd.f32 0.0, %v1386
        %1388 = vmatmul.f32.gmra.mxu0 %v1251
        %v1389 = vpop.f32.mrf.mxu0
        %v1390 = vadd.f32 0.0, %v1389
        %1391 = vmatmul.f32.gmra.mxu0 %v1257
        %v1392 = vpop.f32.mrf.mxu0
        %v1393 = vadd.f32 0.0, %v1392
        %1394 = vmatmul.f32.gmra.mxu0 %v1263
        %v1395 = vpop.f32.mrf.mxu0
        %v1396 = vadd.f32 0.0, %v1395
        %1397 = vmatmul.f32.gmra.mxu0 %v1269
        %v1398 = vpop.f32.mrf.mxu0
        %v1399 = vadd.f32 0.0, %v1398
        %1400 = vmatmul.f32.gmra.mxu0 %v1275
        %v1401 = vpop.f32.mrf.mxu0
        %v1402 = vadd.f32 0.0, %v1401
        %1403 = vmatmul.f32.gmra.mxu0 %v1281
        %v1404 = vpop.f32.mrf.mxu0
        %v1405 = vadd.f32 0.0, %v1404
        %1406 = vdwg.mxu0
        %1407 = vmatpush.msra.mxu0 %v1364
        %1408 = vmatpush.msra.mxu0 %v1362
        %1409 = vmatpush.msra.mxu0 %v1360
        %1410 = vmatpush.msra.mxu0 %v1358
        %1411 = vmatpush.msra.mxu0 %v1356
        %1412 = vmatpush.msra.mxu0 %v1354
        %1413 = vmatpush.msra.mxu0 %v1352
        %1414 = vmatpush.msra.mxu0 %v1350
        %1415 = vmatpush.msra.mxu0 %v1348
        %1416 = vmatpush.msra.mxu0 %v1346
        %1417 = vmatpush.msra.mxu0 %v1344
        %1418 = vmatpush.msra.mxu0 %v1342
        %1419 = vmatpush.msra.mxu0 %v1340
        %1420 = vmatpush.msra.mxu0 %v1338
        %1421 = vmatpush.msra.mxu0 %v1336
        %1422 = vmatpush.msra.mxu0 %v1334
        %1423 = vmatmul.f32.gmra.mxu0 %v1242
        %v1424 = vpop.f32.mrf.mxu0
        %v1425 = vadd.f32 %v1384, %v1424
        %1426 = vmatmul.f32.gmra.mxu0 %v1248
        %v1427 = vpop.f32.mrf.mxu0
        %v1428 = vadd.f32 %v1387, %v1427
        %1429 = vmatmul.f32.gmra.mxu0 %v1254
        %v1430 = vpop.f32.mrf.mxu0
        %v1431 = vadd.f32 %v1390, %v1430
        %1432 = vmatmul.f32.gmra.mxu0 %v1260
        %v1433 = vpop.f32.mrf.mxu0
        %v1434 = vadd.f32 %v1393, %v1433
        %1435 = vmatmul.f32.gmra.mxu0 %v1266
        %v1436 = vpop.f32.mrf.mxu0
        %v1437 = vadd.f32 %v1396, %v1436
        %1438 = vmatmul.f32.gmra.mxu0 %v1272
        %v1439 = vpop.f32.mrf.mxu0
        %v1440 = vadd.f32 %v1399, %v1439
        %1441 = vmatmul.f32.gmra.mxu0 %v1278
        %v1442 = vpop.f32.mrf.mxu0
        %v1443 = vadd.f32 %v1402, %v1442
        %1444 = vmatmul.f32.gmra.mxu0 %v1284
        %v1445 = vpop.f32.mrf.mxu0
        %v1446 = vadd.f32 %v1405, %v1445
        %1447 = vdwg.mxu0
        %1448 = vmatpush.msra.mxu0 %v1333
        %1449 = vmatpush.msra.mxu0 %v1331
        %1450 = vmatpush.msra.mxu0 %v1329
        %1451 = vmatpush.msra.mxu0 %v1327
        %1452 = vmatpush.msra.mxu0 %v1325
        %1453 = vmatpush.msra.mxu0 %v1323
        %1454 = vmatpush.msra.mxu0 %v1321
        %1455 = vmatpush.msra.mxu0 %v1319
        %1456 = vmatpush.msra.mxu0 %v1317
        %1457 = vmatpush.msra.mxu0 %v1315
        %1458 = vmatpush.msra.mxu0 %v1313
        %1459 = vmatpush.msra.mxu0 %v1311
        %1460 = vmatpush.msra.mxu0 %v1309
        %1461 = vmatpush.msra.mxu0 %v1307
        %1462 = vmatpush.msra.mxu0 %v1305
        %1463 = vmatpush.msra.mxu0 %v1303
        %1464 = vmatmul.f32.gmra.mxu0 %v1239
        %v1465 = vpop.f32.mrf.mxu0
        %v1466 = vadd.f32 0.0, %v1465
        %1467 = vmatmul.f32.gmra.mxu0 %v1245
        %v1468 = vpop.f32.mrf.mxu0
        %v1469 = vadd.f32 0.0, %v1468
        %1470 = vmatmul.f32.gmra.mxu0 %v1251
        %v1471 = vpop.f32.mrf.mxu0
        %v1472 = vadd.f32 0.0, %v1471
        %1473 = vmatmul.f32.gmra.mxu0 %v1257
        %v1474 = vpop.f32.mrf.mxu0
        %v1475 = vadd.f32 0.0, %v1474
        %1476 = vmatmul.f32.gmra.mxu0 %v1263
        %v1477 = vpop.f32.mrf.mxu0
        %v1478 = vadd.f32 0.0, %v1477
        %1479 = vmatmul.f32.gmra.mxu0 %v1269
        %v1480 = vpop.f32.mrf.mxu0
        %v1481 = vadd.f32 0.0, %v1480
        %1482 = vmatmul.f32.gmra.mxu0 %v1275
        %v1483 = vpop.f32.mrf.mxu0
        %v1484 = vadd.f32 0.0, %v1483
        %1485 = vmatmul.f32.gmra.mxu0 %v1281
        %v1486 = vpop.f32.mrf.mxu0
        %v1487 = vadd.f32 0.0, %v1486
        %1488 = vdwg.mxu0
        %1489 = vmatpush.msra.mxu0 %v1365
        %1490 = vmatpush.msra.mxu0 %v1363
        %1491 = vmatpush.msra.mxu0 %v1361
        %1492 = vmatpush.msra.mxu0 %v1359
        %1493 = vmatpush.msra.mxu0 %v1357
        %1494 = vmatpush.msra.mxu0 %v1355
        %1495 = vmatpush.msra.mxu0 %v1353
        %1496 = vmatpush.msra.mxu0 %v1351
        %1497 = vmatpush.msra.mxu0 %v1349
        %1498 = vmatpush.msra.mxu0 %v1347
        %1499 = vmatpush.msra.mxu0 %v1345
        %1500 = vmatpush.msra.mxu0 %v1343
        %1501 = vmatpush.msra.mxu0 %v1341
        %1502 = vmatpush.msra.mxu0 %v1339
        %1503 = vmatpush.msra.mxu0 %v1337
        %1504 = vmatpush.msra.mxu0 %v1335
        %1505 = vmatmul.f32.gmra.mxu0 %v1242
        %v1506 = vpop.f32.mrf.mxu0
        %v1507 = vadd.f32 %v1466, %v1506
        %1508 = vmatmul.f32.gmra.mxu0 %v1248
        %v1509 = vpop.f32.mrf.mxu0
        %v1510 = vadd.f32 %v1469, %v1509
        %1511 = vmatmul.f32.gmra.mxu0 %v1254
        %v1512 = vpop.f32.mrf.mxu0
        %v1513 = vadd.f32 %v1472, %v1512
        %1514 = vmatmul.f32.gmra.mxu0 %v1260
        %v1515 = vpop.f32.mrf.mxu0
        %v1516 = vadd.f32 %v1475, %v1515
        %1517 = vmatmul.f32.gmra.mxu0 %v1266
        %v1518 = vpop.f32.mrf.mxu0
        %v1519 = vadd.f32 %v1478, %v1518
        %1520 = vmatmul.f32.gmra.mxu0 %v1272
        %v1521 = vpop.f32.mrf.mxu0
        %v1522 = vadd.f32 %v1481, %v1521
        %1523 = vmatmul.f32.gmra.mxu0 %v1278
        %v1524 = vpop.f32.mrf.mxu0
        %v1525 = vadd.f32 %v1484, %v1524
        %1526 = vmatmul.f32.gmra.mxu0 %v1284
        %v1527 = vpop.f32.mrf.mxu0
        %v1528 = vadd.f32 %v1487, %v1527
        %1529 = vdwg.mxu0
        %v1530 = vadd.f32 %v1067, %v1425
        %v1531 = vadd.f32 %v1149, %v1507
        %v1532 = vadd.f32 %v1070, %v1428
        %v1533 = vadd.f32 %v1152, %v1510
        %v1534 = vadd.f32 %v1073, %v1431
        %v1535 = vadd.f32 %v1155, %v1513
        %v1536 = vadd.f32 %v1076, %v1434
        %v1537 = vadd.f32 %v1158, %v1516
        %v1538 = vadd.f32 %v1079, %v1437
        %v1539 = vadd.f32 %v1161, %v1519
        %v1540 = vadd.f32 %v1082, %v1440
        %v1541 = vadd.f32 %v1164, %v1522
        %v1542 = vadd.f32 %v1085, %v1443
        %v1543 = vadd.f32 %v1167, %v1525
        %v1544 = vadd.f32 %v1088, %v1446
        %v1545 = vadd.f32 %v1170, %v1528
        %v1546 = vld [vmem:[%s358] sm:$0xff]
        %v1547 = vld [vmem:[%s358 + $0x8] sm:$0xff]
        %v1548 = vld [vmem:[%s358 + $0x20] sm:$0xff]
        %v1549 = vld [vmem:[%s358 + $0x28] sm:$0xff]
        %v1550 = vld [vmem:[%s358 + $0x40] sm:$0xff]
        %v1551 = vld [vmem:[%s358 + $0x48] sm:$0xff]
        %v1552 = vld [vmem:[%s358 + $0x60] sm:$0xff]
        %v1553 = vld [vmem:[%s358 + $0x68] sm:$0xff]
        %v1554 = vld [vmem:[%s358 + $0x80] sm:$0xff]
        %v1555 = vld [vmem:[%s358 + $0x88] sm:$0xff]
        %v1556 = vld [vmem:[%s358 + $0xa0] sm:$0xff]
        %v1557 = vld [vmem:[%s358 + $0xa8] sm:$0xff]
        %v1558 = vld [vmem:[%s358 + $0xc0] sm:$0xff]
        %v1559 = vld [vmem:[%s358 + $0xc8] sm:$0xff]
        %v1560 = vld [vmem:[%s358 + $0xe0] sm:$0xff]
        %v1561 = vld [vmem:[%s358 + $0xe8] sm:$0xff]
        %s1562 = scalar_lea.vmem [#allocation7], 1536
        %v1563 = vld [vmem:[%s1562] sm:$0xff]
        %v1564 = vld [vmem:[%s1562 + $0x8] sm:$0xff]
        %v1565 = vld [vmem:[%s1562 + $0x10] sm:$0xff]
        %v1566 = vld [vmem:[%s1562 + $0x18] sm:$0xff]
        %v1567 = vld [vmem:[%s1562 + $0x20] sm:$0xff]
        %v1568 = vld [vmem:[%s1562 + $0x28] sm:$0xff]
        %v1569 = vld [vmem:[%s1562 + $0x30] sm:$0xff]
        %v1570 = vld [vmem:[%s1562 + $0x38] sm:$0xff]
        %v1571 = vld [vmem:[%s1562 + $0x40] sm:$0xff]
        %v1572 = vld [vmem:[%s1562 + $0x48] sm:$0xff]
        %v1573 = vld [vmem:[%s1562 + $0x50] sm:$0xff]
        %v1574 = vld [vmem:[%s1562 + $0x58] sm:$0xff]
        %v1575 = vld [vmem:[%s1562 + $0x60] sm:$0xff]
        %v1576 = vld [vmem:[%s1562 + $0x68] sm:$0xff]
        %v1577 = vld [vmem:[%s1562 + $0x70] sm:$0xff]
        %v1578 = vld [vmem:[%s1562 + $0x78] sm:$0xff]
        %v1579 = vld [vmem:[%s1562 + $0x80] sm:$0xff]
        %v1580 = vld [vmem:[%s1562 + $0x88] sm:$0xff]
        %v1581 = vld [vmem:[%s1562 + $0x90] sm:$0xff]
        %v1582 = vld [vmem:[%s1562 + $0x98] sm:$0xff]
        %v1583 = vld [vmem:[%s1562 + $0xa0] sm:$0xff]
        %v1584 = vld [vmem:[%s1562 + $0xa8] sm:$0xff]
        %v1585 = vld [vmem:[%s1562 + $0xb0] sm:$0xff]
        %v1586 = vld [vmem:[%s1562 + $0xb8] sm:$0xff]
        %v1587 = vld [vmem:[%s1562 + $0xc0] sm:$0xff]
        %v1588 = vld [vmem:[%s1562 + $0xc8] sm:$0xff]
        %v1589 = vld [vmem:[%s1562 + $0xd0] sm:$0xff]
        %v1590 = vld [vmem:[%s1562 + $0xd8] sm:$0xff]
        %v1591 = vld [vmem:[%s1562 + $0xe0] sm:$0xff]
        %v1592 = vld [vmem:[%s1562 + $0xe8] sm:$0xff]
        %v1593 = vld [vmem:[%s1562 + $0xf0] sm:$0xff]
        %v1594 = vld [vmem:[%s1562 + $0xf8] sm:$0xff]
        %v1595 = vld [vmem:[%s1562 + $0x100] sm:$0xff]
        %v1596 = vld [vmem:[%s1562 + $0x108] sm:$0xff]
        %v1597 = vld [vmem:[%s1562 + $0x110] sm:$0xff]
        %v1598 = vld [vmem:[%s1562 + $0x118] sm:$0xff]
        %v1599 = vld [vmem:[%s1562 + $0x120] sm:$0xff]
        %v1600 = vld [vmem:[%s1562 + $0x128] sm:$0xff]
        %v1601 = vld [vmem:[%s1562 + $0x130] sm:$0xff]
        %v1602 = vld [vmem:[%s1562 + $0x138] sm:$0xff]
        %v1603 = vld [vmem:[%s1562 + $0x140] sm:$0xff]
        %v1604 = vld [vmem:[%s1562 + $0x148] sm:$0xff]
        %v1605 = vld [vmem:[%s1562 + $0x150] sm:$0xff]
        %v1606 = vld [vmem:[%s1562 + $0x158] sm:$0xff]
        %v1607 = vld [vmem:[%s1562 + $0x160] sm:$0xff]
        %v1608 = vld [vmem:[%s1562 + $0x168] sm:$0xff]
        %v1609 = vld [vmem:[%s1562 + $0x170] sm:$0xff]
        %v1610 = vld [vmem:[%s1562 + $0x178] sm:$0xff]
        %v1611 = vld [vmem:[%s1562 + $0x180] sm:$0xff]
        %v1612 = vld [vmem:[%s1562 + $0x188] sm:$0xff]
        %v1613 = vld [vmem:[%s1562 + $0x190] sm:$0xff]
        %v1614 = vld [vmem:[%s1562 + $0x198] sm:$0xff]
        %v1615 = vld [vmem:[%s1562 + $0x1a0] sm:$0xff]
        %v1616 = vld [vmem:[%s1562 + $0x1a8] sm:$0xff]
        %v1617 = vld [vmem:[%s1562 + $0x1b0] sm:$0xff]
        %v1618 = vld [vmem:[%s1562 + $0x1b8] sm:$0xff]
        %v1619 = vld [vmem:[%s1562 + $0x1c0] sm:$0xff]
        %v1620 = vld [vmem:[%s1562 + $0x1c8] sm:$0xff]
        %v1621 = vld [vmem:[%s1562 + $0x1d0] sm:$0xff]
        %v1622 = vld [vmem:[%s1562 + $0x1d8] sm:$0xff]
        %v1623 = vld [vmem:[%s1562 + $0x1e0] sm:$0xff]
        %v1624 = vld [vmem:[%s1562 + $0x1e8] sm:$0xff]
        %v1625 = vld [vmem:[%s1562 + $0x1f0] sm:$0xff]
        %v1626 = vld [vmem:[%s1562 + $0x1f8] sm:$0xff]
        %1627 = vmatpush.msra.mxu0 %v1593
        %1628 = vmatpush.msra.mxu0 %v1591
        %1629 = vmatpush.msra.mxu0 %v1589
        %1630 = vmatpush.msra.mxu0 %v1587
        %1631 = vmatpush.msra.mxu0 %v1585
        %1632 = vmatpush.msra.mxu0 %v1583
        %1633 = vmatpush.msra.mxu0 %v1581
        %1634 = vmatpush.msra.mxu0 %v1579
        %1635 = vmatpush.msra.mxu0 %v1577
        %1636 = vmatpush.msra.mxu0 %v1575
        %1637 = vmatpush.msra.mxu0 %v1573
        %1638 = vmatpush.msra.mxu0 %v1571
        %1639 = vmatpush.msra.mxu0 %v1569
        %1640 = vmatpush.msra.mxu0 %v1567
        %1641 = vmatpush.msra.mxu0 %v1565
        %1642 = vmatpush.msra.mxu0 %v1563
        %1643 = vmatmul.f32.gmra.mxu0 %v1546
        %v1644 = vpop.f32.mrf.mxu0
        %v1645 = vadd.f32 0.0, %v1644
        %1646 = vmatmul.f32.gmra.mxu0 %v1548
        %v1647 = vpop.f32.mrf.mxu0
        %v1648 = vadd.f32 0.0, %v1647
        %1649 = vmatmul.f32.gmra.mxu0 %v1550
        %v1650 = vpop.f32.mrf.mxu0
        %v1651 = vadd.f32 0.0, %v1650
        %1652 = vmatmul.f32.gmra.mxu0 %v1552
        %v1653 = vpop.f32.mrf.mxu0
        %v1654 = vadd.f32 0.0, %v1653
        %1655 = vmatmul.f32.gmra.mxu0 %v1554
        %v1656 = vpop.f32.mrf.mxu0
        %v1657 = vadd.f32 0.0, %v1656
        %1658 = vmatmul.f32.gmra.mxu0 %v1556
        %v1659 = vpop.f32.mrf.mxu0
        %v1660 = vadd.f32 0.0, %v1659
        %1661 = vmatmul.f32.gmra.mxu0 %v1558
        %v1662 = vpop.f32.mrf.mxu0
        %v1663 = vadd.f32 0.0, %v1662
        %1664 = vmatmul.f32.gmra.mxu0 %v1560
        %v1665 = vpop.f32.mrf.mxu0
        %v1666 = vadd.f32 0.0, %v1665
        %1667 = vdwg.mxu0
        %1668 = vmatpush.msra.mxu0 %v1625
        %1669 = vmatpush.msra.mxu0 %v1623
        %1670 = vmatpush.msra.mxu0 %v1621
        %1671 = vmatpush.msra.mxu0 %v1619
        %1672 = vmatpush.msra.mxu0 %v1617
        %1673 = vmatpush.msra.mxu0 %v1615
        %1674 = vmatpush.msra.mxu0 %v1613
        %1675 = vmatpush.msra.mxu0 %v1611
        %1676 = vmatpush.msra.mxu0 %v1609
        %1677 = vmatpush.msra.mxu0 %v1607
        %1678 = vmatpush.msra.mxu0 %v1605
        %1679 = vmatpush.msra.mxu0 %v1603
        %1680 = vmatpush.msra.mxu0 %v1601
        %1681 = vmatpush.msra.mxu0 %v1599
        %1682 = vmatpush.msra.mxu0 %v1597
        %1683 = vmatpush.msra.mxu0 %v1595
        %1684 = vmatmul.f32.gmra.mxu0 %v1547
        %v1685 = vpop.f32.mrf.mxu0
        %v1686 = vadd.f32 %v1645, %v1685
        %1687 = vmatmul.f32.gmra.mxu0 %v1549
        %v1688 = vpop.f32.mrf.mxu0
        %v1689 = vadd.f32 %v1648, %v1688
        %1690 = vmatmul.f32.gmra.mxu0 %v1551
        %v1691 = vpop.f32.mrf.mxu0
        %v1692 = vadd.f32 %v1651, %v1691
        %1693 = vmatmul.f32.gmra.mxu0 %v1553
        %v1694 = vpop.f32.mrf.mxu0
        %v1695 = vadd.f32 %v1654, %v1694
        %1696 = vmatmul.f32.gmra.mxu0 %v1555
        %v1697 = vpop.f32.mrf.mxu0
        %v1698 = vadd.f32 %v1657, %v1697
        %1699 = vmatmul.f32.gmra.mxu0 %v1557
        %v1700 = vpop.f32.mrf.mxu0
        %v1701 = vadd.f32 %v1660, %v1700
        %1702 = vmatmul.f32.gmra.mxu0 %v1559
        %v1703 = vpop.f32.mrf.mxu0
        %v1704 = vadd.f32 %v1663, %v1703
        %1705 = vmatmul.f32.gmra.mxu0 %v1561
        %v1706 = vpop.f32.mrf.mxu0
        %v1707 = vadd.f32 %v1666, %v1706
        %1708 = vdwg.mxu0
        %1709 = vmatpush.msra.mxu0 %v1594
        %1710 = vmatpush.msra.mxu0 %v1592
        %1711 = vmatpush.msra.mxu0 %v1590
        %1712 = vmatpush.msra.mxu0 %v1588
        %1713 = vmatpush.msra.mxu0 %v1586
        %1714 = vmatpush.msra.mxu0 %v1584
        %1715 = vmatpush.msra.mxu0 %v1582
        %1716 = vmatpush.msra.mxu0 %v1580
        %1717 = vmatpush.msra.mxu0 %v1578
        %1718 = vmatpush.msra.mxu0 %v1576
        %1719 = vmatpush.msra.mxu0 %v1574
        %1720 = vmatpush.msra.mxu0 %v1572
        %1721 = vmatpush.msra.mxu0 %v1570
        %1722 = vmatpush.msra.mxu0 %v1568
        %1723 = vmatpush.msra.mxu0 %v1566
        %1724 = vmatpush.msra.mxu0 %v1564
        %1725 = vmatmul.f32.gmra.mxu0 %v1546
        %v1726 = vpop.f32.mrf.mxu0
        %v1727 = vadd.f32 0.0, %v1726
        %1728 = vmatmul.f32.gmra.mxu0 %v1548
        %v1729 = vpop.f32.mrf.mxu0
        %v1730 = vadd.f32 0.0, %v1729
        %1731 = vmatmul.f32.gmra.mxu0 %v1550
        %v1732 = vpop.f32.mrf.mxu0
        %v1733 = vadd.f32 0.0, %v1732
        %1734 = vmatmul.f32.gmra.mxu0 %v1552
        %v1735 = vpop.f32.mrf.mxu0
        %v1736 = vadd.f32 0.0, %v1735
        %1737 = vmatmul.f32.gmra.mxu0 %v1554
        %v1738 = vpop.f32.mrf.mxu0
        %v1739 = vadd.f32 0.0, %v1738
        %1740 = vmatmul.f32.gmra.mxu0 %v1556
        %v1741 = vpop.f32.mrf.mxu0
        %v1742 = vadd.f32 0.0, %v1741
        %1743 = vmatmul.f32.gmra.mxu0 %v1558
        %v1744 = vpop.f32.mrf.mxu0
        %v1745 = vadd.f32 0.0, %v1744
        %1746 = vmatmul.f32.gmra.mxu0 %v1560
        %v1747 = vpop.f32.mrf.mxu0
        %v1748 = vadd.f32 0.0, %v1747
        %1749 = vdwg.mxu0
        %1750 = vmatpush.msra.mxu0 %v1626
        %1751 = vmatpush.msra.mxu0 %v1624
        %1752 = vmatpush.msra.mxu0 %v1622
        %1753 = vmatpush.msra.mxu0 %v1620
        %1754 = vmatpush.msra.mxu0 %v1618
        %1755 = vmatpush.msra.mxu0 %v1616
        %1756 = vmatpush.msra.mxu0 %v1614
        %1757 = vmatpush.msra.mxu0 %v1612
        %1758 = vmatpush.msra.mxu0 %v1610
        %1759 = vmatpush.msra.mxu0 %v1608
        %1760 = vmatpush.msra.mxu0 %v1606
        %1761 = vmatpush.msra.mxu0 %v1604
        %1762 = vmatpush.msra.mxu0 %v1602
        %1763 = vmatpush.msra.mxu0 %v1600
        %1764 = vmatpush.msra.mxu0 %v1598
        %1765 = vmatpush.msra.mxu0 %v1596
        %1766 = vmatmul.f32.gmra.mxu0 %v1547
        %v1767 = vpop.f32.mrf.mxu0
        %v1768 = vadd.f32 %v1727, %v1767
        %1769 = vmatmul.f32.gmra.mxu0 %v1549
        %v1770 = vpop.f32.mrf.mxu0
        %v1771 = vadd.f32 %v1730, %v1770
        %1772 = vmatmul.f32.gmra.mxu0 %v1551
        %v1773 = vpop.f32.mrf.mxu0
        %v1774 = vadd.f32 %v1733, %v1773
        %1775 = vmatmul.f32.gmra.mxu0 %v1553
        %v1776 = vpop.f32.mrf.mxu0
        %v1777 = vadd.f32 %v1736, %v1776
        %1778 = vmatmul.f32.gmra.mxu0 %v1555
        %v1779 = vpop.f32.mrf.mxu0
        %v1780 = vadd.f32 %v1739, %v1779
        %1781 = vmatmul.f32.gmra.mxu0 %v1557
        %v1782 = vpop.f32.mrf.mxu0
        %v1783 = vadd.f32 %v1742, %v1782
        %1784 = vmatmul.f32.gmra.mxu0 %v1559
        %v1785 = vpop.f32.mrf.mxu0
        %v1786 = vadd.f32 %v1745, %v1785
        %1787 = vmatmul.f32.gmra.mxu0 %v1561
        %v1788 = vpop.f32.mrf.mxu0
        %v1789 = vadd.f32 %v1748, %v1788
        %1790 = vdwg.mxu0
        %v1791 = vadd.f32 %v1530, %v1686
        %v1792 = vadd.f32 %v1531, %v1768
        %v1793 = vadd.f32 %v1532, %v1689
        %v1794 = vadd.f32 %v1533, %v1771
        %v1795 = vadd.f32 %v1534, %v1692
        %v1796 = vadd.f32 %v1535, %v1774
        %v1797 = vadd.f32 %v1536, %v1695
        %v1798 = vadd.f32 %v1537, %v1777
        %v1799 = vadd.f32 %v1538, %v1698
        %v1800 = vadd.f32 %v1539, %v1780
        %v1801 = vadd.f32 %v1540, %v1701
        %v1802 = vadd.f32 %v1541, %v1783
        %v1803 = vadd.f32 %v1542, %v1704
        %v1804 = vadd.f32 %v1543, %v1786
        %v1805 = vadd.f32 %v1544, %v1707
        %v1806 = vadd.f32 %v1545, %v1789
        %v1807 = vld [vmem:[%s358] sm:$0xfe]
        %v1808 = vld [vmem:[%s358 + $0x8] sm:$0xfe]
        %v1809 = vld [vmem:[%s358 + $0x10] sm:$0x1]
        %v1810 = vld [vmem:[%s358 + $0x18] sm:$0x1]
        %v1811 = vld [vmem:[%s358 + $0x20] sm:$0xfe]
        %v1812 = vld [vmem:[%s358 + $0x28] sm:$0xfe]
        %v1813 = vld [vmem:[%s358 + $0x30] sm:$0x1]
        %v1814 = vld [vmem:[%s358 + $0x38] sm:$0x1]
        %v1815 = vld [vmem:[%s358 + $0x40] sm:$0xfe]
        %v1816 = vld [vmem:[%s358 + $0x48] sm:$0xfe]
        %v1817 = vld [vmem:[%s358 + $0x50] sm:$0x1]
        %v1818 = vld [vmem:[%s358 + $0x58] sm:$0x1]
        %v1819 = vld [vmem:[%s358 + $0x60] sm:$0xfe]
        %v1820 = vld [vmem:[%s358 + $0x68] sm:$0xfe]
        %v1821 = vld [vmem:[%s358 + $0x70] sm:$0x1]
        %v1822 = vld [vmem:[%s358 + $0x78] sm:$0x1]
        %v1823 = vld [vmem:[%s358 + $0x80] sm:$0xfe]
        %v1824 = vld [vmem:[%s358 + $0x88] sm:$0xfe]
        %v1825 = vld [vmem:[%s358 + $0x90] sm:$0x1]
        %v1826 = vld [vmem:[%s358 + $0x98] sm:$0x1]
        %v1827 = vld [vmem:[%s358 + $0xa0] sm:$0xfe]
        %v1828 = vld [vmem:[%s358 + $0xa8] sm:$0xfe]
        %v1829 = vld [vmem:[%s358 + $0xb0] sm:$0x1]
        %v1830 = vld [vmem:[%s358 + $0xb8] sm:$0x1]
        %v1831 = vld [vmem:[%s358 + $0xc0] sm:$0xfe]
        %v1832 = vld [vmem:[%s358 + $0xc8] sm:$0xfe]
        %v1833 = vld [vmem:[%s358 + $0xd0] sm:$0x1]
        %v1834 = vld [vmem:[%s358 + $0xd8] sm:$0x1]
        %v1835 = vld [vmem:[%s358 + $0xe0] sm:$0xfe]
        %v1836 = vld [vmem:[%s358 + $0xe8] sm:$0xfe]
        %v1837 = vld [vmem:[%s358 + $0xf0] sm:$0x1]
        %v1838 = vld [vmem:[%s358 + $0xf8] sm:$0x1]
        %v1871 = vrot.slane %v1807, 1
        %v1872 = vrot.slane %v1809, 1
        %v1873 = vsel %vm714, %v1871, %v1872
        %v1874 = vrot.slane %v1808, 1
        %v1875 = vrot.slane %v1810, 1
        %v1876 = vsel %vm714, %v1874, %v1875
        %v1877 = vrot.slane %v1811, 1
        %v1878 = vrot.slane %v1813, 1
        %v1879 = vsel %vm714, %v1877, %v1878
        %v1880 = vrot.slane %v1812, 1
        %v1881 = vrot.slane %v1814, 1
        %v1882 = vsel %vm714, %v1880, %v1881
        %v1883 = vrot.slane %v1815, 1
        %v1884 = vrot.slane %v1817, 1
        %v1885 = vsel %vm714, %v1883, %v1884
        %v1886 = vrot.slane %v1816, 1
        %v1887 = vrot.slane %v1818, 1
        %v1888 = vsel %vm714, %v1886, %v1887
        %v1889 = vrot.slane %v1819, 1
        %v1890 = vrot.slane %v1821, 1
        %v1891 = vsel %vm714, %v1889, %v1890
        %v1892 = vrot.slane %v1820, 1
        %v1893 = vrot.slane %v1822, 1
        %v1894 = vsel %vm714, %v1892, %v1893
        %v1895 = vrot.slane %v1823, 1
        %v1896 = vrot.slane %v1825, 1
        %v1897 = vsel %vm714, %v1895, %v1896
        %v1898 = vrot.slane %v1824, 1
        %v1899 = vrot.slane %v1826, 1
        %v1900 = vsel %vm714, %v1898, %v1899
        %v1901 = vrot.slane %v1827, 1
        %v1902 = vrot.slane %v1829, 1
        %v1903 = vsel %vm714, %v1901, %v1902
        %v1904 = vrot.slane %v1828, 1
        %v1905 = vrot.slane %v1830, 1
        %v1906 = vsel %vm714, %v1904, %v1905
        %v1907 = vrot.slane %v1831, 1
        %v1908 = vrot.slane %v1833, 1
        %v1909 = vsel %vm714, %v1907, %v1908
        %v1910 = vrot.slane %v1832, 1
        %v1911 = vrot.slane %v1834, 1
        %v1912 = vsel %vm714, %v1910, %v1911
        %v1913 = vrot.slane %v1835, 1
        %v1914 = vrot.slane %v1837, 1
        %v1915 = vsel %vm714, %v1913, %v1914
        %v1916 = vrot.slane %v1836, 1
        %v1917 = vrot.slane %v1838, 1
        %v1918 = vsel %vm714, %v1916, %v1917
        %s1935 = scalar_lea.vmem [#allocation7], 2048
        %v1936 = vld [vmem:[%s1935] sm:$0xff]
        %v1937 = vld [vmem:[%s1935 + $0x8] sm:$0xff]
        %v1938 = vld [vmem:[%s1935 + $0x10] sm:$0xff]
        %v1939 = vld [vmem:[%s1935 + $0x18] sm:$0xff]
        %v1940 = vld [vmem:[%s1935 + $0x20] sm:$0xff]
        %v1941 = vld [vmem:[%s1935 + $0x28] sm:$0xff]
        %v1942 = vld [vmem:[%s1935 + $0x30] sm:$0xff]
        %v1943 = vld [vmem:[%s1935 + $0x38] sm:$0xff]
        %v1944 = vld [vmem:[%s1935 + $0x40] sm:$0xff]
        %v1945 = vld [vmem:[%s1935 + $0x48] sm:$0xff]
        %v1946 = vld [vmem:[%s1935 + $0x50] sm:$0xff]
        %v1947 = vld [vmem:[%s1935 + $0x58] sm:$0xff]
        %v1948 = vld [vmem:[%s1935 + $0x60] sm:$0xff]
        %v1949 = vld [vmem:[%s1935 + $0x68] sm:$0xff]
        %v1950 = vld [vmem:[%s1935 + $0x70] sm:$0xff]
        %v1951 = vld [vmem:[%s1935 + $0x78] sm:$0xff]
        %v1952 = vld [vmem:[%s1935 + $0x80] sm:$0xff]
        %v1953 = vld [vmem:[%s1935 + $0x88] sm:$0xff]
        %v1954 = vld [vmem:[%s1935 + $0x90] sm:$0xff]
        %v1955 = vld [vmem:[%s1935 + $0x98] sm:$0xff]
        %v1956 = vld [vmem:[%s1935 + $0xa0] sm:$0xff]
        %v1957 = vld [vmem:[%s1935 + $0xa8] sm:$0xff]
        %v1958 = vld [vmem:[%s1935 + $0xb0] sm:$0xff]
        %v1959 = vld [vmem:[%s1935 + $0xb8] sm:$0xff]
        %v1960 = vld [vmem:[%s1935 + $0xc0] sm:$0xff]
        %v1961 = vld [vmem:[%s1935 + $0xc8] sm:$0xff]
        %v1962 = vld [vmem:[%s1935 + $0xd0] sm:$0xff]
        %v1963 = vld [vmem:[%s1935 + $0xd8] sm:$0xff]
        %v1964 = vld [vmem:[%s1935 + $0xe0] sm:$0xff]
        %v1965 = vld [vmem:[%s1935 + $0xe8] sm:$0xff]
        %v1966 = vld [vmem:[%s1935 + $0xf0] sm:$0xff]
        %v1967 = vld [vmem:[%s1935 + $0xf8] sm:$0xff]
        %v1968 = vld [vmem:[%s1935 + $0x100] sm:$0xff]
        %v1969 = vld [vmem:[%s1935 + $0x108] sm:$0xff]
        %v1970 = vld [vmem:[%s1935 + $0x110] sm:$0xff]
        %v1971 = vld [vmem:[%s1935 + $0x118] sm:$0xff]
        %v1972 = vld [vmem:[%s1935 + $0x120] sm:$0xff]
        %v1973 = vld [vmem:[%s1935 + $0x128] sm:$0xff]
        %v1974 = vld [vmem:[%s1935 + $0x130] sm:$0xff]
        %v1975 = vld [vmem:[%s1935 + $0x138] sm:$0xff]
        %v1976 = vld [vmem:[%s1935 + $0x140] sm:$0xff]
        %v1977 = vld [vmem:[%s1935 + $0x148] sm:$0xff]
        %v1978 = vld [vmem:[%s1935 + $0x150] sm:$0xff]
        %v1979 = vld [vmem:[%s1935 + $0x158] sm:$0xff]
        %v1980 = vld [vmem:[%s1935 + $0x160] sm:$0xff]
        %v1981 = vld [vmem:[%s1935 + $0x168] sm:$0xff]
        %v1982 = vld [vmem:[%s1935 + $0x170] sm:$0xff]
        %v1983 = vld [vmem:[%s1935 + $0x178] sm:$0xff]
        %v1984 = vld [vmem:[%s1935 + $0x180] sm:$0xff]
        %v1985 = vld [vmem:[%s1935 + $0x188] sm:$0xff]
        %v1986 = vld [vmem:[%s1935 + $0x190] sm:$0xff]
        %v1987 = vld [vmem:[%s1935 + $0x198] sm:$0xff]
        %v1988 = vld [vmem:[%s1935 + $0x1a0] sm:$0xff]
        %v1989 = vld [vmem:[%s1935 + $0x1a8] sm:$0xff]
        %v1990 = vld [vmem:[%s1935 + $0x1b0] sm:$0xff]
        %v1991 = vld [vmem:[%s1935 + $0x1b8] sm:$0xff]
        %v1992 = vld [vmem:[%s1935 + $0x1c0] sm:$0xff]
        %v1993 = vld [vmem:[%s1935 + $0x1c8] sm:$0xff]
        %v1994 = vld [vmem:[%s1935 + $0x1d0] sm:$0xff]
        %v1995 = vld [vmem:[%s1935 + $0x1d8] sm:$0xff]
        %v1996 = vld [vmem:[%s1935 + $0x1e0] sm:$0xff]
        %v1997 = vld [vmem:[%s1935 + $0x1e8] sm:$0xff]
        %v1998 = vld [vmem:[%s1935 + $0x1f0] sm:$0xff]
        %v1999 = vld [vmem:[%s1935 + $0x1f8] sm:$0xff]
        %2000 = vmatpush.msra.mxu0 %v1966
        %2001 = vmatpush.msra.mxu0 %v1964
        %2002 = vmatpush.msra.mxu0 %v1962
        %2003 = vmatpush.msra.mxu0 %v1960
        %2004 = vmatpush.msra.mxu0 %v1958
        %2005 = vmatpush.msra.mxu0 %v1956
        %2006 = vmatpush.msra.mxu0 %v1954
        %2007 = vmatpush.msra.mxu0 %v1952
        %2008 = vmatpush.msra.mxu0 %v1950
        %2009 = vmatpush.msra.mxu0 %v1948
        %2010 = vmatpush.msra.mxu0 %v1946
        %2011 = vmatpush.msra.mxu0 %v1944
        %2012 = vmatpush.msra.mxu0 %v1942
        %2013 = vmatpush.msra.mxu0 %v1940
        %2014 = vmatpush.msra.mxu0 %v1938
        %2015 = vmatpush.msra.mxu0 %v1936
        %2016 = vmatmul.f32.gmra.mxu0 %v1873
        %v2017 = vpop.f32.mrf.mxu0
        %v2018 = vadd.f32 0.0, %v2017
        %2019 = vmatmul.f32.gmra.mxu0 %v1879
        %v2020 = vpop.f32.mrf.mxu0
        %v2021 = vadd.f32 0.0, %v2020
        %2022 = vmatmul.f32.gmra.mxu0 %v1885
        %v2023 = vpop.f32.mrf.mxu0
        %v2024 = vadd.f32 0.0, %v2023
        %2025 = vmatmul.f32.gmra.mxu0 %v1891
        %v2026 = vpop.f32.mrf.mxu0
        %v2027 = vadd.f32 0.0, %v2026
        %2028 = vmatmul.f32.gmra.mxu0 %v1897
        %v2029 = vpop.f32.mrf.mxu0
        %v2030 = vadd.f32 0.0, %v2029
        %2031 = vmatmul.f32.gmra.mxu0 %v1903
        %v2032 = vpop.f32.mrf.mxu0
        %v2033 = vadd.f32 0.0, %v2032
        %2034 = vmatmul.f32.gmra.mxu0 %v1909
        %v2035 = vpop.f32.mrf.mxu0
        %v2036 = vadd.f32 0.0, %v2035
        %2037 = vmatmul.f32.gmra.mxu0 %v1915
        %v2038 = vpop.f32.mrf.mxu0
        %v2039 = vadd.f32 0.0, %v2038
        %2040 = vdwg.mxu0
        %2041 = vmatpush.msra.mxu0 %v1998
        %2042 = vmatpush.msra.mxu0 %v1996
        %2043 = vmatpush.msra.mxu0 %v1994
        %2044 = vmatpush.msra.mxu0 %v1992
        %2045 = vmatpush.msra.mxu0 %v1990
        %2046 = vmatpush.msra.mxu0 %v1988
        %2047 = vmatpush.msra.mxu0 %v1986
        %2048 = vmatpush.msra.mxu0 %v1984
        %2049 = vmatpush.msra.mxu0 %v1982
        %2050 = vmatpush.msra.mxu0 %v1980
        %2051 = vmatpush.msra.mxu0 %v1978
        %2052 = vmatpush.msra.mxu0 %v1976
        %2053 = vmatpush.msra.mxu0 %v1974
        %2054 = vmatpush.msra.mxu0 %v1972
        %2055 = vmatpush.msra.mxu0 %v1970
        %2056 = vmatpush.msra.mxu0 %v1968
        %2057 = vmatmul.f32.gmra.mxu0 %v1876
        %v2058 = vpop.f32.mrf.mxu0
        %v2059 = vadd.f32 %v2018, %v2058
        %2060 = vmatmul.f32.gmra.mxu0 %v1882
        %v2061 = vpop.f32.mrf.mxu0
        %v2062 = vadd.f32 %v2021, %v2061
        %2063 = vmatmul.f32.gmra.mxu0 %v1888
        %v2064 = vpop.f32.mrf.mxu0
        %v2065 = vadd.f32 %v2024, %v2064
        %2066 = vmatmul.f32.gmra.mxu0 %v1894
        %v2067 = vpop.f32.mrf.mxu0
        %v2068 = vadd.f32 %v2027, %v2067
        %2069 = vmatmul.f32.gmra.mxu0 %v1900
        %v2070 = vpop.f32.mrf.mxu0
        %v2071 = vadd.f32 %v2030, %v2070
        %2072 = vmatmul.f32.gmra.mxu0 %v1906
        %v2073 = vpop.f32.mrf.mxu0
        %v2074 = vadd.f32 %v2033, %v2073
        %2075 = vmatmul.f32.gmra.mxu0 %v1912
        %v2076 = vpop.f32.mrf.mxu0
        %v2077 = vadd.f32 %v2036, %v2076
        %2078 = vmatmul.f32.gmra.mxu0 %v1918
        %v2079 = vpop.f32.mrf.mxu0
        %v2080 = vadd.f32 %v2039, %v2079
        %2081 = vdwg.mxu0
        %2082 = vmatpush.msra.mxu0 %v1967
        %2083 = vmatpush.msra.mxu0 %v1965
        %2084 = vmatpush.msra.mxu0 %v1963
        %2085 = vmatpush.msra.mxu0 %v1961
        %2086 = vmatpush.msra.mxu0 %v1959
        %2087 = vmatpush.msra.mxu0 %v1957
        %2088 = vmatpush.msra.mxu0 %v1955
        %2089 = vmatpush.msra.mxu0 %v1953
        %2090 = vmatpush.msra.mxu0 %v1951
        %2091 = vmatpush.msra.mxu0 %v1949
        %2092 = vmatpush.msra.mxu0 %v1947
        %2093 = vmatpush.msra.mxu0 %v1945
        %2094 = vmatpush.msra.mxu0 %v1943
        %2095 = vmatpush.msra.mxu0 %v1941
        %2096 = vmatpush.msra.mxu0 %v1939
        %2097 = vmatpush.msra.mxu0 %v1937
        %2098 = vmatmul.f32.gmra.mxu0 %v1873
        %v2099 = vpop.f32.mrf.mxu0
        %v2100 = vadd.f32 0.0, %v2099
        %2101 = vmatmul.f32.gmra.mxu0 %v1879
        %v2102 = vpop.f32.mrf.mxu0
        %v2103 = vadd.f32 0.0, %v2102
        %2104 = vmatmul.f32.gmra.mxu0 %v1885
        %v2105 = vpop.f32.mrf.mxu0
        %v2106 = vadd.f32 0.0, %v2105
        %2107 = vmatmul.f32.gmra.mxu0 %v1891
        %v2108 = vpop.f32.mrf.mxu0
        %v2109 = vadd.f32 0.0, %v2108
        %2110 = vmatmul.f32.gmra.mxu0 %v1897
        %v2111 = vpop.f32.mrf.mxu0
        %v2112 = vadd.f32 0.0, %v2111
        %2113 = vmatmul.f32.gmra.mxu0 %v1903
        %v2114 = vpop.f32.mrf.mxu0
        %v2115 = vadd.f32 0.0, %v2114
        %2116 = vmatmul.f32.gmra.mxu0 %v1909
        %v2117 = vpop.f32.mrf.mxu0
        %v2118 = vadd.f32 0.0, %v2117
        %2119 = vmatmul.f32.gmra.mxu0 %v1915
        %v2120 = vpop.f32.mrf.mxu0
        %v2121 = vadd.f32 0.0, %v2120
        %2122 = vdwg.mxu0
        %2123 = vmatpush.msra.mxu0 %v1999
        %2124 = vmatpush.msra.mxu0 %v1997
        %2125 = vmatpush.msra.mxu0 %v1995
        %2126 = vmatpush.msra.mxu0 %v1993
        %2127 = vmatpush.msra.mxu0 %v1991
        %2128 = vmatpush.msra.mxu0 %v1989
        %2129 = vmatpush.msra.mxu0 %v1987
        %2130 = vmatpush.msra.mxu0 %v1985
        %2131 = vmatpush.msra.mxu0 %v1983
        %2132 = vmatpush.msra.mxu0 %v1981
        %2133 = vmatpush.msra.mxu0 %v1979
        %2134 = vmatpush.msra.mxu0 %v1977
        %2135 = vmatpush.msra.mxu0 %v1975
        %2136 = vmatpush.msra.mxu0 %v1973
        %2137 = vmatpush.msra.mxu0 %v1971
        %2138 = vmatpush.msra.mxu0 %v1969
        %2139 = vmatmul.f32.gmra.mxu0 %v1876
        %v2140 = vpop.f32.mrf.mxu0
        %v2141 = vadd.f32 %v2100, %v2140
        %2142 = vmatmul.f32.gmra.mxu0 %v1882
        %v2143 = vpop.f32.mrf.mxu0
        %v2144 = vadd.f32 %v2103, %v2143
        %2145 = vmatmul.f32.gmra.mxu0 %v1888
        %v2146 = vpop.f32.mrf.mxu0
        %v2147 = vadd.f32 %v2106, %v2146
        %2148 = vmatmul.f32.gmra.mxu0 %v1894
        %v2149 = vpop.f32.mrf.mxu0
        %v2150 = vadd.f32 %v2109, %v2149
        %2151 = vmatmul.f32.gmra.mxu0 %v1900
        %v2152 = vpop.f32.mrf.mxu0
        %v2153 = vadd.f32 %v2112, %v2152
        %2154 = vmatmul.f32.gmra.mxu0 %v1906
        %v2155 = vpop.f32.mrf.mxu0
        %v2156 = vadd.f32 %v2115, %v2155
        %2157 = vmatmul.f32.gmra.mxu0 %v1912
        %v2158 = vpop.f32.mrf.mxu0
        %v2159 = vadd.f32 %v2118, %v2158
        %2160 = vmatmul.f32.gmra.mxu0 %v1918
        %v2161 = vpop.f32.mrf.mxu0
        %v2162 = vadd.f32 %v2121, %v2161
        %2163 = vdwg.mxu0
        %v2164 = vadd.f32 %v1791, %v2059
        %v2165 = vadd.f32 %v1792, %v2141
        %v2166 = vadd.f32 %v1793, %v2062
        %v2167 = vadd.f32 %v1794, %v2144
        %v2168 = vadd.f32 %v1795, %v2065
        %v2169 = vadd.f32 %v1796, %v2147
        %v2170 = vadd.f32 %v1797, %v2068
        %v2171 = vadd.f32 %v1798, %v2150
        %v2172 = vadd.f32 %v1799, %v2071
        %v2173 = vadd.f32 %v1800, %v2153
        %v2174 = vadd.f32 %v1801, %v2074
        %v2175 = vadd.f32 %v1802, %v2156
        %v2176 = vadd.f32 %v1803, %v2077
        %v2177 = vadd.f32 %v1804, %v2159
        %v2178 = vadd.f32 %v1805, %v2080
        %v2179 = vadd.f32 %v1806, %v2162
        %v2180 = vld [vmem:[%s358] sm:$0xfc]
        %v2181 = vld [vmem:[%s358 + $0x8] sm:$0xfc]
        %v2182 = vld [vmem:[%s358 + $0x10] sm:$0x3]
        %v2183 = vld [vmem:[%s358 + $0x18] sm:$0x3]
        %v2184 = vld [vmem:[%s358 + $0x20] sm:$0xfc]
        %v2185 = vld [vmem:[%s358 + $0x28] sm:$0xfc]
        %v2186 = vld [vmem:[%s358 + $0x30] sm:$0x3]
        %v2187 = vld [vmem:[%s358 + $0x38] sm:$0x3]
        %v2188 = vld [vmem:[%s358 + $0x40] sm:$0xfc]
        %v2189 = vld [vmem:[%s358 + $0x48] sm:$0xfc]
        %v2190 = vld [vmem:[%s358 + $0x50] sm:$0x3]
        %v2191 = vld [vmem:[%s358 + $0x58] sm:$0x3]
        %v2192 = vld [vmem:[%s358 + $0x60] sm:$0xfc]
        %v2193 = vld [vmem:[%s358 + $0x68] sm:$0xfc]
        %v2194 = vld [vmem:[%s358 + $0x70] sm:$0x3]
        %v2195 = vld [vmem:[%s358 + $0x78] sm:$0x3]
        %v2196 = vld [vmem:[%s358 + $0x80] sm:$0xfc]
        %v2197 = vld [vmem:[%s358 + $0x88] sm:$0xfc]
        %v2198 = vld [vmem:[%s358 + $0x90] sm:$0x3]
        %v2199 = vld [vmem:[%s358 + $0x98] sm:$0x3]
        %v2200 = vld [vmem:[%s358 + $0xa0] sm:$0xfc]
        %v2201 = vld [vmem:[%s358 + $0xa8] sm:$0xfc]
        %v2202 = vld [vmem:[%s358 + $0xb0] sm:$0x3]
        %v2203 = vld [vmem:[%s358 + $0xb8] sm:$0x3]
        %v2204 = vld [vmem:[%s358 + $0xc0] sm:$0xfc]
        %v2205 = vld [vmem:[%s358 + $0xc8] sm:$0xfc]
        %v2206 = vld [vmem:[%s358 + $0xd0] sm:$0x3]
        %v2207 = vld [vmem:[%s358 + $0xd8] sm:$0x3]
        %v2208 = vld [vmem:[%s358 + $0xe0] sm:$0xfc]
        %v2209 = vld [vmem:[%s358 + $0xe8] sm:$0xfc]
        %v2210 = vld [vmem:[%s358 + $0xf0] sm:$0x3]
        %v2211 = vld [vmem:[%s358 + $0xf8] sm:$0x3]
        %v2244 = vrot.slane %v2180, 2
        %v2245 = vrot.slane %v2182, 2
        %v2246 = vsel %vm1236, %v2244, %v2245
        %v2247 = vrot.slane %v2181, 2
        %v2248 = vrot.slane %v2183, 2
        %v2249 = vsel %vm1236, %v2247, %v2248
        %v2250 = vrot.slane %v2184, 2
        %v2251 = vrot.slane %v2186, 2
        %v2252 = vsel %vm1236, %v2250, %v2251
        %v2253 = vrot.slane %v2185, 2
        %v2254 = vrot.slane %v2187, 2
        %v2255 = vsel %vm1236, %v2253, %v2254
        %v2256 = vrot.slane %v2188, 2
        %v2257 = vrot.slane %v2190, 2
        %v2258 = vsel %vm1236, %v2256, %v2257
        %v2259 = vrot.slane %v2189, 2
        %v2260 = vrot.slane %v2191, 2
        %v2261 = vsel %vm1236, %v2259, %v2260
        %v2262 = vrot.slane %v2192, 2
        %v2263 = vrot.slane %v2194, 2
        %v2264 = vsel %vm1236, %v2262, %v2263
        %v2265 = vrot.slane %v2193, 2
        %v2266 = vrot.slane %v2195, 2
        %v2267 = vsel %vm1236, %v2265, %v2266
        %v2268 = vrot.slane %v2196, 2
        %v2269 = vrot.slane %v2198, 2
        %v2270 = vsel %vm1236, %v2268, %v2269
        %v2271 = vrot.slane %v2197, 2
        %v2272 = vrot.slane %v2199, 2
        %v2273 = vsel %vm1236, %v2271, %v2272
        %v2274 = vrot.slane %v2200, 2
        %v2275 = vrot.slane %v2202, 2
        %v2276 = vsel %vm1236, %v2274, %v2275
        %v2277 = vrot.slane %v2201, 2
        %v2278 = vrot.slane %v2203, 2
        %v2279 = vsel %vm1236, %v2277, %v2278
        %v2280 = vrot.slane %v2204, 2
        %v2281 = vrot.slane %v2206, 2
        %v2282 = vsel %vm1236, %v2280, %v2281
        %v2283 = vrot.slane %v2205, 2
        %v2284 = vrot.slane %v2207, 2
        %v2285 = vsel %vm1236, %v2283, %v2284
        %v2286 = vrot.slane %v2208, 2
        %v2287 = vrot.slane %v2210, 2
        %v2288 = vsel %vm1236, %v2286, %v2287
        %v2289 = vrot.slane %v2209, 2
        %v2290 = vrot.slane %v2211, 2
        %v2291 = vsel %vm1236, %v2289, %v2290
        %s2308 = scalar_lea.vmem [#allocation7], 2560
        %v2309 = vld [vmem:[%s2308] sm:$0xff]
        %v2310 = vld [vmem:[%s2308 + $0x8] sm:$0xff]
        %v2311 = vld [vmem:[%s2308 + $0x10] sm:$0xff]
        %v2312 = vld [vmem:[%s2308 + $0x18] sm:$0xff]
        %v2313 = vld [vmem:[%s2308 + $0x20] sm:$0xff]
        %v2314 = vld [vmem:[%s2308 + $0x28] sm:$0xff]
        %v2315 = vld [vmem:[%s2308 + $0x30] sm:$0xff]
        %v2316 = vld [vmem:[%s2308 + $0x38] sm:$0xff]
        %v2317 = vld [vmem:[%s2308 + $0x40] sm:$0xff]
        %v2318 = vld [vmem:[%s2308 + $0x48] sm:$0xff]
        %v2319 = vld [vmem:[%s2308 + $0x50] sm:$0xff]
        %v2320 = vld [vmem:[%s2308 + $0x58] sm:$0xff]
        %v2321 = vld [vmem:[%s2308 + $0x60] sm:$0xff]
        %v2322 = vld [vmem:[%s2308 + $0x68] sm:$0xff]
        %v2323 = vld [vmem:[%s2308 + $0x70] sm:$0xff]
        %v2324 = vld [vmem:[%s2308 + $0x78] sm:$0xff]
        %v2325 = vld [vmem:[%s2308 + $0x80] sm:$0xff]
        %v2326 = vld [vmem:[%s2308 + $0x88] sm:$0xff]
        %v2327 = vld [vmem:[%s2308 + $0x90] sm:$0xff]
        %v2328 = vld [vmem:[%s2308 + $0x98] sm:$0xff]
        %v2329 = vld [vmem:[%s2308 + $0xa0] sm:$0xff]
        %v2330 = vld [vmem:[%s2308 + $0xa8] sm:$0xff]
        %v2331 = vld [vmem:[%s2308 + $0xb0] sm:$0xff]
        %v2332 = vld [vmem:[%s2308 + $0xb8] sm:$0xff]
        %v2333 = vld [vmem:[%s2308 + $0xc0] sm:$0xff]
        %v2334 = vld [vmem:[%s2308 + $0xc8] sm:$0xff]
        %v2335 = vld [vmem:[%s2308 + $0xd0] sm:$0xff]
        %v2336 = vld [vmem:[%s2308 + $0xd8] sm:$0xff]
        %v2337 = vld [vmem:[%s2308 + $0xe0] sm:$0xff]
        %v2338 = vld [vmem:[%s2308 + $0xe8] sm:$0xff]
        %v2339 = vld [vmem:[%s2308 + $0xf0] sm:$0xff]
        %v2340 = vld [vmem:[%s2308 + $0xf8] sm:$0xff]
        %v2341 = vld [vmem:[%s2308 + $0x100] sm:$0xff]
        %v2342 = vld [vmem:[%s2308 + $0x108] sm:$0xff]
        %v2343 = vld [vmem:[%s2308 + $0x110] sm:$0xff]
        %v2344 = vld [vmem:[%s2308 + $0x118] sm:$0xff]
        %v2345 = vld [vmem:[%s2308 + $0x120] sm:$0xff]
        %v2346 = vld [vmem:[%s2308 + $0x128] sm:$0xff]
        %v2347 = vld [vmem:[%s2308 + $0x130] sm:$0xff]
        %v2348 = vld [vmem:[%s2308 + $0x138] sm:$0xff]
        %v2349 = vld [vmem:[%s2308 + $0x140] sm:$0xff]
        %v2350 = vld [vmem:[%s2308 + $0x148] sm:$0xff]
        %v2351 = vld [vmem:[%s2308 + $0x150] sm:$0xff]
        %v2352 = vld [vmem:[%s2308 + $0x158] sm:$0xff]
        %v2353 = vld [vmem:[%s2308 + $0x160] sm:$0xff]
        %v2354 = vld [vmem:[%s2308 + $0x168] sm:$0xff]
        %v2355 = vld [vmem:[%s2308 + $0x170] sm:$0xff]
        %v2356 = vld [vmem:[%s2308 + $0x178] sm:$0xff]
        %v2357 = vld [vmem:[%s2308 + $0x180] sm:$0xff]
        %v2358 = vld [vmem:[%s2308 + $0x188] sm:$0xff]
        %v2359 = vld [vmem:[%s2308 + $0x190] sm:$0xff]
        %v2360 = vld [vmem:[%s2308 + $0x198] sm:$0xff]
        %v2361 = vld [vmem:[%s2308 + $0x1a0] sm:$0xff]
        %v2362 = vld [vmem:[%s2308 + $0x1a8] sm:$0xff]
        %v2363 = vld [vmem:[%s2308 + $0x1b0] sm:$0xff]
        %v2364 = vld [vmem:[%s2308 + $0x1b8] sm:$0xff]
        %v2365 = vld [vmem:[%s2308 + $0x1c0] sm:$0xff]
        %v2366 = vld [vmem:[%s2308 + $0x1c8] sm:$0xff]
        %v2367 = vld [vmem:[%s2308 + $0x1d0] sm:$0xff]
        %v2368 = vld [vmem:[%s2308 + $0x1d8] sm:$0xff]
        %v2369 = vld [vmem:[%s2308 + $0x1e0] sm:$0xff]
        %v2370 = vld [vmem:[%s2308 + $0x1e8] sm:$0xff]
        %v2371 = vld [vmem:[%s2308 + $0x1f0] sm:$0xff]
        %v2372 = vld [vmem:[%s2308 + $0x1f8] sm:$0xff]
        %2373 = vmatpush.msra.mxu0 %v2339
        %2374 = vmatpush.msra.mxu0 %v2337
        %2375 = vmatpush.msra.mxu0 %v2335
        %2376 = vmatpush.msra.mxu0 %v2333
        %2377 = vmatpush.msra.mxu0 %v2331
        %2378 = vmatpush.msra.mxu0 %v2329
        %2379 = vmatpush.msra.mxu0 %v2327
        %2380 = vmatpush.msra.mxu0 %v2325
        %2381 = vmatpush.msra.mxu0 %v2323
        %2382 = vmatpush.msra.mxu0 %v2321
        %2383 = vmatpush.msra.mxu0 %v2319
        %2384 = vmatpush.msra.mxu0 %v2317
        %2385 = vmatpush.msra.mxu0 %v2315
        %2386 = vmatpush.msra.mxu0 %v2313
        %2387 = vmatpush.msra.mxu0 %v2311
        %2388 = vmatpush.msra.mxu0 %v2309
        %2389 = vmatmul.f32.gmra.mxu0 %v2246
        %v2390 = vpop.f32.mrf.mxu0
        %v2391 = vadd.f32 0.0, %v2390
        %2392 = vmatmul.f32.gmra.mxu0 %v2252
        %v2393 = vpop.f32.mrf.mxu0
        %v2394 = vadd.f32 0.0, %v2393
        %2395 = vmatmul.f32.gmra.mxu0 %v2258
        %v2396 = vpop.f32.mrf.mxu0
        %v2397 = vadd.f32 0.0, %v2396
        %2398 = vmatmul.f32.gmra.mxu0 %v2264
        %v2399 = vpop.f32.mrf.mxu0
        %v2400 = vadd.f32 0.0, %v2399
        %2401 = vmatmul.f32.gmra.mxu0 %v2270
        %v2402 = vpop.f32.mrf.mxu0
        %v2403 = vadd.f32 0.0, %v2402
        %2404 = vmatmul.f32.gmra.mxu0 %v2276
        %v2405 = vpop.f32.mrf.mxu0
        %v2406 = vadd.f32 0.0, %v2405
        %2407 = vmatmul.f32.gmra.mxu0 %v2282
        %v2408 = vpop.f32.mrf.mxu0
        %v2409 = vadd.f32 0.0, %v2408
        %2410 = vmatmul.f32.gmra.mxu0 %v2288
        %v2411 = vpop.f32.mrf.mxu0
        %v2412 = vadd.f32 0.0, %v2411
        %2413 = vdwg.mxu0
        %2414 = vmatpush.msra.mxu0 %v2371
        %2415 = vmatpush.msra.mxu0 %v2369
        %2416 = vmatpush.msra.mxu0 %v2367
        %2417 = vmatpush.msra.mxu0 %v2365
        %2418 = vmatpush.msra.mxu0 %v2363
        %2419 = vmatpush.msra.mxu0 %v2361
        %2420 = vmatpush.msra.mxu0 %v2359
        %2421 = vmatpush.msra.mxu0 %v2357
        %2422 = vmatpush.msra.mxu0 %v2355
        %2423 = vmatpush.msra.mxu0 %v2353
        %2424 = vmatpush.msra.mxu0 %v2351
        %2425 = vmatpush.msra.mxu0 %v2349
        %2426 = vmatpush.msra.mxu0 %v2347
        %2427 = vmatpush.msra.mxu0 %v2345
        %2428 = vmatpush.msra.mxu0 %v2343
        %2429 = vmatpush.msra.mxu0 %v2341
        %2430 = vmatmul.f32.gmra.mxu0 %v2249
        %v2431 = vpop.f32.mrf.mxu0
        %v2432 = vadd.f32 %v2391, %v2431
        %2433 = vmatmul.f32.gmra.mxu0 %v2255
        %v2434 = vpop.f32.mrf.mxu0
        %v2435 = vadd.f32 %v2394, %v2434
        %2436 = vmatmul.f32.gmra.mxu0 %v2261
        %v2437 = vpop.f32.mrf.mxu0
        %v2438 = vadd.f32 %v2397, %v2437
        %2439 = vmatmul.f32.gmra.mxu0 %v2267
        %v2440 = vpop.f32.mrf.mxu0
        %v2441 = vadd.f32 %v2400, %v2440
        %2442 = vmatmul.f32.gmra.mxu0 %v2273
        %v2443 = vpop.f32.mrf.mxu0
        %v2444 = vadd.f32 %v2403, %v2443
        %2445 = vmatmul.f32.gmra.mxu0 %v2279
        %v2446 = vpop.f32.mrf.mxu0
        %v2447 = vadd.f32 %v2406, %v2446
        %2448 = vmatmul.f32.gmra.mxu0 %v2285
        %v2449 = vpop.f32.mrf.mxu0
        %v2450 = vadd.f32 %v2409, %v2449
        %2451 = vmatmul.f32.gmra.mxu0 %v2291
        %v2452 = vpop.f32.mrf.mxu0
        %v2453 = vadd.f32 %v2412, %v2452
        %2454 = vdwg.mxu0
        %2455 = vmatpush.msra.mxu0 %v2340
        %2456 = vmatpush.msra.mxu0 %v2338
        %2457 = vmatpush.msra.mxu0 %v2336
        %2458 = vmatpush.msra.mxu0 %v2334
        %2459 = vmatpush.msra.mxu0 %v2332
        %2460 = vmatpush.msra.mxu0 %v2330
        %2461 = vmatpush.msra.mxu0 %v2328
        %2462 = vmatpush.msra.mxu0 %v2326
        %2463 = vmatpush.msra.mxu0 %v2324
        %2464 = vmatpush.msra.mxu0 %v2322
        %2465 = vmatpush.msra.mxu0 %v2320
        %2466 = vmatpush.msra.mxu0 %v2318
        %2467 = vmatpush.msra.mxu0 %v2316
        %2468 = vmatpush.msra.mxu0 %v2314
        %2469 = vmatpush.msra.mxu0 %v2312
        %2470 = vmatpush.msra.mxu0 %v2310
        %2471 = vmatmul.f32.gmra.mxu0 %v2246
        %v2472 = vpop.f32.mrf.mxu0
        %v2473 = vadd.f32 0.0, %v2472
        %2474 = vmatmul.f32.gmra.mxu0 %v2252
        %v2475 = vpop.f32.mrf.mxu0
        %v2476 = vadd.f32 0.0, %v2475
        %2477 = vmatmul.f32.gmra.mxu0 %v2258
        %v2478 = vpop.f32.mrf.mxu0
        %v2479 = vadd.f32 0.0, %v2478
        %2480 = vmatmul.f32.gmra.mxu0 %v2264
        %v2481 = vpop.f32.mrf.mxu0
        %v2482 = vadd.f32 0.0, %v2481
        %2483 = vmatmul.f32.gmra.mxu0 %v2270
        %v2484 = vpop.f32.mrf.mxu0
        %v2485 = vadd.f32 0.0, %v2484
        %2486 = vmatmul.f32.gmra.mxu0 %v2276
        %v2487 = vpop.f32.mrf.mxu0
        %v2488 = vadd.f32 0.0, %v2487
        %2489 = vmatmul.f32.gmra.mxu0 %v2282
        %v2490 = vpop.f32.mrf.mxu0
        %v2491 = vadd.f32 0.0, %v2490
        %2492 = vmatmul.f32.gmra.mxu0 %v2288
        %v2493 = vpop.f32.mrf.mxu0
        %v2494 = vadd.f32 0.0, %v2493
        %2495 = vdwg.mxu0
        %2496 = vmatpush.msra.mxu0 %v2372
        %2497 = vmatpush.msra.mxu0 %v2370
        %2498 = vmatpush.msra.mxu0 %v2368
        %2499 = vmatpush.msra.mxu0 %v2366
        %2500 = vmatpush.msra.mxu0 %v2364
        %2501 = vmatpush.msra.mxu0 %v2362
        %2502 = vmatpush.msra.mxu0 %v2360
        %2503 = vmatpush.msra.mxu0 %v2358
        %2504 = vmatpush.msra.mxu0 %v2356
        %2505 = vmatpush.msra.mxu0 %v2354
        %2506 = vmatpush.msra.mxu0 %v2352
        %2507 = vmatpush.msra.mxu0 %v2350
        %2508 = vmatpush.msra.mxu0 %v2348
        %2509 = vmatpush.msra.mxu0 %v2346
        %2510 = vmatpush.msra.mxu0 %v2344
        %2511 = vmatpush.msra.mxu0 %v2342
        %2512 = vmatmul.f32.gmra.mxu0 %v2249
        %v2513 = vpop.f32.mrf.mxu0
        %v2514 = vadd.f32 %v2473, %v2513
        %2515 = vmatmul.f32.gmra.mxu0 %v2255
        %v2516 = vpop.f32.mrf.mxu0
        %v2517 = vadd.f32 %v2476, %v2516
        %2518 = vmatmul.f32.gmra.mxu0 %v2261
        %v2519 = vpop.f32.mrf.mxu0
        %v2520 = vadd.f32 %v2479, %v2519
        %2521 = vmatmul.f32.gmra.mxu0 %v2267
        %v2522 = vpop.f32.mrf.mxu0
        %v2523 = vadd.f32 %v2482, %v2522
        %2524 = vmatmul.f32.gmra.mxu0 %v2273
        %v2525 = vpop.f32.mrf.mxu0
        %v2526 = vadd.f32 %v2485, %v2525
        %2527 = vmatmul.f32.gmra.mxu0 %v2279
        %v2528 = vpop.f32.mrf.mxu0
        %v2529 = vadd.f32 %v2488, %v2528
        %2530 = vmatmul.f32.gmra.mxu0 %v2285
        %v2531 = vpop.f32.mrf.mxu0
        %v2532 = vadd.f32 %v2491, %v2531
        %2533 = vmatmul.f32.gmra.mxu0 %v2291
        %v2534 = vpop.f32.mrf.mxu0
        %v2535 = vadd.f32 %v2494, %v2534
        %2536 = vdwg.mxu0
        %v2537 = vadd.f32 %v2164, %v2432
        %v2538 = vadd.f32 %v2165, %v2514
        %v2539 = vadd.f32 %v2166, %v2435
        %v2540 = vadd.f32 %v2167, %v2517
        %v2541 = vadd.f32 %v2168, %v2438
        %v2542 = vadd.f32 %v2169, %v2520
        %v2543 = vadd.f32 %v2170, %v2441
        %v2544 = vadd.f32 %v2171, %v2523
        %v2545 = vadd.f32 %v2172, %v2444
        %v2546 = vadd.f32 %v2173, %v2526
        %v2547 = vadd.f32 %v2174, %v2447
        %v2548 = vadd.f32 %v2175, %v2529
        %v2549 = vadd.f32 %v2176, %v2450
        %v2550 = vadd.f32 %v2177, %v2532
        %v2551 = vadd.f32 %v2178, %v2453
        %v2552 = vadd.f32 %v2179, %v2535
        %s2553 = scalar_lea.vmem [#allocation2], 64
        %v2554 = vld [vmem:[%s2553] sm:$0xff]
        %v2555 = vld [vmem:[%s2553 + $0x8] sm:$0xff]
        %v2556 = vld [vmem:[%s2553 + $0x20] sm:$0xff]
        %v2557 = vld [vmem:[%s2553 + $0x28] sm:$0xff]
        %v2558 = vld [vmem:[%s2553 + $0x40] sm:$0xff]
        %v2559 = vld [vmem:[%s2553 + $0x48] sm:$0xff]
        %v2560 = vld [vmem:[%s2553 + $0x60] sm:$0xff]
        %v2561 = vld [vmem:[%s2553 + $0x68] sm:$0xff]
        %v2562 = vld [vmem:[%s2553 + $0x80] sm:$0xff]
        %v2563 = vld [vmem:[%s2553 + $0x88] sm:$0xff]
        %v2564 = vld [vmem:[%s2553 + $0xa0] sm:$0xff]
        %v2565 = vld [vmem:[%s2553 + $0xa8] sm:$0xff]
        %v2566 = vld [vmem:[%s2553 + $0xc0] sm:$0xff]
        %v2567 = vld [vmem:[%s2553 + $0xc8] sm:$0xff]
        %v2568 = vld [vmem:[%s2553 + $0xe0] sm:$0xff]
        %v2569 = vld [vmem:[%s2553 + $0xe8] sm:$0xff]
        %s2570 = scalar_lea.vmem [#allocation7], 3072
        %v2571 = vld [vmem:[%s2570] sm:$0xff]
        %v2572 = vld [vmem:[%s2570 + $0x8] sm:$0xff]
        %v2573 = vld [vmem:[%s2570 + $0x10] sm:$0xff]
        %v2574 = vld [vmem:[%s2570 + $0x18] sm:$0xff]
        %v2575 = vld [vmem:[%s2570 + $0x20] sm:$0xff]
        %v2576 = vld [vmem:[%s2570 + $0x28] sm:$0xff]
        %v2577 = vld [vmem:[%s2570 + $0x30] sm:$0xff]
        %v2578 = vld [vmem:[%s2570 + $0x38] sm:$0xff]
        %v2579 = vld [vmem:[%s2570 + $0x40] sm:$0xff]
        %v2580 = vld [vmem:[%s2570 + $0x48] sm:$0xff]
        %v2581 = vld [vmem:[%s2570 + $0x50] sm:$0xff]
        %v2582 = vld [vmem:[%s2570 + $0x58] sm:$0xff]
        %v2583 = vld [vmem:[%s2570 + $0x60] sm:$0xff]
        %v2584 = vld [vmem:[%s2570 + $0x68] sm:$0xff]
        %v2585 = vld [vmem:[%s2570 + $0x70] sm:$0xff]
        %v2586 = vld [vmem:[%s2570 + $0x78] sm:$0xff]
        %v2587 = vld [vmem:[%s2570 + $0x80] sm:$0xff]
        %v2588 = vld [vmem:[%s2570 + $0x88] sm:$0xff]
        %v2589 = vld [vmem:[%s2570 + $0x90] sm:$0xff]
        %v2590 = vld [vmem:[%s2570 + $0x98] sm:$0xff]
        %v2591 = vld [vmem:[%s2570 + $0xa0] sm:$0xff]
        %v2592 = vld [vmem:[%s2570 + $0xa8] sm:$0xff]
        %v2593 = vld [vmem:[%s2570 + $0xb0] sm:$0xff]
        %v2594 = vld [vmem:[%s2570 + $0xb8] sm:$0xff]
        %v2595 = vld [vmem:[%s2570 + $0xc0] sm:$0xff]
        %v2596 = vld [vmem:[%s2570 + $0xc8] sm:$0xff]
        %v2597 = vld [vmem:[%s2570 + $0xd0] sm:$0xff]
        %v2598 = vld [vmem:[%s2570 + $0xd8] sm:$0xff]
        %v2599 = vld [vmem:[%s2570 + $0xe0] sm:$0xff]
        %v2600 = vld [vmem:[%s2570 + $0xe8] sm:$0xff]
        %v2601 = vld [vmem:[%s2570 + $0xf0] sm:$0xff]
        %v2602 = vld [vmem:[%s2570 + $0xf8] sm:$0xff]
        %v2603 = vld [vmem:[%s2570 + $0x100] sm:$0xff]
        %v2604 = vld [vmem:[%s2570 + $0x108] sm:$0xff]
        %v2605 = vld [vmem:[%s2570 + $0x110] sm:$0xff]
        %v2606 = vld [vmem:[%s2570 + $0x118] sm:$0xff]
        %v2607 = vld [vmem:[%s2570 + $0x120] sm:$0xff]
        %v2608 = vld [vmem:[%s2570 + $0x128] sm:$0xff]
        %v2609 = vld [vmem:[%s2570 + $0x130] sm:$0xff]
        %v2610 = vld [vmem:[%s2570 + $0x138] sm:$0xff]
        %v2611 = vld [vmem:[%s2570 + $0x140] sm:$0xff]
        %v2612 = vld [vmem:[%s2570 + $0x148] sm:$0xff]
        %v2613 = vld [vmem:[%s2570 + $0x150] sm:$0xff]
        %v2614 = vld [vmem:[%s2570 + $0x158] sm:$0xff]
        %v2615 = vld [vmem:[%s2570 + $0x160] sm:$0xff]
        %v2616 = vld [vmem:[%s2570 + $0x168] sm:$0xff]
        %v2617 = vld [vmem:[%s2570 + $0x170] sm:$0xff]
        %v2618 = vld [vmem:[%s2570 + $0x178] sm:$0xff]
        %v2619 = vld [vmem:[%s2570 + $0x180] sm:$0xff]
        %v2620 = vld [vmem:[%s2570 + $0x188] sm:$0xff]
        %v2621 = vld [vmem:[%s2570 + $0x190] sm:$0xff]
        %v2622 = vld [vmem:[%s2570 + $0x198] sm:$0xff]
        %v2623 = vld [vmem:[%s2570 + $0x1a0] sm:$0xff]
        %v2624 = vld [vmem:[%s2570 + $0x1a8] sm:$0xff]
        %v2625 = vld [vmem:[%s2570 + $0x1b0] sm:$0xff]
        %v2626 = vld [vmem:[%s2570 + $0x1b8] sm:$0xff]
        %v2627 = vld [vmem:[%s2570 + $0x1c0] sm:$0xff]
        %v2628 = vld [vmem:[%s2570 + $0x1c8] sm:$0xff]
        %v2629 = vld [vmem:[%s2570 + $0x1d0] sm:$0xff]
        %v2630 = vld [vmem:[%s2570 + $0x1d8] sm:$0xff]
        %v2631 = vld [vmem:[%s2570 + $0x1e0] sm:$0xff]
        %v2632 = vld [vmem:[%s2570 + $0x1e8] sm:$0xff]
        %v2633 = vld [vmem:[%s2570 + $0x1f0] sm:$0xff]
        %v2634 = vld [vmem:[%s2570 + $0x1f8] sm:$0xff]
        %2635 = vmatpush.msra.mxu0 %v2601
        %2636 = vmatpush.msra.mxu0 %v2599
        %2637 = vmatpush.msra.mxu0 %v2597
        %2638 = vmatpush.msra.mxu0 %v2595
        %2639 = vmatpush.msra.mxu0 %v2593
        %2640 = vmatpush.msra.mxu0 %v2591
        %2641 = vmatpush.msra.mxu0 %v2589
        %2642 = vmatpush.msra.mxu0 %v2587
        %2643 = vmatpush.msra.mxu0 %v2585
        %2644 = vmatpush.msra.mxu0 %v2583
        %2645 = vmatpush.msra.mxu0 %v2581
        %2646 = vmatpush.msra.mxu0 %v2579
        %2647 = vmatpush.msra.mxu0 %v2577
        %2648 = vmatpush.msra.mxu0 %v2575
        %2649 = vmatpush.msra.mxu0 %v2573
        %2650 = vmatpush.msra.mxu0 %v2571
        %2651 = vmatmul.f32.gmra.mxu0 %v2554
        %v2652 = vpop.f32.mrf.mxu0
        %v2653 = vadd.f32 0.0, %v2652
        %2654 = vmatmul.f32.gmra.mxu0 %v2556
        %v2655 = vpop.f32.mrf.mxu0
        %v2656 = vadd.f32 0.0, %v2655
        %2657 = vmatmul.f32.gmra.mxu0 %v2558
        %v2658 = vpop.f32.mrf.mxu0
        %v2659 = vadd.f32 0.0, %v2658
        %2660 = vmatmul.f32.gmra.mxu0 %v2560
        %v2661 = vpop.f32.mrf.mxu0
        %v2662 = vadd.f32 0.0, %v2661
        %2663 = vmatmul.f32.gmra.mxu0 %v2562
        %v2664 = vpop.f32.mrf.mxu0
        %v2665 = vadd.f32 0.0, %v2664
        %2666 = vmatmul.f32.gmra.mxu0 %v2564
        %v2667 = vpop.f32.mrf.mxu0
        %v2668 = vadd.f32 0.0, %v2667
        %2669 = vmatmul.f32.gmra.mxu0 %v2566
        %v2670 = vpop.f32.mrf.mxu0
        %v2671 = vadd.f32 0.0, %v2670
        %2672 = vmatmul.f32.gmra.mxu0 %v2568
        %v2673 = vpop.f32.mrf.mxu0
        %v2674 = vadd.f32 0.0, %v2673
        %2675 = vdwg.mxu0
        %2676 = vmatpush.msra.mxu0 %v2633
        %2677 = vmatpush.msra.mxu0 %v2631
        %2678 = vmatpush.msra.mxu0 %v2629
        %2679 = vmatpush.msra.mxu0 %v2627
        %2680 = vmatpush.msra.mxu0 %v2625
        %2681 = vmatpush.msra.mxu0 %v2623
        %2682 = vmatpush.msra.mxu0 %v2621
        %2683 = vmatpush.msra.mxu0 %v2619
        %2684 = vmatpush.msra.mxu0 %v2617
        %2685 = vmatpush.msra.mxu0 %v2615
        %2686 = vmatpush.msra.mxu0 %v2613
        %2687 = vmatpush.msra.mxu0 %v2611
        %2688 = vmatpush.msra.mxu0 %v2609
        %2689 = vmatpush.msra.mxu0 %v2607
        %2690 = vmatpush.msra.mxu0 %v2605
        %2691 = vmatpush.msra.mxu0 %v2603
        %2692 = vmatmul.f32.gmra.mxu0 %v2555
        %v2693 = vpop.f32.mrf.mxu0
        %v2694 = vadd.f32 %v2653, %v2693
        %2695 = vmatmul.f32.gmra.mxu0 %v2557
        %v2696 = vpop.f32.mrf.mxu0
        %v2697 = vadd.f32 %v2656, %v2696
        %2698 = vmatmul.f32.gmra.mxu0 %v2559
        %v2699 = vpop.f32.mrf.mxu0
        %v2700 = vadd.f32 %v2659, %v2699
        %2701 = vmatmul.f32.gmra.mxu0 %v2561
        %v2702 = vpop.f32.mrf.mxu0
        %v2703 = vadd.f32 %v2662, %v2702
        %2704 = vmatmul.f32.gmra.mxu0 %v2563
        %v2705 = vpop.f32.mrf.mxu0
        %v2706 = vadd.f32 %v2665, %v2705
        %2707 = vmatmul.f32.gmra.mxu0 %v2565
        %v2708 = vpop.f32.mrf.mxu0
        %v2709 = vadd.f32 %v2668, %v2708
        %2710 = vmatmul.f32.gmra.mxu0 %v2567
        %v2711 = vpop.f32.mrf.mxu0
        %v2712 = vadd.f32 %v2671, %v2711
        %2713 = vmatmul.f32.gmra.mxu0 %v2569
        %v2714 = vpop.f32.mrf.mxu0
        %v2715 = vadd.f32 %v2674, %v2714
        %2716 = vdwg.mxu0
        %2717 = vmatpush.msra.mxu0 %v2602
        %2718 = vmatpush.msra.mxu0 %v2600
        %2719 = vmatpush.msra.mxu0 %v2598
        %2720 = vmatpush.msra.mxu0 %v2596
        %2721 = vmatpush.msra.mxu0 %v2594
        %2722 = vmatpush.msra.mxu0 %v2592
        %2723 = vmatpush.msra.mxu0 %v2590
        %2724 = vmatpush.msra.mxu0 %v2588
        %2725 = vmatpush.msra.mxu0 %v2586
        %2726 = vmatpush.msra.mxu0 %v2584
        %2727 = vmatpush.msra.mxu0 %v2582
        %2728 = vmatpush.msra.mxu0 %v2580
        %2729 = vmatpush.msra.mxu0 %v2578
        %2730 = vmatpush.msra.mxu0 %v2576
        %2731 = vmatpush.msra.mxu0 %v2574
        %2732 = vmatpush.msra.mxu0 %v2572
        %2733 = vmatmul.f32.gmra.mxu0 %v2554
        %v2734 = vpop.f32.mrf.mxu0
        %v2735 = vadd.f32 0.0, %v2734
        %2736 = vmatmul.f32.gmra.mxu0 %v2556
        %v2737 = vpop.f32.mrf.mxu0
        %v2738 = vadd.f32 0.0, %v2737
        %2739 = vmatmul.f32.gmra.mxu0 %v2558
        %v2740 = vpop.f32.mrf.mxu0
        %v2741 = vadd.f32 0.0, %v2740
        %2742 = vmatmul.f32.gmra.mxu0 %v2560
        %v2743 = vpop.f32.mrf.mxu0
        %v2744 = vadd.f32 0.0, %v2743
        %2745 = vmatmul.f32.gmra.mxu0 %v2562
        %v2746 = vpop.f32.mrf.mxu0
        %v2747 = vadd.f32 0.0, %v2746
        %2748 = vmatmul.f32.gmra.mxu0 %v2564
        %v2749 = vpop.f32.mrf.mxu0
        %v2750 = vadd.f32 0.0, %v2749
        %2751 = vmatmul.f32.gmra.mxu0 %v2566
        %v2752 = vpop.f32.mrf.mxu0
        %v2753 = vadd.f32 0.0, %v2752
        %2754 = vmatmul.f32.gmra.mxu0 %v2568
        %v2755 = vpop.f32.mrf.mxu0
        %v2756 = vadd.f32 0.0, %v2755
        %2757 = vdwg.mxu0
        %2758 = vmatpush.msra.mxu0 %v2634
        %2759 = vmatpush.msra.mxu0 %v2632
        %2760 = vmatpush.msra.mxu0 %v2630
        %2761 = vmatpush.msra.mxu0 %v2628
        %2762 = vmatpush.msra.mxu0 %v2626
        %2763 = vmatpush.msra.mxu0 %v2624
        %2764 = vmatpush.msra.mxu0 %v2622
        %2765 = vmatpush.msra.mxu0 %v2620
        %2766 = vmatpush.msra.mxu0 %v2618
        %2767 = vmatpush.msra.mxu0 %v2616
        %2768 = vmatpush.msra.mxu0 %v2614
        %2769 = vmatpush.msra.mxu0 %v2612
        %2770 = vmatpush.msra.mxu0 %v2610
        %2771 = vmatpush.msra.mxu0 %v2608
        %2772 = vmatpush.msra.mxu0 %v2606
        %2773 = vmatpush.msra.mxu0 %v2604
        %2774 = vmatmul.f32.gmra.mxu0 %v2555
        %v2775 = vpop.f32.mrf.mxu0
        %v2776 = vadd.f32 %v2735, %v2775
        %2777 = vmatmul.f32.gmra.mxu0 %v2557
        %v2778 = vpop.f32.mrf.mxu0
        %v2779 = vadd.f32 %v2738, %v2778
        %2780 = vmatmul.f32.gmra.mxu0 %v2559
        %v2781 = vpop.f32.mrf.mxu0
        %v2782 = vadd.f32 %v2741, %v2781
        %2783 = vmatmul.f32.gmra.mxu0 %v2561
        %v2784 = vpop.f32.mrf.mxu0
        %v2785 = vadd.f32 %v2744, %v2784
        %2786 = vmatmul.f32.gmra.mxu0 %v2563
        %v2787 = vpop.f32.mrf.mxu0
        %v2788 = vadd.f32 %v2747, %v2787
        %2789 = vmatmul.f32.gmra.mxu0 %v2565
        %v2790 = vpop.f32.mrf.mxu0
        %v2791 = vadd.f32 %v2750, %v2790
        %2792 = vmatmul.f32.gmra.mxu0 %v2567
        %v2793 = vpop.f32.mrf.mxu0
        %v2794 = vadd.f32 %v2753, %v2793
        %2795 = vmatmul.f32.gmra.mxu0 %v2569
        %v2796 = vpop.f32.mrf.mxu0
        %v2797 = vadd.f32 %v2756, %v2796
        %2798 = vdwg.mxu0
        %v2799 = vadd.f32 %v2537, %v2694
        %v2800 = vadd.f32 %v2538, %v2776
        %v2801 = vadd.f32 %v2539, %v2697
        %v2802 = vadd.f32 %v2540, %v2779
        %v2803 = vadd.f32 %v2541, %v2700
        %v2804 = vadd.f32 %v2542, %v2782
        %v2805 = vadd.f32 %v2543, %v2703
        %v2806 = vadd.f32 %v2544, %v2785
        %v2807 = vadd.f32 %v2545, %v2706
        %v2808 = vadd.f32 %v2546, %v2788
        %v2809 = vadd.f32 %v2547, %v2709
        %v2810 = vadd.f32 %v2548, %v2791
        %v2811 = vadd.f32 %v2549, %v2712
        %v2812 = vadd.f32 %v2550, %v2794
        %v2813 = vadd.f32 %v2551, %v2715
        %v2814 = vadd.f32 %v2552, %v2797
        %v2815 = vld [vmem:[%s2553] sm:$0xfe]
        %v2816 = vld [vmem:[%s2553 + $0x8] sm:$0xfe]
        %v2817 = vld [vmem:[%s2553 + $0x10] sm:$0x1]
        %v2818 = vld [vmem:[%s2553 + $0x18] sm:$0x1]
        %v2819 = vld [vmem:[%s2553 + $0x20] sm:$0xfe]
        %v2820 = vld [vmem:[%s2553 + $0x28] sm:$0xfe]
        %v2821 = vld [vmem:[%s2553 + $0x30] sm:$0x1]
        %v2822 = vld [vmem:[%s2553 + $0x38] sm:$0x1]
        %v2823 = vld [vmem:[%s2553 + $0x40] sm:$0xfe]
        %v2824 = vld [vmem:[%s2553 + $0x48] sm:$0xfe]
        %v2825 = vld [vmem:[%s2553 + $0x50] sm:$0x1]
        %v2826 = vld [vmem:[%s2553 + $0x58] sm:$0x1]
        %v2827 = vld [vmem:[%s2553 + $0x60] sm:$0xfe]
        %v2828 = vld [vmem:[%s2553 + $0x68] sm:$0xfe]
        %v2829 = vld [vmem:[%s2553 + $0x70] sm:$0x1]
        %v2830 = vld [vmem:[%s2553 + $0x78] sm:$0x1]
        %v2831 = vld [vmem:[%s2553 + $0x80] sm:$0xfe]
        %v2832 = vld [vmem:[%s2553 + $0x88] sm:$0xfe]
        %v2833 = vld [vmem:[%s2553 + $0x90] sm:$0x1]
        %v2834 = vld [vmem:[%s2553 + $0x98] sm:$0x1]
        %v2835 = vld [vmem:[%s2553 + $0xa0] sm:$0xfe]
        %v2836 = vld [vmem:[%s2553 + $0xa8] sm:$0xfe]
        %v2837 = vld [vmem:[%s2553 + $0xb0] sm:$0x1]
        %v2838 = vld [vmem:[%s2553 + $0xb8] sm:$0x1]
        %v2839 = vld [vmem:[%s2553 + $0xc0] sm:$0xfe]
        %v2840 = vld [vmem:[%s2553 + $0xc8] sm:$0xfe]
        %v2841 = vld [vmem:[%s2553 + $0xd0] sm:$0x1]
        %v2842 = vld [vmem:[%s2553 + $0xd8] sm:$0x1]
        %v2843 = vld [vmem:[%s2553 + $0xe0] sm:$0xfe]
        %v2844 = vld [vmem:[%s2553 + $0xe8] sm:$0xfe]
        %v2845 = vld [vmem:[%s2553 + $0xf0] sm:$0x1]
        %v2846 = vld [vmem:[%s2553 + $0xf8] sm:$0x1]
        %v2879 = vrot.slane %v2815, 1
        %v2880 = vrot.slane %v2817, 1
        %v2881 = vsel %vm714, %v2879, %v2880
        %v2882 = vrot.slane %v2816, 1
        %v2883 = vrot.slane %v2818, 1
        %v2884 = vsel %vm714, %v2882, %v2883
        %v2885 = vrot.slane %v2819, 1
        %v2886 = vrot.slane %v2821, 1
        %v2887 = vsel %vm714, %v2885, %v2886
        %v2888 = vrot.slane %v2820, 1
        %v2889 = vrot.slane %v2822, 1
        %v2890 = vsel %vm714, %v2888, %v2889
        %v2891 = vrot.slane %v2823, 1
        %v2892 = vrot.slane %v2825, 1
        %v2893 = vsel %vm714, %v2891, %v2892
        %v2894 = vrot.slane %v2824, 1
        %v2895 = vrot.slane %v2826, 1
        %v2896 = vsel %vm714, %v2894, %v2895
        %v2897 = vrot.slane %v2827, 1
        %v2898 = vrot.slane %v2829, 1
        %v2899 = vsel %vm714, %v2897, %v2898
        %v2900 = vrot.slane %v2828, 1
        %v2901 = vrot.slane %v2830, 1
        %v2902 = vsel %vm714, %v2900, %v2901
        %v2903 = vrot.slane %v2831, 1
        %v2904 = vrot.slane %v2833, 1
        %v2905 = vsel %vm714, %v2903, %v2904
        %v2906 = vrot.slane %v2832, 1
        %v2907 = vrot.slane %v2834, 1
        %v2908 = vsel %vm714, %v2906, %v2907
        %v2909 = vrot.slane %v2835, 1
        %v2910 = vrot.slane %v2837, 1
        %v2911 = vsel %vm714, %v2909, %v2910
        %v2912 = vrot.slane %v2836, 1
        %v2913 = vrot.slane %v2838, 1
        %v2914 = vsel %vm714, %v2912, %v2913
        %v2915 = vrot.slane %v2839, 1
        %v2916 = vrot.slane %v2841, 1
        %v2917 = vsel %vm714, %v2915, %v2916
        %v2918 = vrot.slane %v2840, 1
        %v2919 = vrot.slane %v2842, 1
        %v2920 = vsel %vm714, %v2918, %v2919
        %v2921 = vrot.slane %v2843, 1
        %v2922 = vrot.slane %v2845, 1
        %v2923 = vsel %vm714, %v2921, %v2922
        %v2924 = vrot.slane %v2844, 1
        %v2925 = vrot.slane %v2846, 1
        %v2926 = vsel %vm714, %v2924, %v2925
        %s2943 = scalar_lea.vmem [#allocation7], 3584
        %v2944 = vld [vmem:[%s2943] sm:$0xff]
        %v2945 = vld [vmem:[%s2943 + $0x8] sm:$0xff]
        %v2946 = vld [vmem:[%s2943 + $0x10] sm:$0xff]
        %v2947 = vld [vmem:[%s2943 + $0x18] sm:$0xff]
        %v2948 = vld [vmem:[%s2943 + $0x20] sm:$0xff]
        %v2949 = vld [vmem:[%s2943 + $0x28] sm:$0xff]
        %v2950 = vld [vmem:[%s2943 + $0x30] sm:$0xff]
        %v2951 = vld [vmem:[%s2943 + $0x38] sm:$0xff]
        %v2952 = vld [vmem:[%s2943 + $0x40] sm:$0xff]
        %v2953 = vld [vmem:[%s2943 + $0x48] sm:$0xff]
        %v2954 = vld [vmem:[%s2943 + $0x50] sm:$0xff]
        %v2955 = vld [vmem:[%s2943 + $0x58] sm:$0xff]
        %v2956 = vld [vmem:[%s2943 + $0x60] sm:$0xff]
        %v2957 = vld [vmem:[%s2943 + $0x68] sm:$0xff]
        %v2958 = vld [vmem:[%s2943 + $0x70] sm:$0xff]
        %v2959 = vld [vmem:[%s2943 + $0x78] sm:$0xff]
        %v2960 = vld [vmem:[%s2943 + $0x80] sm:$0xff]
        %v2961 = vld [vmem:[%s2943 + $0x88] sm:$0xff]
        %v2962 = vld [vmem:[%s2943 + $0x90] sm:$0xff]
        %v2963 = vld [vmem:[%s2943 + $0x98] sm:$0xff]
        %v2964 = vld [vmem:[%s2943 + $0xa0] sm:$0xff]
        %v2965 = vld [vmem:[%s2943 + $0xa8] sm:$0xff]
        %v2966 = vld [vmem:[%s2943 + $0xb0] sm:$0xff]
        %v2967 = vld [vmem:[%s2943 + $0xb8] sm:$0xff]
        %v2968 = vld [vmem:[%s2943 + $0xc0] sm:$0xff]
        %v2969 = vld [vmem:[%s2943 + $0xc8] sm:$0xff]
        %v2970 = vld [vmem:[%s2943 + $0xd0] sm:$0xff]
        %v2971 = vld [vmem:[%s2943 + $0xd8] sm:$0xff]
        %v2972 = vld [vmem:[%s2943 + $0xe0] sm:$0xff]
        %v2973 = vld [vmem:[%s2943 + $0xe8] sm:$0xff]
        %v2974 = vld [vmem:[%s2943 + $0xf0] sm:$0xff]
        %v2975 = vld [vmem:[%s2943 + $0xf8] sm:$0xff]
        %v2976 = vld [vmem:[%s2943 + $0x100] sm:$0xff]
        %v2977 = vld [vmem:[%s2943 + $0x108] sm:$0xff]
        %v2978 = vld [vmem:[%s2943 + $0x110] sm:$0xff]
        %v2979 = vld [vmem:[%s2943 + $0x118] sm:$0xff]
        %v2980 = vld [vmem:[%s2943 + $0x120] sm:$0xff]
        %v2981 = vld [vmem:[%s2943 + $0x128] sm:$0xff]
        %v2982 = vld [vmem:[%s2943 + $0x130] sm:$0xff]
        %v2983 = vld [vmem:[%s2943 + $0x138] sm:$0xff]
        %v2984 = vld [vmem:[%s2943 + $0x140] sm:$0xff]
        %v2985 = vld [vmem:[%s2943 + $0x148] sm:$0xff]
        %v2986 = vld [vmem:[%s2943 + $0x150] sm:$0xff]
        %v2987 = vld [vmem:[%s2943 + $0x158] sm:$0xff]
        %v2988 = vld [vmem:[%s2943 + $0x160] sm:$0xff]
        %v2989 = vld [vmem:[%s2943 + $0x168] sm:$0xff]
        %v2990 = vld [vmem:[%s2943 + $0x170] sm:$0xff]
        %v2991 = vld [vmem:[%s2943 + $0x178] sm:$0xff]
        %v2992 = vld [vmem:[%s2943 + $0x180] sm:$0xff]
        %v2993 = vld [vmem:[%s2943 + $0x188] sm:$0xff]
        %v2994 = vld [vmem:[%s2943 + $0x190] sm:$0xff]
        %v2995 = vld [vmem:[%s2943 + $0x198] sm:$0xff]
        %v2996 = vld [vmem:[%s2943 + $0x1a0] sm:$0xff]
        %v2997 = vld [vmem:[%s2943 + $0x1a8] sm:$0xff]
        %v2998 = vld [vmem:[%s2943 + $0x1b0] sm:$0xff]
        %v2999 = vld [vmem:[%s2943 + $0x1b8] sm:$0xff]
        %v3000 = vld [vmem:[%s2943 + $0x1c0] sm:$0xff]
        %v3001 = vld [vmem:[%s2943 + $0x1c8] sm:$0xff]
        %v3002 = vld [vmem:[%s2943 + $0x1d0] sm:$0xff]
        %v3003 = vld [vmem:[%s2943 + $0x1d8] sm:$0xff]
        %v3004 = vld [vmem:[%s2943 + $0x1e0] sm:$0xff]
        %v3005 = vld [vmem:[%s2943 + $0x1e8] sm:$0xff]
        %v3006 = vld [vmem:[%s2943 + $0x1f0] sm:$0xff]
        %v3007 = vld [vmem:[%s2943 + $0x1f8] sm:$0xff]
        %3008 = vmatpush.msra.mxu0 %v2974
        %3009 = vmatpush.msra.mxu0 %v2972
        %3010 = vmatpush.msra.mxu0 %v2970
        %3011 = vmatpush.msra.mxu0 %v2968
        %3012 = vmatpush.msra.mxu0 %v2966
        %3013 = vmatpush.msra.mxu0 %v2964
        %3014 = vmatpush.msra.mxu0 %v2962
        %3015 = vmatpush.msra.mxu0 %v2960
        %3016 = vmatpush.msra.mxu0 %v2958
        %3017 = vmatpush.msra.mxu0 %v2956
        %3018 = vmatpush.msra.mxu0 %v2954
        %3019 = vmatpush.msra.mxu0 %v2952
        %3020 = vmatpush.msra.mxu0 %v2950
        %3021 = vmatpush.msra.mxu0 %v2948
        %3022 = vmatpush.msra.mxu0 %v2946
        %3023 = vmatpush.msra.mxu0 %v2944
        %3024 = vmatmul.f32.gmra.mxu0 %v2881
        %v3025 = vpop.f32.mrf.mxu0
        %v3026 = vadd.f32 0.0, %v3025
        %3027 = vmatmul.f32.gmra.mxu0 %v2887
        %v3028 = vpop.f32.mrf.mxu0
        %v3029 = vadd.f32 0.0, %v3028
        %3030 = vmatmul.f32.gmra.mxu0 %v2893
        %v3031 = vpop.f32.mrf.mxu0
        %v3032 = vadd.f32 0.0, %v3031
        %3033 = vmatmul.f32.gmra.mxu0 %v2899
        %v3034 = vpop.f32.mrf.mxu0
        %v3035 = vadd.f32 0.0, %v3034
        %3036 = vmatmul.f32.gmra.mxu0 %v2905
        %v3037 = vpop.f32.mrf.mxu0
        %v3038 = vadd.f32 0.0, %v3037
        %3039 = vmatmul.f32.gmra.mxu0 %v2911
        %v3040 = vpop.f32.mrf.mxu0
        %v3041 = vadd.f32 0.0, %v3040
        %3042 = vmatmul.f32.gmra.mxu0 %v2917
        %v3043 = vpop.f32.mrf.mxu0
        %v3044 = vadd.f32 0.0, %v3043
        %3045 = vmatmul.f32.gmra.mxu0 %v2923
        %v3046 = vpop.f32.mrf.mxu0
        %v3047 = vadd.f32 0.0, %v3046
        %3048 = vdwg.mxu0
        %3049 = vmatpush.msra.mxu0 %v3006
        %3050 = vmatpush.msra.mxu0 %v3004
        %3051 = vmatpush.msra.mxu0 %v3002
        %3052 = vmatpush.msra.mxu0 %v3000
        %3053 = vmatpush.msra.mxu0 %v2998
        %3054 = vmatpush.msra.mxu0 %v2996
        %3055 = vmatpush.msra.mxu0 %v2994
        %3056 = vmatpush.msra.mxu0 %v2992
        %3057 = vmatpush.msra.mxu0 %v2990
        %3058 = vmatpush.msra.mxu0 %v2988
        %3059 = vmatpush.msra.mxu0 %v2986
        %3060 = vmatpush.msra.mxu0 %v2984
        %3061 = vmatpush.msra.mxu0 %v2982
        %3062 = vmatpush.msra.mxu0 %v2980
        %3063 = vmatpush.msra.mxu0 %v2978
        %3064 = vmatpush.msra.mxu0 %v2976
        %3065 = vmatmul.f32.gmra.mxu0 %v2884
        %v3066 = vpop.f32.mrf.mxu0
        %v3067 = vadd.f32 %v3026, %v3066
        %3068 = vmatmul.f32.gmra.mxu0 %v2890
        %v3069 = vpop.f32.mrf.mxu0
        %v3070 = vadd.f32 %v3029, %v3069
        %3071 = vmatmul.f32.gmra.mxu0 %v2896
        %v3072 = vpop.f32.mrf.mxu0
        %v3073 = vadd.f32 %v3032, %v3072
        %3074 = vmatmul.f32.gmra.mxu0 %v2902
        %v3075 = vpop.f32.mrf.mxu0
        %v3076 = vadd.f32 %v3035, %v3075
        %3077 = vmatmul.f32.gmra.mxu0 %v2908
        %v3078 = vpop.f32.mrf.mxu0
        %v3079 = vadd.f32 %v3038, %v3078
        %3080 = vmatmul.f32.gmra.mxu0 %v2914
        %v3081 = vpop.f32.mrf.mxu0
        %v3082 = vadd.f32 %v3041, %v3081
        %3083 = vmatmul.f32.gmra.mxu0 %v2920
        %v3084 = vpop.f32.mrf.mxu0
        %v3085 = vadd.f32 %v3044, %v3084
        %3086 = vmatmul.f32.gmra.mxu0 %v2926
        %v3087 = vpop.f32.mrf.mxu0
        %v3088 = vadd.f32 %v3047, %v3087
        %3089 = vdwg.mxu0
        %3090 = vmatpush.msra.mxu0 %v2975
        %3091 = vmatpush.msra.mxu0 %v2973
        %3092 = vmatpush.msra.mxu0 %v2971
        %3093 = vmatpush.msra.mxu0 %v2969
        %3094 = vmatpush.msra.mxu0 %v2967
        %3095 = vmatpush.msra.mxu0 %v2965
        %3096 = vmatpush.msra.mxu0 %v2963
        %3097 = vmatpush.msra.mxu0 %v2961
        %3098 = vmatpush.msra.mxu0 %v2959
        %3099 = vmatpush.msra.mxu0 %v2957
        %3100 = vmatpush.msra.mxu0 %v2955
        %3101 = vmatpush.msra.mxu0 %v2953
        %3102 = vmatpush.msra.mxu0 %v2951
        %3103 = vmatpush.msra.mxu0 %v2949
        %3104 = vmatpush.msra.mxu0 %v2947
        %3105 = vmatpush.msra.mxu0 %v2945
        %3106 = vmatmul.f32.gmra.mxu0 %v2881
        %v3107 = vpop.f32.mrf.mxu0
        %v3108 = vadd.f32 0.0, %v3107
        %3109 = vmatmul.f32.gmra.mxu0 %v2887
        %v3110 = vpop.f32.mrf.mxu0
        %v3111 = vadd.f32 0.0, %v3110
        %3112 = vmatmul.f32.gmra.mxu0 %v2893
        %v3113 = vpop.f32.mrf.mxu0
        %v3114 = vadd.f32 0.0, %v3113
        %3115 = vmatmul.f32.gmra.mxu0 %v2899
        %v3116 = vpop.f32.mrf.mxu0
        %v3117 = vadd.f32 0.0, %v3116
        %3118 = vmatmul.f32.gmra.mxu0 %v2905
        %v3119 = vpop.f32.mrf.mxu0
        %v3120 = vadd.f32 0.0, %v3119
        %3121 = vmatmul.f32.gmra.mxu0 %v2911
        %v3122 = vpop.f32.mrf.mxu0
        %v3123 = vadd.f32 0.0, %v3122
        %3124 = vmatmul.f32.gmra.mxu0 %v2917
        %v3125 = vpop.f32.mrf.mxu0
        %v3126 = vadd.f32 0.0, %v3125
        %3127 = vmatmul.f32.gmra.mxu0 %v2923
        %v3128 = vpop.f32.mrf.mxu0
        %v3129 = vadd.f32 0.0, %v3128
        %3130 = vdwg.mxu0
        %3131 = vmatpush.msra.mxu0 %v3007
        %3132 = vmatpush.msra.mxu0 %v3005
        %3133 = vmatpush.msra.mxu0 %v3003
        %3134 = vmatpush.msra.mxu0 %v3001
        %3135 = vmatpush.msra.mxu0 %v2999
        %3136 = vmatpush.msra.mxu0 %v2997
        %3137 = vmatpush.msra.mxu0 %v2995
        %3138 = vmatpush.msra.mxu0 %v2993
        %3139 = vmatpush.msra.mxu0 %v2991
        %3140 = vmatpush.msra.mxu0 %v2989
        %3141 = vmatpush.msra.mxu0 %v2987
        %3142 = vmatpush.msra.mxu0 %v2985
        %3143 = vmatpush.msra.mxu0 %v2983
        %3144 = vmatpush.msra.mxu0 %v2981
        %3145 = vmatpush.msra.mxu0 %v2979
        %3146 = vmatpush.msra.mxu0 %v2977
        %3147 = vmatmul.f32.gmra.mxu0 %v2884
        %v3148 = vpop.f32.mrf.mxu0
        %v3149 = vadd.f32 %v3108, %v3148
        %3150 = vmatmul.f32.gmra.mxu0 %v2890
        %v3151 = vpop.f32.mrf.mxu0
        %v3152 = vadd.f32 %v3111, %v3151
        %3153 = vmatmul.f32.gmra.mxu0 %v2896
        %v3154 = vpop.f32.mrf.mxu0
        %v3155 = vadd.f32 %v3114, %v3154
        %3156 = vmatmul.f32.gmra.mxu0 %v2902
        %v3157 = vpop.f32.mrf.mxu0
        %v3158 = vadd.f32 %v3117, %v3157
        %3159 = vmatmul.f32.gmra.mxu0 %v2908
        %v3160 = vpop.f32.mrf.mxu0
        %v3161 = vadd.f32 %v3120, %v3160
        %3162 = vmatmul.f32.gmra.mxu0 %v2914
        %v3163 = vpop.f32.mrf.mxu0
        %v3164 = vadd.f32 %v3123, %v3163
        %3165 = vmatmul.f32.gmra.mxu0 %v2920
        %v3166 = vpop.f32.mrf.mxu0
        %v3167 = vadd.f32 %v3126, %v3166
        %3168 = vmatmul.f32.gmra.mxu0 %v2926
        %v3169 = vpop.f32.mrf.mxu0
        %v3170 = vadd.f32 %v3129, %v3169
        %3171 = vdwg.mxu0
        %v3172 = vadd.f32 %v2799, %v3067
        %v3173 = vadd.f32 %v2800, %v3149
        %v3174 = vadd.f32 %v2801, %v3070
        %v3175 = vadd.f32 %v2802, %v3152
        %v3176 = vadd.f32 %v2803, %v3073
        %v3177 = vadd.f32 %v2804, %v3155
        %v3178 = vadd.f32 %v2805, %v3076
        %v3179 = vadd.f32 %v2806, %v3158
        %v3180 = vadd.f32 %v2807, %v3079
        %v3181 = vadd.f32 %v2808, %v3161
        %v3182 = vadd.f32 %v2809, %v3082
        %v3183 = vadd.f32 %v2810, %v3164
        %v3184 = vadd.f32 %v2811, %v3085
        %v3185 = vadd.f32 %v2812, %v3167
        %v3186 = vadd.f32 %v2813, %v3088
        %v3187 = vadd.f32 %v2814, %v3170
        %v3188 = vld [vmem:[%s2553] sm:$0xfc]
        %v3189 = vld [vmem:[%s2553 + $0x8] sm:$0xfc]
        %v3190 = vld [vmem:[%s2553 + $0x10] sm:$0x3]
        %v3191 = vld [vmem:[%s2553 + $0x18] sm:$0x3]
        %v3192 = vld [vmem:[%s2553 + $0x20] sm:$0xfc]
        %v3193 = vld [vmem:[%s2553 + $0x28] sm:$0xfc]
        %v3194 = vld [vmem:[%s2553 + $0x30] sm:$0x3]
        %v3195 = vld [vmem:[%s2553 + $0x38] sm:$0x3]
        %v3196 = vld [vmem:[%s2553 + $0x40] sm:$0xfc]
        %v3197 = vld [vmem:[%s2553 + $0x48] sm:$0xfc]
        %v3198 = vld [vmem:[%s2553 + $0x50] sm:$0x3]
        %v3199 = vld [vmem:[%s2553 + $0x58] sm:$0x3]
        %v3200 = vld [vmem:[%s2553 + $0x60] sm:$0xfc]
        %v3201 = vld [vmem:[%s2553 + $0x68] sm:$0xfc]
        %v3202 = vld [vmem:[%s2553 + $0x70] sm:$0x3]
        %v3203 = vld [vmem:[%s2553 + $0x78] sm:$0x3]
        %v3204 = vld [vmem:[%s2553 + $0x80] sm:$0xfc]
        %v3205 = vld [vmem:[%s2553 + $0x88] sm:$0xfc]
        %v3206 = vld [vmem:[%s2553 + $0x90] sm:$0x3]
        %v3207 = vld [vmem:[%s2553 + $0x98] sm:$0x3]
        %v3208 = vld [vmem:[%s2553 + $0xa0] sm:$0xfc]
        %v3209 = vld [vmem:[%s2553 + $0xa8] sm:$0xfc]
        %v3210 = vld [vmem:[%s2553 + $0xb0] sm:$0x3]
        %v3211 = vld [vmem:[%s2553 + $0xb8] sm:$0x3]
        %v3212 = vld [vmem:[%s2553 + $0xc0] sm:$0xfc]
        %v3213 = vld [vmem:[%s2553 + $0xc8] sm:$0xfc]
        %v3214 = vld [vmem:[%s2553 + $0xd0] sm:$0x3]
        %v3215 = vld [vmem:[%s2553 + $0xd8] sm:$0x3]
        %v3216 = vld [vmem:[%s2553 + $0xe0] sm:$0xfc]
        %v3217 = vld [vmem:[%s2553 + $0xe8] sm:$0xfc]
        %v3218 = vld [vmem:[%s2553 + $0xf0] sm:$0x3]
        %v3219 = vld [vmem:[%s2553 + $0xf8] sm:$0x3]
        %v3252 = vrot.slane %v3188, 2
        %v3253 = vrot.slane %v3190, 2
        %v3254 = vsel %vm1236, %v3252, %v3253
        %v3255 = vrot.slane %v3189, 2
        %v3256 = vrot.slane %v3191, 2
        %v3257 = vsel %vm1236, %v3255, %v3256
        %v3258 = vrot.slane %v3192, 2
        %v3259 = vrot.slane %v3194, 2
        %v3260 = vsel %vm1236, %v3258, %v3259
        %v3261 = vrot.slane %v3193, 2
        %v3262 = vrot.slane %v3195, 2
        %v3263 = vsel %vm1236, %v3261, %v3262
        %v3264 = vrot.slane %v3196, 2
        %v3265 = vrot.slane %v3198, 2
        %v3266 = vsel %vm1236, %v3264, %v3265
        %v3267 = vrot.slane %v3197, 2
        %v3268 = vrot.slane %v3199, 2
        %v3269 = vsel %vm1236, %v3267, %v3268
        %v3270 = vrot.slane %v3200, 2
        %v3271 = vrot.slane %v3202, 2
        %v3272 = vsel %vm1236, %v3270, %v3271
        %v3273 = vrot.slane %v3201, 2
        %v3274 = vrot.slane %v3203, 2
        %v3275 = vsel %vm1236, %v3273, %v3274
        %v3276 = vrot.slane %v3204, 2
        %v3277 = vrot.slane %v3206, 2
        %v3278 = vsel %vm1236, %v3276, %v3277
        %v3279 = vrot.slane %v3205, 2
        %v3280 = vrot.slane %v3207, 2
        %v3281 = vsel %vm1236, %v3279, %v3280
        %v3282 = vrot.slane %v3208, 2
        %v3283 = vrot.slane %v3210, 2
        %v3284 = vsel %vm1236, %v3282, %v3283
        %v3285 = vrot.slane %v3209, 2
        %v3286 = vrot.slane %v3211, 2
        %v3287 = vsel %vm1236, %v3285, %v3286
        %v3288 = vrot.slane %v3212, 2
        %v3289 = vrot.slane %v3214, 2
        %v3290 = vsel %vm1236, %v3288, %v3289
        %v3291 = vrot.slane %v3213, 2
        %v3292 = vrot.slane %v3215, 2
        %v3293 = vsel %vm1236, %v3291, %v3292
        %v3294 = vrot.slane %v3216, 2
        %v3295 = vrot.slane %v3218, 2
        %v3296 = vsel %vm1236, %v3294, %v3295
        %v3297 = vrot.slane %v3217, 2
        %v3298 = vrot.slane %v3219, 2
        %v3299 = vsel %vm1236, %v3297, %v3298
        %s3316 = scalar_lea.vmem [#allocation7], 4096
        %v3317 = vld [vmem:[%s3316] sm:$0xff]
        %v3318 = vld [vmem:[%s3316 + $0x8] sm:$0xff]
        %v3319 = vld [vmem:[%s3316 + $0x10] sm:$0xff]
        %v3320 = vld [vmem:[%s3316 + $0x18] sm:$0xff]
        %v3321 = vld [vmem:[%s3316 + $0x20] sm:$0xff]
        %v3322 = vld [vmem:[%s3316 + $0x28] sm:$0xff]
        %v3323 = vld [vmem:[%s3316 + $0x30] sm:$0xff]
        %v3324 = vld [vmem:[%s3316 + $0x38] sm:$0xff]
        %v3325 = vld [vmem:[%s3316 + $0x40] sm:$0xff]
        %v3326 = vld [vmem:[%s3316 + $0x48] sm:$0xff]
        %v3327 = vld [vmem:[%s3316 + $0x50] sm:$0xff]
        %v3328 = vld [vmem:[%s3316 + $0x58] sm:$0xff]
        %v3329 = vld [vmem:[%s3316 + $0x60] sm:$0xff]
        %v3330 = vld [vmem:[%s3316 + $0x68] sm:$0xff]
        %v3331 = vld [vmem:[%s3316 + $0x70] sm:$0xff]
        %v3332 = vld [vmem:[%s3316 + $0x78] sm:$0xff]
        %v3333 = vld [vmem:[%s3316 + $0x80] sm:$0xff]
        %v3334 = vld [vmem:[%s3316 + $0x88] sm:$0xff]
        %v3335 = vld [vmem:[%s3316 + $0x90] sm:$0xff]
        %v3336 = vld [vmem:[%s3316 + $0x98] sm:$0xff]
        %v3337 = vld [vmem:[%s3316 + $0xa0] sm:$0xff]
        %v3338 = vld [vmem:[%s3316 + $0xa8] sm:$0xff]
        %v3339 = vld [vmem:[%s3316 + $0xb0] sm:$0xff]
        %v3340 = vld [vmem:[%s3316 + $0xb8] sm:$0xff]
        %v3341 = vld [vmem:[%s3316 + $0xc0] sm:$0xff]
        %v3342 = vld [vmem:[%s3316 + $0xc8] sm:$0xff]
        %v3343 = vld [vmem:[%s3316 + $0xd0] sm:$0xff]
        %v3344 = vld [vmem:[%s3316 + $0xd8] sm:$0xff]
        %v3345 = vld [vmem:[%s3316 + $0xe0] sm:$0xff]
        %v3346 = vld [vmem:[%s3316 + $0xe8] sm:$0xff]
        %v3347 = vld [vmem:[%s3316 + $0xf0] sm:$0xff]
        %v3348 = vld [vmem:[%s3316 + $0xf8] sm:$0xff]
        %v3349 = vld [vmem:[%s3316 + $0x100] sm:$0xff]
        %v3350 = vld [vmem:[%s3316 + $0x108] sm:$0xff]
        %v3351 = vld [vmem:[%s3316 + $0x110] sm:$0xff]
        %v3352 = vld [vmem:[%s3316 + $0x118] sm:$0xff]
        %v3353 = vld [vmem:[%s3316 + $0x120] sm:$0xff]
        %v3354 = vld [vmem:[%s3316 + $0x128] sm:$0xff]
        %v3355 = vld [vmem:[%s3316 + $0x130] sm:$0xff]
        %v3356 = vld [vmem:[%s3316 + $0x138] sm:$0xff]
        %v3357 = vld [vmem:[%s3316 + $0x140] sm:$0xff]
        %v3358 = vld [vmem:[%s3316 + $0x148] sm:$0xff]
        %v3359 = vld [vmem:[%s3316 + $0x150] sm:$0xff]
        %v3360 = vld [vmem:[%s3316 + $0x158] sm:$0xff]
        %v3361 = vld [vmem:[%s3316 + $0x160] sm:$0xff]
        %v3362 = vld [vmem:[%s3316 + $0x168] sm:$0xff]
        %v3363 = vld [vmem:[%s3316 + $0x170] sm:$0xff]
        %v3364 = vld [vmem:[%s3316 + $0x178] sm:$0xff]
        %v3365 = vld [vmem:[%s3316 + $0x180] sm:$0xff]
        %v3366 = vld [vmem:[%s3316 + $0x188] sm:$0xff]
        %v3367 = vld [vmem:[%s3316 + $0x190] sm:$0xff]
        %v3368 = vld [vmem:[%s3316 + $0x198] sm:$0xff]
        %v3369 = vld [vmem:[%s3316 + $0x1a0] sm:$0xff]
        %v3370 = vld [vmem:[%s3316 + $0x1a8] sm:$0xff]
        %v3371 = vld [vmem:[%s3316 + $0x1b0] sm:$0xff]
        %v3372 = vld [vmem:[%s3316 + $0x1b8] sm:$0xff]
        %v3373 = vld [vmem:[%s3316 + $0x1c0] sm:$0xff]
        %v3374 = vld [vmem:[%s3316 + $0x1c8] sm:$0xff]
        %v3375 = vld [vmem:[%s3316 + $0x1d0] sm:$0xff]
        %v3376 = vld [vmem:[%s3316 + $0x1d8] sm:$0xff]
        %v3377 = vld [vmem:[%s3316 + $0x1e0] sm:$0xff]
        %v3378 = vld [vmem:[%s3316 + $0x1e8] sm:$0xff]
        %v3379 = vld [vmem:[%s3316 + $0x1f0] sm:$0xff]
        %v3380 = vld [vmem:[%s3316 + $0x1f8] sm:$0xff]
        %3381 = vmatpush.msra.mxu0 %v3347
        %3382 = vmatpush.msra.mxu0 %v3345
        %3383 = vmatpush.msra.mxu0 %v3343
        %3384 = vmatpush.msra.mxu0 %v3341
        %3385 = vmatpush.msra.mxu0 %v3339
        %3386 = vmatpush.msra.mxu0 %v3337
        %3387 = vmatpush.msra.mxu0 %v3335
        %3388 = vmatpush.msra.mxu0 %v3333
        %3389 = vmatpush.msra.mxu0 %v3331
        %3390 = vmatpush.msra.mxu0 %v3329
        %3391 = vmatpush.msra.mxu0 %v3327
        %3392 = vmatpush.msra.mxu0 %v3325
        %3393 = vmatpush.msra.mxu0 %v3323
        %3394 = vmatpush.msra.mxu0 %v3321
        %3395 = vmatpush.msra.mxu0 %v3319
        %3396 = vmatpush.msra.mxu0 %v3317
        %3397 = vmatmul.f32.gmra.mxu0 %v3254
        %v3398 = vpop.f32.mrf.mxu0
        %v3399 = vadd.f32 0.0, %v3398
        %3400 = vmatmul.f32.gmra.mxu0 %v3260
        %v3401 = vpop.f32.mrf.mxu0
        %v3402 = vadd.f32 0.0, %v3401
        %3403 = vmatmul.f32.gmra.mxu0 %v3266
        %v3404 = vpop.f32.mrf.mxu0
        %v3405 = vadd.f32 0.0, %v3404
        %3406 = vmatmul.f32.gmra.mxu0 %v3272
        %v3407 = vpop.f32.mrf.mxu0
        %v3408 = vadd.f32 0.0, %v3407
        %3409 = vmatmul.f32.gmra.mxu0 %v3278
        %v3410 = vpop.f32.mrf.mxu0
        %v3411 = vadd.f32 0.0, %v3410
        %3412 = vmatmul.f32.gmra.mxu0 %v3284
        %v3413 = vpop.f32.mrf.mxu0
        %v3414 = vadd.f32 0.0, %v3413
        %3415 = vmatmul.f32.gmra.mxu0 %v3290
        %v3416 = vpop.f32.mrf.mxu0
        %v3417 = vadd.f32 0.0, %v3416
        %3418 = vmatmul.f32.gmra.mxu0 %v3296
        %v3419 = vpop.f32.mrf.mxu0
        %v3420 = vadd.f32 0.0, %v3419
        %3421 = vdwg.mxu0
        %3422 = vmatpush.msra.mxu0 %v3379
        %3423 = vmatpush.msra.mxu0 %v3377
        %3424 = vmatpush.msra.mxu0 %v3375
        %3425 = vmatpush.msra.mxu0 %v3373
        %3426 = vmatpush.msra.mxu0 %v3371
        %3427 = vmatpush.msra.mxu0 %v3369
        %3428 = vmatpush.msra.mxu0 %v3367
        %3429 = vmatpush.msra.mxu0 %v3365
        %3430 = vmatpush.msra.mxu0 %v3363
        %3431 = vmatpush.msra.mxu0 %v3361
        %3432 = vmatpush.msra.mxu0 %v3359
        %3433 = vmatpush.msra.mxu0 %v3357
        %3434 = vmatpush.msra.mxu0 %v3355
        %3435 = vmatpush.msra.mxu0 %v3353
        %3436 = vmatpush.msra.mxu0 %v3351
        %3437 = vmatpush.msra.mxu0 %v3349
        %3438 = vmatmul.f32.gmra.mxu0 %v3257
        %v3439 = vpop.f32.mrf.mxu0
        %v3440 = vadd.f32 %v3399, %v3439
        %3441 = vmatmul.f32.gmra.mxu0 %v3263
        %v3442 = vpop.f32.mrf.mxu0
        %v3443 = vadd.f32 %v3402, %v3442
        %3444 = vmatmul.f32.gmra.mxu0 %v3269
        %v3445 = vpop.f32.mrf.mxu0
        %v3446 = vadd.f32 %v3405, %v3445
        %3447 = vmatmul.f32.gmra.mxu0 %v3275
        %v3448 = vpop.f32.mrf.mxu0
        %v3449 = vadd.f32 %v3408, %v3448
        %3450 = vmatmul.f32.gmra.mxu0 %v3281
        %v3451 = vpop.f32.mrf.mxu0
        %v3452 = vadd.f32 %v3411, %v3451
        %3453 = vmatmul.f32.gmra.mxu0 %v3287
        %v3454 = vpop.f32.mrf.mxu0
        %v3455 = vadd.f32 %v3414, %v3454
        %3456 = vmatmul.f32.gmra.mxu0 %v3293
        %v3457 = vpop.f32.mrf.mxu0
        %v3458 = vadd.f32 %v3417, %v3457
        %3459 = vmatmul.f32.gmra.mxu0 %v3299
        %v3460 = vpop.f32.mrf.mxu0
        %v3461 = vadd.f32 %v3420, %v3460
        %3462 = vdwg.mxu0
        %3463 = vmatpush.msra.mxu0 %v3348
        %3464 = vmatpush.msra.mxu0 %v3346
        %3465 = vmatpush.msra.mxu0 %v3344
        %3466 = vmatpush.msra.mxu0 %v3342
        %3467 = vmatpush.msra.mxu0 %v3340
        %3468 = vmatpush.msra.mxu0 %v3338
        %3469 = vmatpush.msra.mxu0 %v3336
        %3470 = vmatpush.msra.mxu0 %v3334
        %3471 = vmatpush.msra.mxu0 %v3332
        %3472 = vmatpush.msra.mxu0 %v3330
        %3473 = vmatpush.msra.mxu0 %v3328
        %3474 = vmatpush.msra.mxu0 %v3326
        %3475 = vmatpush.msra.mxu0 %v3324
        %3476 = vmatpush.msra.mxu0 %v3322
        %3477 = vmatpush.msra.mxu0 %v3320
        %3478 = vmatpush.msra.mxu0 %v3318
        %3479 = vmatmul.f32.gmra.mxu0 %v3254
        %v3480 = vpop.f32.mrf.mxu0
        %v3481 = vadd.f32 0.0, %v3480
        %3482 = vmatmul.f32.gmra.mxu0 %v3260
        %v3483 = vpop.f32.mrf.mxu0
        %v3484 = vadd.f32 0.0, %v3483
        %3485 = vmatmul.f32.gmra.mxu0 %v3266
        %v3486 = vpop.f32.mrf.mxu0
        %v3487 = vadd.f32 0.0, %v3486
        %3488 = vmatmul.f32.gmra.mxu0 %v3272
        %v3489 = vpop.f32.mrf.mxu0
        %v3490 = vadd.f32 0.0, %v3489
        %3491 = vmatmul.f32.gmra.mxu0 %v3278
        %v3492 = vpop.f32.mrf.mxu0
        %v3493 = vadd.f32 0.0, %v3492
        %3494 = vmatmul.f32.gmra.mxu0 %v3284
        %v3495 = vpop.f32.mrf.mxu0
        %v3496 = vadd.f32 0.0, %v3495
        %3497 = vmatmul.f32.gmra.mxu0 %v3290
        %v3498 = vpop.f32.mrf.mxu0
        %v3499 = vadd.f32 0.0, %v3498
        %3500 = vmatmul.f32.gmra.mxu0 %v3296
        %v3501 = vpop.f32.mrf.mxu0
        %v3502 = vadd.f32 0.0, %v3501
        %3503 = vdwg.mxu0
        %3504 = vmatpush.msra.mxu0 %v3380
        %3505 = vmatpush.msra.mxu0 %v3378
        %3506 = vmatpush.msra.mxu0 %v3376
        %3507 = vmatpush.msra.mxu0 %v3374
        %3508 = vmatpush.msra.mxu0 %v3372
        %3509 = vmatpush.msra.mxu0 %v3370
        %3510 = vmatpush.msra.mxu0 %v3368
        %3511 = vmatpush.msra.mxu0 %v3366
        %3512 = vmatpush.msra.mxu0 %v3364
        %3513 = vmatpush.msra.mxu0 %v3362
        %3514 = vmatpush.msra.mxu0 %v3360
        %3515 = vmatpush.msra.mxu0 %v3358
        %3516 = vmatpush.msra.mxu0 %v3356
        %3517 = vmatpush.msra.mxu0 %v3354
        %3518 = vmatpush.msra.mxu0 %v3352
        %3519 = vmatpush.msra.mxu0 %v3350
        %3520 = vmatmul.f32.gmra.mxu0 %v3257
        %v3521 = vpop.f32.mrf.mxu0
        %v3522 = vadd.f32 %v3481, %v3521
        %3523 = vmatmul.f32.gmra.mxu0 %v3263
        %v3524 = vpop.f32.mrf.mxu0
        %v3525 = vadd.f32 %v3484, %v3524
        %3526 = vmatmul.f32.gmra.mxu0 %v3269
        %v3527 = vpop.f32.mrf.mxu0
        %v3528 = vadd.f32 %v3487, %v3527
        %3529 = vmatmul.f32.gmra.mxu0 %v3275
        %v3530 = vpop.f32.mrf.mxu0
        %v3531 = vadd.f32 %v3490, %v3530
        %3532 = vmatmul.f32.gmra.mxu0 %v3281
        %v3533 = vpop.f32.mrf.mxu0
        %v3534 = vadd.f32 %v3493, %v3533
        %3535 = vmatmul.f32.gmra.mxu0 %v3287
        %v3536 = vpop.f32.mrf.mxu0
        %v3537 = vadd.f32 %v3496, %v3536
        %3538 = vmatmul.f32.gmra.mxu0 %v3293
        %v3539 = vpop.f32.mrf.mxu0
        %v3540 = vadd.f32 %v3499, %v3539
        %3541 = vmatmul.f32.gmra.mxu0 %v3299
        %v3542 = vpop.f32.mrf.mxu0
        %v3543 = vadd.f32 %v3502, %v3542
        %3544 = vdwg.mxu0
        %v3545 = vadd.f32 %v3172, %v3440
        %v3546 = vadd.f32 %v3173, %v3522
        %v3547 = vadd.f32 %v3174, %v3443
        %v3548 = vadd.f32 %v3175, %v3525
        %v3549 = vadd.f32 %v3176, %v3446
        %v3550 = vadd.f32 %v3177, %v3528
        %v3551 = vadd.f32 %v3178, %v3449
        %v3552 = vadd.f32 %v3179, %v3531
        %v3553 = vadd.f32 %v3180, %v3452
        %v3554 = vadd.f32 %v3181, %v3534
        %v3555 = vadd.f32 %v3182, %v3455
        %v3556 = vadd.f32 %v3183, %v3537
        %v3557 = vadd.f32 %v3184, %v3458
        %v3558 = vadd.f32 %v3185, %v3540
        %v3559 = vadd.f32 %v3186, %v3461
        %v3560 = vadd.f32 %v3187, %v3543
        %v3562 = vperm.slane %v563, 0
        %v3563 = vperm.slane %v563, 1
        %v3566 = vmul.f32 %v3545, %v3562
        %v3567 = vmul.f32 %v3546, %v3563
        %v3568 = vmul.f32 %v3547, %v3562
        %v3569 = vmul.f32 %v3548, %v3563
        %v3570 = vmul.f32 %v3549, %v3562
        %v3571 = vmul.f32 %v3550, %v3563
        %v3572 = vmul.f32 %v3551, %v3562
        %v3573 = vmul.f32 %v3552, %v3563
        %v3574 = vmul.f32 %v3553, %v3562
        %v3575 = vmul.f32 %v3554, %v3563
        %v3576 = vmul.f32 %v3555, %v3562
        %v3577 = vmul.f32 %v3556, %v3563
        %v3578 = vmul.f32 %v3557, %v3562
        %v3579 = vmul.f32 %v3558, %v3563
        %v3580 = vmul.f32 %v3559, %v3562
        %v3581 = vmul.f32 %v3560, %v3563
        %v3583 = vperm.slane %v565, 0
        %v3584 = vperm.slane %v565, 1
        %v3587 = vadd.f32 %v3566, %v3583
        %v3588 = vadd.f32 %v3567, %v3584
        %v3589 = vadd.f32 %v3568, %v3583
        %v3590 = vadd.f32 %v3569, %v3584
        %v3591 = vadd.f32 %v3570, %v3583
        %v3592 = vadd.f32 %v3571, %v3584
        %v3593 = vadd.f32 %v3572, %v3583
        %v3594 = vadd.f32 %v3573, %v3584
        %v3595 = vadd.f32 %v3574, %v3583
        %v3596 = vadd.f32 %v3575, %v3584
        %v3597 = vadd.f32 %v3576, %v3583
        %v3598 = vadd.f32 %v3577, %v3584
        %v3599 = vadd.f32 %v3578, %v3583
        %v3600 = vadd.f32 %v3579, %v3584
        %v3601 = vadd.f32 %v3580, %v3583
        %v3602 = vadd.f32 %v3581, %v3584
        %v3603 = vmax.f32 %v3587, 0.0
        %v3604 = vmax.f32 %v3588, 0.0
        %v3605 = vmax.f32 %v3589, 0.0
        %v3606 = vmax.f32 %v3590, 0.0
        %v3607 = vmax.f32 %v3591, 0.0
        %v3608 = vmax.f32 %v3592, 0.0
        %v3609 = vmax.f32 %v3593, 0.0
        %v3610 = vmax.f32 %v3594, 0.0
        %v3611 = vmax.f32 %v3595, 0.0
        %v3612 = vmax.f32 %v3596, 0.0
        %v3613 = vmax.f32 %v3597, 0.0
        %v3614 = vmax.f32 %v3598, 0.0
        %v3615 = vmax.f32 %v3599, 0.0
        %v3616 = vmax.f32 %v3600, 0.0
        %v3617 = vmax.f32 %v3601, 0.0
        %v3618 = vmax.f32 %v3602, 0.0
        %v3635 = vrot.slane %v3603, 7
        %v3636 = vrot.slane %v3604, 7
        %v3637 = vrot.slane %v3605, 7
        %v3638 = vrot.slane %v3606, 7
        %v3639 = vrot.slane %v3607, 7
        %v3640 = vrot.slane %v3608, 7
        %v3641 = vrot.slane %v3609, 7
        %v3642 = vrot.slane %v3610, 7
        %v3643 = vrot.slane %v3611, 7
        %v3644 = vrot.slane %v3612, 7
        %v3645 = vrot.slane %v3613, 7
        %v3646 = vrot.slane %v3614, 7
        %v3647 = vrot.slane %v3615, 7
        %v3648 = vrot.slane %v3616, 7
        %v3649 = vrot.slane %v3617, 7
        %v3650 = vrot.slane %v3618, 7
        %3667 = vst [vmem:[%s419] sm:$0xfe] %v3635
        %3668 = vst [vmem:[%s419 + $0x8] sm:$0xfe] %v3636
        %3669 = vst [vmem:[%s419 + $0x10] sm:$0x1] %v3635
        %3670 = vst [vmem:[%s419 + $0x18] sm:$0x1] %v3636
        %3671 = vst [vmem:[%s419 + $0x20] sm:$0xfe] %v3637
        %3672 = vst [vmem:[%s419 + $0x28] sm:$0xfe] %v3638
        %3673 = vst [vmem:[%s419 + $0x30] sm:$0x1] %v3637
        %3674 = vst [vmem:[%s419 + $0x38] sm:$0x1] %v3638
        %3675 = vst [vmem:[%s419 + $0x40] sm:$0xfe] %v3639
        %3676 = vst [vmem:[%s419 + $0x48] sm:$0xfe] %v3640
        %3677 = vst [vmem:[%s419 + $0x50] sm:$0x1] %v3639
        %3678 = vst [vmem:[%s419 + $0x58] sm:$0x1] %v3640
        %3679 = vst [vmem:[%s419 + $0x60] sm:$0xfe] %v3641
        %3680 = vst [vmem:[%s419 + $0x68] sm:$0xfe] %v3642
        %3681 = vst [vmem:[%s419 + $0x70] sm:$0x1] %v3641
        %3682 = vst [vmem:[%s419 + $0x78] sm:$0x1] %v3642
        %3683 = vst [vmem:[%s419 + $0x80] sm:$0xfe] %v3643
        %3684 = vst [vmem:[%s419 + $0x88] sm:$0xfe] %v3644
        %3685 = vst [vmem:[%s419 + $0x90] sm:$0x1] %v3643
        %3686 = vst [vmem:[%s419 + $0x98] sm:$0x1] %v3644
        %3687 = vst [vmem:[%s419 + $0xa0] sm:$0xfe] %v3645
        %3688 = vst [vmem:[%s419 + $0xa8] sm:$0xfe] %v3646
        %3689 = vst [vmem:[%s419 + $0xb0] sm:$0x1] %v3645
        %3690 = vst [vmem:[%s419 + $0xb8] sm:$0x1] %v3646
        %3691 = vst [vmem:[%s419 + $0xc0] sm:$0xfe] %v3647
        %3692 = vst [vmem:[%s419 + $0xc8] sm:$0xfe] %v3648
        %3693 = vst [vmem:[%s419 + $0xd0] sm:$0x1] %v3647
        %3694 = vst [vmem:[%s419 + $0xd8] sm:$0x1] %v3648
        %3695 = vst [vmem:[%s419 + $0xe0] sm:$0xfe] %v3649
        %3696 = vst [vmem:[%s419 + $0xe8] sm:$0xfe] %v3650
        %3697 = vst [vmem:[%s419 + $0xf0] sm:$0x1] %v3649
        %3698 = vst [vmem:[%s419 + $0xf8] sm:$0x1] %v3650
        %v3699 = vld [vmem:[#allocation3] sm:$0xff]
        %v3700 = vld [vmem:[#allocation3 + $0x8] sm:$0xff]
        %v3701 = vld [vmem:[#allocation3 + $0x20] sm:$0xff]
        %v3702 = vld [vmem:[#allocation3 + $0x28] sm:$0xff]
        %v3703 = vld [vmem:[#allocation3 + $0x40] sm:$0xff]
        %v3704 = vld [vmem:[#allocation3 + $0x48] sm:$0xff]
        %v3705 = vld [vmem:[#allocation3 + $0x60] sm:$0xff]
        %v3706 = vld [vmem:[#allocation3 + $0x68] sm:$0xff]
        %v3707 = vld [vmem:[#allocation3 + $0x80] sm:$0xff]
        %v3708 = vld [vmem:[#allocation3 + $0x88] sm:$0xff]
        %v3709 = vld [vmem:[#allocation3 + $0xa0] sm:$0xff]
        %v3710 = vld [vmem:[#allocation3 + $0xa8] sm:$0xff]
        %v3711 = vld [vmem:[#allocation3 + $0xc0] sm:$0xff]
        %v3712 = vld [vmem:[#allocation3 + $0xc8] sm:$0xff]
        %v3713 = vld [vmem:[#allocation3 + $0xe0] sm:$0xff]
        %v3714 = vld [vmem:[#allocation3 + $0xe8] sm:$0xff]
        %v3715 = vld [vmem:[#allocation9] sm:$0xff]
        %v3716 = vld [vmem:[#allocation9 + $0x8] sm:$0xff]
        %v3717 = vld [vmem:[#allocation9 + $0x10] sm:$0xff]
        %v3718 = vld [vmem:[#allocation9 + $0x18] sm:$0xff]
        %v3719 = vld [vmem:[#allocation9 + $0x20] sm:$0xff]
        %v3720 = vld [vmem:[#allocation9 + $0x28] sm:$0xff]
        %v3721 = vld [vmem:[#allocation9 + $0x30] sm:$0xff]
        %v3722 = vld [vmem:[#allocation9 + $0x38] sm:$0xff]
        %v3723 = vld [vmem:[#allocation9 + $0x40] sm:$0xff]
        %v3724 = vld [vmem:[#allocation9 + $0x48] sm:$0xff]
        %v3725 = vld [vmem:[#allocation9 + $0x50] sm:$0xff]
        %v3726 = vld [vmem:[#allocation9 + $0x58] sm:$0xff]
        %v3727 = vld [vmem:[#allocation9 + $0x60] sm:$0xff]
        %v3728 = vld [vmem:[#allocation9 + $0x68] sm:$0xff]
        %v3729 = vld [vmem:[#allocation9 + $0x70] sm:$0xff]
        %v3730 = vld [vmem:[#allocation9 + $0x78] sm:$0xff]
        %v3731 = vld [vmem:[#allocation9 + $0x80] sm:$0xff]
        %v3732 = vld [vmem:[#allocation9 + $0x88] sm:$0xff]
        %v3733 = vld [vmem:[#allocation9 + $0x90] sm:$0xff]
        %v3734 = vld [vmem:[#allocation9 + $0x98] sm:$0xff]
        %v3735 = vld [vmem:[#allocation9 + $0xa0] sm:$0xff]
        %v3736 = vld [vmem:[#allocation9 + $0xa8] sm:$0xff]
        %v3737 = vld [vmem:[#allocation9 + $0xb0] sm:$0xff]
        %v3738 = vld [vmem:[#allocation9 + $0xb8] sm:$0xff]
        %v3739 = vld [vmem:[#allocation9 + $0xc0] sm:$0xff]
        %v3740 = vld [vmem:[#allocation9 + $0xc8] sm:$0xff]
        %v3741 = vld [vmem:[#allocation9 + $0xd0] sm:$0xff]
        %v3742 = vld [vmem:[#allocation9 + $0xd8] sm:$0xff]
        %v3743 = vld [vmem:[#allocation9 + $0xe0] sm:$0xff]
        %v3744 = vld [vmem:[#allocation9 + $0xe8] sm:$0xff]
        %v3745 = vld [vmem:[#allocation9 + $0xf0] sm:$0xff]
        %v3746 = vld [vmem:[#allocation9 + $0xf8] sm:$0xff]
        %v3747 = vld [vmem:[#allocation9 + $0x100] sm:$0xff]
        %v3748 = vld [vmem:[#allocation9 + $0x108] sm:$0xff]
        %v3749 = vld [vmem:[#allocation9 + $0x110] sm:$0xff]
        %v3750 = vld [vmem:[#allocation9 + $0x118] sm:$0xff]
        %v3751 = vld [vmem:[#allocation9 + $0x120] sm:$0xff]
        %v3752 = vld [vmem:[#allocation9 + $0x128] sm:$0xff]
        %v3753 = vld [vmem:[#allocation9 + $0x130] sm:$0xff]
        %v3754 = vld [vmem:[#allocation9 + $0x138] sm:$0xff]
        %v3755 = vld [vmem:[#allocation9 + $0x140] sm:$0xff]
        %v3756 = vld [vmem:[#allocation9 + $0x148] sm:$0xff]
        %v3757 = vld [vmem:[#allocation9 + $0x150] sm:$0xff]
        %v3758 = vld [vmem:[#allocation9 + $0x158] sm:$0xff]
        %v3759 = vld [vmem:[#allocation9 + $0x160] sm:$0xff]
        %v3760 = vld [vmem:[#allocation9 + $0x168] sm:$0xff]
        %v3761 = vld [vmem:[#allocation9 + $0x170] sm:$0xff]
        %v3762 = vld [vmem:[#allocation9 + $0x178] sm:$0xff]
        %v3763 = vld [vmem:[#allocation9 + $0x180] sm:$0xff]
        %v3764 = vld [vmem:[#allocation9 + $0x188] sm:$0xff]
        %v3765 = vld [vmem:[#allocation9 + $0x190] sm:$0xff]
        %v3766 = vld [vmem:[#allocation9 + $0x198] sm:$0xff]
        %v3767 = vld [vmem:[#allocation9 + $0x1a0] sm:$0xff]
        %v3768 = vld [vmem:[#allocation9 + $0x1a8] sm:$0xff]
        %v3769 = vld [vmem:[#allocation9 + $0x1b0] sm:$0xff]
        %v3770 = vld [vmem:[#allocation9 + $0x1b8] sm:$0xff]
        %v3771 = vld [vmem:[#allocation9 + $0x1c0] sm:$0xff]
        %v3772 = vld [vmem:[#allocation9 + $0x1c8] sm:$0xff]
        %v3773 = vld [vmem:[#allocation9 + $0x1d0] sm:$0xff]
        %v3774 = vld [vmem:[#allocation9 + $0x1d8] sm:$0xff]
        %v3775 = vld [vmem:[#allocation9 + $0x1e0] sm:$0xff]
        %v3776 = vld [vmem:[#allocation9 + $0x1e8] sm:$0xff]
        %v3777 = vld [vmem:[#allocation9 + $0x1f0] sm:$0xff]
        %v3778 = vld [vmem:[#allocation9 + $0x1f8] sm:$0xff]
        %v3779 = vld [vmem:[#allocation3] sm:$0xfe]
        %v3780 = vld [vmem:[#allocation3 + $0x8] sm:$0xfe]
        %v3781 = vld [vmem:[#allocation3 + $0x10] sm:$0x1]
        %v3782 = vld [vmem:[#allocation3 + $0x18] sm:$0x1]
        %v3783 = vld [vmem:[#allocation3 + $0x20] sm:$0xfe]
        %v3784 = vld [vmem:[#allocation3 + $0x28] sm:$0xfe]
        %v3785 = vld [vmem:[#allocation3 + $0x30] sm:$0x1]
        %v3786 = vld [vmem:[#allocation3 + $0x38] sm:$0x1]
        %v3787 = vld [vmem:[#allocation3 + $0x40] sm:$0xfe]
        %v3788 = vld [vmem:[#allocation3 + $0x48] sm:$0xfe]
        %v3789 = vld [vmem:[#allocation3 + $0x50] sm:$0x1]
        %v3790 = vld [vmem:[#allocation3 + $0x58] sm:$0x1]
        %v3791 = vld [vmem:[#allocation3 + $0x60] sm:$0xfe]
        %v3792 = vld [vmem:[#allocation3 + $0x68] sm:$0xfe]
        %v3793 = vld [vmem:[#allocation3 + $0x70] sm:$0x1]
        %v3794 = vld [vmem:[#allocation3 + $0x78] sm:$0x1]
        %v3795 = vld [vmem:[#allocation3 + $0x80] sm:$0xfe]
        %v3796 = vld [vmem:[#allocation3 + $0x88] sm:$0xfe]
        %v3797 = vld [vmem:[#allocation3 + $0x90] sm:$0x1]
        %v3798 = vld [vmem:[#allocation3 + $0x98] sm:$0x1]
        %v3799 = vld [vmem:[#allocation3 + $0xa0] sm:$0xfe]
        %v3800 = vld [vmem:[#allocation3 + $0xa8] sm:$0xfe]
        %v3801 = vld [vmem:[#allocation3 + $0xb0] sm:$0x1]
        %v3802 = vld [vmem:[#allocation3 + $0xb8] sm:$0x1]
        %v3803 = vld [vmem:[#allocation3 + $0xc0] sm:$0xfe]
        %v3804 = vld [vmem:[#allocation3 + $0xc8] sm:$0xfe]
        %v3805 = vld [vmem:[#allocation3 + $0xd0] sm:$0x1]
        %v3806 = vld [vmem:[#allocation3 + $0xd8] sm:$0x1]
        %v3807 = vld [vmem:[#allocation3 + $0xe0] sm:$0xfe]
        %v3808 = vld [vmem:[#allocation3 + $0xe8] sm:$0xfe]
        %v3809 = vld [vmem:[#allocation3 + $0xf0] sm:$0x1]
        %v3810 = vld [vmem:[#allocation3 + $0xf8] sm:$0x1]
        %v3843 = vrot.slane %v3779, 1
        %v3844 = vrot.slane %v3781, 1
        %v3845 = vsel %vm714, %v3843, %v3844
        %v3846 = vrot.slane %v3780, 1
        %v3847 = vrot.slane %v3782, 1
        %v3848 = vsel %vm714, %v3846, %v3847
        %v3849 = vrot.slane %v3783, 1
        %v3850 = vrot.slane %v3785, 1
        %v3851 = vsel %vm714, %v3849, %v3850
        %v3852 = vrot.slane %v3784, 1
        %v3853 = vrot.slane %v3786, 1
        %v3854 = vsel %vm714, %v3852, %v3853
        %v3855 = vrot.slane %v3787, 1
        %v3856 = vrot.slane %v3789, 1
        %v3857 = vsel %vm714, %v3855, %v3856
        %v3858 = vrot.slane %v3788, 1
        %v3859 = vrot.slane %v3790, 1
        %v3860 = vsel %vm714, %v3858, %v3859
        %v3861 = vrot.slane %v3791, 1
        %v3862 = vrot.slane %v3793, 1
        %v3863 = vsel %vm714, %v3861, %v3862
        %v3864 = vrot.slane %v3792, 1
        %v3865 = vrot.slane %v3794, 1
        %v3866 = vsel %vm714, %v3864, %v3865
        %v3867 = vrot.slane %v3795, 1
        %v3868 = vrot.slane %v3797, 1
        %v3869 = vsel %vm714, %v3867, %v3868
        %v3870 = vrot.slane %v3796, 1
        %v3871 = vrot.slane %v3798, 1
        %v3872 = vsel %vm714, %v3870, %v3871
        %v3873 = vrot.slane %v3799, 1
        %v3874 = vrot.slane %v3801, 1
        %v3875 = vsel %vm714, %v3873, %v3874
        %v3876 = vrot.slane %v3800, 1
        %v3877 = vrot.slane %v3802, 1
        %v3878 = vsel %vm714, %v3876, %v3877
        %v3879 = vrot.slane %v3803, 1
        %v3880 = vrot.slane %v3805, 1
        %v3881 = vsel %vm714, %v3879, %v3880
        %v3882 = vrot.slane %v3804, 1
        %v3883 = vrot.slane %v3806, 1
        %v3884 = vsel %vm714, %v3882, %v3883
        %v3885 = vrot.slane %v3807, 1
        %v3886 = vrot.slane %v3809, 1
        %v3887 = vsel %vm714, %v3885, %v3886
        %v3888 = vrot.slane %v3808, 1
        %v3889 = vrot.slane %v3810, 1
        %v3890 = vsel %vm714, %v3888, %v3889
        %s3907 = scalar_lea.vmem [#allocation9], 512
        %v3908 = vld [vmem:[%s3907] sm:$0xff]
        %v3909 = vld [vmem:[%s3907 + $0x8] sm:$0xff]
        %v3910 = vld [vmem:[%s3907 + $0x10] sm:$0xff]
        %v3911 = vld [vmem:[%s3907 + $0x18] sm:$0xff]
        %v3912 = vld [vmem:[%s3907 + $0x20] sm:$0xff]
        %v3913 = vld [vmem:[%s3907 + $0x28] sm:$0xff]
        %v3914 = vld [vmem:[%s3907 + $0x30] sm:$0xff]
        %v3915 = vld [vmem:[%s3907 + $0x38] sm:$0xff]
        %v3916 = vld [vmem:[%s3907 + $0x40] sm:$0xff]
        %v3917 = vld [vmem:[%s3907 + $0x48] sm:$0xff]
        %v3918 = vld [vmem:[%s3907 + $0x50] sm:$0xff]
        %v3919 = vld [vmem:[%s3907 + $0x58] sm:$0xff]
        %v3920 = vld [vmem:[%s3907 + $0x60] sm:$0xff]
        %v3921 = vld [vmem:[%s3907 + $0x68] sm:$0xff]
        %v3922 = vld [vmem:[%s3907 + $0x70] sm:$0xff]
        %v3923 = vld [vmem:[%s3907 + $0x78] sm:$0xff]
        %v3924 = vld [vmem:[%s3907 + $0x80] sm:$0xff]
        %v3925 = vld [vmem:[%s3907 + $0x88] sm:$0xff]
        %v3926 = vld [vmem:[%s3907 + $0x90] sm:$0xff]
        %v3927 = vld [vmem:[%s3907 + $0x98] sm:$0xff]
        %v3928 = vld [vmem:[%s3907 + $0xa0] sm:$0xff]
        %v3929 = vld [vmem:[%s3907 + $0xa8] sm:$0xff]
        %v3930 = vld [vmem:[%s3907 + $0xb0] sm:$0xff]
        %v3931 = vld [vmem:[%s3907 + $0xb8] sm:$0xff]
        %v3932 = vld [vmem:[%s3907 + $0xc0] sm:$0xff]
        %v3933 = vld [vmem:[%s3907 + $0xc8] sm:$0xff]
        %v3934 = vld [vmem:[%s3907 + $0xd0] sm:$0xff]
        %v3935 = vld [vmem:[%s3907 + $0xd8] sm:$0xff]
        %v3936 = vld [vmem:[%s3907 + $0xe0] sm:$0xff]
        %v3937 = vld [vmem:[%s3907 + $0xe8] sm:$0xff]
        %v3938 = vld [vmem:[%s3907 + $0xf0] sm:$0xff]
        %v3939 = vld [vmem:[%s3907 + $0xf8] sm:$0xff]
        %v3940 = vld [vmem:[%s3907 + $0x100] sm:$0xff]
        %v3941 = vld [vmem:[%s3907 + $0x108] sm:$0xff]
        %v3942 = vld [vmem:[%s3907 + $0x110] sm:$0xff]
        %v3943 = vld [vmem:[%s3907 + $0x118] sm:$0xff]
        %v3944 = vld [vmem:[%s3907 + $0x120] sm:$0xff]
        %v3945 = vld [vmem:[%s3907 + $0x128] sm:$0xff]
        %v3946 = vld [vmem:[%s3907 + $0x130] sm:$0xff]
        %v3947 = vld [vmem:[%s3907 + $0x138] sm:$0xff]
        %v3948 = vld [vmem:[%s3907 + $0x140] sm:$0xff]
        %v3949 = vld [vmem:[%s3907 + $0x148] sm:$0xff]
        %v3950 = vld [vmem:[%s3907 + $0x150] sm:$0xff]
        %v3951 = vld [vmem:[%s3907 + $0x158] sm:$0xff]
        %v3952 = vld [vmem:[%s3907 + $0x160] sm:$0xff]
        %v3953 = vld [vmem:[%s3907 + $0x168] sm:$0xff]
        %v3954 = vld [vmem:[%s3907 + $0x170] sm:$0xff]
        %v3955 = vld [vmem:[%s3907 + $0x178] sm:$0xff]
        %v3956 = vld [vmem:[%s3907 + $0x180] sm:$0xff]
        %v3957 = vld [vmem:[%s3907 + $0x188] sm:$0xff]
        %v3958 = vld [vmem:[%s3907 + $0x190] sm:$0xff]
        %v3959 = vld [vmem:[%s3907 + $0x198] sm:$0xff]
        %v3960 = vld [vmem:[%s3907 + $0x1a0] sm:$0xff]
        %v3961 = vld [vmem:[%s3907 + $0x1a8] sm:$0xff]
        %v3962 = vld [vmem:[%s3907 + $0x1b0] sm:$0xff]
        %v3963 = vld [vmem:[%s3907 + $0x1b8] sm:$0xff]
        %v3964 = vld [vmem:[%s3907 + $0x1c0] sm:$0xff]
        %v3965 = vld [vmem:[%s3907 + $0x1c8] sm:$0xff]
        %v3966 = vld [vmem:[%s3907 + $0x1d0] sm:$0xff]
        %v3967 = vld [vmem:[%s3907 + $0x1d8] sm:$0xff]
        %v3968 = vld [vmem:[%s3907 + $0x1e0] sm:$0xff]
        %v3969 = vld [vmem:[%s3907 + $0x1e8] sm:$0xff]
        %v3970 = vld [vmem:[%s3907 + $0x1f0] sm:$0xff]
        %v3971 = vld [vmem:[%s3907 + $0x1f8] sm:$0xff]
        %3972 = vmatpush.msra.mxu0 %v3938
        %3973 = vmatpush.msra.mxu0 %v3936
        %3974 = vmatpush.msra.mxu0 %v3934
        %3975 = vmatpush.msra.mxu0 %v3932
        %3976 = vmatpush.msra.mxu0 %v3930
        %3977 = vmatpush.msra.mxu0 %v3928
        %3978 = vmatpush.msra.mxu0 %v3926
        %3979 = vmatpush.msra.mxu0 %v3924
        %3980 = vmatpush.msra.mxu0 %v3922
        %3981 = vmatpush.msra.mxu0 %v3920
        %3982 = vmatpush.msra.mxu0 %v3918
        %3983 = vmatpush.msra.mxu0 %v3916
        %3984 = vmatpush.msra.mxu0 %v3914
        %3985 = vmatpush.msra.mxu0 %v3912
        %3986 = vmatpush.msra.mxu0 %v3910
        %3987 = vmatpush.msra.mxu0 %v3908
        %3988 = vmatmul.f32.gmra.mxu0 %v3845
        %v3989 = vpop.f32.mrf.mxu0
        %v3990 = vadd.f32 0.0, %v3989
        %3991 = vmatmul.f32.gmra.mxu0 %v3851
        %v3992 = vpop.f32.mrf.mxu0
        %v3993 = vadd.f32 0.0, %v3992
        %3994 = vmatmul.f32.gmra.mxu0 %v3857
        %v3995 = vpop.f32.mrf.mxu0
        %v3996 = vadd.f32 0.0, %v3995
        %3997 = vmatmul.f32.gmra.mxu0 %v3863
        %v3998 = vpop.f32.mrf.mxu0
        %v3999 = vadd.f32 0.0, %v3998
        %4000 = vmatmul.f32.gmra.mxu0 %v3869
        %v4001 = vpop.f32.mrf.mxu0
        %v4002 = vadd.f32 0.0, %v4001
        %4003 = vmatmul.f32.gmra.mxu0 %v3875
        %v4004 = vpop.f32.mrf.mxu0
        %v4005 = vadd.f32 0.0, %v4004
        %4006 = vmatmul.f32.gmra.mxu0 %v3881
        %v4007 = vpop.f32.mrf.mxu0
        %v4008 = vadd.f32 0.0, %v4007
        %4009 = vmatmul.f32.gmra.mxu0 %v3887
        %v4010 = vpop.f32.mrf.mxu0
        %v4011 = vadd.f32 0.0, %v4010
        %4012 = vdwg.mxu0
        %4013 = vmatpush.msra.mxu0 %v3970
        %4014 = vmatpush.msra.mxu0 %v3968
        %4015 = vmatpush.msra.mxu0 %v3966
        %4016 = vmatpush.msra.mxu0 %v3964
        %4017 = vmatpush.msra.mxu0 %v3962
        %4018 = vmatpush.msra.mxu0 %v3960
        %4019 = vmatpush.msra.mxu0 %v3958
        %4020 = vmatpush.msra.mxu0 %v3956
        %4021 = vmatpush.msra.mxu0 %v3954
        %4022 = vmatpush.msra.mxu0 %v3952
        %4023 = vmatpush.msra.mxu0 %v3950
        %4024 = vmatpush.msra.mxu0 %v3948
        %4025 = vmatpush.msra.mxu0 %v3946
        %4026 = vmatpush.msra.mxu0 %v3944
        %4027 = vmatpush.msra.mxu0 %v3942
        %4028 = vmatpush.msra.mxu0 %v3940
        %4029 = vmatmul.f32.gmra.mxu0 %v3848
        %v4030 = vpop.f32.mrf.mxu0
        %v4031 = vadd.f32 %v3990, %v4030
        %4032 = vmatmul.f32.gmra.mxu0 %v3854
        %v4033 = vpop.f32.mrf.mxu0
        %v4034 = vadd.f32 %v3993, %v4033
        %4035 = vmatmul.f32.gmra.mxu0 %v3860
        %v4036 = vpop.f32.mrf.mxu0
        %v4037 = vadd.f32 %v3996, %v4036
        %4038 = vmatmul.f32.gmra.mxu0 %v3866
        %v4039 = vpop.f32.mrf.mxu0
        %v4040 = vadd.f32 %v3999, %v4039
        %4041 = vmatmul.f32.gmra.mxu0 %v3872
        %v4042 = vpop.f32.mrf.mxu0
        %v4043 = vadd.f32 %v4002, %v4042
        %4044 = vmatmul.f32.gmra.mxu0 %v3878
        %v4045 = vpop.f32.mrf.mxu0
        %v4046 = vadd.f32 %v4005, %v4045
        %4047 = vmatmul.f32.gmra.mxu0 %v3884
        %v4048 = vpop.f32.mrf.mxu0
        %v4049 = vadd.f32 %v4008, %v4048
        %4050 = vmatmul.f32.gmra.mxu0 %v3890
        %v4051 = vpop.f32.mrf.mxu0
        %v4052 = vadd.f32 %v4011, %v4051
        %4053 = vdwg.mxu0
        %4054 = vmatpush.msra.mxu0 %v3939
        %4055 = vmatpush.msra.mxu0 %v3937
        %4056 = vmatpush.msra.mxu0 %v3935
        %4057 = vmatpush.msra.mxu0 %v3933
        %4058 = vmatpush.msra.mxu0 %v3931
        %4059 = vmatpush.msra.mxu0 %v3929
        %4060 = vmatpush.msra.mxu0 %v3927
        %4061 = vmatpush.msra.mxu0 %v3925
        %4062 = vmatpush.msra.mxu0 %v3923
        %4063 = vmatpush.msra.mxu0 %v3921
        %4064 = vmatpush.msra.mxu0 %v3919
        %4065 = vmatpush.msra.mxu0 %v3917
        %4066 = vmatpush.msra.mxu0 %v3915
        %4067 = vmatpush.msra.mxu0 %v3913
        %4068 = vmatpush.msra.mxu0 %v3911
        %4069 = vmatpush.msra.mxu0 %v3909
        %4070 = vmatmul.f32.gmra.mxu0 %v3845
        %v4071 = vpop.f32.mrf.mxu0
        %v4072 = vadd.f32 0.0, %v4071
        %4073 = vmatmul.f32.gmra.mxu0 %v3851
        %v4074 = vpop.f32.mrf.mxu0
        %v4075 = vadd.f32 0.0, %v4074
        %4076 = vmatmul.f32.gmra.mxu0 %v3857
        %v4077 = vpop.f32.mrf.mxu0
        %v4078 = vadd.f32 0.0, %v4077
        %4079 = vmatmul.f32.gmra.mxu0 %v3863
        %v4080 = vpop.f32.mrf.mxu0
        %v4081 = vadd.f32 0.0, %v4080
        %4082 = vmatmul.f32.gmra.mxu0 %v3869
        %v4083 = vpop.f32.mrf.mxu0
        %v4084 = vadd.f32 0.0, %v4083
        %4085 = vmatmul.f32.gmra.mxu0 %v3875
        %v4086 = vpop.f32.mrf.mxu0
        %v4087 = vadd.f32 0.0, %v4086
        %4088 = vmatmul.f32.gmra.mxu0 %v3881
        %v4089 = vpop.f32.mrf.mxu0
        %v4090 = vadd.f32 0.0, %v4089
        %4091 = vmatmul.f32.gmra.mxu0 %v3887
        %v4092 = vpop.f32.mrf.mxu0
        %v4093 = vadd.f32 0.0, %v4092
        %4094 = vdwg.mxu0
        %4095 = vmatpush.msra.mxu0 %v3971
        %4096 = vmatpush.msra.mxu0 %v3969
        %4097 = vmatpush.msra.mxu0 %v3967
        %4098 = vmatpush.msra.mxu0 %v3965
        %4099 = vmatpush.msra.mxu0 %v3963
        %4100 = vmatpush.msra.mxu0 %v3961
        %4101 = vmatpush.msra.mxu0 %v3959
        %4102 = vmatpush.msra.mxu0 %v3957
        %4103 = vmatpush.msra.mxu0 %v3955
        %4104 = vmatpush.msra.mxu0 %v3953
        %4105 = vmatpush.msra.mxu0 %v3951
        %4106 = vmatpush.msra.mxu0 %v3949
        %4107 = vmatpush.msra.mxu0 %v3947
        %4108 = vmatpush.msra.mxu0 %v3945
        %4109 = vmatpush.msra.mxu0 %v3943
        %4110 = vmatpush.msra.mxu0 %v3941
        %4111 = vmatmul.f32.gmra.mxu0 %v3848
        %v4112 = vpop.f32.mrf.mxu0
        %v4113 = vadd.f32 %v4072, %v4112
        %4114 = vmatmul.f32.gmra.mxu0 %v3854
        %v4115 = vpop.f32.mrf.mxu0
        %v4116 = vadd.f32 %v4075, %v4115
        %4117 = vmatmul.f32.gmra.mxu0 %v3860
        %v4118 = vpop.f32.mrf.mxu0
        %v4119 = vadd.f32 %v4078, %v4118
        %4120 = vmatmul.f32.gmra.mxu0 %v3866
        %v4121 = vpop.f32.mrf.mxu0
        %v4122 = vadd.f32 %v4081, %v4121
        %4123 = vmatmul.f32.gmra.mxu0 %v3872
        %v4124 = vpop.f32.mrf.mxu0
        %v4125 = vadd.f32 %v4084, %v4124
        %4126 = vmatmul.f32.gmra.mxu0 %v3878
        %v4127 = vpop.f32.mrf.mxu0
        %v4128 = vadd.f32 %v4087, %v4127
        %4129 = vmatmul.f32.gmra.mxu0 %v3884
        %v4130 = vpop.f32.mrf.mxu0
        %v4131 = vadd.f32 %v4090, %v4130
        %4132 = vmatmul.f32.gmra.mxu0 %v3890
        %v4133 = vpop.f32.mrf.mxu0
        %v4134 = vadd.f32 %v4093, %v4133
        %4135 = vdwg.mxu0
        %4136 = vmatpush.msra.mxu0 %v3745
        %4137 = vmatpush.msra.mxu0 %v3743
        %4138 = vmatpush.msra.mxu0 %v3741
        %4139 = vmatpush.msra.mxu0 %v3739
        %4140 = vmatpush.msra.mxu0 %v3737
        %4141 = vmatpush.msra.mxu0 %v3735
        %4142 = vmatpush.msra.mxu0 %v3733
        %4143 = vmatpush.msra.mxu0 %v3731
        %4144 = vmatpush.msra.mxu0 %v3729
        %4145 = vmatpush.msra.mxu0 %v3727
        %4146 = vmatpush.msra.mxu0 %v3725
        %4147 = vmatpush.msra.mxu0 %v3723
        %4148 = vmatpush.msra.mxu0 %v3721
        %4149 = vmatpush.msra.mxu0 %v3719
        %4150 = vmatpush.msra.mxu0 %v3717
        %4151 = vmatpush.msra.mxu0 %v3715
        %4152 = vmatmul.f32.gmra.mxu0 %v3699
        %v4153 = vpop.f32.mrf.mxu0
        %v4154 = vadd.f32 %v4031, %v4153
        %4155 = vmatmul.f32.gmra.mxu0 %v3701
        %v4156 = vpop.f32.mrf.mxu0
        %v4157 = vadd.f32 %v4034, %v4156
        %4158 = vmatmul.f32.gmra.mxu0 %v3703
        %v4159 = vpop.f32.mrf.mxu0
        %v4160 = vadd.f32 %v4037, %v4159
        %4161 = vmatmul.f32.gmra.mxu0 %v3705
        %v4162 = vpop.f32.mrf.mxu0
        %v4163 = vadd.f32 %v4040, %v4162
        %4164 = vmatmul.f32.gmra.mxu0 %v3707
        %v4165 = vpop.f32.mrf.mxu0
        %v4166 = vadd.f32 %v4043, %v4165
        %4167 = vmatmul.f32.gmra.mxu0 %v3709
        %v4168 = vpop.f32.mrf.mxu0
        %v4169 = vadd.f32 %v4046, %v4168
        %4170 = vmatmul.f32.gmra.mxu0 %v3711
        %v4171 = vpop.f32.mrf.mxu0
        %v4172 = vadd.f32 %v4049, %v4171
        %4173 = vmatmul.f32.gmra.mxu0 %v3713
        %v4174 = vpop.f32.mrf.mxu0
        %v4175 = vadd.f32 %v4052, %v4174
        %4176 = vdwg.mxu0
        %4177 = vmatpush.msra.mxu0 %v3777
        %4178 = vmatpush.msra.mxu0 %v3775
        %4179 = vmatpush.msra.mxu0 %v3773
        %4180 = vmatpush.msra.mxu0 %v3771
        %4181 = vmatpush.msra.mxu0 %v3769
        %4182 = vmatpush.msra.mxu0 %v3767
        %4183 = vmatpush.msra.mxu0 %v3765
        %4184 = vmatpush.msra.mxu0 %v3763
        %4185 = vmatpush.msra.mxu0 %v3761
        %4186 = vmatpush.msra.mxu0 %v3759
        %4187 = vmatpush.msra.mxu0 %v3757
        %4188 = vmatpush.msra.mxu0 %v3755
        %4189 = vmatpush.msra.mxu0 %v3753
        %4190 = vmatpush.msra.mxu0 %v3751
        %4191 = vmatpush.msra.mxu0 %v3749
        %4192 = vmatpush.msra.mxu0 %v3747
        %4193 = vmatmul.f32.gmra.mxu0 %v3700
        %v4194 = vpop.f32.mrf.mxu0
        %v4195 = vadd.f32 %v4154, %v4194
        %4196 = vmatmul.f32.gmra.mxu0 %v3702
        %v4197 = vpop.f32.mrf.mxu0
        %v4198 = vadd.f32 %v4157, %v4197
        %4199 = vmatmul.f32.gmra.mxu0 %v3704
        %v4200 = vpop.f32.mrf.mxu0
        %v4201 = vadd.f32 %v4160, %v4200
        %4202 = vmatmul.f32.gmra.mxu0 %v3706
        %v4203 = vpop.f32.mrf.mxu0
        %v4204 = vadd.f32 %v4163, %v4203
        %4205 = vmatmul.f32.gmra.mxu0 %v3708
        %v4206 = vpop.f32.mrf.mxu0
        %v4207 = vadd.f32 %v4166, %v4206
        %4208 = vmatmul.f32.gmra.mxu0 %v3710
        %v4209 = vpop.f32.mrf.mxu0
        %v4210 = vadd.f32 %v4169, %v4209
        %4211 = vmatmul.f32.gmra.mxu0 %v3712
        %v4212 = vpop.f32.mrf.mxu0
        %v4213 = vadd.f32 %v4172, %v4212
        %4214 = vmatmul.f32.gmra.mxu0 %v3714
        %v4215 = vpop.f32.mrf.mxu0
        %v4216 = vadd.f32 %v4175, %v4215
        %4217 = vdwg.mxu0
        %4218 = vmatpush.msra.mxu0 %v3746
        %4219 = vmatpush.msra.mxu0 %v3744
        %4220 = vmatpush.msra.mxu0 %v3742
        %4221 = vmatpush.msra.mxu0 %v3740
        %4222 = vmatpush.msra.mxu0 %v3738
        %4223 = vmatpush.msra.mxu0 %v3736
        %4224 = vmatpush.msra.mxu0 %v3734
        %4225 = vmatpush.msra.mxu0 %v3732
        %4226 = vmatpush.msra.mxu0 %v3730
        %4227 = vmatpush.msra.mxu0 %v3728
        %4228 = vmatpush.msra.mxu0 %v3726
        %4229 = vmatpush.msra.mxu0 %v3724
        %4230 = vmatpush.msra.mxu0 %v3722
        %4231 = vmatpush.msra.mxu0 %v3720
        %4232 = vmatpush.msra.mxu0 %v3718
        %4233 = vmatpush.msra.mxu0 %v3716
        %4234 = vmatmul.f32.gmra.mxu0 %v3699
        %v4235 = vpop.f32.mrf.mxu0
        %v4236 = vadd.f32 %v4113, %v4235
        %4237 = vmatmul.f32.gmra.mxu0 %v3701
        %v4238 = vpop.f32.mrf.mxu0
        %v4239 = vadd.f32 %v4116, %v4238
        %4240 = vmatmul.f32.gmra.mxu0 %v3703
        %v4241 = vpop.f32.mrf.mxu0
        %v4242 = vadd.f32 %v4119, %v4241
        %4243 = vmatmul.f32.gmra.mxu0 %v3705
        %v4244 = vpop.f32.mrf.mxu0
        %v4245 = vadd.f32 %v4122, %v4244
        %4246 = vmatmul.f32.gmra.mxu0 %v3707
        %v4247 = vpop.f32.mrf.mxu0
        %v4248 = vadd.f32 %v4125, %v4247
        %4249 = vmatmul.f32.gmra.mxu0 %v3709
        %v4250 = vpop.f32.mrf.mxu0
        %v4251 = vadd.f32 %v4128, %v4250
        %4252 = vmatmul.f32.gmra.mxu0 %v3711
        %v4253 = vpop.f32.mrf.mxu0
        %v4254 = vadd.f32 %v4131, %v4253
        %4255 = vmatmul.f32.gmra.mxu0 %v3713
        %v4256 = vpop.f32.mrf.mxu0
        %v4257 = vadd.f32 %v4134, %v4256
        %4258 = vdwg.mxu0
        %4259 = vmatpush.msra.mxu0 %v3778
        %4260 = vmatpush.msra.mxu0 %v3776
        %4261 = vmatpush.msra.mxu0 %v3774
        %4262 = vmatpush.msra.mxu0 %v3772
        %4263 = vmatpush.msra.mxu0 %v3770
        %4264 = vmatpush.msra.mxu0 %v3768
        %4265 = vmatpush.msra.mxu0 %v3766
        %4266 = vmatpush.msra.mxu0 %v3764
        %4267 = vmatpush.msra.mxu0 %v3762
        %4268 = vmatpush.msra.mxu0 %v3760
        %4269 = vmatpush.msra.mxu0 %v3758
        %4270 = vmatpush.msra.mxu0 %v3756
        %4271 = vmatpush.msra.mxu0 %v3754
        %4272 = vmatpush.msra.mxu0 %v3752
        %4273 = vmatpush.msra.mxu0 %v3750
        %4274 = vmatpush.msra.mxu0 %v3748
        %4275 = vmatmul.f32.gmra.mxu0 %v3700
        %v4276 = vpop.f32.mrf.mxu0
        %v4277 = vadd.f32 %v4236, %v4276
        %4278 = vmatmul.f32.gmra.mxu0 %v3702
        %v4279 = vpop.f32.mrf.mxu0
        %v4280 = vadd.f32 %v4239, %v4279
        %4281 = vmatmul.f32.gmra.mxu0 %v3704
        %v4282 = vpop.f32.mrf.mxu0
        %v4283 = vadd.f32 %v4242, %v4282
        %4284 = vmatmul.f32.gmra.mxu0 %v3706
        %v4285 = vpop.f32.mrf.mxu0
        %v4286 = vadd.f32 %v4245, %v4285
        %4287 = vmatmul.f32.gmra.mxu0 %v3708
        %v4288 = vpop.f32.mrf.mxu0
        %v4289 = vadd.f32 %v4248, %v4288
        %4290 = vmatmul.f32.gmra.mxu0 %v3710
        %v4291 = vpop.f32.mrf.mxu0
        %v4292 = vadd.f32 %v4251, %v4291
        %4293 = vmatmul.f32.gmra.mxu0 %v3712
        %v4294 = vpop.f32.mrf.mxu0
        %v4295 = vadd.f32 %v4254, %v4294
        %4296 = vmatmul.f32.gmra.mxu0 %v3714
        %v4297 = vpop.f32.mrf.mxu0
        %v4298 = vadd.f32 %v4257, %v4297
        %4299 = vdwg.mxu0
        %v4300 = vld [vmem:[#allocation3] sm:$0xfc]
        %v4301 = vld [vmem:[#allocation3 + $0x8] sm:$0xfc]
        %v4302 = vld [vmem:[#allocation3 + $0x10] sm:$0x3]
        %v4303 = vld [vmem:[#allocation3 + $0x18] sm:$0x3]
        %v4304 = vld [vmem:[#allocation3 + $0x20] sm:$0xfc]
        %v4305 = vld [vmem:[#allocation3 + $0x28] sm:$0xfc]
        %v4306 = vld [vmem:[#allocation3 + $0x30] sm:$0x3]
        %v4307 = vld [vmem:[#allocation3 + $0x38] sm:$0x3]
        %v4308 = vld [vmem:[#allocation3 + $0x40] sm:$0xfc]
        %v4309 = vld [vmem:[#allocation3 + $0x48] sm:$0xfc]
        %v4310 = vld [vmem:[#allocation3 + $0x50] sm:$0x3]
        %v4311 = vld [vmem:[#allocation3 + $0x58] sm:$0x3]
        %v4312 = vld [vmem:[#allocation3 + $0x60] sm:$0xfc]
        %v4313 = vld [vmem:[#allocation3 + $0x68] sm:$0xfc]
        %v4314 = vld [vmem:[#allocation3 + $0x70] sm:$0x3]
        %v4315 = vld [vmem:[#allocation3 + $0x78] sm:$0x3]
        %v4316 = vld [vmem:[#allocation3 + $0x80] sm:$0xfc]
        %v4317 = vld [vmem:[#allocation3 + $0x88] sm:$0xfc]
        %v4318 = vld [vmem:[#allocation3 + $0x90] sm:$0x3]
        %v4319 = vld [vmem:[#allocation3 + $0x98] sm:$0x3]
        %v4320 = vld [vmem:[#allocation3 + $0xa0] sm:$0xfc]
        %v4321 = vld [vmem:[#allocation3 + $0xa8] sm:$0xfc]
        %v4322 = vld [vmem:[#allocation3 + $0xb0] sm:$0x3]
        %v4323 = vld [vmem:[#allocation3 + $0xb8] sm:$0x3]
        %v4324 = vld [vmem:[#allocation3 + $0xc0] sm:$0xfc]
        %v4325 = vld [vmem:[#allocation3 + $0xc8] sm:$0xfc]
        %v4326 = vld [vmem:[#allocation3 + $0xd0] sm:$0x3]
        %v4327 = vld [vmem:[#allocation3 + $0xd8] sm:$0x3]
        %v4328 = vld [vmem:[#allocation3 + $0xe0] sm:$0xfc]
        %v4329 = vld [vmem:[#allocation3 + $0xe8] sm:$0xfc]
        %v4330 = vld [vmem:[#allocation3 + $0xf0] sm:$0x3]
        %v4331 = vld [vmem:[#allocation3 + $0xf8] sm:$0x3]
        %v4364 = vrot.slane %v4300, 2
        %v4365 = vrot.slane %v4302, 2
        %v4366 = vsel %vm1236, %v4364, %v4365
        %v4367 = vrot.slane %v4301, 2
        %v4368 = vrot.slane %v4303, 2
        %v4369 = vsel %vm1236, %v4367, %v4368
        %v4370 = vrot.slane %v4304, 2
        %v4371 = vrot.slane %v4306, 2
        %v4372 = vsel %vm1236, %v4370, %v4371
        %v4373 = vrot.slane %v4305, 2
        %v4374 = vrot.slane %v4307, 2
        %v4375 = vsel %vm1236, %v4373, %v4374
        %v4376 = vrot.slane %v4308, 2
        %v4377 = vrot.slane %v4310, 2
        %v4378 = vsel %vm1236, %v4376, %v4377
        %v4379 = vrot.slane %v4309, 2
        %v4380 = vrot.slane %v4311, 2
        %v4381 = vsel %vm1236, %v4379, %v4380
        %v4382 = vrot.slane %v4312, 2
        %v4383 = vrot.slane %v4314, 2
        %v4384 = vsel %vm1236, %v4382, %v4383
        %v4385 = vrot.slane %v4313, 2
        %v4386 = vrot.slane %v4315, 2
        %v4387 = vsel %vm1236, %v4385, %v4386
        %v4388 = vrot.slane %v4316, 2
        %v4389 = vrot.slane %v4318, 2
        %v4390 = vsel %vm1236, %v4388, %v4389
        %v4391 = vrot.slane %v4317, 2
        %v4392 = vrot.slane %v4319, 2
        %v4393 = vsel %vm1236, %v4391, %v4392
        %v4394 = vrot.slane %v4320, 2
        %v4395 = vrot.slane %v4322, 2
        %v4396 = vsel %vm1236, %v4394, %v4395
        %v4397 = vrot.slane %v4321, 2
        %v4398 = vrot.slane %v4323, 2
        %v4399 = vsel %vm1236, %v4397, %v4398
        %v4400 = vrot.slane %v4324, 2
        %v4401 = vrot.slane %v4326, 2
        %v4402 = vsel %vm1236, %v4400, %v4401
        %v4403 = vrot.slane %v4325, 2
        %v4404 = vrot.slane %v4327, 2
        %v4405 = vsel %vm1236, %v4403, %v4404
        %v4406 = vrot.slane %v4328, 2
        %v4407 = vrot.slane %v4330, 2
        %v4408 = vsel %vm1236, %v4406, %v4407
        %v4409 = vrot.slane %v4329, 2
        %v4410 = vrot.slane %v4331, 2
        %v4411 = vsel %vm1236, %v4409, %v4410
        %s4428 = scalar_lea.vmem [#allocation9], 1024
        %v4429 = vld [vmem:[%s4428] sm:$0xff]
        %v4430 = vld [vmem:[%s4428 + $0x8] sm:$0xff]
        %v4431 = vld [vmem:[%s4428 + $0x10] sm:$0xff]
        %v4432 = vld [vmem:[%s4428 + $0x18] sm:$0xff]
        %v4433 = vld [vmem:[%s4428 + $0x20] sm:$0xff]
        %v4434 = vld [vmem:[%s4428 + $0x28] sm:$0xff]
        %v4435 = vld [vmem:[%s4428 + $0x30] sm:$0xff]
        %v4436 = vld [vmem:[%s4428 + $0x38] sm:$0xff]
        %v4437 = vld [vmem:[%s4428 + $0x40] sm:$0xff]
        %v4438 = vld [vmem:[%s4428 + $0x48] sm:$0xff]
        %v4439 = vld [vmem:[%s4428 + $0x50] sm:$0xff]
        %v4440 = vld [vmem:[%s4428 + $0x58] sm:$0xff]
        %v4441 = vld [vmem:[%s4428 + $0x60] sm:$0xff]
        %v4442 = vld [vmem:[%s4428 + $0x68] sm:$0xff]
        %v4443 = vld [vmem:[%s4428 + $0x70] sm:$0xff]
        %v4444 = vld [vmem:[%s4428 + $0x78] sm:$0xff]
        %v4445 = vld [vmem:[%s4428 + $0x80] sm:$0xff]
        %v4446 = vld [vmem:[%s4428 + $0x88] sm:$0xff]
        %v4447 = vld [vmem:[%s4428 + $0x90] sm:$0xff]
        %v4448 = vld [vmem:[%s4428 + $0x98] sm:$0xff]
        %v4449 = vld [vmem:[%s4428 + $0xa0] sm:$0xff]
        %v4450 = vld [vmem:[%s4428 + $0xa8] sm:$0xff]
        %v4451 = vld [vmem:[%s4428 + $0xb0] sm:$0xff]
        %v4452 = vld [vmem:[%s4428 + $0xb8] sm:$0xff]
        %v4453 = vld [vmem:[%s4428 + $0xc0] sm:$0xff]
        %v4454 = vld [vmem:[%s4428 + $0xc8] sm:$0xff]
        %v4455 = vld [vmem:[%s4428 + $0xd0] sm:$0xff]
        %v4456 = vld [vmem:[%s4428 + $0xd8] sm:$0xff]
        %v4457 = vld [vmem:[%s4428 + $0xe0] sm:$0xff]
        %v4458 = vld [vmem:[%s4428 + $0xe8] sm:$0xff]
        %v4459 = vld [vmem:[%s4428 + $0xf0] sm:$0xff]
        %v4460 = vld [vmem:[%s4428 + $0xf8] sm:$0xff]
        %v4461 = vld [vmem:[%s4428 + $0x100] sm:$0xff]
        %v4462 = vld [vmem:[%s4428 + $0x108] sm:$0xff]
        %v4463 = vld [vmem:[%s4428 + $0x110] sm:$0xff]
        %v4464 = vld [vmem:[%s4428 + $0x118] sm:$0xff]
        %v4465 = vld [vmem:[%s4428 + $0x120] sm:$0xff]
        %v4466 = vld [vmem:[%s4428 + $0x128] sm:$0xff]
        %v4467 = vld [vmem:[%s4428 + $0x130] sm:$0xff]
        %v4468 = vld [vmem:[%s4428 + $0x138] sm:$0xff]
        %v4469 = vld [vmem:[%s4428 + $0x140] sm:$0xff]
        %v4470 = vld [vmem:[%s4428 + $0x148] sm:$0xff]
        %v4471 = vld [vmem:[%s4428 + $0x150] sm:$0xff]
        %v4472 = vld [vmem:[%s4428 + $0x158] sm:$0xff]
        %v4473 = vld [vmem:[%s4428 + $0x160] sm:$0xff]
        %v4474 = vld [vmem:[%s4428 + $0x168] sm:$0xff]
        %v4475 = vld [vmem:[%s4428 + $0x170] sm:$0xff]
        %v4476 = vld [vmem:[%s4428 + $0x178] sm:$0xff]
        %v4477 = vld [vmem:[%s4428 + $0x180] sm:$0xff]
        %v4478 = vld [vmem:[%s4428 + $0x188] sm:$0xff]
        %v4479 = vld [vmem:[%s4428 + $0x190] sm:$0xff]
        %v4480 = vld [vmem:[%s4428 + $0x198] sm:$0xff]
        %v4481 = vld [vmem:[%s4428 + $0x1a0] sm:$0xff]
        %v4482 = vld [vmem:[%s4428 + $0x1a8] sm:$0xff]
        %v4483 = vld [vmem:[%s4428 + $0x1b0] sm:$0xff]
        %v4484 = vld [vmem:[%s4428 + $0x1b8] sm:$0xff]
        %v4485 = vld [vmem:[%s4428 + $0x1c0] sm:$0xff]
        %v4486 = vld [vmem:[%s4428 + $0x1c8] sm:$0xff]
        %v4487 = vld [vmem:[%s4428 + $0x1d0] sm:$0xff]
        %v4488 = vld [vmem:[%s4428 + $0x1d8] sm:$0xff]
        %v4489 = vld [vmem:[%s4428 + $0x1e0] sm:$0xff]
        %v4490 = vld [vmem:[%s4428 + $0x1e8] sm:$0xff]
        %v4491 = vld [vmem:[%s4428 + $0x1f0] sm:$0xff]
        %v4492 = vld [vmem:[%s4428 + $0x1f8] sm:$0xff]
        %4493 = vmatpush.msra.mxu0 %v4459
        %4494 = vmatpush.msra.mxu0 %v4457
        %4495 = vmatpush.msra.mxu0 %v4455
        %4496 = vmatpush.msra.mxu0 %v4453
        %4497 = vmatpush.msra.mxu0 %v4451
        %4498 = vmatpush.msra.mxu0 %v4449
        %4499 = vmatpush.msra.mxu0 %v4447
        %4500 = vmatpush.msra.mxu0 %v4445
        %4501 = vmatpush.msra.mxu0 %v4443
        %4502 = vmatpush.msra.mxu0 %v4441
        %4503 = vmatpush.msra.mxu0 %v4439
        %4504 = vmatpush.msra.mxu0 %v4437
        %4505 = vmatpush.msra.mxu0 %v4435
        %4506 = vmatpush.msra.mxu0 %v4433
        %4507 = vmatpush.msra.mxu0 %v4431
        %4508 = vmatpush.msra.mxu0 %v4429
        %4509 = vmatmul.f32.gmra.mxu0 %v4366
        %v4510 = vpop.f32.mrf.mxu0
        %v4511 = vadd.f32 0.0, %v4510
        %4512 = vmatmul.f32.gmra.mxu0 %v4372
        %v4513 = vpop.f32.mrf.mxu0
        %v4514 = vadd.f32 0.0, %v4513
        %4515 = vmatmul.f32.gmra.mxu0 %v4378
        %v4516 = vpop.f32.mrf.mxu0
        %v4517 = vadd.f32 0.0, %v4516
        %4518 = vmatmul.f32.gmra.mxu0 %v4384
        %v4519 = vpop.f32.mrf.mxu0
        %v4520 = vadd.f32 0.0, %v4519
        %4521 = vmatmul.f32.gmra.mxu0 %v4390
        %v4522 = vpop.f32.mrf.mxu0
        %v4523 = vadd.f32 0.0, %v4522
        %4524 = vmatmul.f32.gmra.mxu0 %v4396
        %v4525 = vpop.f32.mrf.mxu0
        %v4526 = vadd.f32 0.0, %v4525
        %4527 = vmatmul.f32.gmra.mxu0 %v4402
        %v4528 = vpop.f32.mrf.mxu0
        %v4529 = vadd.f32 0.0, %v4528
        %4530 = vmatmul.f32.gmra.mxu0 %v4408
        %v4531 = vpop.f32.mrf.mxu0
        %v4532 = vadd.f32 0.0, %v4531
        %4533 = vdwg.mxu0
        %4534 = vmatpush.msra.mxu0 %v4491
        %4535 = vmatpush.msra.mxu0 %v4489
        %4536 = vmatpush.msra.mxu0 %v4487
        %4537 = vmatpush.msra.mxu0 %v4485
        %4538 = vmatpush.msra.mxu0 %v4483
        %4539 = vmatpush.msra.mxu0 %v4481
        %4540 = vmatpush.msra.mxu0 %v4479
        %4541 = vmatpush.msra.mxu0 %v4477
        %4542 = vmatpush.msra.mxu0 %v4475
        %4543 = vmatpush.msra.mxu0 %v4473
        %4544 = vmatpush.msra.mxu0 %v4471
        %4545 = vmatpush.msra.mxu0 %v4469
        %4546 = vmatpush.msra.mxu0 %v4467
        %4547 = vmatpush.msra.mxu0 %v4465
        %4548 = vmatpush.msra.mxu0 %v4463
        %4549 = vmatpush.msra.mxu0 %v4461
        %4550 = vmatmul.f32.gmra.mxu0 %v4369
        %v4551 = vpop.f32.mrf.mxu0
        %v4552 = vadd.f32 %v4511, %v4551
        %4553 = vmatmul.f32.gmra.mxu0 %v4375
        %v4554 = vpop.f32.mrf.mxu0
        %v4555 = vadd.f32 %v4514, %v4554
        %4556 = vmatmul.f32.gmra.mxu0 %v4381
        %v4557 = vpop.f32.mrf.mxu0
        %v4558 = vadd.f32 %v4517, %v4557
        %4559 = vmatmul.f32.gmra.mxu0 %v4387
        %v4560 = vpop.f32.mrf.mxu0
        %v4561 = vadd.f32 %v4520, %v4560
        %4562 = vmatmul.f32.gmra.mxu0 %v4393
        %v4563 = vpop.f32.mrf.mxu0
        %v4564 = vadd.f32 %v4523, %v4563
        %4565 = vmatmul.f32.gmra.mxu0 %v4399
        %v4566 = vpop.f32.mrf.mxu0
        %v4567 = vadd.f32 %v4526, %v4566
        %4568 = vmatmul.f32.gmra.mxu0 %v4405
        %v4569 = vpop.f32.mrf.mxu0
        %v4570 = vadd.f32 %v4529, %v4569
        %4571 = vmatmul.f32.gmra.mxu0 %v4411
        %v4572 = vpop.f32.mrf.mxu0
        %v4573 = vadd.f32 %v4532, %v4572
        %4574 = vdwg.mxu0
        %4575 = vmatpush.msra.mxu0 %v4460
        %4576 = vmatpush.msra.mxu0 %v4458
        %4577 = vmatpush.msra.mxu0 %v4456
        %4578 = vmatpush.msra.mxu0 %v4454
        %4579 = vmatpush.msra.mxu0 %v4452
        %4580 = vmatpush.msra.mxu0 %v4450
        %4581 = vmatpush.msra.mxu0 %v4448
        %4582 = vmatpush.msra.mxu0 %v4446
        %4583 = vmatpush.msra.mxu0 %v4444
        %4584 = vmatpush.msra.mxu0 %v4442
        %4585 = vmatpush.msra.mxu0 %v4440
        %4586 = vmatpush.msra.mxu0 %v4438
        %4587 = vmatpush.msra.mxu0 %v4436
        %4588 = vmatpush.msra.mxu0 %v4434
        %4589 = vmatpush.msra.mxu0 %v4432
        %4590 = vmatpush.msra.mxu0 %v4430
        %4591 = vmatmul.f32.gmra.mxu0 %v4366
        %v4592 = vpop.f32.mrf.mxu0
        %v4593 = vadd.f32 0.0, %v4592
        %4594 = vmatmul.f32.gmra.mxu0 %v4372
        %v4595 = vpop.f32.mrf.mxu0
        %v4596 = vadd.f32 0.0, %v4595
        %4597 = vmatmul.f32.gmra.mxu0 %v4378
        %v4598 = vpop.f32.mrf.mxu0
        %v4599 = vadd.f32 0.0, %v4598
        %4600 = vmatmul.f32.gmra.mxu0 %v4384
        %v4601 = vpop.f32.mrf.mxu0
        %v4602 = vadd.f32 0.0, %v4601
        %4603 = vmatmul.f32.gmra.mxu0 %v4390
        %v4604 = vpop.f32.mrf.mxu0
        %v4605 = vadd.f32 0.0, %v4604
        %4606 = vmatmul.f32.gmra.mxu0 %v4396
        %v4607 = vpop.f32.mrf.mxu0
        %v4608 = vadd.f32 0.0, %v4607
        %4609 = vmatmul.f32.gmra.mxu0 %v4402
        %v4610 = vpop.f32.mrf.mxu0
        %v4611 = vadd.f32 0.0, %v4610
        %4612 = vmatmul.f32.gmra.mxu0 %v4408
        %v4613 = vpop.f32.mrf.mxu0
        %v4614 = vadd.f32 0.0, %v4613
        %4615 = vdwg.mxu0
        %4616 = vmatpush.msra.mxu0 %v4492
        %4617 = vmatpush.msra.mxu0 %v4490
        %4618 = vmatpush.msra.mxu0 %v4488
        %4619 = vmatpush.msra.mxu0 %v4486
        %4620 = vmatpush.msra.mxu0 %v4484
        %4621 = vmatpush.msra.mxu0 %v4482
        %4622 = vmatpush.msra.mxu0 %v4480
        %4623 = vmatpush.msra.mxu0 %v4478
        %4624 = vmatpush.msra.mxu0 %v4476
        %4625 = vmatpush.msra.mxu0 %v4474
        %4626 = vmatpush.msra.mxu0 %v4472
        %4627 = vmatpush.msra.mxu0 %v4470
        %4628 = vmatpush.msra.mxu0 %v4468
        %4629 = vmatpush.msra.mxu0 %v4466
        %4630 = vmatpush.msra.mxu0 %v4464
        %4631 = vmatpush.msra.mxu0 %v4462
        %4632 = vmatmul.f32.gmra.mxu0 %v4369
        %v4633 = vpop.f32.mrf.mxu0
        %v4634 = vadd.f32 %v4593, %v4633
        %4635 = vmatmul.f32.gmra.mxu0 %v4375
        %v4636 = vpop.f32.mrf.mxu0
        %v4637 = vadd.f32 %v4596, %v4636
        %4638 = vmatmul.f32.gmra.mxu0 %v4381
        %v4639 = vpop.f32.mrf.mxu0
        %v4640 = vadd.f32 %v4599, %v4639
        %4641 = vmatmul.f32.gmra.mxu0 %v4387
        %v4642 = vpop.f32.mrf.mxu0
        %v4643 = vadd.f32 %v4602, %v4642
        %4644 = vmatmul.f32.gmra.mxu0 %v4393
        %v4645 = vpop.f32.mrf.mxu0
        %v4646 = vadd.f32 %v4605, %v4645
        %4647 = vmatmul.f32.gmra.mxu0 %v4399
        %v4648 = vpop.f32.mrf.mxu0
        %v4649 = vadd.f32 %v4608, %v4648
        %4650 = vmatmul.f32.gmra.mxu0 %v4405
        %v4651 = vpop.f32.mrf.mxu0
        %v4652 = vadd.f32 %v4611, %v4651
        %4653 = vmatmul.f32.gmra.mxu0 %v4411
        %v4654 = vpop.f32.mrf.mxu0
        %v4655 = vadd.f32 %v4614, %v4654
        %4656 = vdwg.mxu0
        %v4657 = vadd.f32 %v4195, %v4552
        %v4658 = vadd.f32 %v4277, %v4634
        %v4659 = vadd.f32 %v4198, %v4555
        %v4660 = vadd.f32 %v4280, %v4637
        %v4661 = vadd.f32 %v4201, %v4558
        %v4662 = vadd.f32 %v4283, %v4640
        %v4663 = vadd.f32 %v4204, %v4561
        %v4664 = vadd.f32 %v4286, %v4643
        %v4665 = vadd.f32 %v4207, %v4564
        %v4666 = vadd.f32 %v4289, %v4646
        %v4667 = vadd.f32 %v4210, %v4567
        %v4668 = vadd.f32 %v4292, %v4649
        %v4669 = vadd.f32 %v4213, %v4570
        %v4670 = vadd.f32 %v4295, %v4652
        %v4671 = vadd.f32 %v4216, %v4573
        %v4672 = vadd.f32 %v4298, %v4655
        %v4673 = vld [vmem:[%s419] sm:$0xff]
        %v4674 = vld [vmem:[%s419 + $0x8] sm:$0xff]
        %v4675 = vld [vmem:[%s419 + $0x20] sm:$0xff]
        %v4676 = vld [vmem:[%s419 + $0x28] sm:$0xff]
        %v4677 = vld [vmem:[%s419 + $0x40] sm:$0xff]
        %v4678 = vld [vmem:[%s419 + $0x48] sm:$0xff]
        %v4679 = vld [vmem:[%s419 + $0x60] sm:$0xff]
        %v4680 = vld [vmem:[%s419 + $0x68] sm:$0xff]
        %v4681 = vld [vmem:[%s419 + $0x80] sm:$0xff]
        %v4682 = vld [vmem:[%s419 + $0x88] sm:$0xff]
        %v4683 = vld [vmem:[%s419 + $0xa0] sm:$0xff]
        %v4684 = vld [vmem:[%s419 + $0xa8] sm:$0xff]
        %v4685 = vld [vmem:[%s419 + $0xc0] sm:$0xff]
        %v4686 = vld [vmem:[%s419 + $0xc8] sm:$0xff]
        %v4687 = vld [vmem:[%s419 + $0xe0] sm:$0xff]
        %v4688 = vld [vmem:[%s419 + $0xe8] sm:$0xff]
        %s4689 = scalar_lea.vmem [#allocation9], 1536
        %v4690 = vld [vmem:[%s4689] sm:$0xff]
        %v4691 = vld [vmem:[%s4689 + $0x8] sm:$0xff]
        %v4692 = vld [vmem:[%s4689 + $0x10] sm:$0xff]
        %v4693 = vld [vmem:[%s4689 + $0x18] sm:$0xff]
        %v4694 = vld [vmem:[%s4689 + $0x20] sm:$0xff]
        %v4695 = vld [vmem:[%s4689 + $0x28] sm:$0xff]
        %v4696 = vld [vmem:[%s4689 + $0x30] sm:$0xff]
        %v4697 = vld [vmem:[%s4689 + $0x38] sm:$0xff]
        %v4698 = vld [vmem:[%s4689 + $0x40] sm:$0xff]
        %v4699 = vld [vmem:[%s4689 + $0x48] sm:$0xff]
        %v4700 = vld [vmem:[%s4689 + $0x50] sm:$0xff]
        %v4701 = vld [vmem:[%s4689 + $0x58] sm:$0xff]
        %v4702 = vld [vmem:[%s4689 + $0x60] sm:$0xff]
        %v4703 = vld [vmem:[%s4689 + $0x68] sm:$0xff]
        %v4704 = vld [vmem:[%s4689 + $0x70] sm:$0xff]
        %v4705 = vld [vmem:[%s4689 + $0x78] sm:$0xff]
        %v4706 = vld [vmem:[%s4689 + $0x80] sm:$0xff]
        %v4707 = vld [vmem:[%s4689 + $0x88] sm:$0xff]
        %v4708 = vld [vmem:[%s4689 + $0x90] sm:$0xff]
        %v4709 = vld [vmem:[%s4689 + $0x98] sm:$0xff]
        %v4710 = vld [vmem:[%s4689 + $0xa0] sm:$0xff]
        %v4711 = vld [vmem:[%s4689 + $0xa8] sm:$0xff]
        %v4712 = vld [vmem:[%s4689 + $0xb0] sm:$0xff]
        %v4713 = vld [vmem:[%s4689 + $0xb8] sm:$0xff]
        %v4714 = vld [vmem:[%s4689 + $0xc0] sm:$0xff]
        %v4715 = vld [vmem:[%s4689 + $0xc8] sm:$0xff]
        %v4716 = vld [vmem:[%s4689 + $0xd0] sm:$0xff]
        %v4717 = vld [vmem:[%s4689 + $0xd8] sm:$0xff]
        %v4718 = vld [vmem:[%s4689 + $0xe0] sm:$0xff]
        %v4719 = vld [vmem:[%s4689 + $0xe8] sm:$0xff]
        %v4720 = vld [vmem:[%s4689 + $0xf0] sm:$0xff]
        %v4721 = vld [vmem:[%s4689 + $0xf8] sm:$0xff]
        %v4722 = vld [vmem:[%s4689 + $0x100] sm:$0xff]
        %v4723 = vld [vmem:[%s4689 + $0x108] sm:$0xff]
        %v4724 = vld [vmem:[%s4689 + $0x110] sm:$0xff]
        %v4725 = vld [vmem:[%s4689 + $0x118] sm:$0xff]
        %v4726 = vld [vmem:[%s4689 + $0x120] sm:$0xff]
        %v4727 = vld [vmem:[%s4689 + $0x128] sm:$0xff]
        %v4728 = vld [vmem:[%s4689 + $0x130] sm:$0xff]
        %v4729 = vld [vmem:[%s4689 + $0x138] sm:$0xff]
        %v4730 = vld [vmem:[%s4689 + $0x140] sm:$0xff]
        %v4731 = vld [vmem:[%s4689 + $0x148] sm:$0xff]
        %v4732 = vld [vmem:[%s4689 + $0x150] sm:$0xff]
        %v4733 = vld [vmem:[%s4689 + $0x158] sm:$0xff]
        %v4734 = vld [vmem:[%s4689 + $0x160] sm:$0xff]
        %v4735 = vld [vmem:[%s4689 + $0x168] sm:$0xff]
        %v4736 = vld [vmem:[%s4689 + $0x170] sm:$0xff]
        %v4737 = vld [vmem:[%s4689 + $0x178] sm:$0xff]
        %v4738 = vld [vmem:[%s4689 + $0x180] sm:$0xff]
        %v4739 = vld [vmem:[%s4689 + $0x188] sm:$0xff]
        %v4740 = vld [vmem:[%s4689 + $0x190] sm:$0xff]
        %v4741 = vld [vmem:[%s4689 + $0x198] sm:$0xff]
        %v4742 = vld [vmem:[%s4689 + $0x1a0] sm:$0xff]
        %v4743 = vld [vmem:[%s4689 + $0x1a8] sm:$0xff]
        %v4744 = vld [vmem:[%s4689 + $0x1b0] sm:$0xff]
        %v4745 = vld [vmem:[%s4689 + $0x1b8] sm:$0xff]
        %v4746 = vld [vmem:[%s4689 + $0x1c0] sm:$0xff]
        %v4747 = vld [vmem:[%s4689 + $0x1c8] sm:$0xff]
        %v4748 = vld [vmem:[%s4689 + $0x1d0] sm:$0xff]
        %v4749 = vld [vmem:[%s4689 + $0x1d8] sm:$0xff]
        %v4750 = vld [vmem:[%s4689 + $0x1e0] sm:$0xff]
        %v4751 = vld [vmem:[%s4689 + $0x1e8] sm:$0xff]
        %v4752 = vld [vmem:[%s4689 + $0x1f0] sm:$0xff]
        %v4753 = vld [vmem:[%s4689 + $0x1f8] sm:$0xff]
        %4754 = vmatpush.msra.mxu0 %v4720
        %4755 = vmatpush.msra.mxu0 %v4718
        %4756 = vmatpush.msra.mxu0 %v4716
        %4757 = vmatpush.msra.mxu0 %v4714
        %4758 = vmatpush.msra.mxu0 %v4712
        %4759 = vmatpush.msra.mxu0 %v4710
        %4760 = vmatpush.msra.mxu0 %v4708
        %4761 = vmatpush.msra.mxu0 %v4706
        %4762 = vmatpush.msra.mxu0 %v4704
        %4763 = vmatpush.msra.mxu0 %v4702
        %4764 = vmatpush.msra.mxu0 %v4700
        %4765 = vmatpush.msra.mxu0 %v4698
        %4766 = vmatpush.msra.mxu0 %v4696
        %4767 = vmatpush.msra.mxu0 %v4694
        %4768 = vmatpush.msra.mxu0 %v4692
        %4769 = vmatpush.msra.mxu0 %v4690
        %4770 = vmatmul.f32.gmra.mxu0 %v4673
        %v4771 = vpop.f32.mrf.mxu0
        %v4772 = vadd.f32 0.0, %v4771
        %4773 = vmatmul.f32.gmra.mxu0 %v4675
        %v4774 = vpop.f32.mrf.mxu0
        %v4775 = vadd.f32 0.0, %v4774
        %4776 = vmatmul.f32.gmra.mxu0 %v4677
        %v4777 = vpop.f32.mrf.mxu0
        %v4778 = vadd.f32 0.0, %v4777
        %4779 = vmatmul.f32.gmra.mxu0 %v4679
        %v4780 = vpop.f32.mrf.mxu0
        %v4781 = vadd.f32 0.0, %v4780
        %4782 = vmatmul.f32.gmra.mxu0 %v4681
        %v4783 = vpop.f32.mrf.mxu0
        %v4784 = vadd.f32 0.0, %v4783
        %4785 = vmatmul.f32.gmra.mxu0 %v4683
        %v4786 = vpop.f32.mrf.mxu0
        %v4787 = vadd.f32 0.0, %v4786
        %4788 = vmatmul.f32.gmra.mxu0 %v4685
        %v4789 = vpop.f32.mrf.mxu0
        %v4790 = vadd.f32 0.0, %v4789
        %4791 = vmatmul.f32.gmra.mxu0 %v4687
        %v4792 = vpop.f32.mrf.mxu0
        %v4793 = vadd.f32 0.0, %v4792
        %4794 = vdwg.mxu0
        %4795 = vmatpush.msra.mxu0 %v4752
        %4796 = vmatpush.msra.mxu0 %v4750
        %4797 = vmatpush.msra.mxu0 %v4748
        %4798 = vmatpush.msra.mxu0 %v4746
        %4799 = vmatpush.msra.mxu0 %v4744
        %4800 = vmatpush.msra.mxu0 %v4742
        %4801 = vmatpush.msra.mxu0 %v4740
        %4802 = vmatpush.msra.mxu0 %v4738
        %4803 = vmatpush.msra.mxu0 %v4736
        %4804 = vmatpush.msra.mxu0 %v4734
        %4805 = vmatpush.msra.mxu0 %v4732
        %4806 = vmatpush.msra.mxu0 %v4730
        %4807 = vmatpush.msra.mxu0 %v4728
        %4808 = vmatpush.msra.mxu0 %v4726
        %4809 = vmatpush.msra.mxu0 %v4724
        %4810 = vmatpush.msra.mxu0 %v4722
        %4811 = vmatmul.f32.gmra.mxu0 %v4674
        %v4812 = vpop.f32.mrf.mxu0
        %v4813 = vadd.f32 %v4772, %v4812
        %4814 = vmatmul.f32.gmra.mxu0 %v4676
        %v4815 = vpop.f32.mrf.mxu0
        %v4816 = vadd.f32 %v4775, %v4815
        %4817 = vmatmul.f32.gmra.mxu0 %v4678
        %v4818 = vpop.f32.mrf.mxu0
        %v4819 = vadd.f32 %v4778, %v4818
        %4820 = vmatmul.f32.gmra.mxu0 %v4680
        %v4821 = vpop.f32.mrf.mxu0
        %v4822 = vadd.f32 %v4781, %v4821
        %4823 = vmatmul.f32.gmra.mxu0 %v4682
        %v4824 = vpop.f32.mrf.mxu0
        %v4825 = vadd.f32 %v4784, %v4824
        %4826 = vmatmul.f32.gmra.mxu0 %v4684
        %v4827 = vpop.f32.mrf.mxu0
        %v4828 = vadd.f32 %v4787, %v4827
        %4829 = vmatmul.f32.gmra.mxu0 %v4686
        %v4830 = vpop.f32.mrf.mxu0
        %v4831 = vadd.f32 %v4790, %v4830
        %4832 = vmatmul.f32.gmra.mxu0 %v4688
        %v4833 = vpop.f32.mrf.mxu0
        %v4834 = vadd.f32 %v4793, %v4833
        %4835 = vdwg.mxu0
        %4836 = vmatpush.msra.mxu0 %v4721
        %4837 = vmatpush.msra.mxu0 %v4719
        %4838 = vmatpush.msra.mxu0 %v4717
        %4839 = vmatpush.msra.mxu0 %v4715
        %4840 = vmatpush.msra.mxu0 %v4713
        %4841 = vmatpush.msra.mxu0 %v4711
        %4842 = vmatpush.msra.mxu0 %v4709
        %4843 = vmatpush.msra.mxu0 %v4707
        %4844 = vmatpush.msra.mxu0 %v4705
        %4845 = vmatpush.msra.mxu0 %v4703
        %4846 = vmatpush.msra.mxu0 %v4701
        %4847 = vmatpush.msra.mxu0 %v4699
        %4848 = vmatpush.msra.mxu0 %v4697
        %4849 = vmatpush.msra.mxu0 %v4695
        %4850 = vmatpush.msra.mxu0 %v4693
        %4851 = vmatpush.msra.mxu0 %v4691
        %4852 = vmatmul.f32.gmra.mxu0 %v4673
        %v4853 = vpop.f32.mrf.mxu0
        %v4854 = vadd.f32 0.0, %v4853
        %4855 = vmatmul.f32.gmra.mxu0 %v4675
        %v4856 = vpop.f32.mrf.mxu0
        %v4857 = vadd.f32 0.0, %v4856
        %4858 = vmatmul.f32.gmra.mxu0 %v4677
        %v4859 = vpop.f32.mrf.mxu0
        %v4860 = vadd.f32 0.0, %v4859
        %4861 = vmatmul.f32.gmra.mxu0 %v4679
        %v4862 = vpop.f32.mrf.mxu0
        %v4863 = vadd.f32 0.0, %v4862
        %4864 = vmatmul.f32.gmra.mxu0 %v4681
        %v4865 = vpop.f32.mrf.mxu0
        %v4866 = vadd.f32 0.0, %v4865
        %4867 = vmatmul.f32.gmra.mxu0 %v4683
        %v4868 = vpop.f32.mrf.mxu0
        %v4869 = vadd.f32 0.0, %v4868
        %4870 = vmatmul.f32.gmra.mxu0 %v4685
        %v4871 = vpop.f32.mrf.mxu0
        %v4872 = vadd.f32 0.0, %v4871
        %4873 = vmatmul.f32.gmra.mxu0 %v4687
        %v4874 = vpop.f32.mrf.mxu0
        %v4875 = vadd.f32 0.0, %v4874
        %4876 = vdwg.mxu0
        %4877 = vmatpush.msra.mxu0 %v4753
        %4878 = vmatpush.msra.mxu0 %v4751
        %4879 = vmatpush.msra.mxu0 %v4749
        %4880 = vmatpush.msra.mxu0 %v4747
        %4881 = vmatpush.msra.mxu0 %v4745
        %4882 = vmatpush.msra.mxu0 %v4743
        %4883 = vmatpush.msra.mxu0 %v4741
        %4884 = vmatpush.msra.mxu0 %v4739
        %4885 = vmatpush.msra.mxu0 %v4737
        %4886 = vmatpush.msra.mxu0 %v4735
        %4887 = vmatpush.msra.mxu0 %v4733
        %4888 = vmatpush.msra.mxu0 %v4731
        %4889 = vmatpush.msra.mxu0 %v4729
        %4890 = vmatpush.msra.mxu0 %v4727
        %4891 = vmatpush.msra.mxu0 %v4725
        %4892 = vmatpush.msra.mxu0 %v4723
        %4893 = vmatmul.f32.gmra.mxu0 %v4674
        %v4894 = vpop.f32.mrf.mxu0
        %v4895 = vadd.f32 %v4854, %v4894
        %4896 = vmatmul.f32.gmra.mxu0 %v4676
        %v4897 = vpop.f32.mrf.mxu0
        %v4898 = vadd.f32 %v4857, %v4897
        %4899 = vmatmul.f32.gmra.mxu0 %v4678
        %v4900 = vpop.f32.mrf.mxu0
        %v4901 = vadd.f32 %v4860, %v4900
        %4902 = vmatmul.f32.gmra.mxu0 %v4680
        %v4903 = vpop.f32.mrf.mxu0
        %v4904 = vadd.f32 %v4863, %v4903
        %4905 = vmatmul.f32.gmra.mxu0 %v4682
        %v4906 = vpop.f32.mrf.mxu0
        %v4907 = vadd.f32 %v4866, %v4906
        %4908 = vmatmul.f32.gmra.mxu0 %v4684
        %v4909 = vpop.f32.mrf.mxu0
        %v4910 = vadd.f32 %v4869, %v4909
        %4911 = vmatmul.f32.gmra.mxu0 %v4686
        %v4912 = vpop.f32.mrf.mxu0
        %v4913 = vadd.f32 %v4872, %v4912
        %4914 = vmatmul.f32.gmra.mxu0 %v4688
        %v4915 = vpop.f32.mrf.mxu0
        %v4916 = vadd.f32 %v4875, %v4915
        %4917 = vdwg.mxu0
        %v4918 = vadd.f32 %v4657, %v4813
        %v4919 = vadd.f32 %v4658, %v4895
        %v4920 = vadd.f32 %v4659, %v4816
        %v4921 = vadd.f32 %v4660, %v4898
        %v4922 = vadd.f32 %v4661, %v4819
        %v4923 = vadd.f32 %v4662, %v4901
        %v4924 = vadd.f32 %v4663, %v4822
        %v4925 = vadd.f32 %v4664, %v4904
        %v4926 = vadd.f32 %v4665, %v4825
        %v4927 = vadd.f32 %v4666, %v4907
        %v4928 = vadd.f32 %v4667, %v4828
        %v4929 = vadd.f32 %v4668, %v4910
        %v4930 = vadd.f32 %v4669, %v4831
        %v4931 = vadd.f32 %v4670, %v4913
        %v4932 = vadd.f32 %v4671, %v4834
        %v4933 = vadd.f32 %v4672, %v4916
        %v4934 = vld [vmem:[%s419] sm:$0xfe]
        %v4935 = vld [vmem:[%s419 + $0x8] sm:$0xfe]
        %v4936 = vld [vmem:[%s419 + $0x10] sm:$0x1]
        %v4937 = vld [vmem:[%s419 + $0x18] sm:$0x1]
        %v4938 = vld [vmem:[%s419 + $0x20] sm:$0xfe]
        %v4939 = vld [vmem:[%s419 + $0x28] sm:$0xfe]
        %v4940 = vld [vmem:[%s419 + $0x30] sm:$0x1]
        %v4941 = vld [vmem:[%s419 + $0x38] sm:$0x1]
        %v4942 = vld [vmem:[%s419 + $0x40] sm:$0xfe]
        %v4943 = vld [vmem:[%s419 + $0x48] sm:$0xfe]
        %v4944 = vld [vmem:[%s419 + $0x50] sm:$0x1]
        %v4945 = vld [vmem:[%s419 + $0x58] sm:$0x1]
        %v4946 = vld [vmem:[%s419 + $0x60] sm:$0xfe]
        %v4947 = vld [vmem:[%s419 + $0x68] sm:$0xfe]
        %v4948 = vld [vmem:[%s419 + $0x70] sm:$0x1]
        %v4949 = vld [vmem:[%s419 + $0x78] sm:$0x1]
        %v4950 = vld [vmem:[%s419 + $0x80] sm:$0xfe]
        %v4951 = vld [vmem:[%s419 + $0x88] sm:$0xfe]
        %v4952 = vld [vmem:[%s419 + $0x90] sm:$0x1]
        %v4953 = vld [vmem:[%s419 + $0x98] sm:$0x1]
        %v4954 = vld [vmem:[%s419 + $0xa0] sm:$0xfe]
        %v4955 = vld [vmem:[%s419 + $0xa8] sm:$0xfe]
        %v4956 = vld [vmem:[%s419 + $0xb0] sm:$0x1]
        %v4957 = vld [vmem:[%s419 + $0xb8] sm:$0x1]
        %v4958 = vld [vmem:[%s419 + $0xc0] sm:$0xfe]
        %v4959 = vld [vmem:[%s419 + $0xc8] sm:$0xfe]
        %v4960 = vld [vmem:[%s419 + $0xd0] sm:$0x1]
        %v4961 = vld [vmem:[%s419 + $0xd8] sm:$0x1]
        %v4962 = vld [vmem:[%s419 + $0xe0] sm:$0xfe]
        %v4963 = vld [vmem:[%s419 + $0xe8] sm:$0xfe]
        %v4964 = vld [vmem:[%s419 + $0xf0] sm:$0x1]
        %v4965 = vld [vmem:[%s419 + $0xf8] sm:$0x1]
        %v4998 = vrot.slane %v4934, 1
        %v4999 = vrot.slane %v4936, 1
        %v5000 = vsel %vm714, %v4998, %v4999
        %v5001 = vrot.slane %v4935, 1
        %v5002 = vrot.slane %v4937, 1
        %v5003 = vsel %vm714, %v5001, %v5002
        %v5004 = vrot.slane %v4938, 1
        %v5005 = vrot.slane %v4940, 1
        %v5006 = vsel %vm714, %v5004, %v5005
        %v5007 = vrot.slane %v4939, 1
        %v5008 = vrot.slane %v4941, 1
        %v5009 = vsel %vm714, %v5007, %v5008
        %v5010 = vrot.slane %v4942, 1
        %v5011 = vrot.slane %v4944, 1
        %v5012 = vsel %vm714, %v5010, %v5011
        %v5013 = vrot.slane %v4943, 1
        %v5014 = vrot.slane %v4945, 1
        %v5015 = vsel %vm714, %v5013, %v5014
        %v5016 = vrot.slane %v4946, 1
        %v5017 = vrot.slane %v4948, 1
        %v5018 = vsel %vm714, %v5016, %v5017
        %v5019 = vrot.slane %v4947, 1
        %v5020 = vrot.slane %v4949, 1
        %v5021 = vsel %vm714, %v5019, %v5020
        %v5022 = vrot.slane %v4950, 1
        %v5023 = vrot.slane %v4952, 1
        %v5024 = vsel %vm714, %v5022, %v5023
        %v5025 = vrot.slane %v4951, 1
        %v5026 = vrot.slane %v4953, 1
        %v5027 = vsel %vm714, %v5025, %v5026
        %v5028 = vrot.slane %v4954, 1
        %v5029 = vrot.slane %v4956, 1
        %v5030 = vsel %vm714, %v5028, %v5029
        %v5031 = vrot.slane %v4955, 1
        %v5032 = vrot.slane %v4957, 1
        %v5033 = vsel %vm714, %v5031, %v5032
        %v5034 = vrot.slane %v4958, 1
        %v5035 = vrot.slane %v4960, 1
        %v5036 = vsel %vm714, %v5034, %v5035
        %v5037 = vrot.slane %v4959, 1
        %v5038 = vrot.slane %v4961, 1
        %v5039 = vsel %vm714, %v5037, %v5038
        %v5040 = vrot.slane %v4962, 1
        %v5041 = vrot.slane %v4964, 1
        %v5042 = vsel %vm714, %v5040, %v5041
        %v5043 = vrot.slane %v4963, 1
        %v5044 = vrot.slane %v4965, 1
        %v5045 = vsel %vm714, %v5043, %v5044
        %s5062 = scalar_lea.vmem [#allocation9], 2048
        %v5063 = vld [vmem:[%s5062] sm:$0xff]
        %v5064 = vld [vmem:[%s5062 + $0x8] sm:$0xff]
        %v5065 = vld [vmem:[%s5062 + $0x10] sm:$0xff]
        %v5066 = vld [vmem:[%s5062 + $0x18] sm:$0xff]
        %v5067 = vld [vmem:[%s5062 + $0x20] sm:$0xff]
        %v5068 = vld [vmem:[%s5062 + $0x28] sm:$0xff]
        %v5069 = vld [vmem:[%s5062 + $0x30] sm:$0xff]
        %v5070 = vld [vmem:[%s5062 + $0x38] sm:$0xff]
        %v5071 = vld [vmem:[%s5062 + $0x40] sm:$0xff]
        %v5072 = vld [vmem:[%s5062 + $0x48] sm:$0xff]
        %v5073 = vld [vmem:[%s5062 + $0x50] sm:$0xff]
        %v5074 = vld [vmem:[%s5062 + $0x58] sm:$0xff]
        %v5075 = vld [vmem:[%s5062 + $0x60] sm:$0xff]
        %v5076 = vld [vmem:[%s5062 + $0x68] sm:$0xff]
        %v5077 = vld [vmem:[%s5062 + $0x70] sm:$0xff]
        %v5078 = vld [vmem:[%s5062 + $0x78] sm:$0xff]
        %v5079 = vld [vmem:[%s5062 + $0x80] sm:$0xff]
        %v5080 = vld [vmem:[%s5062 + $0x88] sm:$0xff]
        %v5081 = vld [vmem:[%s5062 + $0x90] sm:$0xff]
        %v5082 = vld [vmem:[%s5062 + $0x98] sm:$0xff]
        %v5083 = vld [vmem:[%s5062 + $0xa0] sm:$0xff]
        %v5084 = vld [vmem:[%s5062 + $0xa8] sm:$0xff]
        %v5085 = vld [vmem:[%s5062 + $0xb0] sm:$0xff]
        %v5086 = vld [vmem:[%s5062 + $0xb8] sm:$0xff]
        %v5087 = vld [vmem:[%s5062 + $0xc0] sm:$0xff]
        %v5088 = vld [vmem:[%s5062 + $0xc8] sm:$0xff]
        %v5089 = vld [vmem:[%s5062 + $0xd0] sm:$0xff]
        %v5090 = vld [vmem:[%s5062 + $0xd8] sm:$0xff]
        %v5091 = vld [vmem:[%s5062 + $0xe0] sm:$0xff]
        %v5092 = vld [vmem:[%s5062 + $0xe8] sm:$0xff]
        %v5093 = vld [vmem:[%s5062 + $0xf0] sm:$0xff]
        %v5094 = vld [vmem:[%s5062 + $0xf8] sm:$0xff]
        %v5095 = vld [vmem:[%s5062 + $0x100] sm:$0xff]
        %v5096 = vld [vmem:[%s5062 + $0x108] sm:$0xff]
        %v5097 = vld [vmem:[%s5062 + $0x110] sm:$0xff]
        %v5098 = vld [vmem:[%s5062 + $0x118] sm:$0xff]
        %v5099 = vld [vmem:[%s5062 + $0x120] sm:$0xff]
        %v5100 = vld [vmem:[%s5062 + $0x128] sm:$0xff]
        %v5101 = vld [vmem:[%s5062 + $0x130] sm:$0xff]
        %v5102 = vld [vmem:[%s5062 + $0x138] sm:$0xff]
        %v5103 = vld [vmem:[%s5062 + $0x140] sm:$0xff]
        %v5104 = vld [vmem:[%s5062 + $0x148] sm:$0xff]
        %v5105 = vld [vmem:[%s5062 + $0x150] sm:$0xff]
        %v5106 = vld [vmem:[%s5062 + $0x158] sm:$0xff]
        %v5107 = vld [vmem:[%s5062 + $0x160] sm:$0xff]
        %v5108 = vld [vmem:[%s5062 + $0x168] sm:$0xff]
        %v5109 = vld [vmem:[%s5062 + $0x170] sm:$0xff]
        %v5110 = vld [vmem:[%s5062 + $0x178] sm:$0xff]
        %v5111 = vld [vmem:[%s5062 + $0x180] sm:$0xff]
        %v5112 = vld [vmem:[%s5062 + $0x188] sm:$0xff]
        %v5113 = vld [vmem:[%s5062 + $0x190] sm:$0xff]
        %v5114 = vld [vmem:[%s5062 + $0x198] sm:$0xff]
        %v5115 = vld [vmem:[%s5062 + $0x1a0] sm:$0xff]
        %v5116 = vld [vmem:[%s5062 + $0x1a8] sm:$0xff]
        %v5117 = vld [vmem:[%s5062 + $0x1b0] sm:$0xff]
        %v5118 = vld [vmem:[%s5062 + $0x1b8] sm:$0xff]
        %v5119 = vld [vmem:[%s5062 + $0x1c0] sm:$0xff]
        %v5120 = vld [vmem:[%s5062 + $0x1c8] sm:$0xff]
        %v5121 = vld [vmem:[%s5062 + $0x1d0] sm:$0xff]
        %v5122 = vld [vmem:[%s5062 + $0x1d8] sm:$0xff]
        %v5123 = vld [vmem:[%s5062 + $0x1e0] sm:$0xff]
        %v5124 = vld [vmem:[%s5062 + $0x1e8] sm:$0xff]
        %v5125 = vld [vmem:[%s5062 + $0x1f0] sm:$0xff]
        %v5126 = vld [vmem:[%s5062 + $0x1f8] sm:$0xff]
        %5127 = vmatpush.msra.mxu0 %v5093
        %5128 = vmatpush.msra.mxu0 %v5091
        %5129 = vmatpush.msra.mxu0 %v5089
        %5130 = vmatpush.msra.mxu0 %v5087
        %5131 = vmatpush.msra.mxu0 %v5085
        %5132 = vmatpush.msra.mxu0 %v5083
        %5133 = vmatpush.msra.mxu0 %v5081
        %5134 = vmatpush.msra.mxu0 %v5079
        %5135 = vmatpush.msra.mxu0 %v5077
        %5136 = vmatpush.msra.mxu0 %v5075
        %5137 = vmatpush.msra.mxu0 %v5073
        %5138 = vmatpush.msra.mxu0 %v5071
        %5139 = vmatpush.msra.mxu0 %v5069
        %5140 = vmatpush.msra.mxu0 %v5067
        %5141 = vmatpush.msra.mxu0 %v5065
        %5142 = vmatpush.msra.mxu0 %v5063
        %5143 = vmatmul.f32.gmra.mxu0 %v5000
        %v5144 = vpop.f32.mrf.mxu0
        %v5145 = vadd.f32 0.0, %v5144
        %5146 = vmatmul.f32.gmra.mxu0 %v5006
        %v5147 = vpop.f32.mrf.mxu0
        %v5148 = vadd.f32 0.0, %v5147
        %5149 = vmatmul.f32.gmra.mxu0 %v5012
        %v5150 = vpop.f32.mrf.mxu0
        %v5151 = vadd.f32 0.0, %v5150
        %5152 = vmatmul.f32.gmra.mxu0 %v5018
        %v5153 = vpop.f32.mrf.mxu0
        %v5154 = vadd.f32 0.0, %v5153
        %5155 = vmatmul.f32.gmra.mxu0 %v5024
        %v5156 = vpop.f32.mrf.mxu0
        %v5157 = vadd.f32 0.0, %v5156
        %5158 = vmatmul.f32.gmra.mxu0 %v5030
        %v5159 = vpop.f32.mrf.mxu0
        %v5160 = vadd.f32 0.0, %v5159
        %5161 = vmatmul.f32.gmra.mxu0 %v5036
        %v5162 = vpop.f32.mrf.mxu0
        %v5163 = vadd.f32 0.0, %v5162
        %5164 = vmatmul.f32.gmra.mxu0 %v5042
        %v5165 = vpop.f32.mrf.mxu0
        %v5166 = vadd.f32 0.0, %v5165
        %5167 = vdwg.mxu0
        %5168 = vmatpush.msra.mxu0 %v5125
        %5169 = vmatpush.msra.mxu0 %v5123
        %5170 = vmatpush.msra.mxu0 %v5121
        %5171 = vmatpush.msra.mxu0 %v5119
        %5172 = vmatpush.msra.mxu0 %v5117
        %5173 = vmatpush.msra.mxu0 %v5115
        %5174 = vmatpush.msra.mxu0 %v5113
        %5175 = vmatpush.msra.mxu0 %v5111
        %5176 = vmatpush.msra.mxu0 %v5109
        %5177 = vmatpush.msra.mxu0 %v5107
        %5178 = vmatpush.msra.mxu0 %v5105
        %5179 = vmatpush.msra.mxu0 %v5103
        %5180 = vmatpush.msra.mxu0 %v5101
        %5181 = vmatpush.msra.mxu0 %v5099
        %5182 = vmatpush.msra.mxu0 %v5097
        %5183 = vmatpush.msra.mxu0 %v5095
        %5184 = vmatmul.f32.gmra.mxu0 %v5003
        %v5185 = vpop.f32.mrf.mxu0
        %v5186 = vadd.f32 %v5145, %v5185
        %5187 = vmatmul.f32.gmra.mxu0 %v5009
        %v5188 = vpop.f32.mrf.mxu0
        %v5189 = vadd.f32 %v5148, %v5188
        %5190 = vmatmul.f32.gmra.mxu0 %v5015
        %v5191 = vpop.f32.mrf.mxu0
        %v5192 = vadd.f32 %v5151, %v5191
        %5193 = vmatmul.f32.gmra.mxu0 %v5021
        %v5194 = vpop.f32.mrf.mxu0
        %v5195 = vadd.f32 %v5154, %v5194
        %5196 = vmatmul.f32.gmra.mxu0 %v5027
        %v5197 = vpop.f32.mrf.mxu0
        %v5198 = vadd.f32 %v5157, %v5197
        %5199 = vmatmul.f32.gmra.mxu0 %v5033
        %v5200 = vpop.f32.mrf.mxu0
        %v5201 = vadd.f32 %v5160, %v5200
        %5202 = vmatmul.f32.gmra.mxu0 %v5039
        %v5203 = vpop.f32.mrf.mxu0
        %v5204 = vadd.f32 %v5163, %v5203
        %5205 = vmatmul.f32.gmra.mxu0 %v5045
        %v5206 = vpop.f32.mrf.mxu0
        %v5207 = vadd.f32 %v5166, %v5206
        %5208 = vdwg.mxu0
        %5209 = vmatpush.msra.mxu0 %v5094
        %5210 = vmatpush.msra.mxu0 %v5092
        %5211 = vmatpush.msra.mxu0 %v5090
        %5212 = vmatpush.msra.mxu0 %v5088
        %5213 = vmatpush.msra.mxu0 %v5086
        %5214 = vmatpush.msra.mxu0 %v5084
        %5215 = vmatpush.msra.mxu0 %v5082
        %5216 = vmatpush.msra.mxu0 %v5080
        %5217 = vmatpush.msra.mxu0 %v5078
        %5218 = vmatpush.msra.mxu0 %v5076
        %5219 = vmatpush.msra.mxu0 %v5074
        %5220 = vmatpush.msra.mxu0 %v5072
        %5221 = vmatpush.msra.mxu0 %v5070
        %5222 = vmatpush.msra.mxu0 %v5068
        %5223 = vmatpush.msra.mxu0 %v5066
        %5224 = vmatpush.msra.mxu0 %v5064
        %5225 = vmatmul.f32.gmra.mxu0 %v5000
        %v5226 = vpop.f32.mrf.mxu0
        %v5227 = vadd.f32 0.0, %v5226
        %5228 = vmatmul.f32.gmra.mxu0 %v5006
        %v5229 = vpop.f32.mrf.mxu0
        %v5230 = vadd.f32 0.0, %v5229
        %5231 = vmatmul.f32.gmra.mxu0 %v5012
        %v5232 = vpop.f32.mrf.mxu0
        %v5233 = vadd.f32 0.0, %v5232
        %5234 = vmatmul.f32.gmra.mxu0 %v5018
        %v5235 = vpop.f32.mrf.mxu0
        %v5236 = vadd.f32 0.0, %v5235
        %5237 = vmatmul.f32.gmra.mxu0 %v5024
        %v5238 = vpop.f32.mrf.mxu0
        %v5239 = vadd.f32 0.0, %v5238
        %5240 = vmatmul.f32.gmra.mxu0 %v5030
        %v5241 = vpop.f32.mrf.mxu0
        %v5242 = vadd.f32 0.0, %v5241
        %5243 = vmatmul.f32.gmra.mxu0 %v5036
        %v5244 = vpop.f32.mrf.mxu0
        %v5245 = vadd.f32 0.0, %v5244
        %5246 = vmatmul.f32.gmra.mxu0 %v5042
        %v5247 = vpop.f32.mrf.mxu0
        %v5248 = vadd.f32 0.0, %v5247
        %5249 = vdwg.mxu0
        %5250 = vmatpush.msra.mxu0 %v5126
        %5251 = vmatpush.msra.mxu0 %v5124
        %5252 = vmatpush.msra.mxu0 %v5122
        %5253 = vmatpush.msra.mxu0 %v5120
        %5254 = vmatpush.msra.mxu0 %v5118
        %5255 = vmatpush.msra.mxu0 %v5116
        %5256 = vmatpush.msra.mxu0 %v5114
        %5257 = vmatpush.msra.mxu0 %v5112
        %5258 = vmatpush.msra.mxu0 %v5110
        %5259 = vmatpush.msra.mxu0 %v5108
        %5260 = vmatpush.msra.mxu0 %v5106
        %5261 = vmatpush.msra.mxu0 %v5104
        %5262 = vmatpush.msra.mxu0 %v5102
        %5263 = vmatpush.msra.mxu0 %v5100
        %5264 = vmatpush.msra.mxu0 %v5098
        %5265 = vmatpush.msra.mxu0 %v5096
        %5266 = vmatmul.f32.gmra.mxu0 %v5003
        %v5267 = vpop.f32.mrf.mxu0
        %v5268 = vadd.f32 %v5227, %v5267
        %5269 = vmatmul.f32.gmra.mxu0 %v5009
        %v5270 = vpop.f32.mrf.mxu0
        %v5271 = vadd.f32 %v5230, %v5270
        %5272 = vmatmul.f32.gmra.mxu0 %v5015
        %v5273 = vpop.f32.mrf.mxu0
        %v5274 = vadd.f32 %v5233, %v5273
        %5275 = vmatmul.f32.gmra.mxu0 %v5021
        %v5276 = vpop.f32.mrf.mxu0
        %v5277 = vadd.f32 %v5236, %v5276
        %5278 = vmatmul.f32.gmra.mxu0 %v5027
        %v5279 = vpop.f32.mrf.mxu0
        %v5280 = vadd.f32 %v5239, %v5279
        %5281 = vmatmul.f32.gmra.mxu0 %v5033
        %v5282 = vpop.f32.mrf.mxu0
        %v5283 = vadd.f32 %v5242, %v5282
        %5284 = vmatmul.f32.gmra.mxu0 %v5039
        %v5285 = vpop.f32.mrf.mxu0
        %v5286 = vadd.f32 %v5245, %v5285
        %5287 = vmatmul.f32.gmra.mxu0 %v5045
        %v5288 = vpop.f32.mrf.mxu0
        %v5289 = vadd.f32 %v5248, %v5288
        %5290 = vdwg.mxu0
        %v5291 = vadd.f32 %v4918, %v5186
        %v5292 = vadd.f32 %v4919, %v5268
        %v5293 = vadd.f32 %v4920, %v5189
        %v5294 = vadd.f32 %v4921, %v5271
        %v5295 = vadd.f32 %v4922, %v5192
        %v5296 = vadd.f32 %v4923, %v5274
        %v5297 = vadd.f32 %v4924, %v5195
        %v5298 = vadd.f32 %v4925, %v5277
        %v5299 = vadd.f32 %v4926, %v5198
        %v5300 = vadd.f32 %v4927, %v5280
        %v5301 = vadd.f32 %v4928, %v5201
        %v5302 = vadd.f32 %v4929, %v5283
        %v5303 = vadd.f32 %v4930, %v5204
        %v5304 = vadd.f32 %v4931, %v5286
        %v5305 = vadd.f32 %v4932, %v5207
        %v5306 = vadd.f32 %v4933, %v5289
        %v5307 = vld [vmem:[%s419] sm:$0xfc]
        %v5308 = vld [vmem:[%s419 + $0x8] sm:$0xfc]
        %v5309 = vld [vmem:[%s419 + $0x10] sm:$0x3]
        %v5310 = vld [vmem:[%s419 + $0x18] sm:$0x3]
        %v5311 = vld [vmem:[%s419 + $0x20] sm:$0xfc]
        %v5312 = vld [vmem:[%s419 + $0x28] sm:$0xfc]
        %v5313 = vld [vmem:[%s419 + $0x30] sm:$0x3]
        %v5314 = vld [vmem:[%s419 + $0x38] sm:$0x3]
        %v5315 = vld [vmem:[%s419 + $0x40] sm:$0xfc]
        %v5316 = vld [vmem:[%s419 + $0x48] sm:$0xfc]
        %v5317 = vld [vmem:[%s419 + $0x50] sm:$0x3]
        %v5318 = vld [vmem:[%s419 + $0x58] sm:$0x3]
        %v5319 = vld [vmem:[%s419 + $0x60] sm:$0xfc]
        %v5320 = vld [vmem:[%s419 + $0x68] sm:$0xfc]
        %v5321 = vld [vmem:[%s419 + $0x70] sm:$0x3]
        %v5322 = vld [vmem:[%s419 + $0x78] sm:$0x3]
        %v5323 = vld [vmem:[%s419 + $0x80] sm:$0xfc]
        %v5324 = vld [vmem:[%s419 + $0x88] sm:$0xfc]
        %v5325 = vld [vmem:[%s419 + $0x90] sm:$0x3]
        %v5326 = vld [vmem:[%s419 + $0x98] sm:$0x3]
        %v5327 = vld [vmem:[%s419 + $0xa0] sm:$0xfc]
        %v5328 = vld [vmem:[%s419 + $0xa8] sm:$0xfc]
        %v5329 = vld [vmem:[%s419 + $0xb0] sm:$0x3]
        %v5330 = vld [vmem:[%s419 + $0xb8] sm:$0x3]
        %v5331 = vld [vmem:[%s419 + $0xc0] sm:$0xfc]
        %v5332 = vld [vmem:[%s419 + $0xc8] sm:$0xfc]
        %v5333 = vld [vmem:[%s419 + $0xd0] sm:$0x3]
        %v5334 = vld [vmem:[%s419 + $0xd8] sm:$0x3]
        %v5335 = vld [vmem:[%s419 + $0xe0] sm:$0xfc]
        %v5336 = vld [vmem:[%s419 + $0xe8] sm:$0xfc]
        %v5337 = vld [vmem:[%s419 + $0xf0] sm:$0x3]
        %v5338 = vld [vmem:[%s419 + $0xf8] sm:$0x3]
        %v5371 = vrot.slane %v5307, 2
        %v5372 = vrot.slane %v5309, 2
        %v5373 = vsel %vm1236, %v5371, %v5372
        %v5374 = vrot.slane %v5308, 2
        %v5375 = vrot.slane %v5310, 2
        %v5376 = vsel %vm1236, %v5374, %v5375
        %v5377 = vrot.slane %v5311, 2
        %v5378 = vrot.slane %v5313, 2
        %v5379 = vsel %vm1236, %v5377, %v5378
        %v5380 = vrot.slane %v5312, 2
        %v5381 = vrot.slane %v5314, 2
        %v5382 = vsel %vm1236, %v5380, %v5381
        %v5383 = vrot.slane %v5315, 2
        %v5384 = vrot.slane %v5317, 2
        %v5385 = vsel %vm1236, %v5383, %v5384
        %v5386 = vrot.slane %v5316, 2
        %v5387 = vrot.slane %v5318, 2
        %v5388 = vsel %vm1236, %v5386, %v5387
        %v5389 = vrot.slane %v5319, 2
        %v5390 = vrot.slane %v5321, 2
        %v5391 = vsel %vm1236, %v5389, %v5390
        %v5392 = vrot.slane %v5320, 2
        %v5393 = vrot.slane %v5322, 2
        %v5394 = vsel %vm1236, %v5392, %v5393
        %v5395 = vrot.slane %v5323, 2
        %v5396 = vrot.slane %v5325, 2
        %v5397 = vsel %vm1236, %v5395, %v5396
        %v5398 = vrot.slane %v5324, 2
        %v5399 = vrot.slane %v5326, 2
        %v5400 = vsel %vm1236, %v5398, %v5399
        %v5401 = vrot.slane %v5327, 2
        %v5402 = vrot.slane %v5329, 2
        %v5403 = vsel %vm1236, %v5401, %v5402
        %v5404 = vrot.slane %v5328, 2
        %v5405 = vrot.slane %v5330, 2
        %v5406 = vsel %vm1236, %v5404, %v5405
        %v5407 = vrot.slane %v5331, 2
        %v5408 = vrot.slane %v5333, 2
        %v5409 = vsel %vm1236, %v5407, %v5408
        %v5410 = vrot.slane %v5332, 2
        %v5411 = vrot.slane %v5334, 2
        %v5412 = vsel %vm1236, %v5410, %v5411
        %v5413 = vrot.slane %v5335, 2
        %v5414 = vrot.slane %v5337, 2
        %v5415 = vsel %vm1236, %v5413, %v5414
        %v5416 = vrot.slane %v5336, 2
        %v5417 = vrot.slane %v5338, 2
        %v5418 = vsel %vm1236, %v5416, %v5417
        %s5435 = scalar_lea.vmem [#allocation9], 2560
        %v5436 = vld [vmem:[%s5435] sm:$0xff]
        %v5437 = vld [vmem:[%s5435 + $0x8] sm:$0xff]
        %v5438 = vld [vmem:[%s5435 + $0x10] sm:$0xff]
        %v5439 = vld [vmem:[%s5435 + $0x18] sm:$0xff]
        %v5440 = vld [vmem:[%s5435 + $0x20] sm:$0xff]
        %v5441 = vld [vmem:[%s5435 + $0x28] sm:$0xff]
        %v5442 = vld [vmem:[%s5435 + $0x30] sm:$0xff]
        %v5443 = vld [vmem:[%s5435 + $0x38] sm:$0xff]
        %v5444 = vld [vmem:[%s5435 + $0x40] sm:$0xff]
        %v5445 = vld [vmem:[%s5435 + $0x48] sm:$0xff]
        %v5446 = vld [vmem:[%s5435 + $0x50] sm:$0xff]
        %v5447 = vld [vmem:[%s5435 + $0x58] sm:$0xff]
        %v5448 = vld [vmem:[%s5435 + $0x60] sm:$0xff]
        %v5449 = vld [vmem:[%s5435 + $0x68] sm:$0xff]
        %v5450 = vld [vmem:[%s5435 + $0x70] sm:$0xff]
        %v5451 = vld [vmem:[%s5435 + $0x78] sm:$0xff]
        %v5452 = vld [vmem:[%s5435 + $0x80] sm:$0xff]
        %v5453 = vld [vmem:[%s5435 + $0x88] sm:$0xff]
        %v5454 = vld [vmem:[%s5435 + $0x90] sm:$0xff]
        %v5455 = vld [vmem:[%s5435 + $0x98] sm:$0xff]
        %v5456 = vld [vmem:[%s5435 + $0xa0] sm:$0xff]
        %v5457 = vld [vmem:[%s5435 + $0xa8] sm:$0xff]
        %v5458 = vld [vmem:[%s5435 + $0xb0] sm:$0xff]
        %v5459 = vld [vmem:[%s5435 + $0xb8] sm:$0xff]
        %v5460 = vld [vmem:[%s5435 + $0xc0] sm:$0xff]
        %v5461 = vld [vmem:[%s5435 + $0xc8] sm:$0xff]
        %v5462 = vld [vmem:[%s5435 + $0xd0] sm:$0xff]
        %v5463 = vld [vmem:[%s5435 + $0xd8] sm:$0xff]
        %v5464 = vld [vmem:[%s5435 + $0xe0] sm:$0xff]
        %v5465 = vld [vmem:[%s5435 + $0xe8] sm:$0xff]
        %v5466 = vld [vmem:[%s5435 + $0xf0] sm:$0xff]
        %v5467 = vld [vmem:[%s5435 + $0xf8] sm:$0xff]
        %v5468 = vld [vmem:[%s5435 + $0x100] sm:$0xff]
        %v5469 = vld [vmem:[%s5435 + $0x108] sm:$0xff]
        %v5470 = vld [vmem:[%s5435 + $0x110] sm:$0xff]
        %v5471 = vld [vmem:[%s5435 + $0x118] sm:$0xff]
        %v5472 = vld [vmem:[%s5435 + $0x120] sm:$0xff]
        %v5473 = vld [vmem:[%s5435 + $0x128] sm:$0xff]
        %v5474 = vld [vmem:[%s5435 + $0x130] sm:$0xff]
        %v5475 = vld [vmem:[%s5435 + $0x138] sm:$0xff]
        %v5476 = vld [vmem:[%s5435 + $0x140] sm:$0xff]
        %v5477 = vld [vmem:[%s5435 + $0x148] sm:$0xff]
        %v5478 = vld [vmem:[%s5435 + $0x150] sm:$0xff]
        %v5479 = vld [vmem:[%s5435 + $0x158] sm:$0xff]
        %v5480 = vld [vmem:[%s5435 + $0x160] sm:$0xff]
        %v5481 = vld [vmem:[%s5435 + $0x168] sm:$0xff]
        %v5482 = vld [vmem:[%s5435 + $0x170] sm:$0xff]
        %v5483 = vld [vmem:[%s5435 + $0x178] sm:$0xff]
        %v5484 = vld [vmem:[%s5435 + $0x180] sm:$0xff]
        %v5485 = vld [vmem:[%s5435 + $0x188] sm:$0xff]
        %v5486 = vld [vmem:[%s5435 + $0x190] sm:$0xff]
        %v5487 = vld [vmem:[%s5435 + $0x198] sm:$0xff]
        %v5488 = vld [vmem:[%s5435 + $0x1a0] sm:$0xff]
        %v5489 = vld [vmem:[%s5435 + $0x1a8] sm:$0xff]
        %v5490 = vld [vmem:[%s5435 + $0x1b0] sm:$0xff]
        %v5491 = vld [vmem:[%s5435 + $0x1b8] sm:$0xff]
        %v5492 = vld [vmem:[%s5435 + $0x1c0] sm:$0xff]
        %v5493 = vld [vmem:[%s5435 + $0x1c8] sm:$0xff]
        %v5494 = vld [vmem:[%s5435 + $0x1d0] sm:$0xff]
        %v5495 = vld [vmem:[%s5435 + $0x1d8] sm:$0xff]
        %v5496 = vld [vmem:[%s5435 + $0x1e0] sm:$0xff]
        %v5497 = vld [vmem:[%s5435 + $0x1e8] sm:$0xff]
        %v5498 = vld [vmem:[%s5435 + $0x1f0] sm:$0xff]
        %v5499 = vld [vmem:[%s5435 + $0x1f8] sm:$0xff]
        %5500 = vmatpush.msra.mxu0 %v5466
        %5501 = vmatpush.msra.mxu0 %v5464
        %5502 = vmatpush.msra.mxu0 %v5462
        %5503 = vmatpush.msra.mxu0 %v5460
        %5504 = vmatpush.msra.mxu0 %v5458
        %5505 = vmatpush.msra.mxu0 %v5456
        %5506 = vmatpush.msra.mxu0 %v5454
        %5507 = vmatpush.msra.mxu0 %v5452
        %5508 = vmatpush.msra.mxu0 %v5450
        %5509 = vmatpush.msra.mxu0 %v5448
        %5510 = vmatpush.msra.mxu0 %v5446
        %5511 = vmatpush.msra.mxu0 %v5444
        %5512 = vmatpush.msra.mxu0 %v5442
        %5513 = vmatpush.msra.mxu0 %v5440
        %5514 = vmatpush.msra.mxu0 %v5438
        %5515 = vmatpush.msra.mxu0 %v5436
        %5516 = vmatmul.f32.gmra.mxu0 %v5373
        %v5517 = vpop.f32.mrf.mxu0
        %v5518 = vadd.f32 0.0, %v5517
        %5519 = vmatmul.f32.gmra.mxu0 %v5379
        %v5520 = vpop.f32.mrf.mxu0
        %v5521 = vadd.f32 0.0, %v5520
        %5522 = vmatmul.f32.gmra.mxu0 %v5385
        %v5523 = vpop.f32.mrf.mxu0
        %v5524 = vadd.f32 0.0, %v5523
        %5525 = vmatmul.f32.gmra.mxu0 %v5391
        %v5526 = vpop.f32.mrf.mxu0
        %v5527 = vadd.f32 0.0, %v5526
        %5528 = vmatmul.f32.gmra.mxu0 %v5397
        %v5529 = vpop.f32.mrf.mxu0
        %v5530 = vadd.f32 0.0, %v5529
        %5531 = vmatmul.f32.gmra.mxu0 %v5403
        %v5532 = vpop.f32.mrf.mxu0
        %v5533 = vadd.f32 0.0, %v5532
        %5534 = vmatmul.f32.gmra.mxu0 %v5409
        %v5535 = vpop.f32.mrf.mxu0
        %v5536 = vadd.f32 0.0, %v5535
        %5537 = vmatmul.f32.gmra.mxu0 %v5415
        %v5538 = vpop.f32.mrf.mxu0
        %v5539 = vadd.f32 0.0, %v5538
        %5540 = vdwg.mxu0
        %5541 = vmatpush.msra.mxu0 %v5498
        %5542 = vmatpush.msra.mxu0 %v5496
        %5543 = vmatpush.msra.mxu0 %v5494
        %5544 = vmatpush.msra.mxu0 %v5492
        %5545 = vmatpush.msra.mxu0 %v5490
        %5546 = vmatpush.msra.mxu0 %v5488
        %5547 = vmatpush.msra.mxu0 %v5486
        %5548 = vmatpush.msra.mxu0 %v5484
        %5549 = vmatpush.msra.mxu0 %v5482
        %5550 = vmatpush.msra.mxu0 %v5480
        %5551 = vmatpush.msra.mxu0 %v5478
        %5552 = vmatpush.msra.mxu0 %v5476
        %5553 = vmatpush.msra.mxu0 %v5474
        %5554 = vmatpush.msra.mxu0 %v5472
        %5555 = vmatpush.msra.mxu0 %v5470
        %5556 = vmatpush.msra.mxu0 %v5468
        %5557 = vmatmul.f32.gmra.mxu0 %v5376
        %v5558 = vpop.f32.mrf.mxu0
        %v5559 = vadd.f32 %v5518, %v5558
        %5560 = vmatmul.f32.gmra.mxu0 %v5382
        %v5561 = vpop.f32.mrf.mxu0
        %v5562 = vadd.f32 %v5521, %v5561
        %5563 = vmatmul.f32.gmra.mxu0 %v5388
        %v5564 = vpop.f32.mrf.mxu0
        %v5565 = vadd.f32 %v5524, %v5564
        %5566 = vmatmul.f32.gmra.mxu0 %v5394
        %v5567 = vpop.f32.mrf.mxu0
        %v5568 = vadd.f32 %v5527, %v5567
        %5569 = vmatmul.f32.gmra.mxu0 %v5400
        %v5570 = vpop.f32.mrf.mxu0
        %v5571 = vadd.f32 %v5530, %v5570
        %5572 = vmatmul.f32.gmra.mxu0 %v5406
        %v5573 = vpop.f32.mrf.mxu0
        %v5574 = vadd.f32 %v5533, %v5573
        %5575 = vmatmul.f32.gmra.mxu0 %v5412
        %v5576 = vpop.f32.mrf.mxu0
        %v5577 = vadd.f32 %v5536, %v5576
        %5578 = vmatmul.f32.gmra.mxu0 %v5418
        %v5579 = vpop.f32.mrf.mxu0
        %v5580 = vadd.f32 %v5539, %v5579
        %5581 = vdwg.mxu0
        %5582 = vmatpush.msra.mxu0 %v5467
        %5583 = vmatpush.msra.mxu0 %v5465
        %5584 = vmatpush.msra.mxu0 %v5463
        %5585 = vmatpush.msra.mxu0 %v5461
        %5586 = vmatpush.msra.mxu0 %v5459
        %5587 = vmatpush.msra.mxu0 %v5457
        %5588 = vmatpush.msra.mxu0 %v5455
        %5589 = vmatpush.msra.mxu0 %v5453
        %5590 = vmatpush.msra.mxu0 %v5451
        %5591 = vmatpush.msra.mxu0 %v5449
        %5592 = vmatpush.msra.mxu0 %v5447
        %5593 = vmatpush.msra.mxu0 %v5445
        %5594 = vmatpush.msra.mxu0 %v5443
        %5595 = vmatpush.msra.mxu0 %v5441
        %5596 = vmatpush.msra.mxu0 %v5439
        %5597 = vmatpush.msra.mxu0 %v5437
        %5598 = vmatmul.f32.gmra.mxu0 %v5373
        %v5599 = vpop.f32.mrf.mxu0
        %v5600 = vadd.f32 0.0, %v5599
        %5601 = vmatmul.f32.gmra.mxu0 %v5379
        %v5602 = vpop.f32.mrf.mxu0
        %v5603 = vadd.f32 0.0, %v5602
        %5604 = vmatmul.f32.gmra.mxu0 %v5385
        %v5605 = vpop.f32.mrf.mxu0
        %v5606 = vadd.f32 0.0, %v5605
        %5607 = vmatmul.f32.gmra.mxu0 %v5391
        %v5608 = vpop.f32.mrf.mxu0
        %v5609 = vadd.f32 0.0, %v5608
        %5610 = vmatmul.f32.gmra.mxu0 %v5397
        %v5611 = vpop.f32.mrf.mxu0
        %v5612 = vadd.f32 0.0, %v5611
        %5613 = vmatmul.f32.gmra.mxu0 %v5403
        %v5614 = vpop.f32.mrf.mxu0
        %v5615 = vadd.f32 0.0, %v5614
        %5616 = vmatmul.f32.gmra.mxu0 %v5409
        %v5617 = vpop.f32.mrf.mxu0
        %v5618 = vadd.f32 0.0, %v5617
        %5619 = vmatmul.f32.gmra.mxu0 %v5415
        %v5620 = vpop.f32.mrf.mxu0
        %v5621 = vadd.f32 0.0, %v5620
        %5622 = vdwg.mxu0
        %5623 = vmatpush.msra.mxu0 %v5499
        %5624 = vmatpush.msra.mxu0 %v5497
        %5625 = vmatpush.msra.mxu0 %v5495
        %5626 = vmatpush.msra.mxu0 %v5493
        %5627 = vmatpush.msra.mxu0 %v5491
        %5628 = vmatpush.msra.mxu0 %v5489
        %5629 = vmatpush.msra.mxu0 %v5487
        %5630 = vmatpush.msra.mxu0 %v5485
        %5631 = vmatpush.msra.mxu0 %v5483
        %5632 = vmatpush.msra.mxu0 %v5481
        %5633 = vmatpush.msra.mxu0 %v5479
        %5634 = vmatpush.msra.mxu0 %v5477
        %5635 = vmatpush.msra.mxu0 %v5475
        %5636 = vmatpush.msra.mxu0 %v5473
        %5637 = vmatpush.msra.mxu0 %v5471
        %5638 = vmatpush.msra.mxu0 %v5469
        %5639 = vmatmul.f32.gmra.mxu0 %v5376
        %v5640 = vpop.f32.mrf.mxu0
        %v5641 = vadd.f32 %v5600, %v5640
        %5642 = vmatmul.f32.gmra.mxu0 %v5382
        %v5643 = vpop.f32.mrf.mxu0
        %v5644 = vadd.f32 %v5603, %v5643
        %5645 = vmatmul.f32.gmra.mxu0 %v5388
        %v5646 = vpop.f32.mrf.mxu0
        %v5647 = vadd.f32 %v5606, %v5646
        %5648 = vmatmul.f32.gmra.mxu0 %v5394
        %v5649 = vpop.f32.mrf.mxu0
        %v5650 = vadd.f32 %v5609, %v5649
        %5651 = vmatmul.f32.gmra.mxu0 %v5400
        %v5652 = vpop.f32.mrf.mxu0
        %v5653 = vadd.f32 %v5612, %v5652
        %5654 = vmatmul.f32.gmra.mxu0 %v5406
        %v5655 = vpop.f32.mrf.mxu0
        %v5656 = vadd.f32 %v5615, %v5655
        %5657 = vmatmul.f32.gmra.mxu0 %v5412
        %v5658 = vpop.f32.mrf.mxu0
        %v5659 = vadd.f32 %v5618, %v5658
        %5660 = vmatmul.f32.gmra.mxu0 %v5418
        %v5661 = vpop.f32.mrf.mxu0
        %v5662 = vadd.f32 %v5621, %v5661
        %5663 = vdwg.mxu0
        %v5664 = vadd.f32 %v5291, %v5559
        %v5665 = vadd.f32 %v5292, %v5641
        %v5666 = vadd.f32 %v5293, %v5562
        %v5667 = vadd.f32 %v5294, %v5644
        %v5668 = vadd.f32 %v5295, %v5565
        %v5669 = vadd.f32 %v5296, %v5647
        %v5670 = vadd.f32 %v5297, %v5568
        %v5671 = vadd.f32 %v5298, %v5650
        %v5672 = vadd.f32 %v5299, %v5571
        %v5673 = vadd.f32 %v5300, %v5653
        %v5674 = vadd.f32 %v5301, %v5574
        %v5675 = vadd.f32 %v5302, %v5656
        %v5676 = vadd.f32 %v5303, %v5577
        %v5677 = vadd.f32 %v5304, %v5659
        %v5678 = vadd.f32 %v5305, %v5580
        %v5679 = vadd.f32 %v5306, %v5662
        %s5680 = scalar_lea.vmem [#allocation3], 64
        %v5681 = vld [vmem:[%s5680] sm:$0xff]
        %v5682 = vld [vmem:[%s5680 + $0x8] sm:$0xff]
        %v5683 = vld [vmem:[%s5680 + $0x20] sm:$0xff]
        %v5684 = vld [vmem:[%s5680 + $0x28] sm:$0xff]
        %v5685 = vld [vmem:[%s5680 + $0x40] sm:$0xff]
        %v5686 = vld [vmem:[%s5680 + $0x48] sm:$0xff]
        %v5687 = vld [vmem:[%s5680 + $0x60] sm:$0xff]
        %v5688 = vld [vmem:[%s5680 + $0x68] sm:$0xff]
        %v5689 = vld [vmem:[%s5680 + $0x80] sm:$0xff]
        %v5690 = vld [vmem:[%s5680 + $0x88] sm:$0xff]
        %v5691 = vld [vmem:[%s5680 + $0xa0] sm:$0xff]
        %v5692 = vld [vmem:[%s5680 + $0xa8] sm:$0xff]
        %v5693 = vld [vmem:[%s5680 + $0xc0] sm:$0xff]
        %v5694 = vld [vmem:[%s5680 + $0xc8] sm:$0xff]
        %v5695 = vld [vmem:[%s5680 + $0xe0] sm:$0xff]
        %v5696 = vld [vmem:[%s5680 + $0xe8] sm:$0xff]
        %s5697 = scalar_lea.vmem [#allocation9], 3072
        %v5698 = vld [vmem:[%s5697] sm:$0xff]
        %v5699 = vld [vmem:[%s5697 + $0x8] sm:$0xff]
        %v5700 = vld [vmem:[%s5697 + $0x10] sm:$0xff]
        %v5701 = vld [vmem:[%s5697 + $0x18] sm:$0xff]
        %v5702 = vld [vmem:[%s5697 + $0x20] sm:$0xff]
        %v5703 = vld [vmem:[%s5697 + $0x28] sm:$0xff]
        %v5704 = vld [vmem:[%s5697 + $0x30] sm:$0xff]
        %v5705 = vld [vmem:[%s5697 + $0x38] sm:$0xff]
        %v5706 = vld [vmem:[%s5697 + $0x40] sm:$0xff]
        %v5707 = vld [vmem:[%s5697 + $0x48] sm:$0xff]
        %v5708 = vld [vmem:[%s5697 + $0x50] sm:$0xff]
        %v5709 = vld [vmem:[%s5697 + $0x58] sm:$0xff]
        %v5710 = vld [vmem:[%s5697 + $0x60] sm:$0xff]
        %v5711 = vld [vmem:[%s5697 + $0x68] sm:$0xff]
        %v5712 = vld [vmem:[%s5697 + $0x70] sm:$0xff]
        %v5713 = vld [vmem:[%s5697 + $0x78] sm:$0xff]
        %v5714 = vld [vmem:[%s5697 + $0x80] sm:$0xff]
        %v5715 = vld [vmem:[%s5697 + $0x88] sm:$0xff]
        %v5716 = vld [vmem:[%s5697 + $0x90] sm:$0xff]
        %v5717 = vld [vmem:[%s5697 + $0x98] sm:$0xff]
        %v5718 = vld [vmem:[%s5697 + $0xa0] sm:$0xff]
        %v5719 = vld [vmem:[%s5697 + $0xa8] sm:$0xff]
        %v5720 = vld [vmem:[%s5697 + $0xb0] sm:$0xff]
        %v5721 = vld [vmem:[%s5697 + $0xb8] sm:$0xff]
        %v5722 = vld [vmem:[%s5697 + $0xc0] sm:$0xff]
        %v5723 = vld [vmem:[%s5697 + $0xc8] sm:$0xff]
        %v5724 = vld [vmem:[%s5697 + $0xd0] sm:$0xff]
        %v5725 = vld [vmem:[%s5697 + $0xd8] sm:$0xff]
        %v5726 = vld [vmem:[%s5697 + $0xe0] sm:$0xff]
        %v5727 = vld [vmem:[%s5697 + $0xe8] sm:$0xff]
        %v5728 = vld [vmem:[%s5697 + $0xf0] sm:$0xff]
        %v5729 = vld [vmem:[%s5697 + $0xf8] sm:$0xff]
        %v5730 = vld [vmem:[%s5697 + $0x100] sm:$0xff]
        %v5731 = vld [vmem:[%s5697 + $0x108] sm:$0xff]
        %v5732 = vld [vmem:[%s5697 + $0x110] sm:$0xff]
        %v5733 = vld [vmem:[%s5697 + $0x118] sm:$0xff]
        %v5734 = vld [vmem:[%s5697 + $0x120] sm:$0xff]
        %v5735 = vld [vmem:[%s5697 + $0x128] sm:$0xff]
        %v5736 = vld [vmem:[%s5697 + $0x130] sm:$0xff]
        %v5737 = vld [vmem:[%s5697 + $0x138] sm:$0xff]
        %v5738 = vld [vmem:[%s5697 + $0x140] sm:$0xff]
        %v5739 = vld [vmem:[%s5697 + $0x148] sm:$0xff]
        %v5740 = vld [vmem:[%s5697 + $0x150] sm:$0xff]
        %v5741 = vld [vmem:[%s5697 + $0x158] sm:$0xff]
        %v5742 = vld [vmem:[%s5697 + $0x160] sm:$0xff]
        %v5743 = vld [vmem:[%s5697 + $0x168] sm:$0xff]
        %v5744 = vld [vmem:[%s5697 + $0x170] sm:$0xff]
        %v5745 = vld [vmem:[%s5697 + $0x178] sm:$0xff]
        %v5746 = vld [vmem:[%s5697 + $0x180] sm:$0xff]
        %v5747 = vld [vmem:[%s5697 + $0x188] sm:$0xff]
        %v5748 = vld [vmem:[%s5697 + $0x190] sm:$0xff]
        %v5749 = vld [vmem:[%s5697 + $0x198] sm:$0xff]
        %v5750 = vld [vmem:[%s5697 + $0x1a0] sm:$0xff]
        %v5751 = vld [vmem:[%s5697 + $0x1a8] sm:$0xff]
        %v5752 = vld [vmem:[%s5697 + $0x1b0] sm:$0xff]
        %v5753 = vld [vmem:[%s5697 + $0x1b8] sm:$0xff]
        %v5754 = vld [vmem:[%s5697 + $0x1c0] sm:$0xff]
        %v5755 = vld [vmem:[%s5697 + $0x1c8] sm:$0xff]
        %v5756 = vld [vmem:[%s5697 + $0x1d0] sm:$0xff]
        %v5757 = vld [vmem:[%s5697 + $0x1d8] sm:$0xff]
        %v5758 = vld [vmem:[%s5697 + $0x1e0] sm:$0xff]
        %v5759 = vld [vmem:[%s5697 + $0x1e8] sm:$0xff]
        %v5760 = vld [vmem:[%s5697 + $0x1f0] sm:$0xff]
        %v5761 = vld [vmem:[%s5697 + $0x1f8] sm:$0xff]
        %5762 = vmatpush.msra.mxu0 %v5728
        %5763 = vmatpush.msra.mxu0 %v5726
        %5764 = vmatpush.msra.mxu0 %v5724
        %5765 = vmatpush.msra.mxu0 %v5722
        %5766 = vmatpush.msra.mxu0 %v5720
        %5767 = vmatpush.msra.mxu0 %v5718
        %5768 = vmatpush.msra.mxu0 %v5716
        %5769 = vmatpush.msra.mxu0 %v5714
        %5770 = vmatpush.msra.mxu0 %v5712
        %5771 = vmatpush.msra.mxu0 %v5710
        %5772 = vmatpush.msra.mxu0 %v5708
        %5773 = vmatpush.msra.mxu0 %v5706
        %5774 = vmatpush.msra.mxu0 %v5704
        %5775 = vmatpush.msra.mxu0 %v5702
        %5776 = vmatpush.msra.mxu0 %v5700
        %5777 = vmatpush.msra.mxu0 %v5698
        %5778 = vmatmul.f32.gmra.mxu0 %v5681
        %v5779 = vpop.f32.mrf.mxu0
        %v5780 = vadd.f32 0.0, %v5779
        %5781 = vmatmul.f32.gmra.mxu0 %v5683
        %v5782 = vpop.f32.mrf.mxu0
        %v5783 = vadd.f32 0.0, %v5782
        %5784 = vmatmul.f32.gmra.mxu0 %v5685
        %v5785 = vpop.f32.mrf.mxu0
        %v5786 = vadd.f32 0.0, %v5785
        %5787 = vmatmul.f32.gmra.mxu0 %v5687
        %v5788 = vpop.f32.mrf.mxu0
        %v5789 = vadd.f32 0.0, %v5788
        %5790 = vmatmul.f32.gmra.mxu0 %v5689
        %v5791 = vpop.f32.mrf.mxu0
        %v5792 = vadd.f32 0.0, %v5791
        %5793 = vmatmul.f32.gmra.mxu0 %v5691
        %v5794 = vpop.f32.mrf.mxu0
        %v5795 = vadd.f32 0.0, %v5794
        %5796 = vmatmul.f32.gmra.mxu0 %v5693
        %v5797 = vpop.f32.mrf.mxu0
        %v5798 = vadd.f32 0.0, %v5797
        %5799 = vmatmul.f32.gmra.mxu0 %v5695
        %v5800 = vpop.f32.mrf.mxu0
        %v5801 = vadd.f32 0.0, %v5800
        %5802 = vdwg.mxu0
        %5803 = vmatpush.msra.mxu0 %v5760
        %5804 = vmatpush.msra.mxu0 %v5758
        %5805 = vmatpush.msra.mxu0 %v5756
        %5806 = vmatpush.msra.mxu0 %v5754
        %5807 = vmatpush.msra.mxu0 %v5752
        %5808 = vmatpush.msra.mxu0 %v5750
        %5809 = vmatpush.msra.mxu0 %v5748
        %5810 = vmatpush.msra.mxu0 %v5746
        %5811 = vmatpush.msra.mxu0 %v5744
        %5812 = vmatpush.msra.mxu0 %v5742
        %5813 = vmatpush.msra.mxu0 %v5740
        %5814 = vmatpush.msra.mxu0 %v5738
        %5815 = vmatpush.msra.mxu0 %v5736
        %5816 = vmatpush.msra.mxu0 %v5734
        %5817 = vmatpush.msra.mxu0 %v5732
        %5818 = vmatpush.msra.mxu0 %v5730
        %5819 = vmatmul.f32.gmra.mxu0 %v5682
        %v5820 = vpop.f32.mrf.mxu0
        %v5821 = vadd.f32 %v5780, %v5820
        %5822 = vmatmul.f32.gmra.mxu0 %v5684
        %v5823 = vpop.f32.mrf.mxu0
        %v5824 = vadd.f32 %v5783, %v5823
        %5825 = vmatmul.f32.gmra.mxu0 %v5686
        %v5826 = vpop.f32.mrf.mxu0
        %v5827 = vadd.f32 %v5786, %v5826
        %5828 = vmatmul.f32.gmra.mxu0 %v5688
        %v5829 = vpop.f32.mrf.mxu0
        %v5830 = vadd.f32 %v5789, %v5829
        %5831 = vmatmul.f32.gmra.mxu0 %v5690
        %v5832 = vpop.f32.mrf.mxu0
        %v5833 = vadd.f32 %v5792, %v5832
        %5834 = vmatmul.f32.gmra.mxu0 %v5692
        %v5835 = vpop.f32.mrf.mxu0
        %v5836 = vadd.f32 %v5795, %v5835
        %5837 = vmatmul.f32.gmra.mxu0 %v5694
        %v5838 = vpop.f32.mrf.mxu0
        %v5839 = vadd.f32 %v5798, %v5838
        %5840 = vmatmul.f32.gmra.mxu0 %v5696
        %v5841 = vpop.f32.mrf.mxu0
        %v5842 = vadd.f32 %v5801, %v5841
        %5843 = vdwg.mxu0
        %5844 = vmatpush.msra.mxu0 %v5729
        %5845 = vmatpush.msra.mxu0 %v5727
        %5846 = vmatpush.msra.mxu0 %v5725
        %5847 = vmatpush.msra.mxu0 %v5723
        %5848 = vmatpush.msra.mxu0 %v5721
        %5849 = vmatpush.msra.mxu0 %v5719
        %5850 = vmatpush.msra.mxu0 %v5717
        %5851 = vmatpush.msra.mxu0 %v5715
        %5852 = vmatpush.msra.mxu0 %v5713
        %5853 = vmatpush.msra.mxu0 %v5711
        %5854 = vmatpush.msra.mxu0 %v5709
        %5855 = vmatpush.msra.mxu0 %v5707
        %5856 = vmatpush.msra.mxu0 %v5705
        %5857 = vmatpush.msra.mxu0 %v5703
        %5858 = vmatpush.msra.mxu0 %v5701
        %5859 = vmatpush.msra.mxu0 %v5699
        %5860 = vmatmul.f32.gmra.mxu0 %v5681
        %v5861 = vpop.f32.mrf.mxu0
        %v5862 = vadd.f32 0.0, %v5861
        %5863 = vmatmul.f32.gmra.mxu0 %v5683
        %v5864 = vpop.f32.mrf.mxu0
        %v5865 = vadd.f32 0.0, %v5864
        %5866 = vmatmul.f32.gmra.mxu0 %v5685
        %v5867 = vpop.f32.mrf.mxu0
        %v5868 = vadd.f32 0.0, %v5867
        %5869 = vmatmul.f32.gmra.mxu0 %v5687
        %v5870 = vpop.f32.mrf.mxu0
        %v5871 = vadd.f32 0.0, %v5870
        %5872 = vmatmul.f32.gmra.mxu0 %v5689
        %v5873 = vpop.f32.mrf.mxu0
        %v5874 = vadd.f32 0.0, %v5873
        %5875 = vmatmul.f32.gmra.mxu0 %v5691
        %v5876 = vpop.f32.mrf.mxu0
        %v5877 = vadd.f32 0.0, %v5876
        %5878 = vmatmul.f32.gmra.mxu0 %v5693
        %v5879 = vpop.f32.mrf.mxu0
        %v5880 = vadd.f32 0.0, %v5879
        %5881 = vmatmul.f32.gmra.mxu0 %v5695
        %v5882 = vpop.f32.mrf.mxu0
        %v5883 = vadd.f32 0.0, %v5882
        %5884 = vdwg.mxu0
        %5885 = vmatpush.msra.mxu0 %v5761
        %5886 = vmatpush.msra.mxu0 %v5759
        %5887 = vmatpush.msra.mxu0 %v5757
        %5888 = vmatpush.msra.mxu0 %v5755
        %5889 = vmatpush.msra.mxu0 %v5753
        %5890 = vmatpush.msra.mxu0 %v5751
        %5891 = vmatpush.msra.mxu0 %v5749
        %5892 = vmatpush.msra.mxu0 %v5747
        %5893 = vmatpush.msra.mxu0 %v5745
        %5894 = vmatpush.msra.mxu0 %v5743
        %5895 = vmatpush.msra.mxu0 %v5741
        %5896 = vmatpush.msra.mxu0 %v5739
        %5897 = vmatpush.msra.mxu0 %v5737
        %5898 = vmatpush.msra.mxu0 %v5735
        %5899 = vmatpush.msra.mxu0 %v5733
        %5900 = vmatpush.msra.mxu0 %v5731
        %5901 = vmatmul.f32.gmra.mxu0 %v5682
        %v5902 = vpop.f32.mrf.mxu0
        %v5903 = vadd.f32 %v5862, %v5902
        %5904 = vmatmul.f32.gmra.mxu0 %v5684
        %v5905 = vpop.f32.mrf.mxu0
        %v5906 = vadd.f32 %v5865, %v5905
        %5907 = vmatmul.f32.gmra.mxu0 %v5686
        %v5908 = vpop.f32.mrf.mxu0
        %v5909 = vadd.f32 %v5868, %v5908
        %5910 = vmatmul.f32.gmra.mxu0 %v5688
        %v5911 = vpop.f32.mrf.mxu0
        %v5912 = vadd.f32 %v5871, %v5911
        %5913 = vmatmul.f32.gmra.mxu0 %v5690
        %v5914 = vpop.f32.mrf.mxu0
        %v5915 = vadd.f32 %v5874, %v5914
        %5916 = vmatmul.f32.gmra.mxu0 %v5692
        %v5917 = vpop.f32.mrf.mxu0
        %v5918 = vadd.f32 %v5877, %v5917
        %5919 = vmatmul.f32.gmra.mxu0 %v5694
        %v5920 = vpop.f32.mrf.mxu0
        %v5921 = vadd.f32 %v5880, %v5920
        %5922 = vmatmul.f32.gmra.mxu0 %v5696
        %v5923 = vpop.f32.mrf.mxu0
        %v5924 = vadd.f32 %v5883, %v5923
        %5925 = vdwg.mxu0
        %v5926 = vadd.f32 %v5664, %v5821
        %v5927 = vadd.f32 %v5665, %v5903
        %v5928 = vadd.f32 %v5666, %v5824
        %v5929 = vadd.f32 %v5667, %v5906
        %v5930 = vadd.f32 %v5668, %v5827
        %v5931 = vadd.f32 %v5669, %v5909
        %v5932 = vadd.f32 %v5670, %v5830
        %v5933 = vadd.f32 %v5671, %v5912
        %v5934 = vadd.f32 %v5672, %v5833
        %v5935 = vadd.f32 %v5673, %v5915
        %v5936 = vadd.f32 %v5674, %v5836
        %v5937 = vadd.f32 %v5675, %v5918
        %v5938 = vadd.f32 %v5676, %v5839
        %v5939 = vadd.f32 %v5677, %v5921
        %v5940 = vadd.f32 %v5678, %v5842
        %v5941 = vadd.f32 %v5679, %v5924
        %v5942 = vld [vmem:[%s5680] sm:$0xfe]
        %v5943 = vld [vmem:[%s5680 + $0x8] sm:$0xfe]
        %v5944 = vld [vmem:[%s5680 + $0x10] sm:$0x1]
        %v5945 = vld [vmem:[%s5680 + $0x18] sm:$0x1]
        %v5946 = vld [vmem:[%s5680 + $0x20] sm:$0xfe]
        %v5947 = vld [vmem:[%s5680 + $0x28] sm:$0xfe]
        %v5948 = vld [vmem:[%s5680 + $0x30] sm:$0x1]
        %v5949 = vld [vmem:[%s5680 + $0x38] sm:$0x1]
        %v5950 = vld [vmem:[%s5680 + $0x40] sm:$0xfe]
        %v5951 = vld [vmem:[%s5680 + $0x48] sm:$0xfe]
        %v5952 = vld [vmem:[%s5680 + $0x50] sm:$0x1]
        %v5953 = vld [vmem:[%s5680 + $0x58] sm:$0x1]
        %v5954 = vld [vmem:[%s5680 + $0x60] sm:$0xfe]
        %v5955 = vld [vmem:[%s5680 + $0x68] sm:$0xfe]
        %v5956 = vld [vmem:[%s5680 + $0x70] sm:$0x1]
        %v5957 = vld [vmem:[%s5680 + $0x78] sm:$0x1]
        %v5958 = vld [vmem:[%s5680 + $0x80] sm:$0xfe]
        %v5959 = vld [vmem:[%s5680 + $0x88] sm:$0xfe]
        %v5960 = vld [vmem:[%s5680 + $0x90] sm:$0x1]
        %v5961 = vld [vmem:[%s5680 + $0x98] sm:$0x1]
        %v5962 = vld [vmem:[%s5680 + $0xa0] sm:$0xfe]
        %v5963 = vld [vmem:[%s5680 + $0xa8] sm:$0xfe]
        %v5964 = vld [vmem:[%s5680 + $0xb0] sm:$0x1]
        %v5965 = vld [vmem:[%s5680 + $0xb8] sm:$0x1]
        %v5966 = vld [vmem:[%s5680 + $0xc0] sm:$0xfe]
        %v5967 = vld [vmem:[%s5680 + $0xc8] sm:$0xfe]
        %v5968 = vld [vmem:[%s5680 + $0xd0] sm:$0x1]
        %v5969 = vld [vmem:[%s5680 + $0xd8] sm:$0x1]
        %v5970 = vld [vmem:[%s5680 + $0xe0] sm:$0xfe]
        %v5971 = vld [vmem:[%s5680 + $0xe8] sm:$0xfe]
        %v5972 = vld [vmem:[%s5680 + $0xf0] sm:$0x1]
        %v5973 = vld [vmem:[%s5680 + $0xf8] sm:$0x1]
        %v6006 = vrot.slane %v5942, 1
        %v6007 = vrot.slane %v5944, 1
        %v6008 = vsel %vm714, %v6006, %v6007
        %v6009 = vrot.slane %v5943, 1
        %v6010 = vrot.slane %v5945, 1
        %v6011 = vsel %vm714, %v6009, %v6010
        %v6012 = vrot.slane %v5946, 1
        %v6013 = vrot.slane %v5948, 1
        %v6014 = vsel %vm714, %v6012, %v6013
        %v6015 = vrot.slane %v5947, 1
        %v6016 = vrot.slane %v5949, 1
        %v6017 = vsel %vm714, %v6015, %v6016
        %v6018 = vrot.slane %v5950, 1
        %v6019 = vrot.slane %v5952, 1
        %v6020 = vsel %vm714, %v6018, %v6019
        %v6021 = vrot.slane %v5951, 1
        %v6022 = vrot.slane %v5953, 1
        %v6023 = vsel %vm714, %v6021, %v6022
        %v6024 = vrot.slane %v5954, 1
        %v6025 = vrot.slane %v5956, 1
        %v6026 = vsel %vm714, %v6024, %v6025
        %v6027 = vrot.slane %v5955, 1
        %v6028 = vrot.slane %v5957, 1
        %v6029 = vsel %vm714, %v6027, %v6028
        %v6030 = vrot.slane %v5958, 1
        %v6031 = vrot.slane %v5960, 1
        %v6032 = vsel %vm714, %v6030, %v6031
        %v6033 = vrot.slane %v5959, 1
        %v6034 = vrot.slane %v5961, 1
        %v6035 = vsel %vm714, %v6033, %v6034
        %v6036 = vrot.slane %v5962, 1
        %v6037 = vrot.slane %v5964, 1
        %v6038 = vsel %vm714, %v6036, %v6037
        %v6039 = vrot.slane %v5963, 1
        %v6040 = vrot.slane %v5965, 1
        %v6041 = vsel %vm714, %v6039, %v6040
        %v6042 = vrot.slane %v5966, 1
        %v6043 = vrot.slane %v5968, 1
        %v6044 = vsel %vm714, %v6042, %v6043
        %v6045 = vrot.slane %v5967, 1
        %v6046 = vrot.slane %v5969, 1
        %v6047 = vsel %vm714, %v6045, %v6046
        %v6048 = vrot.slane %v5970, 1
        %v6049 = vrot.slane %v5972, 1
        %v6050 = vsel %vm714, %v6048, %v6049
        %v6051 = vrot.slane %v5971, 1
        %v6052 = vrot.slane %v5973, 1
        %v6053 = vsel %vm714, %v6051, %v6052
        %s6070 = scalar_lea.vmem [#allocation9], 3584
        %v6071 = vld [vmem:[%s6070] sm:$0xff]
        %v6072 = vld [vmem:[%s6070 + $0x8] sm:$0xff]
        %v6073 = vld [vmem:[%s6070 + $0x10] sm:$0xff]
        %v6074 = vld [vmem:[%s6070 + $0x18] sm:$0xff]
        %v6075 = vld [vmem:[%s6070 + $0x20] sm:$0xff]
        %v6076 = vld [vmem:[%s6070 + $0x28] sm:$0xff]
        %v6077 = vld [vmem:[%s6070 + $0x30] sm:$0xff]
        %v6078 = vld [vmem:[%s6070 + $0x38] sm:$0xff]
        %v6079 = vld [vmem:[%s6070 + $0x40] sm:$0xff]
        %v6080 = vld [vmem:[%s6070 + $0x48] sm:$0xff]
        %v6081 = vld [vmem:[%s6070 + $0x50] sm:$0xff]
        %v6082 = vld [vmem:[%s6070 + $0x58] sm:$0xff]
        %v6083 = vld [vmem:[%s6070 + $0x60] sm:$0xff]
        %v6084 = vld [vmem:[%s6070 + $0x68] sm:$0xff]
        %v6085 = vld [vmem:[%s6070 + $0x70] sm:$0xff]
        %v6086 = vld [vmem:[%s6070 + $0x78] sm:$0xff]
        %v6087 = vld [vmem:[%s6070 + $0x80] sm:$0xff]
        %v6088 = vld [vmem:[%s6070 + $0x88] sm:$0xff]
        %v6089 = vld [vmem:[%s6070 + $0x90] sm:$0xff]
        %v6090 = vld [vmem:[%s6070 + $0x98] sm:$0xff]
        %v6091 = vld [vmem:[%s6070 + $0xa0] sm:$0xff]
        %v6092 = vld [vmem:[%s6070 + $0xa8] sm:$0xff]
        %v6093 = vld [vmem:[%s6070 + $0xb0] sm:$0xff]
        %v6094 = vld [vmem:[%s6070 + $0xb8] sm:$0xff]
        %v6095 = vld [vmem:[%s6070 + $0xc0] sm:$0xff]
        %v6096 = vld [vmem:[%s6070 + $0xc8] sm:$0xff]
        %v6097 = vld [vmem:[%s6070 + $0xd0] sm:$0xff]
        %v6098 = vld [vmem:[%s6070 + $0xd8] sm:$0xff]
        %v6099 = vld [vmem:[%s6070 + $0xe0] sm:$0xff]
        %v6100 = vld [vmem:[%s6070 + $0xe8] sm:$0xff]
        %v6101 = vld [vmem:[%s6070 + $0xf0] sm:$0xff]
        %v6102 = vld [vmem:[%s6070 + $0xf8] sm:$0xff]
        %v6103 = vld [vmem:[%s6070 + $0x100] sm:$0xff]
        %v6104 = vld [vmem:[%s6070 + $0x108] sm:$0xff]
        %v6105 = vld [vmem:[%s6070 + $0x110] sm:$0xff]
        %v6106 = vld [vmem:[%s6070 + $0x118] sm:$0xff]
        %v6107 = vld [vmem:[%s6070 + $0x120] sm:$0xff]
        %v6108 = vld [vmem:[%s6070 + $0x128] sm:$0xff]
        %v6109 = vld [vmem:[%s6070 + $0x130] sm:$0xff]
        %v6110 = vld [vmem:[%s6070 + $0x138] sm:$0xff]
        %v6111 = vld [vmem:[%s6070 + $0x140] sm:$0xff]
        %v6112 = vld [vmem:[%s6070 + $0x148] sm:$0xff]
        %v6113 = vld [vmem:[%s6070 + $0x150] sm:$0xff]
        %v6114 = vld [vmem:[%s6070 + $0x158] sm:$0xff]
        %v6115 = vld [vmem:[%s6070 + $0x160] sm:$0xff]
        %v6116 = vld [vmem:[%s6070 + $0x168] sm:$0xff]
        %v6117 = vld [vmem:[%s6070 + $0x170] sm:$0xff]
        %v6118 = vld [vmem:[%s6070 + $0x178] sm:$0xff]
        %v6119 = vld [vmem:[%s6070 + $0x180] sm:$0xff]
        %v6120 = vld [vmem:[%s6070 + $0x188] sm:$0xff]
        %v6121 = vld [vmem:[%s6070 + $0x190] sm:$0xff]
        %v6122 = vld [vmem:[%s6070 + $0x198] sm:$0xff]
        %v6123 = vld [vmem:[%s6070 + $0x1a0] sm:$0xff]
        %v6124 = vld [vmem:[%s6070 + $0x1a8] sm:$0xff]
        %v6125 = vld [vmem:[%s6070 + $0x1b0] sm:$0xff]
        %v6126 = vld [vmem:[%s6070 + $0x1b8] sm:$0xff]
        %v6127 = vld [vmem:[%s6070 + $0x1c0] sm:$0xff]
        %v6128 = vld [vmem:[%s6070 + $0x1c8] sm:$0xff]
        %v6129 = vld [vmem:[%s6070 + $0x1d0] sm:$0xff]
        %v6130 = vld [vmem:[%s6070 + $0x1d8] sm:$0xff]
        %v6131 = vld [vmem:[%s6070 + $0x1e0] sm:$0xff]
        %v6132 = vld [vmem:[%s6070 + $0x1e8] sm:$0xff]
        %v6133 = vld [vmem:[%s6070 + $0x1f0] sm:$0xff]
        %v6134 = vld [vmem:[%s6070 + $0x1f8] sm:$0xff]
        %6135 = vmatpush.msra.mxu0 %v6101
        %6136 = vmatpush.msra.mxu0 %v6099
        %6137 = vmatpush.msra.mxu0 %v6097
        %6138 = vmatpush.msra.mxu0 %v6095
        %6139 = vmatpush.msra.mxu0 %v6093
        %6140 = vmatpush.msra.mxu0 %v6091
        %6141 = vmatpush.msra.mxu0 %v6089
        %6142 = vmatpush.msra.mxu0 %v6087
        %6143 = vmatpush.msra.mxu0 %v6085
        %6144 = vmatpush.msra.mxu0 %v6083
        %6145 = vmatpush.msra.mxu0 %v6081
        %6146 = vmatpush.msra.mxu0 %v6079
        %6147 = vmatpush.msra.mxu0 %v6077
        %6148 = vmatpush.msra.mxu0 %v6075
        %6149 = vmatpush.msra.mxu0 %v6073
        %6150 = vmatpush.msra.mxu0 %v6071
        %6151 = vmatmul.f32.gmra.mxu0 %v6008
        %v6152 = vpop.f32.mrf.mxu0
        %v6153 = vadd.f32 0.0, %v6152
        %6154 = vmatmul.f32.gmra.mxu0 %v6014
        %v6155 = vpop.f32.mrf.mxu0
        %v6156 = vadd.f32 0.0, %v6155
        %6157 = vmatmul.f32.gmra.mxu0 %v6020
        %v6158 = vpop.f32.mrf.mxu0
        %v6159 = vadd.f32 0.0, %v6158
        %6160 = vmatmul.f32.gmra.mxu0 %v6026
        %v6161 = vpop.f32.mrf.mxu0
        %v6162 = vadd.f32 0.0, %v6161
        %6163 = vmatmul.f32.gmra.mxu0 %v6032
        %v6164 = vpop.f32.mrf.mxu0
        %v6165 = vadd.f32 0.0, %v6164
        %6166 = vmatmul.f32.gmra.mxu0 %v6038
        %v6167 = vpop.f32.mrf.mxu0
        %v6168 = vadd.f32 0.0, %v6167
        %6169 = vmatmul.f32.gmra.mxu0 %v6044
        %v6170 = vpop.f32.mrf.mxu0
        %v6171 = vadd.f32 0.0, %v6170
        %6172 = vmatmul.f32.gmra.mxu0 %v6050
        %v6173 = vpop.f32.mrf.mxu0
        %v6174 = vadd.f32 0.0, %v6173
        %6175 = vdwg.mxu0
        %6176 = vmatpush.msra.mxu0 %v6133
        %6177 = vmatpush.msra.mxu0 %v6131
        %6178 = vmatpush.msra.mxu0 %v6129
        %6179 = vmatpush.msra.mxu0 %v6127
        %6180 = vmatpush.msra.mxu0 %v6125
        %6181 = vmatpush.msra.mxu0 %v6123
        %6182 = vmatpush.msra.mxu0 %v6121
        %6183 = vmatpush.msra.mxu0 %v6119
        %6184 = vmatpush.msra.mxu0 %v6117
        %6185 = vmatpush.msra.mxu0 %v6115
        %6186 = vmatpush.msra.mxu0 %v6113
        %6187 = vmatpush.msra.mxu0 %v6111
        %6188 = vmatpush.msra.mxu0 %v6109
        %6189 = vmatpush.msra.mxu0 %v6107
        %6190 = vmatpush.msra.mxu0 %v6105
        %6191 = vmatpush.msra.mxu0 %v6103
        %6192 = vmatmul.f32.gmra.mxu0 %v6011
        %v6193 = vpop.f32.mrf.mxu0
        %v6194 = vadd.f32 %v6153, %v6193
        %6195 = vmatmul.f32.gmra.mxu0 %v6017
        %v6196 = vpop.f32.mrf.mxu0
        %v6197 = vadd.f32 %v6156, %v6196
        %6198 = vmatmul.f32.gmra.mxu0 %v6023
        %v6199 = vpop.f32.mrf.mxu0
        %v6200 = vadd.f32 %v6159, %v6199
        %6201 = vmatmul.f32.gmra.mxu0 %v6029
        %v6202 = vpop.f32.mrf.mxu0
        %v6203 = vadd.f32 %v6162, %v6202
        %6204 = vmatmul.f32.gmra.mxu0 %v6035
        %v6205 = vpop.f32.mrf.mxu0
        %v6206 = vadd.f32 %v6165, %v6205
        %6207 = vmatmul.f32.gmra.mxu0 %v6041
        %v6208 = vpop.f32.mrf.mxu0
        %v6209 = vadd.f32 %v6168, %v6208
        %6210 = vmatmul.f32.gmra.mxu0 %v6047
        %v6211 = vpop.f32.mrf.mxu0
        %v6212 = vadd.f32 %v6171, %v6211
        %6213 = vmatmul.f32.gmra.mxu0 %v6053
        %v6214 = vpop.f32.mrf.mxu0
        %v6215 = vadd.f32 %v6174, %v6214
        %6216 = vdwg.mxu0
        %6217 = vmatpush.msra.mxu0 %v6102
        %6218 = vmatpush.msra.mxu0 %v6100
        %6219 = vmatpush.msra.mxu0 %v6098
        %6220 = vmatpush.msra.mxu0 %v6096
        %6221 = vmatpush.msra.mxu0 %v6094
        %6222 = vmatpush.msra.mxu0 %v6092
        %6223 = vmatpush.msra.mxu0 %v6090
        %6224 = vmatpush.msra.mxu0 %v6088
        %6225 = vmatpush.msra.mxu0 %v6086
        %6226 = vmatpush.msra.mxu0 %v6084
        %6227 = vmatpush.msra.mxu0 %v6082
        %6228 = vmatpush.msra.mxu0 %v6080
        %6229 = vmatpush.msra.mxu0 %v6078
        %6230 = vmatpush.msra.mxu0 %v6076
        %6231 = vmatpush.msra.mxu0 %v6074
        %6232 = vmatpush.msra.mxu0 %v6072
        %6233 = vmatmul.f32.gmra.mxu0 %v6008
        %v6234 = vpop.f32.mrf.mxu0
        %v6235 = vadd.f32 0.0, %v6234
        %6236 = vmatmul.f32.gmra.mxu0 %v6014
        %v6237 = vpop.f32.mrf.mxu0
        %v6238 = vadd.f32 0.0, %v6237
        %6239 = vmatmul.f32.gmra.mxu0 %v6020
        %v6240 = vpop.f32.mrf.mxu0
        %v6241 = vadd.f32 0.0, %v6240
        %6242 = vmatmul.f32.gmra.mxu0 %v6026
        %v6243 = vpop.f32.mrf.mxu0
        %v6244 = vadd.f32 0.0, %v6243
        %6245 = vmatmul.f32.gmra.mxu0 %v6032
        %v6246 = vpop.f32.mrf.mxu0
        %v6247 = vadd.f32 0.0, %v6246
        %6248 = vmatmul.f32.gmra.mxu0 %v6038
        %v6249 = vpop.f32.mrf.mxu0
        %v6250 = vadd.f32 0.0, %v6249
        %6251 = vmatmul.f32.gmra.mxu0 %v6044
        %v6252 = vpop.f32.mrf.mxu0
        %v6253 = vadd.f32 0.0, %v6252
        %6254 = vmatmul.f32.gmra.mxu0 %v6050
        %v6255 = vpop.f32.mrf.mxu0
        %v6256 = vadd.f32 0.0, %v6255
        %6257 = vdwg.mxu0
        %6258 = vmatpush.msra.mxu0 %v6134
        %6259 = vmatpush.msra.mxu0 %v6132
        %6260 = vmatpush.msra.mxu0 %v6130
        %6261 = vmatpush.msra.mxu0 %v6128
        %6262 = vmatpush.msra.mxu0 %v6126
        %6263 = vmatpush.msra.mxu0 %v6124
        %6264 = vmatpush.msra.mxu0 %v6122
        %6265 = vmatpush.msra.mxu0 %v6120
        %6266 = vmatpush.msra.mxu0 %v6118
        %6267 = vmatpush.msra.mxu0 %v6116
        %6268 = vmatpush.msra.mxu0 %v6114
        %6269 = vmatpush.msra.mxu0 %v6112
        %6270 = vmatpush.msra.mxu0 %v6110
        %6271 = vmatpush.msra.mxu0 %v6108
        %6272 = vmatpush.msra.mxu0 %v6106
        %6273 = vmatpush.msra.mxu0 %v6104
        %6274 = vmatmul.f32.gmra.mxu0 %v6011
        %v6275 = vpop.f32.mrf.mxu0
        %v6276 = vadd.f32 %v6235, %v6275
        %6277 = vmatmul.f32.gmra.mxu0 %v6017
        %v6278 = vpop.f32.mrf.mxu0
        %v6279 = vadd.f32 %v6238, %v6278
        %6280 = vmatmul.f32.gmra.mxu0 %v6023
        %v6281 = vpop.f32.mrf.mxu0
        %v6282 = vadd.f32 %v6241, %v6281
        %6283 = vmatmul.f32.gmra.mxu0 %v6029
        %v6284 = vpop.f32.mrf.mxu0
        %v6285 = vadd.f32 %v6244, %v6284
        %6286 = vmatmul.f32.gmra.mxu0 %v6035
        %v6287 = vpop.f32.mrf.mxu0
        %v6288 = vadd.f32 %v6247, %v6287
        %6289 = vmatmul.f32.gmra.mxu0 %v6041
        %v6290 = vpop.f32.mrf.mxu0
        %v6291 = vadd.f32 %v6250, %v6290
        %6292 = vmatmul.f32.gmra.mxu0 %v6047
        %v6293 = vpop.f32.mrf.mxu0
        %v6294 = vadd.f32 %v6253, %v6293
        %6295 = vmatmul.f32.gmra.mxu0 %v6053
        %v6296 = vpop.f32.mrf.mxu0
        %v6297 = vadd.f32 %v6256, %v6296
        %6298 = vdwg.mxu0
        %v6299 = vadd.f32 %v5926, %v6194
        %v6300 = vadd.f32 %v5927, %v6276
        %v6301 = vadd.f32 %v5928, %v6197
        %v6302 = vadd.f32 %v5929, %v6279
        %v6303 = vadd.f32 %v5930, %v6200
        %v6304 = vadd.f32 %v5931, %v6282
        %v6305 = vadd.f32 %v5932, %v6203
        %v6306 = vadd.f32 %v5933, %v6285
        %v6307 = vadd.f32 %v5934, %v6206
        %v6308 = vadd.f32 %v5935, %v6288
        %v6309 = vadd.f32 %v5936, %v6209
        %v6310 = vadd.f32 %v5937, %v6291
        %v6311 = vadd.f32 %v5938, %v6212
        %v6312 = vadd.f32 %v5939, %v6294
        %v6313 = vadd.f32 %v5940, %v6215
        %v6314 = vadd.f32 %v5941, %v6297
        %v6315 = vld [vmem:[%s5680] sm:$0xfc]
        %v6316 = vld [vmem:[%s5680 + $0x8] sm:$0xfc]
        %v6317 = vld [vmem:[%s5680 + $0x10] sm:$0x3]
        %v6318 = vld [vmem:[%s5680 + $0x18] sm:$0x3]
        %v6319 = vld [vmem:[%s5680 + $0x20] sm:$0xfc]
        %v6320 = vld [vmem:[%s5680 + $0x28] sm:$0xfc]
        %v6321 = vld [vmem:[%s5680 + $0x30] sm:$0x3]
        %v6322 = vld [vmem:[%s5680 + $0x38] sm:$0x3]
        %v6323 = vld [vmem:[%s5680 + $0x40] sm:$0xfc]
        %v6324 = vld [vmem:[%s5680 + $0x48] sm:$0xfc]
        %v6325 = vld [vmem:[%s5680 + $0x50] sm:$0x3]
        %v6326 = vld [vmem:[%s5680 + $0x58] sm:$0x3]
        %v6327 = vld [vmem:[%s5680 + $0x60] sm:$0xfc]
        %v6328 = vld [vmem:[%s5680 + $0x68] sm:$0xfc]
        %v6329 = vld [vmem:[%s5680 + $0x70] sm:$0x3]
        %v6330 = vld [vmem:[%s5680 + $0x78] sm:$0x3]
        %v6331 = vld [vmem:[%s5680 + $0x80] sm:$0xfc]
        %v6332 = vld [vmem:[%s5680 + $0x88] sm:$0xfc]
        %v6333 = vld [vmem:[%s5680 + $0x90] sm:$0x3]
        %v6334 = vld [vmem:[%s5680 + $0x98] sm:$0x3]
        %v6335 = vld [vmem:[%s5680 + $0xa0] sm:$0xfc]
        %v6336 = vld [vmem:[%s5680 + $0xa8] sm:$0xfc]
        %v6337 = vld [vmem:[%s5680 + $0xb0] sm:$0x3]
        %v6338 = vld [vmem:[%s5680 + $0xb8] sm:$0x3]
        %v6339 = vld [vmem:[%s5680 + $0xc0] sm:$0xfc]
        %v6340 = vld [vmem:[%s5680 + $0xc8] sm:$0xfc]
        %v6341 = vld [vmem:[%s5680 + $0xd0] sm:$0x3]
        %v6342 = vld [vmem:[%s5680 + $0xd8] sm:$0x3]
        %v6343 = vld [vmem:[%s5680 + $0xe0] sm:$0xfc]
        %v6344 = vld [vmem:[%s5680 + $0xe8] sm:$0xfc]
        %v6345 = vld [vmem:[%s5680 + $0xf0] sm:$0x3]
        %v6346 = vld [vmem:[%s5680 + $0xf8] sm:$0x3]
        %v6379 = vrot.slane %v6315, 2
        %v6380 = vrot.slane %v6317, 2
        %v6381 = vsel %vm1236, %v6379, %v6380
        %v6382 = vrot.slane %v6316, 2
        %v6383 = vrot.slane %v6318, 2
        %v6384 = vsel %vm1236, %v6382, %v6383
        %v6385 = vrot.slane %v6319, 2
        %v6386 = vrot.slane %v6321, 2
        %v6387 = vsel %vm1236, %v6385, %v6386
        %v6388 = vrot.slane %v6320, 2
        %v6389 = vrot.slane %v6322, 2
        %v6390 = vsel %vm1236, %v6388, %v6389
        %v6391 = vrot.slane %v6323, 2
        %v6392 = vrot.slane %v6325, 2
        %v6393 = vsel %vm1236, %v6391, %v6392
        %v6394 = vrot.slane %v6324, 2
        %v6395 = vrot.slane %v6326, 2
        %v6396 = vsel %vm1236, %v6394, %v6395
        %v6397 = vrot.slane %v6327, 2
        %v6398 = vrot.slane %v6329, 2
        %v6399 = vsel %vm1236, %v6397, %v6398
        %v6400 = vrot.slane %v6328, 2
        %v6401 = vrot.slane %v6330, 2
        %v6402 = vsel %vm1236, %v6400, %v6401
        %v6403 = vrot.slane %v6331, 2
        %v6404 = vrot.slane %v6333, 2
        %v6405 = vsel %vm1236, %v6403, %v6404
        %v6406 = vrot.slane %v6332, 2
        %v6407 = vrot.slane %v6334, 2
        %v6408 = vsel %vm1236, %v6406, %v6407
        %v6409 = vrot.slane %v6335, 2
        %v6410 = vrot.slane %v6337, 2
        %v6411 = vsel %vm1236, %v6409, %v6410
        %v6412 = vrot.slane %v6336, 2
        %v6413 = vrot.slane %v6338, 2
        %v6414 = vsel %vm1236, %v6412, %v6413
        %v6415 = vrot.slane %v6339, 2
        %v6416 = vrot.slane %v6341, 2
        %v6417 = vsel %vm1236, %v6415, %v6416
        %v6418 = vrot.slane %v6340, 2
        %v6419 = vrot.slane %v6342, 2
        %v6420 = vsel %vm1236, %v6418, %v6419
        %v6421 = vrot.slane %v6343, 2
        %v6422 = vrot.slane %v6345, 2
        %v6423 = vsel %vm1236, %v6421, %v6422
        %v6424 = vrot.slane %v6344, 2
        %v6425 = vrot.slane %v6346, 2
        %v6426 = vsel %vm1236, %v6424, %v6425
        %s6443 = scalar_lea.vmem [#allocation9], 4096
        %v6444 = vld [vmem:[%s6443] sm:$0xff]
        %v6445 = vld [vmem:[%s6443 + $0x8] sm:$0xff]
        %v6446 = vld [vmem:[%s6443 + $0x10] sm:$0xff]
        %v6447 = vld [vmem:[%s6443 + $0x18] sm:$0xff]
        %v6448 = vld [vmem:[%s6443 + $0x20] sm:$0xff]
        %v6449 = vld [vmem:[%s6443 + $0x28] sm:$0xff]
        %v6450 = vld [vmem:[%s6443 + $0x30] sm:$0xff]
        %v6451 = vld [vmem:[%s6443 + $0x38] sm:$0xff]
        %v6452 = vld [vmem:[%s6443 + $0x40] sm:$0xff]
        %v6453 = vld [vmem:[%s6443 + $0x48] sm:$0xff]
        %v6454 = vld [vmem:[%s6443 + $0x50] sm:$0xff]
        %v6455 = vld [vmem:[%s6443 + $0x58] sm:$0xff]
        %v6456 = vld [vmem:[%s6443 + $0x60] sm:$0xff]
        %v6457 = vld [vmem:[%s6443 + $0x68] sm:$0xff]
        %v6458 = vld [vmem:[%s6443 + $0x70] sm:$0xff]
        %v6459 = vld [vmem:[%s6443 + $0x78] sm:$0xff]
        %v6460 = vld [vmem:[%s6443 + $0x80] sm:$0xff]
        %v6461 = vld [vmem:[%s6443 + $0x88] sm:$0xff]
        %v6462 = vld [vmem:[%s6443 + $0x90] sm:$0xff]
        %v6463 = vld [vmem:[%s6443 + $0x98] sm:$0xff]
        %v6464 = vld [vmem:[%s6443 + $0xa0] sm:$0xff]
        %v6465 = vld [vmem:[%s6443 + $0xa8] sm:$0xff]
        %v6466 = vld [vmem:[%s6443 + $0xb0] sm:$0xff]
        %v6467 = vld [vmem:[%s6443 + $0xb8] sm:$0xff]
        %v6468 = vld [vmem:[%s6443 + $0xc0] sm:$0xff]
        %v6469 = vld [vmem:[%s6443 + $0xc8] sm:$0xff]
        %v6470 = vld [vmem:[%s6443 + $0xd0] sm:$0xff]
        %v6471 = vld [vmem:[%s6443 + $0xd8] sm:$0xff]
        %v6472 = vld [vmem:[%s6443 + $0xe0] sm:$0xff]
        %v6473 = vld [vmem:[%s6443 + $0xe8] sm:$0xff]
        %v6474 = vld [vmem:[%s6443 + $0xf0] sm:$0xff]
        %v6475 = vld [vmem:[%s6443 + $0xf8] sm:$0xff]
        %v6476 = vld [vmem:[%s6443 + $0x100] sm:$0xff]
        %v6477 = vld [vmem:[%s6443 + $0x108] sm:$0xff]
        %v6478 = vld [vmem:[%s6443 + $0x110] sm:$0xff]
        %v6479 = vld [vmem:[%s6443 + $0x118] sm:$0xff]
        %v6480 = vld [vmem:[%s6443 + $0x120] sm:$0xff]
        %v6481 = vld [vmem:[%s6443 + $0x128] sm:$0xff]
        %v6482 = vld [vmem:[%s6443 + $0x130] sm:$0xff]
        %v6483 = vld [vmem:[%s6443 + $0x138] sm:$0xff]
        %v6484 = vld [vmem:[%s6443 + $0x140] sm:$0xff]
        %v6485 = vld [vmem:[%s6443 + $0x148] sm:$0xff]
        %v6486 = vld [vmem:[%s6443 + $0x150] sm:$0xff]
        %v6487 = vld [vmem:[%s6443 + $0x158] sm:$0xff]
        %v6488 = vld [vmem:[%s6443 + $0x160] sm:$0xff]
        %v6489 = vld [vmem:[%s6443 + $0x168] sm:$0xff]
        %v6490 = vld [vmem:[%s6443 + $0x170] sm:$0xff]
        %v6491 = vld [vmem:[%s6443 + $0x178] sm:$0xff]
        %v6492 = vld [vmem:[%s6443 + $0x180] sm:$0xff]
        %v6493 = vld [vmem:[%s6443 + $0x188] sm:$0xff]
        %v6494 = vld [vmem:[%s6443 + $0x190] sm:$0xff]
        %v6495 = vld [vmem:[%s6443 + $0x198] sm:$0xff]
        %v6496 = vld [vmem:[%s6443 + $0x1a0] sm:$0xff]
        %v6497 = vld [vmem:[%s6443 + $0x1a8] sm:$0xff]
        %v6498 = vld [vmem:[%s6443 + $0x1b0] sm:$0xff]
        %v6499 = vld [vmem:[%s6443 + $0x1b8] sm:$0xff]
        %v6500 = vld [vmem:[%s6443 + $0x1c0] sm:$0xff]
        %v6501 = vld [vmem:[%s6443 + $0x1c8] sm:$0xff]
        %v6502 = vld [vmem:[%s6443 + $0x1d0] sm:$0xff]
        %v6503 = vld [vmem:[%s6443 + $0x1d8] sm:$0xff]
        %v6504 = vld [vmem:[%s6443 + $0x1e0] sm:$0xff]
        %v6505 = vld [vmem:[%s6443 + $0x1e8] sm:$0xff]
        %v6506 = vld [vmem:[%s6443 + $0x1f0] sm:$0xff]
        %v6507 = vld [vmem:[%s6443 + $0x1f8] sm:$0xff]
        %6508 = vmatpush.msra.mxu0 %v6474
        %6509 = vmatpush.msra.mxu0 %v6472
        %6510 = vmatpush.msra.mxu0 %v6470
        %6511 = vmatpush.msra.mxu0 %v6468
        %6512 = vmatpush.msra.mxu0 %v6466
        %6513 = vmatpush.msra.mxu0 %v6464
        %6514 = vmatpush.msra.mxu0 %v6462
        %6515 = vmatpush.msra.mxu0 %v6460
        %6516 = vmatpush.msra.mxu0 %v6458
        %6517 = vmatpush.msra.mxu0 %v6456
        %6518 = vmatpush.msra.mxu0 %v6454
        %6519 = vmatpush.msra.mxu0 %v6452
        %6520 = vmatpush.msra.mxu0 %v6450
        %6521 = vmatpush.msra.mxu0 %v6448
        %6522 = vmatpush.msra.mxu0 %v6446
        %6523 = vmatpush.msra.mxu0 %v6444
        %6524 = vmatmul.f32.gmra.mxu0 %v6381
        %v6525 = vpop.f32.mrf.mxu0
        %v6526 = vadd.f32 0.0, %v6525
        %6527 = vmatmul.f32.gmra.mxu0 %v6387
        %v6528 = vpop.f32.mrf.mxu0
        %v6529 = vadd.f32 0.0, %v6528
        %6530 = vmatmul.f32.gmra.mxu0 %v6393
        %v6531 = vpop.f32.mrf.mxu0
        %v6532 = vadd.f32 0.0, %v6531
        %6533 = vmatmul.f32.gmra.mxu0 %v6399
        %v6534 = vpop.f32.mrf.mxu0
        %v6535 = vadd.f32 0.0, %v6534
        %6536 = vmatmul.f32.gmra.mxu0 %v6405
        %v6537 = vpop.f32.mrf.mxu0
        %v6538 = vadd.f32 0.0, %v6537
        %6539 = vmatmul.f32.gmra.mxu0 %v6411
        %v6540 = vpop.f32.mrf.mxu0
        %v6541 = vadd.f32 0.0, %v6540
        %6542 = vmatmul.f32.gmra.mxu0 %v6417
        %v6543 = vpop.f32.mrf.mxu0
        %v6544 = vadd.f32 0.0, %v6543
        %6545 = vmatmul.f32.gmra.mxu0 %v6423
        %v6546 = vpop.f32.mrf.mxu0
        %v6547 = vadd.f32 0.0, %v6546
        %6548 = vdwg.mxu0
        %6549 = vmatpush.msra.mxu0 %v6506
        %6550 = vmatpush.msra.mxu0 %v6504
        %6551 = vmatpush.msra.mxu0 %v6502
        %6552 = vmatpush.msra.mxu0 %v6500
        %6553 = vmatpush.msra.mxu0 %v6498
        %6554 = vmatpush.msra.mxu0 %v6496
        %6555 = vmatpush.msra.mxu0 %v6494
        %6556 = vmatpush.msra.mxu0 %v6492
        %6557 = vmatpush.msra.mxu0 %v6490
        %6558 = vmatpush.msra.mxu0 %v6488
        %6559 = vmatpush.msra.mxu0 %v6486
        %6560 = vmatpush.msra.mxu0 %v6484
        %6561 = vmatpush.msra.mxu0 %v6482
        %6562 = vmatpush.msra.mxu0 %v6480
        %6563 = vmatpush.msra.mxu0 %v6478
        %6564 = vmatpush.msra.mxu0 %v6476
        %6565 = vmatmul.f32.gmra.mxu0 %v6384
        %v6566 = vpop.f32.mrf.mxu0
        %v6567 = vadd.f32 %v6526, %v6566
        %6568 = vmatmul.f32.gmra.mxu0 %v6390
        %v6569 = vpop.f32.mrf.mxu0
        %v6570 = vadd.f32 %v6529, %v6569
        %6571 = vmatmul.f32.gmra.mxu0 %v6396
        %v6572 = vpop.f32.mrf.mxu0
        %v6573 = vadd.f32 %v6532, %v6572
        %6574 = vmatmul.f32.gmra.mxu0 %v6402
        %v6575 = vpop.f32.mrf.mxu0
        %v6576 = vadd.f32 %v6535, %v6575
        %6577 = vmatmul.f32.gmra.mxu0 %v6408
        %v6578 = vpop.f32.mrf.mxu0
        %v6579 = vadd.f32 %v6538, %v6578
        %6580 = vmatmul.f32.gmra.mxu0 %v6414
        %v6581 = vpop.f32.mrf.mxu0
        %v6582 = vadd.f32 %v6541, %v6581
        %6583 = vmatmul.f32.gmra.mxu0 %v6420
        %v6584 = vpop.f32.mrf.mxu0
        %v6585 = vadd.f32 %v6544, %v6584
        %6586 = vmatmul.f32.gmra.mxu0 %v6426
        %v6587 = vpop.f32.mrf.mxu0
        %v6588 = vadd.f32 %v6547, %v6587
        %6589 = vdwg.mxu0
        %6590 = vmatpush.msra.mxu0 %v6475
        %6591 = vmatpush.msra.mxu0 %v6473
        %6592 = vmatpush.msra.mxu0 %v6471
        %6593 = vmatpush.msra.mxu0 %v6469
        %6594 = vmatpush.msra.mxu0 %v6467
        %6595 = vmatpush.msra.mxu0 %v6465
        %6596 = vmatpush.msra.mxu0 %v6463
        %6597 = vmatpush.msra.mxu0 %v6461
        %6598 = vmatpush.msra.mxu0 %v6459
        %6599 = vmatpush.msra.mxu0 %v6457
        %6600 = vmatpush.msra.mxu0 %v6455
        %6601 = vmatpush.msra.mxu0 %v6453
        %6602 = vmatpush.msra.mxu0 %v6451
        %6603 = vmatpush.msra.mxu0 %v6449
        %6604 = vmatpush.msra.mxu0 %v6447
        %6605 = vmatpush.msra.mxu0 %v6445
        %6606 = vmatmul.f32.gmra.mxu0 %v6381
        %v6607 = vpop.f32.mrf.mxu0
        %v6608 = vadd.f32 0.0, %v6607
        %6609 = vmatmul.f32.gmra.mxu0 %v6387
        %v6610 = vpop.f32.mrf.mxu0
        %v6611 = vadd.f32 0.0, %v6610
        %6612 = vmatmul.f32.gmra.mxu0 %v6393
        %v6613 = vpop.f32.mrf.mxu0
        %v6614 = vadd.f32 0.0, %v6613
        %6615 = vmatmul.f32.gmra.mxu0 %v6399
        %v6616 = vpop.f32.mrf.mxu0
        %v6617 = vadd.f32 0.0, %v6616
        %6618 = vmatmul.f32.gmra.mxu0 %v6405
        %v6619 = vpop.f32.mrf.mxu0
        %v6620 = vadd.f32 0.0, %v6619
        %6621 = vmatmul.f32.gmra.mxu0 %v6411
        %v6622 = vpop.f32.mrf.mxu0
        %v6623 = vadd.f32 0.0, %v6622
        %6624 = vmatmul.f32.gmra.mxu0 %v6417
        %v6625 = vpop.f32.mrf.mxu0
        %v6626 = vadd.f32 0.0, %v6625
        %6627 = vmatmul.f32.gmra.mxu0 %v6423
        %v6628 = vpop.f32.mrf.mxu0
        %v6629 = vadd.f32 0.0, %v6628
        %6630 = vdwg.mxu0
        %6631 = vmatpush.msra.mxu0 %v6507
        %6632 = vmatpush.msra.mxu0 %v6505
        %6633 = vmatpush.msra.mxu0 %v6503
        %6634 = vmatpush.msra.mxu0 %v6501
        %6635 = vmatpush.msra.mxu0 %v6499
        %6636 = vmatpush.msra.mxu0 %v6497
        %6637 = vmatpush.msra.mxu0 %v6495
        %6638 = vmatpush.msra.mxu0 %v6493
        %6639 = vmatpush.msra.mxu0 %v6491
        %6640 = vmatpush.msra.mxu0 %v6489
        %6641 = vmatpush.msra.mxu0 %v6487
        %6642 = vmatpush.msra.mxu0 %v6485
        %6643 = vmatpush.msra.mxu0 %v6483
        %6644 = vmatpush.msra.mxu0 %v6481
        %6645 = vmatpush.msra.mxu0 %v6479
        %6646 = vmatpush.msra.mxu0 %v6477
        %6647 = vmatmul.f32.gmra.mxu0 %v6384
        %v6648 = vpop.f32.mrf.mxu0
        %v6649 = vadd.f32 %v6608, %v6648
        %6650 = vmatmul.f32.gmra.mxu0 %v6390
        %v6651 = vpop.f32.mrf.mxu0
        %v6652 = vadd.f32 %v6611, %v6651
        %6653 = vmatmul.f32.gmra.mxu0 %v6396
        %v6654 = vpop.f32.mrf.mxu0
        %v6655 = vadd.f32 %v6614, %v6654
        %6656 = vmatmul.f32.gmra.mxu0 %v6402
        %v6657 = vpop.f32.mrf.mxu0
        %v6658 = vadd.f32 %v6617, %v6657
        %6659 = vmatmul.f32.gmra.mxu0 %v6408
        %v6660 = vpop.f32.mrf.mxu0
        %v6661 = vadd.f32 %v6620, %v6660
        %6662 = vmatmul.f32.gmra.mxu0 %v6414
        %v6663 = vpop.f32.mrf.mxu0
        %v6664 = vadd.f32 %v6623, %v6663
        %6665 = vmatmul.f32.gmra.mxu0 %v6420
        %v6666 = vpop.f32.mrf.mxu0
        %v6667 = vadd.f32 %v6626, %v6666
        %6668 = vmatmul.f32.gmra.mxu0 %v6426
        %v6669 = vpop.f32.mrf.mxu0
        %v6670 = vadd.f32 %v6629, %v6669
        %6671 = vdwg.mxu0
        %v6672 = vadd.f32 %v6299, %v6567
        %v6673 = vadd.f32 %v6300, %v6649
        %v6674 = vadd.f32 %v6301, %v6570
        %v6675 = vadd.f32 %v6302, %v6652
        %v6676 = vadd.f32 %v6303, %v6573
        %v6677 = vadd.f32 %v6304, %v6655
        %v6678 = vadd.f32 %v6305, %v6576
        %v6679 = vadd.f32 %v6306, %v6658
        %v6680 = vadd.f32 %v6307, %v6579
        %v6681 = vadd.f32 %v6308, %v6661
        %v6682 = vadd.f32 %v6309, %v6582
        %v6683 = vadd.f32 %v6310, %v6664
        %v6684 = vadd.f32 %v6311, %v6585
        %v6685 = vadd.f32 %v6312, %v6667
        %v6686 = vadd.f32 %v6313, %v6588
        %v6687 = vadd.f32 %v6314, %v6670
        %v6689 = vperm.slane %v567, 0
        %v6690 = vperm.slane %v567, 1
        %v6693 = vmul.f32 %v6672, %v6689
        %v6694 = vmul.f32 %v6673, %v6690
        %v6695 = vmul.f32 %v6674, %v6689
        %v6696 = vmul.f32 %v6675, %v6690
        %v6697 = vmul.f32 %v6676, %v6689
        %v6698 = vmul.f32 %v6677, %v6690
        %v6699 = vmul.f32 %v6678, %v6689
        %v6700 = vmul.f32 %v6679, %v6690
        %v6701 = vmul.f32 %v6680, %v6689
        %v6702 = vmul.f32 %v6681, %v6690
        %v6703 = vmul.f32 %v6682, %v6689
        %v6704 = vmul.f32 %v6683, %v6690
        %v6705 = vmul.f32 %v6684, %v6689
        %v6706 = vmul.f32 %v6685, %v6690
        %v6707 = vmul.f32 %v6686, %v6689
        %v6708 = vmul.f32 %v6687, %v6690
        %v6710 = vperm.slane %v569, 0
        %v6711 = vperm.slane %v569, 1
        %v6714 = vadd.f32 %v6693, %v6710
        %v6715 = vadd.f32 %v6694, %v6711
        %v6716 = vadd.f32 %v6695, %v6710
        %v6717 = vadd.f32 %v6696, %v6711
        %v6718 = vadd.f32 %v6697, %v6710
        %v6719 = vadd.f32 %v6698, %v6711
        %v6720 = vadd.f32 %v6699, %v6710
        %v6721 = vadd.f32 %v6700, %v6711
        %v6722 = vadd.f32 %v6701, %v6710
        %v6723 = vadd.f32 %v6702, %v6711
        %v6724 = vadd.f32 %v6703, %v6710
        %v6725 = vadd.f32 %v6704, %v6711
        %v6726 = vadd.f32 %v6705, %v6710
        %v6727 = vadd.f32 %v6706, %v6711
        %v6728 = vadd.f32 %v6707, %v6710
        %v6729 = vadd.f32 %v6708, %v6711
        %v6730 = vadd.f32 %v6714, %v6716
        %v6731 = vadd.f32 %v6730, %v6718
        %v6732 = vadd.f32 %v6731, %v6720
        %v6733 = vadd.f32 %v6732, %v6722
        %v6734 = vadd.f32 %v6733, %v6724
        %v6735 = vadd.f32 %v6734, %v6726
        %v6736 = vadd.f32 %v6735, %v6728
        %v6737 = vrot.slane %v6736, 4
        %v6738 = vadd.f32 %v6736, %v6737
        %v6739 = vrot.slane %v6738, 2
        %v6740 = vadd.f32 %v6738, %v6739
        %v6741 = vrot.slane %v6740, 1
        %v6742 = vadd.f32 %v6740, %v6741
        %v6743 = vadd.f32 %v6715, %v6717
        %v6744 = vadd.f32 %v6743, %v6719
        %v6745 = vadd.f32 %v6744, %v6721
        %v6746 = vadd.f32 %v6745, %v6723
        %v6747 = vadd.f32 %v6746, %v6725
        %v6748 = vadd.f32 %v6747, %v6727
        %v6749 = vadd.f32 %v6748, %v6729
        %v6750 = vrot.slane %v6749, 4
        %v6751 = vadd.f32 %v6749, %v6750
        %v6752 = vrot.slane %v6751, 2
        %v6753 = vadd.f32 %v6751, %v6752
        %v6754 = vrot.slane %v6753, 1
        %v6755 = vadd.f32 %v6753, %v6754
        %v6756 = vrcp.pop 64.0
        %v6757 = vmul.f32 64.0, %v6756
        %v6758 = vsub.f32 1.0, %v6757
        %v6759 = vmul.f32 %v6756, %v6758
        %v6760 = vadd.f32 %v6756, %v6759
        %vm6761 = vweird.f32 %v6756
        %v6762 = vsel %vm6761, %v6756, %v6760
        %v6763 = vmul.f32 %v6742, %v6762
        %v6764 = vmul.f32 %v6755, %v6762
        %6766 = vrot.lane.b32.xlu0 %v6763, 96
        %v6767 = vpop.permute.xlu0 %6766
        %6769 = vrot.lane.b32.xlu0 %v6763, 64
        %v6770 = vpop.permute.xlu0 %6769
        %6772 = vrot.lane.b32.xlu0 %v6763, 32
        %v6773 = vpop.permute.xlu0 %6772
        %6776 = vrot.lane.b32.xlu0 %v6764, 96
        %v6777 = vpop.permute.xlu0 %6776
        %6779 = vrot.lane.b32.xlu0 %v6764, 64
        %v6780 = vpop.permute.xlu0 %6779
        %6782 = vrot.lane.b32.xlu0 %v6764, 32
        %v6783 = vpop.permute.xlu0 %6782
        %v6785 = vrot.slane %v6770, 4
        %vm6786 = vcmask 1047556
        %v6787 = vsel %vm6786, %v6785, %v6763
        %v6789 = vunpack.c.l.s4 1983009808
        %v6790 = vunpack.c.0.s8 %v6789
        %v6791 = vperm.slane %v6787, %v6790
        %v6792 = vrot.slane %v6773, 4
        %v6793 = vsel %vm6786, %v6792, %v6767
        %v6795 = vunpack.c.l.s4 1983009808
        %v6796 = vunpack.c.0.s8 %v6795
        %v6797 = vperm.slane %v6793, %v6796
        %v6798 = vrot.slane %v6780, 4
        %v6799 = vsel %vm6786, %v6798, %v6764
        %v6801 = vunpack.c.l.s4 1983009808
        %v6802 = vunpack.c.0.s8 %v6801
        %v6803 = vperm.slane %v6799, %v6802
        %v6804 = vrot.slane %v6783, 4
        %v6805 = vsel %vm6786, %v6804, %v6777
        %v6807 = vunpack.c.l.s4 1983009808
        %v6808 = vunpack.c.0.s8 %v6807
        %v6809 = vperm.slane %v6805, %v6808
        %v6810 = vrot.slane %v6797, 4
        %v6811 = vsel %vm6786, %v6810, %v6791
        %v6813 = vunpack.c.l.s4 1934713408
        %v6814 = vunpack.c.0.s8 %v6813
        %v6815 = vperm.slane %v6811, %v6814
        %v6816 = vrot.slane %v6809, 4
        %v6817 = vsel %vm6786, %v6816, %v6803
        %v6819 = vunpack.c.l.s4 1934713408
        %v6820 = vunpack.c.0.s8 %v6819
        %v6821 = vperm.slane %v6817, %v6820
        %v6822 = vrot.slane %v6821, 4
        %v6823 = vsel %vm6786, %v6822, %v6815
        %vm6824 = vcmask 261120
        %v6825 = vsel %vm6824, %v6823, 0.0
        %v6826 = vrot.slane %v6825, 4
        %v6827 = vadd.f32 %v6825, %v6826
        %v6828 = vrot.slane %v6827, 2
        %v6829 = vadd.f32 %v6827, %v6828
        %v6830 = vrot.slane %v6829, 1
        %v6831 = vadd.f32 %v6829, %v6830
        %v6832 = vrcp.pop 8.0
        %v6833 = vmul.f32 8.0, %v6832
        %v6834 = vsub.f32 1.0, %v6833
        %v6835 = vmul.f32 %v6832, %v6834
        %v6836 = vadd.f32 %v6832, %v6835
        %vm6837 = vweird.f32 %v6832
        %v6838 = vsel %vm6837, %v6832, %v6836
        %v6839 = vmul.f32 %v6831, %v6838
        %v6840 = vld [vmem:[#allocation12] sm:$0x3]
        %v6841 = vld [vmem:[#allocation13] sm:$0x3]
        %v6842 = vmul.f32 %v6839, %v6840
        %vm6843 = vcmask 253952
        %v6844 = vsel %vm6843, %v6842, 0.0
        %6845 = vadd.xlane.f32.xlu0 %v6844
        %v6846 = vpop.xlane.xlu0 %6845
        %v6847 = vmax.f32 %v6846, 0.0
        %v6848 = vmul.f32 %v6847, %v6841
        %v6849 = vadd.f32 %v6848, 0.0
        %vm6850 = vcmask 254977
        %v6851 = vsel %vm6850, %v6842, 0.0
        %6852 = vadd.xlane.f32.xlu0 %v6851
        %v6853 = vpop.xlane.xlu0 %6852
        %v6854 = vmax.f32 %v6853, 0.0
        %v6855 = vmul.f32 %v6854, %v6841
        %v6857 = vrot.slane %v6855, 1
        %v6859 = vadd.f32 %v6849, %v6857
        %v6860 = vxor.u32 %v6859, 2147483648
        %v6861 = vmul.f32 %v6860, 1.442695
        %v6862 = vpow.pop %v6861
        %v6863 = vadd.f32 %v6862, 1.0
        %v6864 = vrcp.pop %v6863
        %v6865 = vmul.f32 %v6863, %v6864
        %v6866 = vsub.f32 1.0, %v6865
        %v6867 = vmul.f32 %v6864, %v6866
        %v6868 = vadd.f32 %v6864, %v6867
        %vm6869 = vweird.f32 %v6863
        %vm6870 = vweird.f32 %v6864
        %vm6871 = vmor %vm6869, %vm6870
        %v6872 = vsel %vm6871, %v6864, %v6868
        %v6873 = vand.u32 2147483647, %v6863
        %vm6874 = vcmp.eq.f32.partialorder %v6873, 8.507059e+37
        %v6875 = vand.u32 %v6863, 2147483648
        %v6876 = vor.u32 1.1754944e-38, %v6875
        %v6877 = vsel %vm6874, %v6876, %v6872
        %v6878 = vmul.f32 1.0, %v6877
        %6880 = vrot.lane.b32.xlu0 %v6878, 32
        %v6881 = vpop.permute.xlu0 %6880
        %6883 = vrot.lane.b32.xlu0 %v6878, 64
        %v6884 = vpop.permute.xlu0 %6883
        %6886 = vrot.lane.b32.xlu0 %v6878, 96
        %v6887 = vpop.permute.xlu0 %6886
        %v6889 = vsel %vm6824, %v6878, %v6881
        %vm6890 = vcmask 523264
        %v6891 = vsel %vm6890, %v6889, %v6884
        %vm6892 = vcmask 785408
        %v6893 = vsel %vm6892, %v6891, %v6887
        %v6894 = vperm.slane %v6893, 0
        %v6895 = vmul.f32 %v6714, %v6894
        %v6896 = vmul.f32 %v6715, %v6894
        %v6897 = vmul.f32 %v6716, %v6894
        %v6898 = vmul.f32 %v6717, %v6894
        %v6899 = vmul.f32 %v6718, %v6894
        %v6900 = vmul.f32 %v6719, %v6894
        %v6901 = vmul.f32 %v6720, %v6894
        %v6902 = vmul.f32 %v6721, %v6894
        %v6903 = vmul.f32 %v6722, %v6894
        %v6904 = vmul.f32 %v6723, %v6894
        %v6905 = vmul.f32 %v6724, %v6894
        %v6906 = vmul.f32 %v6725, %v6894
        %v6907 = vmul.f32 %v6726, %v6894
        %v6908 = vmul.f32 %v6727, %v6894
        %v6909 = vmul.f32 %v6728, %v6894
        %v6910 = vmul.f32 %v6729, %v6894
        %v6911 = vadd.f32 %v6895, %v467
        %v6912 = vadd.f32 %v6896, %v468
        %v6913 = vadd.f32 %v6897, %v469
        %v6914 = vadd.f32 %v6898, %v470
        %v6915 = vadd.f32 %v6899, %v471
        %v6916 = vadd.f32 %v6900, %v472
        %v6917 = vadd.f32 %v6901, %v473
        %v6918 = vadd.f32 %v6902, %v474
        %v6919 = vadd.f32 %v6903, %v475
        %v6920 = vadd.f32 %v6904, %v476
        %v6921 = vadd.f32 %v6905, %v477
        %v6922 = vadd.f32 %v6906, %v478
        %v6923 = vadd.f32 %v6907, %v479
        %v6924 = vadd.f32 %v6908, %v480
        %v6925 = vadd.f32 %v6909, %v481
        %v6926 = vadd.f32 %v6910, %v482
        %v6927 = vmax.f32 %v6911, 0.0
        %v6928 = vmax.f32 %v6912, 0.0
        %v6929 = vmax.f32 %v6913, 0.0
        %v6930 = vmax.f32 %v6914, 0.0
        %v6931 = vmax.f32 %v6915, 0.0
        %v6932 = vmax.f32 %v6916, 0.0
        %v6933 = vmax.f32 %v6917, 0.0
        %v6934 = vmax.f32 %v6918, 0.0
        %v6935 = vmax.f32 %v6919, 0.0
        %v6936 = vmax.f32 %v6920, 0.0
        %v6937 = vmax.f32 %v6921, 0.0
        %v6938 = vmax.f32 %v6922, 0.0
        %v6939 = vmax.f32 %v6923, 0.0
        %v6940 = vmax.f32 %v6924, 0.0
        %v6941 = vmax.f32 %v6925, 0.0
        %v6942 = vmax.f32 %v6926, 0.0
        %6943 = vst [vmem:[%s348] sm:$0xff] %v6927
        %6944 = vst [vmem:[%s348 + $0x8] sm:$0xff] %v6928
        %6945 = vst [vmem:[%s348 + $0x10] sm:$0xff] %v6929
        %6946 = vst [vmem:[%s348 + $0x18] sm:$0xff] %v6930
        %6947 = vst [vmem:[%s348 + $0x20] sm:$0xff] %v6931
        %6948 = vst [vmem:[%s348 + $0x28] sm:$0xff] %v6932
        %6949 = vst [vmem:[%s348 + $0x30] sm:$0xff] %v6933
        %6950 = vst [vmem:[%s348 + $0x38] sm:$0xff] %v6934
        %6951 = vst [vmem:[%s348 + $0x40] sm:$0xff] %v6935
        %6952 = vst [vmem:[%s348 + $0x48] sm:$0xff] %v6936
        %6953 = vst [vmem:[%s348 + $0x50] sm:$0xff] %v6937
        %6954 = vst [vmem:[%s348 + $0x58] sm:$0xff] %v6938
        %6955 = vst [vmem:[%s348 + $0x60] sm:$0xff] %v6939
        %6956 = vst [vmem:[%s348 + $0x68] sm:$0xff] %v6940
        %6957 = vst [vmem:[%s348 + $0x70] sm:$0xff] %v6941
        %6958 = vst [vmem:[%s348 + $0x78] sm:$0xff] %v6942
        %s6959 = sand.u32 %s165, 1
        %s6960 = scalar_lea.sflag [#allocation6], %s6959
        %s6961 = sand.u32 %s165, 1
        %s6962 = smul.addr %s6961, 128
        %s6963 = scalar_lea.vmem [#allocation15], %s6962
        // Predicated region
        $region69: #{tpu_custom_call.1} parent=43 // pred_check
          %p6964 = pneg %p175
        $region70: #{tpu_custom_call.1} parent=43 // pred_check_branch
          %6966 = sbr.rel (%p6964) target = $region72
        $region71: #{tpu_custom_call.1} parent=43 // pred_region
          %6968 = vsyncadd %s6960, 0
          %s6969 = smul.addr %s26, 16
          %s6970 = smul.addr %s6969, 8
          %s6971 = scalar_lea.hbm %s6, %s6970
          %s6972 = sshll.u32 %s6963, 4
          %s6973 = int_to_ptr.vmem [resolvable:$true] %s6972
          %s6974 = sshll.u32 %s6971, 4
          %s6975 = int_to_ptr.hbm [resolvable:$true] %s6974
          %6980 = dma.vmem_to_hbm [thread:$0]  %s6973, 2048, %s6975, %s6960, 256, 256, 16
        $region72: #{tpu_custom_call.1} parent=43 // pred_fallthru
          _
      $region44: #{tpu_custom_call.1} parent=5 // pred_fallthru
        _
      %p6981 = scmp.le.s32.totalorder 2, %s21
      // Predicated region
      $region73: #{tpu_custom_call.1} parent=5 // pred_check
        %p6982 = pneg %p6981
      $region74: #{tpu_custom_call.1} parent=5 // pred_check_branch
        %6984 = sbr.rel (%p6982) target = $region76
      $region75: #{tpu_custom_call.1} parent=5 // pred_region
        %s6985 = ssub.s32 %s21, 2
        // Predicated region
        $region77: #{tpu_custom_call.1} parent=75 // pred_check
          %p6986 = pneg %p181
        $region78: #{tpu_custom_call.1} parent=75 // pred_check_branch
          %6988 = sbr.rel (%p6986) target = $region80
        $region79: #{tpu_custom_call.1} parent=75 // pred_region
          %s6989 = sand.u32 %s166, 1
          %s6990 = scalar_lea.sflag [#allocation6], %s6989
          %s6991 = sand.u32 %s166, 1
          %s6992 = smul.addr %s6991, 128
          %s6993 = scalar_lea.vmem [#allocation15], %s6992
          %6995 = dma.done %s6990, 2048
        $region80: #{tpu_custom_call.1} parent=75 // pred_fallthru
          _
      $region76: #{tpu_custom_call.1} parent=5 // pred_fallthru
        _
    $region6: #{tpu_custom_call.1} parent=1 // loop_footer
      %s25 = sadd.s32 1, %s21
    $region7: #{tpu_custom_call.1} parent=1 // loop_footer_branch
      %20 = sbr.rel target = $region3
    $region8: #{tpu_custom_call.1} parent=1 // loop_exit
      _
    %6996 = vsyncpa [#allocation5], 1
    %s6997 = scalar_lea.sflag [#allocation5], 1
    %6998 = vsyncpa %s6997, 1
    %6999 = vsyncpa [#allocation8], 1
    %7000 = vsyncpa [#allocation11], 1
    %7001 = vsyncpa [#allocation14], 1
    %7002 = vsyncpa [#allocation6], 1
    %s7003 = scalar_lea.sflag [#allocation6], 1
    %7004 = vsyncpa %s7003, 1

</llo_original>
